<compile_context>
chip_gen: v7x
topology: tpu7x:2x2x1
jax: 0.10.0
libtpu: 0.0.40
codegen_flags: <defaults>
</compile_context>

<pallas_src>
import jax
import jax.numpy as jnp
from jax.experimental import pallas as pl
from jax.experimental.pallas import tpu as pltpu


_COMPILER_PARAMS = pltpu.CompilerParams(
    dimension_semantics=("parallel",),
    vmem_limit_bytes=32 * 1024 * 1024,
)


# ----------------------------------------------------------------------------
# tiling helpers
# ----------------------------------------------------------------------------
def _conv_batch_tile(b, cap=16):
    """Largest divisor of b that is <= cap, keeping grid >= 2 whenever b >= 2
    (so both v7x TensorCores get work even at tiny batch)."""
    if b <= 1:
        return 1
    cap = max(1, min(cap, b // 2))
    for t in range(cap, 0, -1):
        if b % t == 0:
            return t
    return 1


def _fc_batch_tile(b_pad, cap=512):
    """b_pad is a multiple of 16; largest multiple-of-8 divisor with grid >= 2."""
    cap = max(8, min(cap, b_pad // 2))
    best = 8
    t = 8
    while t <= cap:
        if b_pad % t == 0:
            best = t
        t += 8
    return best


# ----------------------------------------------------------------------------
# wrapper-side "column-pair" im2col + paired weights (tiny, plain XLA glue)
# ----------------------------------------------------------------------------
def _im2col_pairs(x, out_h, out_pairs):
    """x: (B, H, W, C) -> (B, out_h, out_pairs, 12*C).

    Feature order is (dy, dx4, c) with dy in [0,3), dx4 in [0,4): row (b,h,j)
    holds the 4-column input span needed to evaluate a 3x3/s1 conv at output
    columns (2j, 2j+1).  Requires W >= 2*out_pairs + 2."""
    taps = [x[:, dy:dy + out_h, dx:dx + 2 * out_pairs:2, :]
            for dy in range(3) for dx in range(4)]
    return jnp.concatenate(taps, axis=-1)


def _pair_conv_weight(w_oihw):
    """OIHW (Cout, Cin, 3, 3) -> (12*Cin, 2*Cout) matmul RHS: columns [0,Cout)
    compute the even output column of a pair, columns [Cout,2*Cout) the odd one
    (the off-by-one dx alignment is encoded with structured zero rows)."""
    cout, cin, kh, kw = w_oihw.shape
    assert kh == 3 and kw == 3
    wk = jnp.transpose(w_oihw, (2, 3, 1, 0))             # (dy, dx, cin, cout)
    z = jnp.zeros((3, 1, cin, cout), wk.dtype)
    even = jnp.concatenate([wk, z], axis=1)               # taps dx4 = 0..2 live
    odd = jnp.concatenate([z, wk], axis=1)                # taps dx4 = 1..3 live
    w = jnp.concatenate([even, odd], axis=-1)             # (3, 4, cin, 2*cout)
    return w.reshape(12 * cin, 2 * cout).astype(jnp.bfloat16)


def _pair_bias(b):
    return jnp.concatenate([b, b]).reshape(1, 2 * b.shape[0]).astype(jnp.float32)


# ----------------------------------------------------------------------------
# fused conv(3x3, VALID, s1) + bias + relu + maxpool(3x3, s2) kernel
# ----------------------------------------------------------------------------
def _conv_pool_kernel(p_ref, w_ref, b_ref, o_ref, act_ref):
    # p_ref  : (TB, Ho, Jp, K)      bf16  column-pair im2col patches
    # w_ref  : (K, 2*Cout)          bf16  paired conv weights
    # b_ref  : (1, 2*Cout)          f32
    # o_ref  : (TB, Ph, Pw, Cout)   bf16  pooled output
    # act_ref: (TB, Ho, Jp, 2*Cout) f32   VMEM scratch (conv activation)
    tb, ho, wj, kdim = p_ref.shape
    n2 = w_ref.shape[1]
    ph, pw, cout = o_ref.shape[1], o_ref.shape[2], o_ref.shape[3]

    # conv = ONE MXU matmul (all 3x3 taps folded into K); f32 accumulation.
    lhs = p_ref[...].reshape(tb * ho * wj, kdim)
    acc = jnp.dot(lhs, w_ref[...], preferred_element_type=jnp.float32)
    act = acc.reshape(tb, ho, wj, n2) + b_ref[...].reshape(1, 1, 1, n2)
    act_ref[...] = jnp.maximum(act, 0.0)

    # maxpool 3x3 / stride 2 on the f32 activation.  Lanes [0:cout] hold even
    # conv columns (w = 2j), lanes [cout:2*cout] odd ones (w = 2j+1), so the
    # W-window {2x, 2x+1, 2x+2} is two aligned lane-halves plus a one-pair
    # sublane shift.  The H direction is a static unrolled loop.
    for y in range(ph):
        r0 = act_ref[:, 2 * y, :, :]
        r1 = act_ref[:, 2 * y + 1, :, :]
        r2 = act_ref[:, 2 * y + 2, :, :]
        rmax = jnp.maximum(jnp.maximum(r0, r1), r2)        # (tb, Jp, 2*Cout)
        even = rmax[:, 0:pw, 0:cout]                       # conv col w = 2x
        odd = rmax[:, 0:pw, cout:2 * cout]                 # conv col w = 2x+1
        nxt = rmax[:, 1:pw + 1, 0:cout]                    # conv col w = 2x+2
        o_ref[:, y, :, :] = jnp.maximum(
            jnp.maximum(even, odd), nxt).astype(o_ref.dtype)


def conv3x3_relu_pool3x3s2(patches, w_pair, b_pair, *, pool_h, pool_w, cout=64):
    B, ho, wj, kdim = patches.shape
    n2 = w_pair.shape[1]
    assert w_pair.shape[0] == kdim and n2 == 2 * cout
    assert b_pair.shape == (1, n2)
    # pool taps stay inside the computed activation (and away from junk pairs)
    assert 2 * pool_h + 1 <= ho and pool_w + 1 <= wj
    tb = _conv_batch_tile(B)
    return pl.pallas_call(
        _conv_pool_kernel,
        out_shape=jax.ShapeDtypeStruct((B, pool_h, pool_w, cout), jnp.bfloat16),
        grid=(B // tb,),
        in_specs=[
            pl.BlockSpec((tb, ho, wj, kdim), lambda i: (i, 0, 0, 0)),
            pl.BlockSpec((kdim, n2), lambda i: (0, 0)),
            pl.BlockSpec((1, n2), lambda i: (0, 0)),
        ],
        out_specs=pl.BlockSpec((tb, pool_h, pool_w, cout),
                               lambda i: (i, 0, 0, 0)),
        scratch_shapes=[pltpu.VMEM((tb, ho, wj, n2), jnp.float32)],
        compiler_params=_COMPILER_PARAMS,
    )(patches, w_pair, b_pair)


# ----------------------------------------------------------------------------
# fused fc1 -> relu -> fc2 -> relu  (lane-padded 512 / 128 outputs)
# ----------------------------------------------------------------------------
def _fc_head_kernel(x_ref, w1_ref, b1_ref, w2_ref, b2_ref, o_ref):
    h = jnp.dot(x_ref[...], w1_ref[...], preferred_element_type=jnp.float32)
    h = jnp.maximum(h + b1_ref[...], 0.0)
    y = jnp.dot(h.astype(w2_ref.dtype), w2_ref[...],
                preferred_element_type=jnp.float32)
    o_ref[...] = jnp.maximum(y + b2_ref[...], 0.0)


def fc_head(x, w1, b1, w2, b2):
    B, K = x.shape
    N1, N2 = w1.shape[1], w2.shape[1]
    TM = _fc_batch_tile(B)
    return pl.pallas_call(
        _fc_head_kernel,
        out_shape=jax.ShapeDtypeStruct((B, N2), jnp.float32),
        grid=(B // TM,),
        in_specs=[
            pl.BlockSpec((TM, K), lambda i: (i, 0)),
            pl.BlockSpec((K, N1), lambda i: (0, 0)),
            pl.BlockSpec((1, N1), lambda i: (0, 0)),
            pl.BlockSpec((N1, N2), lambda i: (0, 0)),
            pl.BlockSpec((1, N2), lambda i: (0, 0)),
        ],
        out_specs=pl.BlockSpec((TM, N2), lambda i: (i, 0)),
        compiler_params=_COMPILER_PARAMS,
    )(x, w1, b1, w2, b2)


# ----------------------------------------------------------------------------
# Full Net forward
# ----------------------------------------------------------------------------
def net_forward(x_nchw, params):
    B, C, H, W = x_nchw.shape
    assert (C, H, W) == (3, 32, 32), "fc1 expects 1600 = 64*5*5 features"
    x = jnp.transpose(x_nchw, (0, 2, 3, 1)).astype(jnp.bfloat16)    # (B,32,32,3)

    # ---- conv1 + relu + pool1 (fused kernel) ------------------------------
    # 16 column pairs cover conv output cols 0..31 (30,31 are junk, unused by
    # the pool which only needs cols <= 28).  Width padded 32 -> 34 with zeros.
    xp = jnp.pad(x, ((0, 0), (0, 0), (0, 2), (0, 0)))
    p1 = _im2col_pairs(xp, out_h=30, out_pairs=16)                  # (B,30,16,36)
    w1p = _pair_conv_weight(params["conv1_w"])                      # (36,128)
    b1p = _pair_bias(params["conv1_b"])
    pool1 = conv3x3_relu_pool3x3s2(p1, w1p, b1p, pool_h=14, pool_w=14)
    # pool1: (B,14,14,64) bf16

    # ---- conv2 + relu + pool2 (fused kernel) ------------------------------
    # 8 column pairs cover conv output cols 0..15 (12..15 junk, unused by the
    # pool which only needs cols <= 10).  Width padded 14 -> 18 with zeros.
    p1w = jnp.pad(pool1, ((0, 0), (0, 0), (0, 4), (0, 0)))
    p2 = _im2col_pairs(p1w, out_h=12, out_pairs=8)                  # (B,12,8,768)
    w2p = _pair_conv_weight(params["conv2_w"])                      # (768,128)
    b2p = _pair_bias(params["conv2_b"])
    pool2 = conv3x3_relu_pool3x3s2(p2, w2p, b2p, pool_h=5, pool_w=5)
    # pool2: (B,5,5,64) bf16

    # ---- fc head (fused kernel) -------------------------------------------
    flat = pool2.reshape(B, 5 * 5 * 64)                             # NHWC flatten
    Bp = ((B + 15) // 16) * 16                                      # pad batch
    if Bp != B:
        flat = jnp.pad(flat, ((0, Bp - B), (0, 0)))
    # fc1: permute torch's NCHW-flatten input order to our NHWC-flatten order,
    # transpose to (K, N), lane-pad N 500->512.  fc2: pad K 500->512 (padded h
    # columns are exactly zero) and N 100->128 for lane-dense stores.
    w3 = params["fc1_w"].reshape(500, 64, 5, 5).transpose(2, 3, 1, 0)
    w3 = jnp.pad(w3.reshape(1600, 500), ((0, 0), (0, 12))).astype(jnp.bfloat16)
    b3 = jnp.pad(params["fc1_b"], (0, 12)).reshape(1, 512).astype(jnp.float32)
    w4 = jnp.pad(params["fc2_w"].T, ((0, 12), (0, 28))).astype(jnp.bfloat16)
    b4 = jnp.pad(params["fc2_b"], (0, 28)).reshape(1, 128).astype(jnp.float32)

    y = fc_head(flat, w3, b3, w4, b4)
    return y[:B, :100]


# Pure-JAX reference with matching precision (bf16 matmul inputs, f32 accum)
# but a completely independent code path (lax.conv / reduce_window / torch-order
# flatten with the original fc weights).
def net_forward_ref(x_nchw, params):
    bf = lambda a: a.astype(jnp.bfloat16)

    def conv(x, w_oihw, bias):
        w_hwio = jnp.transpose(w_oihw, (2, 3, 1, 0))
        y = jax.lax.conv_general_dilated(
            bf(x), bf(w_hwio), (1, 1), "VALID",
            dimension_numbers=("NHWC", "HWIO", "NHWC"),
            preferred_element_type=jnp.float32)
        return jnp.maximum(y + bias, 0.0)

    def pool(x):
        return jax.lax.reduce_window(
            x, -jnp.inf, jax.lax.max, (1, 3, 3, 1), (1, 2, 2, 1), "VALID")

    x = jnp.transpose(x_nchw, (0, 2, 3, 1))
    x = pool(conv(x, params["conv1_w"], params["conv1_b"]))
    x = pool(conv(x, params["conv2_w"], params["conv2_b"]))
    B = x.shape[0]
    x = jnp.transpose(x, (0, 3, 1, 2)).reshape(B, -1)               # torch flatten
    h = jnp.maximum(
        jnp.dot(bf(x), bf(params["fc1_w"].T),
                preferred_element_type=jnp.float32) + params["fc1_b"], 0.0)
    y = jnp.maximum(
        jnp.dot(bf(h), bf(params["fc2_w"].T),
                preferred_element_type=jnp.float32) + params["fc2_b"], 0.0)
    return y


def init_params(key):
    ks = jax.random.split(key, 8)

    def w(k, shape, fan_in):
        return jax.random.normal(k, shape, jnp.float32) / jnp.sqrt(fan_in)

    return {
        "conv1_w": w(ks[0], (64, 3, 3, 3), 3 * 3 * 3),
        "conv1_b": w(ks[1], (64,), 3 * 3 * 3),
        "conv2_w": w(ks[2], (64, 64, 3, 3), 64 * 3 * 3),
        "conv2_b": w(ks[3], (64,), 64 * 3 * 3),
        "fc1_w": w(ks[4], (500, 1600), 1600),
        "fc1_b": w(ks[5], (500,), 1600),
        "fc2_w": w(ks[6], (100, 500), 500),
        "fc2_b": w(ks[7], (100,), 500),
    }


if __name__ == "__main__":
    key = jax.random.PRNGKey(0)
    k_x, k_p = jax.random.split(key)
    # fc1 expects 1600 = 64*5*5 features -> spatial input must be 32x32.
    x = jax.random.normal(k_x, (2, 3, 32, 32), jnp.float32)
    params = init_params(k_p)

    out = jax.block_until_ready(jax.jit(net_forward)(x, params))
    ref = jax.block_until_ready(jax.jit(net_forward_ref)(x, params))

    assert out.shape == (2, 100), out.shape
    err = float(jnp.max(jnp.abs(out - ref)))
    assert jnp.allclose(out, ref, rtol=2e-2, atol=2e-2), f"max abs diff = {err}"
    print("KERNEL_OK")
</pallas_src>

<mosaic_0001>
module attributes {stable_mosaic.version = 11 : i64} {
  func.func @_conv_pool_kernel(%arg0: i32, %arg1: memref<1x30x16x36xbf16, #tpu.memory_space<vmem>>, %arg2: memref<36x128xbf16, #tpu.memory_space<vmem>>, %arg3: memref<1x128xf32, #tpu.memory_space<vmem>>, %arg4: memref<1x14x14x64xbf16, #tpu.memory_space<vmem>>, %arg5: memref<1x30x16x128xf32, #tpu.memory_space<vmem>>) attributes {dimension_semantics = [#tpu.dimension_semantics<parallel>], iteration_bounds = array<i64: 2>, scalar_prefetch = 0 : i64, scratch_operands = 1 : i64, tpu.core_type = #tpu.core_type<tc>, window_params = [{transform_indices = @transform_0, window_bounds = array<i64: 1, 30, 16, 36>}, {pipeline_mode = #tpu.pipeline_mode<synchronous>, transform_indices = @transform_1, window_bounds = array<i64: 36, 128>}, {pipeline_mode = #tpu.pipeline_mode<synchronous>, transform_indices = @transform_2, window_bounds = array<i64: 1, 128>}, {transform_indices = @transform_3, window_bounds = array<i64: 1, 14, 14, 64>}]} {
    %c0 = arith.constant 0 : index
    %c0_0 = arith.constant 0 : index
    %c0_1 = arith.constant 0 : index
    %c0_2 = arith.constant 0 : index
    %0 = vector.load %arg1[%c0, %c0_0, %c0_1, %c0_2] : memref<1x30x16x36xbf16, #tpu.memory_space<vmem>>, vector<1x30x16x36xbf16>
    %1 = vector.shape_cast %0 : vector<1x30x16x36xbf16> to vector<480x36xbf16>
    %c0_3 = arith.constant 0 : index
    %c0_4 = arith.constant 0 : index
    %2 = vector.load %arg2[%c0_3, %c0_4] : memref<36x128xbf16, #tpu.memory_space<vmem>>, vector<36x128xbf16>
    %cst = arith.constant dense<0.000000e+00> : vector<480x128xf32>
    %3 = tpu.matmul %1, %2, %cst {dimension_numbers = #tpu.dot_dimension_numbers<[1], [0], [0], [1], [0, 0, 1, 1], [], []>} : vector<480x36xbf16>, vector<36x128xbf16>, vector<480x128xf32> -> vector<480x128xf32>
    %4 = vector.shape_cast %3 : vector<480x128xf32> to vector<1x30x16x128xf32>
    %c0_5 = arith.constant 0 : index
    %c0_6 = arith.constant 0 : index
    %5 = vector.load %arg3[%c0_5, %c0_6] : memref<1x128xf32, #tpu.memory_space<vmem>>, vector<1x128xf32>
    %6 = vector.shape_cast %5 : vector<1x128xf32> to vector<1x1x1x128xf32>
    %7 = vector.broadcast %6 : vector<1x1x1x128xf32> to vector<1x30x16x128xf32>
    %8 = arith.addf %4, %7 : vector<1x30x16x128xf32>
    %cst_7 = arith.constant 0.000000e+00 : f32
    %9 = vector.broadcast %cst_7 : f32 to vector<1x30x16x128xf32>
    %10 = arith.maximumf %8, %9 : vector<1x30x16x128xf32>
    %c0_8 = arith.constant 0 : index
    %c0_9 = arith.constant 0 : index
    %c0_10 = arith.constant 0 : index
    %c0_11 = arith.constant 0 : index
    %11 = vector.load %arg5[%c0_8, %c0_9, %c0_10, %c0_11] : memref<1x30x16x128xf32, #tpu.memory_space<vmem>>, vector<1x30x16x128xf32>
    tpu.vector_store %arg5[%c0_8, %c0_9, %c0_10, %c0_11], %10 {strides = array<i32>} : memref<1x30x16x128xf32, #tpu.memory_space<vmem>>, vector<1x30x16x128xf32>,
    %c0_12 = arith.constant 0 : index
    %c0_13 = arith.constant 0 : index
    %c0_14 = arith.constant 0 : index
    %c0_15 = arith.constant 0 : index
    %12 = vector.load %arg5[%c0_12, %c0_13, %c0_14, %c0_15] : memref<1x30x16x128xf32, #tpu.memory_space<vmem>>, vector<1x1x16x128xf32>
    %13 = vector.shape_cast %12 : vector<1x1x16x128xf32> to vector<1x16x128xf32>
    %c0_16 = arith.constant 0 : index
    %c1 = arith.constant 1 : index
    %c0_17 = arith.constant 0 : index
    %c0_18 = arith.constant 0 : index
    %14 = vector.load %arg5[%c0_16, %c1, %c0_17, %c0_18] : memref<1x30x16x128xf32, #tpu.memory_space<vmem>>, vector<1x1x16x128xf32>
    %15 = vector.shape_cast %14 : vector<1x1x16x128xf32> to vector<1x16x128xf32>
    %c0_19 = arith.constant 0 : index
    %c2 = arith.constant 2 : index
    %c0_20 = arith.constant 0 : index
    %c0_21 = arith.constant 0 : index
    %16 = vector.load %arg5[%c0_19, %c2, %c0_20, %c0_21] : memref<1x30x16x128xf32, #tpu.memory_space<vmem>>, vector<1x1x16x128xf32>
    %17 = vector.shape_cast %16 : vector<1x1x16x128xf32> to vector<1x16x128xf32>
    %18 = arith.maximumf %13, %15 : vector<1x16x128xf32>
    %19 = arith.maximumf %18, %17 : vector<1x16x128xf32>
    %20 = vector.extract_strided_slice %19 {offsets = [0, 0, 0], sizes = [1, 14, 64], strides = [1, 1, 1]} : vector<1x16x128xf32> to vector<1x14x64xf32>
    %21 = vector.extract_strided_slice %19 {offsets = [0, 0, 64], sizes = [1, 14, 64], strides = [1, 1, 1]} : vector<1x16x128xf32> to vector<1x14x64xf32>
    %22 = vector.extract_strided_slice %19 {offsets = [0, 1, 0], sizes = [1, 14, 64], strides = [1, 1, 1]} : vector<1x16x128xf32> to vector<1x14x64xf32>
    %23 = arith.maximumf %20, %21 : vector<1x14x64xf32>
    %24 = arith.maximumf %23, %22 : vector<1x14x64xf32>
    %25 = arith.truncf %24 : vector<1x14x64xf32> to vector<1x14x64xbf16>
    %c0_22 = arith.constant 0 : index
    %c0_23 = arith.constant 0 : index
    %c0_24 = arith.constant 0 : index
    %c0_25 = arith.constant 0 : index
    %26 = vector.load %arg4[%c0_22, %c0_23, %c0_24, %c0_25] : memref<1x14x14x64xbf16, #tpu.memory_space<vmem>>, vector<1x1x14x64xbf16>
    %27 = vector.shape_cast %26 : vector<1x1x14x64xbf16> to vector<1x14x64xbf16>
    %28 = vector.shape_cast %25 : vector<1x14x64xbf16> to vector<1x1x14x64xbf16>
    tpu.vector_store %arg4[%c0_22, %c0_23, %c0_24, %c0_25], %28 {strides = array<i32>} : memref<1x14x14x64xbf16, #tpu.memory_space<vmem>>, vector<1x1x14x64xbf16>,
    %c0_26 = arith.constant 0 : index
    %c2_27 = arith.constant 2 : index
    %c0_28 = arith.constant 0 : index
    %c0_29 = arith.constant 0 : index
    %29 = vector.load %arg5[%c0_26, %c2_27, %c0_28, %c0_29] : memref<1x30x16x128xf32, #tpu.memory_space<vmem>>, vector<1x1x16x128xf32>
    %30 = vector.shape_cast %29 : vector<1x1x16x128xf32> to vector<1x16x128xf32>
    %c0_30 = arith.constant 0 : index
    %c3 = arith.constant 3 : index
    %c0_31 = arith.constant 0 : index
    %c0_32 = arith.constant 0 : index
    %31 = vector.load %arg5[%c0_30, %c3, %c0_31, %c0_32] : memref<1x30x16x128xf32, #tpu.memory_space<vmem>>, vector<1x1x16x128xf32>
    %32 = vector.shape_cast %31 : vector<1x1x16x128xf32> to vector<1x16x128xf32>
    %c0_33 = arith.constant 0 : index
    %c4 = arith.constant 4 : index
    %c0_34 = arith.constant 0 : index
    %c0_35 = arith.constant 0 : index
    %33 = vector.load %arg5[%c0_33, %c4, %c0_34, %c0_35] : memref<1x30x16x128xf32, #tpu.memory_space<vmem>>, vector<1x1x16x128xf32>
    %34 = vector.shape_cast %33 : vector<1x1x16x128xf32> to vector<1x16x128xf32>
    %35 = arith.maximumf %30, %32 : vector<1x16x128xf32>
    %36 = arith.maximumf %35, %34 : vector<1x16x128xf32>
    %37 = vector.extract_strided_slice %36 {offsets = [0, 0, 0], sizes = [1, 14, 64], strides = [1, 1, 1]} : vector<1x16x128xf32> to vector<1x14x64xf32>
    %38 = vector.extract_strided_slice %36 {offsets = [0, 0, 64], sizes = [1, 14, 64], strides = [1, 1, 1]} : vector<1x16x128xf32> to vector<1x14x64xf32>
    %39 = vector.extract_strided_slice %36 {offsets = [0, 1, 0], sizes = [1, 14, 64], strides = [1, 1, 1]} : vector<1x16x128xf32> to vector<1x14x64xf32>
    %40 = arith.maximumf %37, %38 : vector<1x14x64xf32>
    %41 = arith.maximumf %40, %39 : vector<1x14x64xf32>
    %42 = arith.truncf %41 : vector<1x14x64xf32> to vector<1x14x64xbf16>
    %c0_36 = arith.constant 0 : index
    %c1_37 = arith.constant 1 : index
    %c0_38 = arith.constant 0 : index
    %c0_39 = arith.constant 0 : index
    %43 = vector.load %arg4[%c0_36, %c1_37, %c0_38, %c0_39] : memref<1x14x14x64xbf16, #tpu.memory_space<vmem>>, vector<1x1x14x64xbf16>
    %44 = vector.shape_cast %43 : vector<1x1x14x64xbf16> to vector<1x14x64xbf16>
    %45 = vector.shape_cast %42 : vector<1x14x64xbf16> to vector<1x1x14x64xbf16>
    tpu.vector_store %arg4[%c0_36, %c1_37, %c0_38, %c0_39], %45 {strides = array<i32>} : memref<1x14x14x64xbf16, #tpu.memory_space<vmem>>, vector<1x1x14x64xbf16>,
    %c0_40 = arith.constant 0 : index
    %c4_41 = arith.constant 4 : index
    %c0_42 = arith.constant 0 : index
    %c0_43 = arith.constant 0 : index
    %46 = vector.load %arg5[%c0_40, %c4_41, %c0_42, %c0_43] : memref<1x30x16x128xf32, #tpu.memory_space<vmem>>, vector<1x1x16x128xf32>
    %47 = vector.shape_cast %46 : vector<1x1x16x128xf32> to vector<1x16x128xf32>
    %c0_44 = arith.constant 0 : index
    %c5 = arith.constant 5 : index
    %c0_45 = arith.constant 0 : index
    %c0_46 = arith.constant 0 : index
    %48 = vector.load %arg5[%c0_44, %c5, %c0_45, %c0_46] : memref<1x30x16x128xf32, #tpu.memory_space<vmem>>, vector<1x1x16x128xf32>
    %49 = vector.shape_cast %48 : vector<1x1x16x128xf32> to vector<1x16x128xf32>
    %c0_47 = arith.constant 0 : index
    %c6 = arith.constant 6 : index
    %c0_48 = arith.constant 0 : index
    %c0_49 = arith.constant 0 : index
    %50 = vector.load %arg5[%c0_47, %c6, %c0_48, %c0_49] : memref<1x30x16x128xf32, #tpu.memory_space<vmem>>, vector<1x1x16x128xf32>
    %51 = vector.shape_cast %50 : vector<1x1x16x128xf32> to vector<1x16x128xf32>
    %52 = arith.maximumf %47, %49 : vector<1x16x128xf32>
    %53 = arith.maximumf %52, %51 : vector<1x16x128xf32>
    %54 = vector.extract_strided_slice %53 {offsets = [0, 0, 0], sizes = [1, 14, 64], strides = [1, 1, 1]} : vector<1x16x128xf32> to vector<1x14x64xf32>
    %55 = vector.extract_strided_slice %53 {offsets = [0, 0, 64], sizes = [1, 14, 64], strides = [1, 1, 1]} : vector<1x16x128xf32> to vector<1x14x64xf32>
    %56 = vector.extract_strided_slice %53 {offsets = [0, 1, 0], sizes = [1, 14, 64], strides = [1, 1, 1]} : vector<1x16x128xf32> to vector<1x14x64xf32>
    %57 = arith.maximumf %54, %55 : vector<1x14x64xf32>
    %58 = arith.maximumf %57, %56 : vector<1x14x64xf32>
    %59 = arith.truncf %58 : vector<1x14x64xf32> to vector<1x14x64xbf16>
    %c0_50 = arith.constant 0 : index
    %c2_51 = arith.constant 2 : index
    %c0_52 = arith.constant 0 : index
    %c0_53 = arith.constant 0 : index
    %60 = vector.load %arg4[%c0_50, %c2_51, %c0_52, %c0_53] : memref<1x14x14x64xbf16, #tpu.memory_space<vmem>>, vector<1x1x14x64xbf16>
    %61 = vector.shape_cast %60 : vector<1x1x14x64xbf16> to vector<1x14x64xbf16>
    %62 = vector.shape_cast %59 : vector<1x14x64xbf16> to vector<1x1x14x64xbf16>
    tpu.vector_store %arg4[%c0_50, %c2_51, %c0_52, %c0_53], %62 {strides = array<i32>} : memref<1x14x14x64xbf16, #tpu.memory_space<vmem>>, vector<1x1x14x64xbf16>,
    %c0_54 = arith.constant 0 : index
    %c6_55 = arith.constant 6 : index
    %c0_56 = arith.constant 0 : index
    %c0_57 = arith.constant 0 : index
    %63 = vector.load %arg5[%c0_54, %c6_55, %c0_56, %c0_57] : memref<1x30x16x128xf32, #tpu.memory_space<vmem>>, vector<1x1x16x128xf32>
    %64 = vector.shape_cast %63 : vector<1x1x16x128xf32> to vector<1x16x128xf32>
    %c0_58 = arith.constant 0 : index
    %c7 = arith.constant 7 : index
    %c0_59 = arith.constant 0 : index
    %c0_60 = arith.constant 0 : index
    %65 = vector.load %arg5[%c0_58, %c7, %c0_59, %c0_60] : memref<1x30x16x128xf32, #tpu.memory_space<vmem>>, vector<1x1x16x128xf32>
    %66 = vector.shape_cast %65 : vector<1x1x16x128xf32> to vector<1x16x128xf32>
    %c0_61 = arith.constant 0 : index
    %c8 = arith.constant 8 : index
    %c0_62 = arith.constant 0 : index
    %c0_63 = arith.constant 0 : index
    %67 = vector.load %arg5[%c0_61, %c8, %c0_62, %c0_63] : memref<1x30x16x128xf32, #tpu.memory_space<vmem>>, vector<1x1x16x128xf32>
    %68 = vector.shape_cast %67 : vector<1x1x16x128xf32> to vector<1x16x128xf32>
    %69 = arith.maximumf %64, %66 : vector<1x16x128xf32>
    %70 = arith.maximumf %69, %68 : vector<1x16x128xf32>
    %71 = vector.extract_strided_slice %70 {offsets = [0, 0, 0], sizes = [1, 14, 64], strides = [1, 1, 1]} : vector<1x16x128xf32> to vector<1x14x64xf32>
    %72 = vector.extract_strided_slice %70 {offsets = [0, 0, 64], sizes = [1, 14, 64], strides = [1, 1, 1]} : vector<1x16x128xf32> to vector<1x14x64xf32>
    %73 = vector.extract_strided_slice %70 {offsets = [0, 1, 0], sizes = [1, 14, 64], strides = [1, 1, 1]} : vector<1x16x128xf32> to vector<1x14x64xf32>
    %74 = arith.maximumf %71, %72 : vector<1x14x64xf32>
    %75 = arith.maximumf %74, %73 : vector<1x14x64xf32>
    %76 = arith.truncf %75 : vector<1x14x64xf32> to vector<1x14x64xbf16>
    %c0_64 = arith.constant 0 : index
    %c3_65 = arith.constant 3 : index
    %c0_66 = arith.constant 0 : index
    %c0_67 = arith.constant 0 : index
    %77 = vector.load %arg4[%c0_64, %c3_65, %c0_66, %c0_67] : memref<1x14x14x64xbf16, #tpu.memory_space<vmem>>, vector<1x1x14x64xbf16>
    %78 = vector.shape_cast %77 : vector<1x1x14x64xbf16> to vector<1x14x64xbf16>
    %79 = vector.shape_cast %76 : vector<1x14x64xbf16> to vector<1x1x14x64xbf16>
    tpu.vector_store %arg4[%c0_64, %c3_65, %c0_66, %c0_67], %79 {strides = array<i32>} : memref<1x14x14x64xbf16, #tpu.memory_space<vmem>>, vector<1x1x14x64xbf16>,
    %c0_68 = arith.constant 0 : index
    %c8_69 = arith.constant 8 : index
    %c0_70 = arith.constant 0 : index
    %c0_71 = arith.constant 0 : index
    %80 = vector.load %arg5[%c0_68, %c8_69, %c0_70, %c0_71] : memref<1x30x16x128xf32, #tpu.memory_space<vmem>>, vector<1x1x16x128xf32>
    %81 = vector.shape_cast %80 : vector<1x1x16x128xf32> to vector<1x16x128xf32>
    %c0_72 = arith.constant 0 : index
    %c9 = arith.constant 9 : index
    %c0_73 = arith.constant 0 : index
    %c0_74 = arith.constant 0 : index
    %82 = vector.load %arg5[%c0_72, %c9, %c0_73, %c0_74] : memref<1x30x16x128xf32, #tpu.memory_space<vmem>>, vector<1x1x16x128xf32>
    %83 = vector.shape_cast %82 : vector<1x1x16x128xf32> to vector<1x16x128xf32>
    %c0_75 = arith.constant 0 : index
    %c10 = arith.constant 10 : index
    %c0_76 = arith.constant 0 : index
    %c0_77 = arith.constant 0 : index
    %84 = vector.load %arg5[%c0_75, %c10, %c0_76, %c0_77] : memref<1x30x16x128xf32, #tpu.memory_space<vmem>>, vector<1x1x16x128xf32>
    %85 = vector.shape_cast %84 : vector<1x1x16x128xf32> to vector<1x16x128xf32>
    %86 = arith.maximumf %81, %83 : vector<1x16x128xf32>
    %87 = arith.maximumf %86, %85 : vector<1x16x128xf32>
    %88 = vector.extract_strided_slice %87 {offsets = [0, 0, 0], sizes = [1, 14, 64], strides = [1, 1, 1]} : vector<1x16x128xf32> to vector<1x14x64xf32>
    %89 = vector.extract_strided_slice %87 {offsets = [0, 0, 64], sizes = [1, 14, 64], strides = [1, 1, 1]} : vector<1x16x128xf32> to vector<1x14x64xf32>
    %90 = vector.extract_strided_slice %87 {offsets = [0, 1, 0], sizes = [1, 14, 64], strides = [1, 1, 1]} : vector<1x16x128xf32> to vector<1x14x64xf32>
    %91 = arith.maximumf %88, %89 : vector<1x14x64xf32>
    %92 = arith.maximumf %91, %90 : vector<1x14x64xf32>
    %93 = arith.truncf %92 : vector<1x14x64xf32> to vector<1x14x64xbf16>
    %c0_78 = arith.constant 0 : index
    %c4_79 = arith.constant 4 : index
    %c0_80 = arith.constant 0 : index
    %c0_81 = arith.constant 0 : index
    %94 = vector.load %arg4[%c0_78, %c4_79, %c0_80, %c0_81] : memref<1x14x14x64xbf16, #tpu.memory_space<vmem>>, vector<1x1x14x64xbf16>
    %95 = vector.shape_cast %94 : vector<1x1x14x64xbf16> to vector<1x14x64xbf16>
    %96 = vector.shape_cast %93 : vector<1x14x64xbf16> to vector<1x1x14x64xbf16>
    tpu.vector_store %arg4[%c0_78, %c4_79, %c0_80, %c0_81], %96 {strides = array<i32>} : memref<1x14x14x64xbf16, #tpu.memory_space<vmem>>, vector<1x1x14x64xbf16>,
    %c0_82 = arith.constant 0 : index
    %c10_83 = arith.constant 10 : index
    %c0_84 = arith.constant 0 : index
    %c0_85 = arith.constant 0 : index
    %97 = vector.load %arg5[%c0_82, %c10_83, %c0_84, %c0_85] : memref<1x30x16x128xf32, #tpu.memory_space<vmem>>, vector<1x1x16x128xf32>
    %98 = vector.shape_cast %97 : vector<1x1x16x128xf32> to vector<1x16x128xf32>
    %c0_86 = arith.constant 0 : index
    %c11 = arith.constant 11 : index
    %c0_87 = arith.constant 0 : index
    %c0_88 = arith.constant 0 : index
    %99 = vector.load %arg5[%c0_86, %c11, %c0_87, %c0_88] : memref<1x30x16x128xf32, #tpu.memory_space<vmem>>, vector<1x1x16x128xf32>
    %100 = vector.shape_cast %99 : vector<1x1x16x128xf32> to vector<1x16x128xf32>
    %c0_89 = arith.constant 0 : index
    %c12 = arith.constant 12 : index
    %c0_90 = arith.constant 0 : index
    %c0_91 = arith.constant 0 : index
    %101 = vector.load %arg5[%c0_89, %c12, %c0_90, %c0_91] : memref<1x30x16x128xf32, #tpu.memory_space<vmem>>, vector<1x1x16x128xf32>
    %102 = vector.shape_cast %101 : vector<1x1x16x128xf32> to vector<1x16x128xf32>
    %103 = arith.maximumf %98, %100 : vector<1x16x128xf32>
    %104 = arith.maximumf %103, %102 : vector<1x16x128xf32>
    %105 = vector.extract_strided_slice %104 {offsets = [0, 0, 0], sizes = [1, 14, 64], strides = [1, 1, 1]} : vector<1x16x128xf32> to vector<1x14x64xf32>
    %106 = vector.extract_strided_slice %104 {offsets = [0, 0, 64], sizes = [1, 14, 64], strides = [1, 1, 1]} : vector<1x16x128xf32> to vector<1x14x64xf32>
    %107 = vector.extract_strided_slice %104 {offsets = [0, 1, 0], sizes = [1, 14, 64], strides = [1, 1, 1]} : vector<1x16x128xf32> to vector<1x14x64xf32>
    %108 = arith.maximumf %105, %106 : vector<1x14x64xf32>
    %109 = arith.maximumf %108, %107 : vector<1x14x64xf32>
    %110 = arith.truncf %109 : vector<1x14x64xf32> to vector<1x14x64xbf16>
    %c0_92 = arith.constant 0 : index
    %c5_93 = arith.constant 5 : index
    %c0_94 = arith.constant 0 : index
    %c0_95 = arith.constant 0 : index
    %111 = vector.load %arg4[%c0_92, %c5_93, %c0_94, %c0_95] : memref<1x14x14x64xbf16, #tpu.memory_space<vmem>>, vector<1x1x14x64xbf16>
    %112 = vector.shape_cast %111 : vector<1x1x14x64xbf16> to vector<1x14x64xbf16>
    %113 = vector.shape_cast %110 : vector<1x14x64xbf16> to vector<1x1x14x64xbf16>
    tpu.vector_store %arg4[%c0_92, %c5_93, %c0_94, %c0_95], %113 {strides = array<i32>} : memref<1x14x14x64xbf16, #tpu.memory_space<vmem>>, vector<1x1x14x64xbf16>,
    %c0_96 = arith.constant 0 : index
    %c12_97 = arith.constant 12 : index
    %c0_98 = arith.constant 0 : index
    %c0_99 = arith.constant 0 : index
    %114 = vector.load %arg5[%c0_96, %c12_97, %c0_98, %c0_99] : memref<1x30x16x128xf32, #tpu.memory_space<vmem>>, vector<1x1x16x128xf32>
    %115 = vector.shape_cast %114 : vector<1x1x16x128xf32> to vector<1x16x128xf32>
    %c0_100 = arith.constant 0 : index
    %c13 = arith.constant 13 : index
    %c0_101 = arith.constant 0 : index
    %c0_102 = arith.constant 0 : index
    %116 = vector.load %arg5[%c0_100, %c13, %c0_101, %c0_102] : memref<1x30x16x128xf32, #tpu.memory_space<vmem>>, vector<1x1x16x128xf32>
    %117 = vector.shape_cast %116 : vector<1x1x16x128xf32> to vector<1x16x128xf32>
    %c0_103 = arith.constant 0 : index
    %c14 = arith.constant 14 : index
    %c0_104 = arith.constant 0 : index
    %c0_105 = arith.constant 0 : index
    %118 = vector.load %arg5[%c0_103, %c14, %c0_104, %c0_105] : memref<1x30x16x128xf32, #tpu.memory_space<vmem>>, vector<1x1x16x128xf32>
    %119 = vector.shape_cast %118 : vector<1x1x16x128xf32> to vector<1x16x128xf32>
    %120 = arith.maximumf %115, %117 : vector<1x16x128xf32>
    %121 = arith.maximumf %120, %119 : vector<1x16x128xf32>
    %122 = vector.extract_strided_slice %121 {offsets = [0, 0, 0], sizes = [1, 14, 64], strides = [1, 1, 1]} : vector<1x16x128xf32> to vector<1x14x64xf32>
    %123 = vector.extract_strided_slice %121 {offsets = [0, 0, 64], sizes = [1, 14, 64], strides = [1, 1, 1]} : vector<1x16x128xf32> to vector<1x14x64xf32>
    %124 = vector.extract_strided_slice %121 {offsets = [0, 1, 0], sizes = [1, 14, 64], strides = [1, 1, 1]} : vector<1x16x128xf32> to vector<1x14x64xf32>
    %125 = arith.maximumf %122, %123 : vector<1x14x64xf32>
    %126 = arith.maximumf %125, %124 : vector<1x14x64xf32>
    %127 = arith.truncf %126 : vector<1x14x64xf32> to vector<1x14x64xbf16>
    %c0_106 = arith.constant 0 : index
    %c6_107 = arith.constant 6 : index
    %c0_108 = arith.constant 0 : index
    %c0_109 = arith.constant 0 : index
    %128 = vector.load %arg4[%c0_106, %c6_107, %c0_108, %c0_109] : memref<1x14x14x64xbf16, #tpu.memory_space<vmem>>, vector<1x1x14x64xbf16>
    %129 = vector.shape_cast %128 : vector<1x1x14x64xbf16> to vector<1x14x64xbf16>
    %130 = vector.shape_cast %127 : vector<1x14x64xbf16> to vector<1x1x14x64xbf16>
    tpu.vector_store %arg4[%c0_106, %c6_107, %c0_108, %c0_109], %130 {strides = array<i32>} : memref<1x14x14x64xbf16, #tpu.memory_space<vmem>>, vector<1x1x14x64xbf16>,
    %c0_110 = arith.constant 0 : index
    %c14_111 = arith.constant 14 : index
    %c0_112 = arith.constant 0 : index
    %c0_113 = arith.constant 0 : index
    %131 = vector.load %arg5[%c0_110, %c14_111, %c0_112, %c0_113] : memref<1x30x16x128xf32, #tpu.memory_space<vmem>>, vector<1x1x16x128xf32>
    %132 = vector.shape_cast %131 : vector<1x1x16x128xf32> to vector<1x16x128xf32>
    %c0_114 = arith.constant 0 : index
    %c15 = arith.constant 15 : index
    %c0_115 = arith.constant 0 : index
    %c0_116 = arith.constant 0 : index
    %133 = vector.load %arg5[%c0_114, %c15, %c0_115, %c0_116] : memref<1x30x16x128xf32, #tpu.memory_space<vmem>>, vector<1x1x16x128xf32>
    %134 = vector.shape_cast %133 : vector<1x1x16x128xf32> to vector<1x16x128xf32>
    %c0_117 = arith.constant 0 : index
    %c16 = arith.constant 16 : index
    %c0_118 = arith.constant 0 : index
    %c0_119 = arith.constant 0 : index
    %135 = vector.load %arg5[%c0_117, %c16, %c0_118, %c0_119] : memref<1x30x16x128xf32, #tpu.memory_space<vmem>>, vector<1x1x16x128xf32>
    %136 = vector.shape_cast %135 : vector<1x1x16x128xf32> to vector<1x16x128xf32>
    %137 = arith.maximumf %132, %134 : vector<1x16x128xf32>
    %138 = arith.maximumf %137, %136 : vector<1x16x128xf32>
    %139 = vector.extract_strided_slice %138 {offsets = [0, 0, 0], sizes = [1, 14, 64], strides = [1, 1, 1]} : vector<1x16x128xf32> to vector<1x14x64xf32>
    %140 = vector.extract_strided_slice %138 {offsets = [0, 0, 64], sizes = [1, 14, 64], strides = [1, 1, 1]} : vector<1x16x128xf32> to vector<1x14x64xf32>
    %141 = vector.extract_strided_slice %138 {offsets = [0, 1, 0], sizes = [1, 14, 64], strides = [1, 1, 1]} : vector<1x16x128xf32> to vector<1x14x64xf32>
    %142 = arith.maximumf %139, %140 : vector<1x14x64xf32>
    %143 = arith.maximumf %142, %141 : vector<1x14x64xf32>
    %144 = arith.truncf %143 : vector<1x14x64xf32> to vector<1x14x64xbf16>
    %c0_120 = arith.constant 0 : index
    %c7_121 = arith.constant 7 : index
    %c0_122 = arith.constant 0 : index
    %c0_123 = arith.constant 0 : index
    %145 = vector.load %arg4[%c0_120, %c7_121, %c0_122, %c0_123] : memref<1x14x14x64xbf16, #tpu.memory_space<vmem>>, vector<1x1x14x64xbf16>
    %146 = vector.shape_cast %145 : vector<1x1x14x64xbf16> to vector<1x14x64xbf16>
    %147 = vector.shape_cast %144 : vector<1x14x64xbf16> to vector<1x1x14x64xbf16>
    tpu.vector_store %arg4[%c0_120, %c7_121, %c0_122, %c0_123], %147 {strides = array<i32>} : memref<1x14x14x64xbf16, #tpu.memory_space<vmem>>, vector<1x1x14x64xbf16>,
    %c0_124 = arith.constant 0 : index
    %c16_125 = arith.constant 16 : index
    %c0_126 = arith.constant 0 : index
    %c0_127 = arith.constant 0 : index
    %148 = vector.load %arg5[%c0_124, %c16_125, %c0_126, %c0_127] : memref<1x30x16x128xf32, #tpu.memory_space<vmem>>, vector<1x1x16x128xf32>
    %149 = vector.shape_cast %148 : vector<1x1x16x128xf32> to vector<1x16x128xf32>
    %c0_128 = arith.constant 0 : index
    %c17 = arith.constant 17 : index
    %c0_129 = arith.constant 0 : index
    %c0_130 = arith.constant 0 : index
    %150 = vector.load %arg5[%c0_128, %c17, %c0_129, %c0_130] : memref<1x30x16x128xf32, #tpu.memory_space<vmem>>, vector<1x1x16x128xf32>
    %151 = vector.shape_cast %150 : vector<1x1x16x128xf32> to vector<1x16x128xf32>
    %c0_131 = arith.constant 0 : index
    %c18 = arith.constant 18 : index
    %c0_132 = arith.constant 0 : index
    %c0_133 = arith.constant 0 : index
    %152 = vector.load %arg5[%c0_131, %c18, %c0_132, %c0_133] : memref<1x30x16x128xf32, #tpu.memory_space<vmem>>, vector<1x1x16x128xf32>
    %153 = vector.shape_cast %152 : vector<1x1x16x128xf32> to vector<1x16x128xf32>
    %154 = arith.maximumf %149, %151 : vector<1x16x128xf32>
    %155 = arith.maximumf %154, %153 : vector<1x16x128xf32>
    %156 = vector.extract_strided_slice %155 {offsets = [0, 0, 0], sizes = [1, 14, 64], strides = [1, 1, 1]} : vector<1x16x128xf32> to vector<1x14x64xf32>
    %157 = vector.extract_strided_slice %155 {offsets = [0, 0, 64], sizes = [1, 14, 64], strides = [1, 1, 1]} : vector<1x16x128xf32> to vector<1x14x64xf32>
    %158 = vector.extract_strided_slice %155 {offsets = [0, 1, 0], sizes = [1, 14, 64], strides = [1, 1, 1]} : vector<1x16x128xf32> to vector<1x14x64xf32>
    %159 = arith.maximumf %156, %157 : vector<1x14x64xf32>
    %160 = arith.maximumf %159, %158 : vector<1x14x64xf32>
    %161 = arith.truncf %160 : vector<1x14x64xf32> to vector<1x14x64xbf16>
    %c0_134 = arith.constant 0 : index
    %c8_135 = arith.constant 8 : index
    %c0_136 = arith.constant 0 : index
    %c0_137 = arith.constant 0 : index
    %162 = vector.load %arg4[%c0_134, %c8_135, %c0_136, %c0_137] : memref<1x14x14x64xbf16, #tpu.memory_space<vmem>>, vector<1x1x14x64xbf16>
    %163 = vector.shape_cast %162 : vector<1x1x14x64xbf16> to vector<1x14x64xbf16>
    %164 = vector.shape_cast %161 : vector<1x14x64xbf16> to vector<1x1x14x64xbf16>
    tpu.vector_store %arg4[%c0_134, %c8_135, %c0_136, %c0_137], %164 {strides = array<i32>} : memref<1x14x14x64xbf16, #tpu.memory_space<vmem>>, vector<1x1x14x64xbf16>,
    %c0_138 = arith.constant 0 : index
    %c18_139 = arith.constant 18 : index
    %c0_140 = arith.constant 0 : index
    %c0_141 = arith.constant 0 : index
    %165 = vector.load %arg5[%c0_138, %c18_139, %c0_140, %c0_141] : memref<1x30x16x128xf32, #tpu.memory_space<vmem>>, vector<1x1x16x128xf32>
    %166 = vector.shape_cast %165 : vector<1x1x16x128xf32> to vector<1x16x128xf32>
    %c0_142 = arith.constant 0 : index
    %c19 = arith.constant 19 : index
    %c0_143 = arith.constant 0 : index
    %c0_144 = arith.constant 0 : index
    %167 = vector.load %arg5[%c0_142, %c19, %c0_143, %c0_144] : memref<1x30x16x128xf32, #tpu.memory_space<vmem>>, vector<1x1x16x128xf32>
    %168 = vector.shape_cast %167 : vector<1x1x16x128xf32> to vector<1x16x128xf32>
    %c0_145 = arith.constant 0 : index
    %c20 = arith.constant 20 : index
    %c0_146 = arith.constant 0 : index
    %c0_147 = arith.constant 0 : index
    %169 = vector.load %arg5[%c0_145, %c20, %c0_146, %c0_147] : memref<1x30x16x128xf32, #tpu.memory_space<vmem>>, vector<1x1x16x128xf32>
    %170 = vector.shape_cast %169 : vector<1x1x16x128xf32> to vector<1x16x128xf32>
    %171 = arith.maximumf %166, %168 : vector<1x16x128xf32>
    %172 = arith.maximumf %171, %170 : vector<1x16x128xf32>
    %173 = vector.extract_strided_slice %172 {offsets = [0, 0, 0], sizes = [1, 14, 64], strides = [1, 1, 1]} : vector<1x16x128xf32> to vector<1x14x64xf32>
    %174 = vector.extract_strided_slice %172 {offsets = [0, 0, 64], sizes = [1, 14, 64], strides = [1, 1, 1]} : vector<1x16x128xf32> to vector<1x14x64xf32>
    %175 = vector.extract_strided_slice %172 {offsets = [0, 1, 0], sizes = [1, 14, 64], strides = [1, 1, 1]} : vector<1x16x128xf32> to vector<1x14x64xf32>
    %176 = arith.maximumf %173, %174 : vector<1x14x64xf32>
    %177 = arith.maximumf %176, %175 : vector<1x14x64xf32>
    %178 = arith.truncf %177 : vector<1x14x64xf32> to vector<1x14x64xbf16>
    %c0_148 = arith.constant 0 : index
    %c9_149 = arith.constant 9 : index
    %c0_150 = arith.constant 0 : index
    %c0_151 = arith.constant 0 : index
    %179 = vector.load %arg4[%c0_148, %c9_149, %c0_150, %c0_151] : memref<1x14x14x64xbf16, #tpu.memory_space<vmem>>, vector<1x1x14x64xbf16>
    %180 = vector.shape_cast %179 : vector<1x1x14x64xbf16> to vector<1x14x64xbf16>
    %181 = vector.shape_cast %178 : vector<1x14x64xbf16> to vector<1x1x14x64xbf16>
    tpu.vector_store %arg4[%c0_148, %c9_149, %c0_150, %c0_151], %181 {strides = array<i32>} : memref<1x14x14x64xbf16, #tpu.memory_space<vmem>>, vector<1x1x14x64xbf16>,
    %c0_152 = arith.constant 0 : index
    %c20_153 = arith.constant 20 : index
    %c0_154 = arith.constant 0 : index
    %c0_155 = arith.constant 0 : index
    %182 = vector.load %arg5[%c0_152, %c20_153, %c0_154, %c0_155] : memref<1x30x16x128xf32, #tpu.memory_space<vmem>>, vector<1x1x16x128xf32>
    %183 = vector.shape_cast %182 : vector<1x1x16x128xf32> to vector<1x16x128xf32>
    %c0_156 = arith.constant 0 : index
    %c21 = arith.constant 21 : index
    %c0_157 = arith.constant 0 : index
    %c0_158 = arith.constant 0 : index
    %184 = vector.load %arg5[%c0_156, %c21, %c0_157, %c0_158] : memref<1x30x16x128xf32, #tpu.memory_space<vmem>>, vector<1x1x16x128xf32>
    %185 = vector.shape_cast %184 : vector<1x1x16x128xf32> to vector<1x16x128xf32>
    %c0_159 = arith.constant 0 : index
    %c22 = arith.constant 22 : index
    %c0_160 = arith.constant 0 : index
    %c0_161 = arith.constant 0 : index
    %186 = vector.load %arg5[%c0_159, %c22, %c0_160, %c0_161] : memref<1x30x16x128xf32, #tpu.memory_space<vmem>>, vector<1x1x16x128xf32>
    %187 = vector.shape_cast %186 : vector<1x1x16x128xf32> to vector<1x16x128xf32>
    %188 = arith.maximumf %183, %185 : vector<1x16x128xf32>
    %189 = arith.maximumf %188, %187 : vector<1x16x128xf32>
    %190 = vector.extract_strided_slice %189 {offsets = [0, 0, 0], sizes = [1, 14, 64], strides = [1, 1, 1]} : vector<1x16x128xf32> to vector<1x14x64xf32>
    %191 = vector.extract_strided_slice %189 {offsets = [0, 0, 64], sizes = [1, 14, 64], strides = [1, 1, 1]} : vector<1x16x128xf32> to vector<1x14x64xf32>
    %192 = vector.extract_strided_slice %189 {offsets = [0, 1, 0], sizes = [1, 14, 64], strides = [1, 1, 1]} : vector<1x16x128xf32> to vector<1x14x64xf32>
    %193 = arith.maximumf %190, %191 : vector<1x14x64xf32>
    %194 = arith.maximumf %193, %192 : vector<1x14x64xf32>
    %195 = arith.truncf %194 : vector<1x14x64xf32> to vector<1x14x64xbf16>
    %c0_162 = arith.constant 0 : index
    %c10_163 = arith.constant 10 : index
    %c0_164 = arith.constant 0 : index
    %c0_165 = arith.constant 0 : index
    %196 = vector.load %arg4[%c0_162, %c10_163, %c0_164, %c0_165] : memref<1x14x14x64xbf16, #tpu.memory_space<vmem>>, vector<1x1x14x64xbf16>
    %197 = vector.shape_cast %196 : vector<1x1x14x64xbf16> to vector<1x14x64xbf16>
    %198 = vector.shape_cast %195 : vector<1x14x64xbf16> to vector<1x1x14x64xbf16>
    tpu.vector_store %arg4[%c0_162, %c10_163, %c0_164, %c0_165], %198 {strides = array<i32>} : memref<1x14x14x64xbf16, #tpu.memory_space<vmem>>, vector<1x1x14x64xbf16>,
    %c0_166 = arith.constant 0 : index
    %c22_167 = arith.constant 22 : index
    %c0_168 = arith.constant 0 : index
    %c0_169 = arith.constant 0 : index
    %199 = vector.load %arg5[%c0_166, %c22_167, %c0_168, %c0_169] : memref<1x30x16x128xf32, #tpu.memory_space<vmem>>, vector<1x1x16x128xf32>
    %200 = vector.shape_cast %199 : vector<1x1x16x128xf32> to vector<1x16x128xf32>
    %c0_170 = arith.constant 0 : index
    %c23 = arith.constant 23 : index
    %c0_171 = arith.constant 0 : index
    %c0_172 = arith.constant 0 : index
    %201 = vector.load %arg5[%c0_170, %c23, %c0_171, %c0_172] : memref<1x30x16x128xf32, #tpu.memory_space<vmem>>, vector<1x1x16x128xf32>
    %202 = vector.shape_cast %201 : vector<1x1x16x128xf32> to vector<1x16x128xf32>
    %c0_173 = arith.constant 0 : index
    %c24 = arith.constant 24 : index
    %c0_174 = arith.constant 0 : index
    %c0_175 = arith.constant 0 : index
    %203 = vector.load %arg5[%c0_173, %c24, %c0_174, %c0_175] : memref<1x30x16x128xf32, #tpu.memory_space<vmem>>, vector<1x1x16x128xf32>
    %204 = vector.shape_cast %203 : vector<1x1x16x128xf32> to vector<1x16x128xf32>
    %205 = arith.maximumf %200, %202 : vector<1x16x128xf32>
    %206 = arith.maximumf %205, %204 : vector<1x16x128xf32>
    %207 = vector.extract_strided_slice %206 {offsets = [0, 0, 0], sizes = [1, 14, 64], strides = [1, 1, 1]} : vector<1x16x128xf32> to vector<1x14x64xf32>
    %208 = vector.extract_strided_slice %206 {offsets = [0, 0, 64], sizes = [1, 14, 64], strides = [1, 1, 1]} : vector<1x16x128xf32> to vector<1x14x64xf32>
    %209 = vector.extract_strided_slice %206 {offsets = [0, 1, 0], sizes = [1, 14, 64], strides = [1, 1, 1]} : vector<1x16x128xf32> to vector<1x14x64xf32>
    %210 = arith.maximumf %207, %208 : vector<1x14x64xf32>
    %211 = arith.maximumf %210, %209 : vector<1x14x64xf32>
    %212 = arith.truncf %211 : vector<1x14x64xf32> to vector<1x14x64xbf16>
    %c0_176 = arith.constant 0 : index
    %c11_177 = arith.constant 11 : index
    %c0_178 = arith.constant 0 : index
    %c0_179 = arith.constant 0 : index
    %213 = vector.load %arg4[%c0_176, %c11_177, %c0_178, %c0_179] : memref<1x14x14x64xbf16, #tpu.memory_space<vmem>>, vector<1x1x14x64xbf16>
    %214 = vector.shape_cast %213 : vector<1x1x14x64xbf16> to vector<1x14x64xbf16>
    %215 = vector.shape_cast %212 : vector<1x14x64xbf16> to vector<1x1x14x64xbf16>
    tpu.vector_store %arg4[%c0_176, %c11_177, %c0_178, %c0_179], %215 {strides = array<i32>} : memref<1x14x14x64xbf16, #tpu.memory_space<vmem>>, vector<1x1x14x64xbf16>,
    %c0_180 = arith.constant 0 : index
    %c24_181 = arith.constant 24 : index
    %c0_182 = arith.constant 0 : index
    %c0_183 = arith.constant 0 : index
    %216 = vector.load %arg5[%c0_180, %c24_181, %c0_182, %c0_183] : memref<1x30x16x128xf32, #tpu.memory_space<vmem>>, vector<1x1x16x128xf32>
    %217 = vector.shape_cast %216 : vector<1x1x16x128xf32> to vector<1x16x128xf32>
    %c0_184 = arith.constant 0 : index
    %c25 = arith.constant 25 : index
    %c0_185 = arith.constant 0 : index
    %c0_186 = arith.constant 0 : index
    %218 = vector.load %arg5[%c0_184, %c25, %c0_185, %c0_186] : memref<1x30x16x128xf32, #tpu.memory_space<vmem>>, vector<1x1x16x128xf32>
    %219 = vector.shape_cast %218 : vector<1x1x16x128xf32> to vector<1x16x128xf32>
    %c0_187 = arith.constant 0 : index
    %c26 = arith.constant 26 : index
    %c0_188 = arith.constant 0 : index
    %c0_189 = arith.constant 0 : index
    %220 = vector.load %arg5[%c0_187, %c26, %c0_188, %c0_189] : memref<1x30x16x128xf32, #tpu.memory_space<vmem>>, vector<1x1x16x128xf32>
    %221 = vector.shape_cast %220 : vector<1x1x16x128xf32> to vector<1x16x128xf32>
    %222 = arith.maximumf %217, %219 : vector<1x16x128xf32>
    %223 = arith.maximumf %222, %221 : vector<1x16x128xf32>
    %224 = vector.extract_strided_slice %223 {offsets = [0, 0, 0], sizes = [1, 14, 64], strides = [1, 1, 1]} : vector<1x16x128xf32> to vector<1x14x64xf32>
    %225 = vector.extract_strided_slice %223 {offsets = [0, 0, 64], sizes = [1, 14, 64], strides = [1, 1, 1]} : vector<1x16x128xf32> to vector<1x14x64xf32>
    %226 = vector.extract_strided_slice %223 {offsets = [0, 1, 0], sizes = [1, 14, 64], strides = [1, 1, 1]} : vector<1x16x128xf32> to vector<1x14x64xf32>
    %227 = arith.maximumf %224, %225 : vector<1x14x64xf32>
    %228 = arith.maximumf %227, %226 : vector<1x14x64xf32>
    %229 = arith.truncf %228 : vector<1x14x64xf32> to vector<1x14x64xbf16>
    %c0_190 = arith.constant 0 : index
    %c12_191 = arith.constant 12 : index
    %c0_192 = arith.constant 0 : index
    %c0_193 = arith.constant 0 : index
    %230 = vector.load %arg4[%c0_190, %c12_191, %c0_192, %c0_193] : memref<1x14x14x64xbf16, #tpu.memory_space<vmem>>, vector<1x1x14x64xbf16>
    %231 = vector.shape_cast %230 : vector<1x1x14x64xbf16> to vector<1x14x64xbf16>
    %232 = vector.shape_cast %229 : vector<1x14x64xbf16> to vector<1x1x14x64xbf16>
    tpu.vector_store %arg4[%c0_190, %c12_191, %c0_192, %c0_193], %232 {strides = array<i32>} : memref<1x14x14x64xbf16, #tpu.memory_space<vmem>>, vector<1x1x14x64xbf16>,
    %c0_194 = arith.constant 0 : index
    %c26_195 = arith.constant 26 : index
    %c0_196 = arith.constant 0 : index
    %c0_197 = arith.constant 0 : index
    %233 = vector.load %arg5[%c0_194, %c26_195, %c0_196, %c0_197] : memref<1x30x16x128xf32, #tpu.memory_space<vmem>>, vector<1x1x16x128xf32>
    %234 = vector.shape_cast %233 : vector<1x1x16x128xf32> to vector<1x16x128xf32>
    %c0_198 = arith.constant 0 : index
    %c27 = arith.constant 27 : index
    %c0_199 = arith.constant 0 : index
    %c0_200 = arith.constant 0 : index
    %235 = vector.load %arg5[%c0_198, %c27, %c0_199, %c0_200] : memref<1x30x16x128xf32, #tpu.memory_space<vmem>>, vector<1x1x16x128xf32>
    %236 = vector.shape_cast %235 : vector<1x1x16x128xf32> to vector<1x16x128xf32>
    %c0_201 = arith.constant 0 : index
    %c28 = arith.constant 28 : index
    %c0_202 = arith.constant 0 : index
    %c0_203 = arith.constant 0 : index
    %237 = vector.load %arg5[%c0_201, %c28, %c0_202, %c0_203] : memref<1x30x16x128xf32, #tpu.memory_space<vmem>>, vector<1x1x16x128xf32>
    %238 = vector.shape_cast %237 : vector<1x1x16x128xf32> to vector<1x16x128xf32>
    %239 = arith.maximumf %234, %236 : vector<1x16x128xf32>
    %240 = arith.maximumf %239, %238 : vector<1x16x128xf32>
    %241 = vector.extract_strided_slice %240 {offsets = [0, 0, 0], sizes = [1, 14, 64], strides = [1, 1, 1]} : vector<1x16x128xf32> to vector<1x14x64xf32>
    %242 = vector.extract_strided_slice %240 {offsets = [0, 0, 64], sizes = [1, 14, 64], strides = [1, 1, 1]} : vector<1x16x128xf32> to vector<1x14x64xf32>
    %243 = vector.extract_strided_slice %240 {offsets = [0, 1, 0], sizes = [1, 14, 64], strides = [1, 1, 1]} : vector<1x16x128xf32> to vector<1x14x64xf32>
    %244 = arith.maximumf %241, %242 : vector<1x14x64xf32>
    %245 = arith.maximumf %244, %243 : vector<1x14x64xf32>
    %246 = arith.truncf %245 : vector<1x14x64xf32> to vector<1x14x64xbf16>
    %c0_204 = arith.constant 0 : index
    %c13_205 = arith.constant 13 : index
    %c0_206 = arith.constant 0 : index
    %c0_207 = arith.constant 0 : index
    %247 = vector.load %arg4[%c0_204, %c13_205, %c0_206, %c0_207] : memref<1x14x14x64xbf16, #tpu.memory_space<vmem>>, vector<1x1x14x64xbf16>
    %248 = vector.shape_cast %247 : vector<1x1x14x64xbf16> to vector<1x14x64xbf16>
    %249 = vector.shape_cast %246 : vector<1x14x64xbf16> to vector<1x1x14x64xbf16>
    tpu.vector_store %arg4[%c0_204, %c13_205, %c0_206, %c0_207], %249 {strides = array<i32>} : memref<1x14x14x64xbf16, #tpu.memory_space<vmem>>, vector<1x1x14x64xbf16>,
    return
  }
  func.func @transform_0(%arg0: i32) -> (i32, i32, i32, i32) {
    %c0_i32 = arith.constant 0 : i32
    %c0_i32_0 = arith.constant 0 : i32
    %c0_i32_1 = arith.constant 0 : i32
    %c0_i32_2 = arith.constant 0 : i32
    return %arg0, %c0_i32, %c0_i32_0, %c0_i32_1 : i32, i32, i32, i32
  }
  func.func @transform_1(%arg0: i32) -> (i32, i32) {
    %c0_i32 = arith.constant 0 : i32
    %c0_i32_0 = arith.constant 0 : i32
    %c0_i32_1 = arith.constant 0 : i32
    return %c0_i32, %c0_i32_0 : i32, i32
  }
  func.func @transform_2(%arg0: i32) -> (i32, i32) {
    %c0_i32 = arith.constant 0 : i32
    %c0_i32_0 = arith.constant 0 : i32
    %c0_i32_1 = arith.constant 0 : i32
    return %c0_i32, %c0_i32_0 : i32, i32
  }
  func.func @transform_3(%arg0: i32) -> (i32, i32, i32, i32) {
    %c0_i32 = arith.constant 0 : i32
    %c0_i32_0 = arith.constant 0 : i32
    %c0_i32_1 = arith.constant 0 : i32
    %c0_i32_2 = arith.constant 0 : i32
    return %arg0, %c0_i32, %c0_i32_0, %c0_i32_1 : i32, i32, i32, i32
  }
}

module attributes {stable_mosaic.version = 11 : i64} {
  func.func @_conv_pool_kernel(%arg0: i32, %arg1: memref<1x12x8x768xbf16, #tpu.memory_space<vmem>>, %arg2: memref<768x128xbf16, #tpu.memory_space<vmem>>, %arg3: memref<1x128xf32, #tpu.memory_space<vmem>>, %arg4: memref<1x5x5x64xbf16, #tpu.memory_space<vmem>>, %arg5: memref<1x12x8x128xf32, #tpu.memory_space<vmem>>) attributes {dimension_semantics = [#tpu.dimension_semantics<parallel>], iteration_bounds = array<i64: 2>, scalar_prefetch = 0 : i64, scratch_operands = 1 : i64, tpu.core_type = #tpu.core_type<tc>, window_params = [{transform_indices = @transform_0, window_bounds = array<i64: 1, 12, 8, 768>}, {pipeline_mode = #tpu.pipeline_mode<synchronous>, transform_indices = @transform_1, window_bounds = array<i64: 768, 128>}, {pipeline_mode = #tpu.pipeline_mode<synchronous>, transform_indices = @transform_2, window_bounds = array<i64: 1, 128>}, {transform_indices = @transform_3, window_bounds = array<i64: 1, 5, 5, 64>}]} {
    %c0 = arith.constant 0 : index
    %c0_0 = arith.constant 0 : index
    %c0_1 = arith.constant 0 : index
    %c0_2 = arith.constant 0 : index
    %0 = vector.load %arg1[%c0, %c0_0, %c0_1, %c0_2] : memref<1x12x8x768xbf16, #tpu.memory_space<vmem>>, vector<1x12x8x768xbf16>
    %1 = vector.shape_cast %0 : vector<1x12x8x768xbf16> to vector<96x768xbf16>
    %c0_3 = arith.constant 0 : index
    %c0_4 = arith.constant 0 : index
    %2 = vector.load %arg2[%c0_3, %c0_4] : memref<768x128xbf16, #tpu.memory_space<vmem>>, vector<768x128xbf16>
    %cst = arith.constant dense<0.000000e+00> : vector<96x128xf32>
    %3 = tpu.matmul %1, %2, %cst {dimension_numbers = #tpu.dot_dimension_numbers<[1], [0], [0], [1], [0, 0, 1, 1], [], []>} : vector<96x768xbf16>, vector<768x128xbf16>, vector<96x128xf32> -> vector<96x128xf32>
    %4 = vector.shape_cast %3 : vector<96x128xf32> to vector<1x12x8x128xf32>
    %c0_5 = arith.constant 0 : index
    %c0_6 = arith.constant 0 : index
    %5 = vector.load %arg3[%c0_5, %c0_6] : memref<1x128xf32, #tpu.memory_space<vmem>>, vector<1x128xf32>
    %6 = vector.shape_cast %5 : vector<1x128xf32> to vector<1x1x1x128xf32>
    %7 = vector.broadcast %6 : vector<1x1x1x128xf32> to vector<1x12x8x128xf32>
    %8 = arith.addf %4, %7 : vector<1x12x8x128xf32>
    %cst_7 = arith.constant 0.000000e+00 : f32
    %9 = vector.broadcast %cst_7 : f32 to vector<1x12x8x128xf32>
    %10 = arith.maximumf %8, %9 : vector<1x12x8x128xf32>
    %c0_8 = arith.constant 0 : index
    %c0_9 = arith.constant 0 : index
    %c0_10 = arith.constant 0 : index
    %c0_11 = arith.constant 0 : index
    %11 = vector.load %arg5[%c0_8, %c0_9, %c0_10, %c0_11] : memref<1x12x8x128xf32, #tpu.memory_space<vmem>>, vector<1x12x8x128xf32>
    tpu.vector_store %arg5[%c0_8, %c0_9, %c0_10, %c0_11], %10 {strides = array<i32>} : memref<1x12x8x128xf32, #tpu.memory_space<vmem>>, vector<1x12x8x128xf32>,
    %c0_12 = arith.constant 0 : index
    %c0_13 = arith.constant 0 : index
    %c0_14 = arith.constant 0 : index
    %c0_15 = arith.constant 0 : index
    %12 = vector.load %arg5[%c0_12, %c0_13, %c0_14, %c0_15] : memref<1x12x8x128xf32, #tpu.memory_space<vmem>>, vector<1x1x8x128xf32>
    %13 = vector.shape_cast %12 : vector<1x1x8x128xf32> to vector<1x8x128xf32>
    %c0_16 = arith.constant 0 : index
    %c1 = arith.constant 1 : index
    %c0_17 = arith.constant 0 : index
    %c0_18 = arith.constant 0 : index
    %14 = vector.load %arg5[%c0_16, %c1, %c0_17, %c0_18] : memref<1x12x8x128xf32, #tpu.memory_space<vmem>>, vector<1x1x8x128xf32>
    %15 = vector.shape_cast %14 : vector<1x1x8x128xf32> to vector<1x8x128xf32>
    %c0_19 = arith.constant 0 : index
    %c2 = arith.constant 2 : index
    %c0_20 = arith.constant 0 : index
    %c0_21 = arith.constant 0 : index
    %16 = vector.load %arg5[%c0_19, %c2, %c0_20, %c0_21] : memref<1x12x8x128xf32, #tpu.memory_space<vmem>>, vector<1x1x8x128xf32>
    %17 = vector.shape_cast %16 : vector<1x1x8x128xf32> to vector<1x8x128xf32>
    %18 = arith.maximumf %13, %15 : vector<1x8x128xf32>
    %19 = arith.maximumf %18, %17 : vector<1x8x128xf32>
    %20 = vector.extract_strided_slice %19 {offsets = [0, 0, 0], sizes = [1, 5, 64], strides = [1, 1, 1]} : vector<1x8x128xf32> to vector<1x5x64xf32>
    %21 = vector.extract_strided_slice %19 {offsets = [0, 0, 64], sizes = [1, 5, 64], strides = [1, 1, 1]} : vector<1x8x128xf32> to vector<1x5x64xf32>
    %22 = vector.extract_strided_slice %19 {offsets = [0, 1, 0], sizes = [1, 5, 64], strides = [1, 1, 1]} : vector<1x8x128xf32> to vector<1x5x64xf32>
    %23 = arith.maximumf %20, %21 : vector<1x5x64xf32>
    %24 = arith.maximumf %23, %22 : vector<1x5x64xf32>
    %25 = arith.truncf %24 : vector<1x5x64xf32> to vector<1x5x64xbf16>
    %c0_22 = arith.constant 0 : index
    %c0_23 = arith.constant 0 : index
    %c0_24 = arith.constant 0 : index
    %c0_25 = arith.constant 0 : index
    %26 = vector.load %arg4[%c0_22, %c0_23, %c0_24, %c0_25] : memref<1x5x5x64xbf16, #tpu.memory_space<vmem>>, vector<1x1x5x64xbf16>
    %27 = vector.shape_cast %26 : vector<1x1x5x64xbf16> to vector<1x5x64xbf16>
    %28 = vector.shape_cast %25 : vector<1x5x64xbf16> to vector<1x1x5x64xbf16>
    tpu.vector_store %arg4[%c0_22, %c0_23, %c0_24, %c0_25], %28 {strides = array<i32>} : memref<1x5x5x64xbf16, #tpu.memory_space<vmem>>, vector<1x1x5x64xbf16>,
    %c0_26 = arith.constant 0 : index
    %c2_27 = arith.constant 2 : index
    %c0_28 = arith.constant 0 : index
    %c0_29 = arith.constant 0 : index
    %29 = vector.load %arg5[%c0_26, %c2_27, %c0_28, %c0_29] : memref<1x12x8x128xf32, #tpu.memory_space<vmem>>, vector<1x1x8x128xf32>
    %30 = vector.shape_cast %29 : vector<1x1x8x128xf32> to vector<1x8x128xf32>
    %c0_30 = arith.constant 0 : index
    %c3 = arith.constant 3 : index
    %c0_31 = arith.constant 0 : index
    %c0_32 = arith.constant 0 : index
    %31 = vector.load %arg5[%c0_30, %c3, %c0_31, %c0_32] : memref<1x12x8x128xf32, #tpu.memory_space<vmem>>, vector<1x1x8x128xf32>
    %32 = vector.shape_cast %31 : vector<1x1x8x128xf32> to vector<1x8x128xf32>
    %c0_33 = arith.constant 0 : index
    %c4 = arith.constant 4 : index
    %c0_34 = arith.constant 0 : index
    %c0_35 = arith.constant 0 : index
    %33 = vector.load %arg5[%c0_33, %c4, %c0_34, %c0_35] : memref<1x12x8x128xf32, #tpu.memory_space<vmem>>, vector<1x1x8x128xf32>
    %34 = vector.shape_cast %33 : vector<1x1x8x128xf32> to vector<1x8x128xf32>
    %35 = arith.maximumf %30, %32 : vector<1x8x128xf32>
    %36 = arith.maximumf %35, %34 : vector<1x8x128xf32>
    %37 = vector.extract_strided_slice %36 {offsets = [0, 0, 0], sizes = [1, 5, 64], strides = [1, 1, 1]} : vector<1x8x128xf32> to vector<1x5x64xf32>
    %38 = vector.extract_strided_slice %36 {offsets = [0, 0, 64], sizes = [1, 5, 64], strides = [1, 1, 1]} : vector<1x8x128xf32> to vector<1x5x64xf32>
    %39 = vector.extract_strided_slice %36 {offsets = [0, 1, 0], sizes = [1, 5, 64], strides = [1, 1, 1]} : vector<1x8x128xf32> to vector<1x5x64xf32>
    %40 = arith.maximumf %37, %38 : vector<1x5x64xf32>
    %41 = arith.maximumf %40, %39 : vector<1x5x64xf32>
    %42 = arith.truncf %41 : vector<1x5x64xf32> to vector<1x5x64xbf16>
    %c0_36 = arith.constant 0 : index
    %c1_37 = arith.constant 1 : index
    %c0_38 = arith.constant 0 : index
    %c0_39 = arith.constant 0 : index
    %43 = vector.load %arg4[%c0_36, %c1_37, %c0_38, %c0_39] : memref<1x5x5x64xbf16, #tpu.memory_space<vmem>>, vector<1x1x5x64xbf16>
    %44 = vector.shape_cast %43 : vector<1x1x5x64xbf16> to vector<1x5x64xbf16>
    %45 = vector.shape_cast %42 : vector<1x5x64xbf16> to vector<1x1x5x64xbf16>
    tpu.vector_store %arg4[%c0_36, %c1_37, %c0_38, %c0_39], %45 {strides = array<i32>} : memref<1x5x5x64xbf16, #tpu.memory_space<vmem>>, vector<1x1x5x64xbf16>,
    %c0_40 = arith.constant 0 : index
    %c4_41 = arith.constant 4 : index
    %c0_42 = arith.constant 0 : index
    %c0_43 = arith.constant 0 : index
    %46 = vector.load %arg5[%c0_40, %c4_41, %c0_42, %c0_43] : memref<1x12x8x128xf32, #tpu.memory_space<vmem>>, vector<1x1x8x128xf32>
    %47 = vector.shape_cast %46 : vector<1x1x8x128xf32> to vector<1x8x128xf32>
    %c0_44 = arith.constant 0 : index
    %c5 = arith.constant 5 : index
    %c0_45 = arith.constant 0 : index
    %c0_46 = arith.constant 0 : index
    %48 = vector.load %arg5[%c0_44, %c5, %c0_45, %c0_46] : memref<1x12x8x128xf32, #tpu.memory_space<vmem>>, vector<1x1x8x128xf32>
    %49 = vector.shape_cast %48 : vector<1x1x8x128xf32> to vector<1x8x128xf32>
    %c0_47 = arith.constant 0 : index
    %c6 = arith.constant 6 : index
    %c0_48 = arith.constant 0 : index
    %c0_49 = arith.constant 0 : index
    %50 = vector.load %arg5[%c0_47, %c6, %c0_48, %c0_49] : memref<1x12x8x128xf32, #tpu.memory_space<vmem>>, vector<1x1x8x128xf32>
    %51 = vector.shape_cast %50 : vector<1x1x8x128xf32> to vector<1x8x128xf32>
    %52 = arith.maximumf %47, %49 : vector<1x8x128xf32>
    %53 = arith.maximumf %52, %51 : vector<1x8x128xf32>
    %54 = vector.extract_strided_slice %53 {offsets = [0, 0, 0], sizes = [1, 5, 64], strides = [1, 1, 1]} : vector<1x8x128xf32> to vector<1x5x64xf32>
    %55 = vector.extract_strided_slice %53 {offsets = [0, 0, 64], sizes = [1, 5, 64], strides = [1, 1, 1]} : vector<1x8x128xf32> to vector<1x5x64xf32>
    %56 = vector.extract_strided_slice %53 {offsets = [0, 1, 0], sizes = [1, 5, 64], strides = [1, 1, 1]} : vector<1x8x128xf32> to vector<1x5x64xf32>
    %57 = arith.maximumf %54, %55 : vector<1x5x64xf32>
    %58 = arith.maximumf %57, %56 : vector<1x5x64xf32>
    %59 = arith.truncf %58 : vector<1x5x64xf32> to vector<1x5x64xbf16>
    %c0_50 = arith.constant 0 : index
    %c2_51 = arith.constant 2 : index
    %c0_52 = arith.constant 0 : index
    %c0_53 = arith.constant 0 : index
    %60 = vector.load %arg4[%c0_50, %c2_51, %c0_52, %c0_53] : memref<1x5x5x64xbf16, #tpu.memory_space<vmem>>, vector<1x1x5x64xbf16>
    %61 = vector.shape_cast %60 : vector<1x1x5x64xbf16> to vector<1x5x64xbf16>
    %62 = vector.shape_cast %59 : vector<1x5x64xbf16> to vector<1x1x5x64xbf16>
    tpu.vector_store %arg4[%c0_50, %c2_51, %c0_52, %c0_53], %62 {strides = array<i32>} : memref<1x5x5x64xbf16, #tpu.memory_space<vmem>>, vector<1x1x5x64xbf16>,
    %c0_54 = arith.constant 0 : index
    %c6_55 = arith.constant 6 : index
    %c0_56 = arith.constant 0 : index
    %c0_57 = arith.constant 0 : index
    %63 = vector.load %arg5[%c0_54, %c6_55, %c0_56, %c0_57] : memref<1x12x8x128xf32, #tpu.memory_space<vmem>>, vector<1x1x8x128xf32>
    %64 = vector.shape_cast %63 : vector<1x1x8x128xf32> to vector<1x8x128xf32>
    %c0_58 = arith.constant 0 : index
    %c7 = arith.constant 7 : index
    %c0_59 = arith.constant 0 : index
    %c0_60 = arith.constant 0 : index
    %65 = vector.load %arg5[%c0_58, %c7, %c0_59, %c0_60] : memref<1x12x8x128xf32, #tpu.memory_space<vmem>>, vector<1x1x8x128xf32>
    %66 = vector.shape_cast %65 : vector<1x1x8x128xf32> to vector<1x8x128xf32>
    %c0_61 = arith.constant 0 : index
    %c8 = arith.constant 8 : index
    %c0_62 = arith.constant 0 : index
    %c0_63 = arith.constant 0 : index
    %67 = vector.load %arg5[%c0_61, %c8, %c0_62, %c0_63] : memref<1x12x8x128xf32, #tpu.memory_space<vmem>>, vector<1x1x8x128xf32>
    %68 = vector.shape_cast %67 : vector<1x1x8x128xf32> to vector<1x8x128xf32>
    %69 = arith.maximumf %64, %66 : vector<1x8x128xf32>
    %70 = arith.maximumf %69, %68 : vector<1x8x128xf32>
    %71 = vector.extract_strided_slice %70 {offsets = [0, 0, 0], sizes = [1, 5, 64], strides = [1, 1, 1]} : vector<1x8x128xf32> to vector<1x5x64xf32>
    %72 = vector.extract_strided_slice %70 {offsets = [0, 0, 64], sizes = [1, 5, 64], strides = [1, 1, 1]} : vector<1x8x128xf32> to vector<1x5x64xf32>
    %73 = vector.extract_strided_slice %70 {offsets = [0, 1, 0], sizes = [1, 5, 64], strides = [1, 1, 1]} : vector<1x8x128xf32> to vector<1x5x64xf32>
    %74 = arith.maximumf %71, %72 : vector<1x5x64xf32>
    %75 = arith.maximumf %74, %73 : vector<1x5x64xf32>
    %76 = arith.truncf %75 : vector<1x5x64xf32> to vector<1x5x64xbf16>
    %c0_64 = arith.constant 0 : index
    %c3_65 = arith.constant 3 : index
    %c0_66 = arith.constant 0 : index
    %c0_67 = arith.constant 0 : index
    %77 = vector.load %arg4[%c0_64, %c3_65, %c0_66, %c0_67] : memref<1x5x5x64xbf16, #tpu.memory_space<vmem>>, vector<1x1x5x64xbf16>
    %78 = vector.shape_cast %77 : vector<1x1x5x64xbf16> to vector<1x5x64xbf16>
    %79 = vector.shape_cast %76 : vector<1x5x64xbf16> to vector<1x1x5x64xbf16>
    tpu.vector_store %arg4[%c0_64, %c3_65, %c0_66, %c0_67], %79 {strides = array<i32>} : memref<1x5x5x64xbf16, #tpu.memory_space<vmem>>, vector<1x1x5x64xbf16>,
    %c0_68 = arith.constant 0 : index
    %c8_69 = arith.constant 8 : index
    %c0_70 = arith.constant 0 : index
    %c0_71 = arith.constant 0 : index
    %80 = vector.load %arg5[%c0_68, %c8_69, %c0_70, %c0_71] : memref<1x12x8x128xf32, #tpu.memory_space<vmem>>, vector<1x1x8x128xf32>
    %81 = vector.shape_cast %80 : vector<1x1x8x128xf32> to vector<1x8x128xf32>
    %c0_72 = arith.constant 0 : index
    %c9 = arith.constant 9 : index
    %c0_73 = arith.constant 0 : index
    %c0_74 = arith.constant 0 : index
    %82 = vector.load %arg5[%c0_72, %c9, %c0_73, %c0_74] : memref<1x12x8x128xf32, #tpu.memory_space<vmem>>, vector<1x1x8x128xf32>
    %83 = vector.shape_cast %82 : vector<1x1x8x128xf32> to vector<1x8x128xf32>
    %c0_75 = arith.constant 0 : index
    %c10 = arith.constant 10 : index
    %c0_76 = arith.constant 0 : index
    %c0_77 = arith.constant 0 : index
    %84 = vector.load %arg5[%c0_75, %c10, %c0_76, %c0_77] : memref<1x12x8x128xf32, #tpu.memory_space<vmem>>, vector<1x1x8x128xf32>
    %85 = vector.shape_cast %84 : vector<1x1x8x128xf32> to vector<1x8x128xf32>
    %86 = arith.maximumf %81, %83 : vector<1x8x128xf32>
    %87 = arith.maximumf %86, %85 : vector<1x8x128xf32>
    %88 = vector.extract_strided_slice %87 {offsets = [0, 0, 0], sizes = [1, 5, 64], strides = [1, 1, 1]} : vector<1x8x128xf32> to vector<1x5x64xf32>
    %89 = vector.extract_strided_slice %87 {offsets = [0, 0, 64], sizes = [1, 5, 64], strides = [1, 1, 1]} : vector<1x8x128xf32> to vector<1x5x64xf32>
    %90 = vector.extract_strided_slice %87 {offsets = [0, 1, 0], sizes = [1, 5, 64], strides = [1, 1, 1]} : vector<1x8x128xf32> to vector<1x5x64xf32>
    %91 = arith.maximumf %88, %89 : vector<1x5x64xf32>
    %92 = arith.maximumf %91, %90 : vector<1x5x64xf32>
    %93 = arith.truncf %92 : vector<1x5x64xf32> to vector<1x5x64xbf16>
    %c0_78 = arith.constant 0 : index
    %c4_79 = arith.constant 4 : index
    %c0_80 = arith.constant 0 : index
    %c0_81 = arith.constant 0 : index
    %94 = vector.load %arg4[%c0_78, %c4_79, %c0_80, %c0_81] : memref<1x5x5x64xbf16, #tpu.memory_space<vmem>>, vector<1x1x5x64xbf16>
    %95 = vector.shape_cast %94 : vector<1x1x5x64xbf16> to vector<1x5x64xbf16>
    %96 = vector.shape_cast %93 : vector<1x5x64xbf16> to vector<1x1x5x64xbf16>
    tpu.vector_store %arg4[%c0_78, %c4_79, %c0_80, %c0_81], %96 {strides = array<i32>} : memref<1x5x5x64xbf16, #tpu.memory_space<vmem>>, vector<1x1x5x64xbf16>,
    return
  }
  func.func @transform_0(%arg0: i32) -> (i32, i32, i32, i32) {
    %c0_i32 = arith.constant 0 : i32
    %c0_i32_0 = arith.constant 0 : i32
    %c0_i32_1 = arith.constant 0 : i32
    %c0_i32_2 = arith.constant 0 : i32
    return %arg0, %c0_i32, %c0_i32_0, %c0_i32_1 : i32, i32, i32, i32
  }
  func.func @transform_1(%arg0: i32) -> (i32, i32) {
    %c0_i32 = arith.constant 0 : i32
    %c0_i32_0 = arith.constant 0 : i32
    %c0_i32_1 = arith.constant 0 : i32
    return %c0_i32, %c0_i32_0 : i32, i32
  }
  func.func @transform_2(%arg0: i32) -> (i32, i32) {
    %c0_i32 = arith.constant 0 : i32
    %c0_i32_0 = arith.constant 0 : i32
    %c0_i32_1 = arith.constant 0 : i32
    return %c0_i32, %c0_i32_0 : i32, i32
  }
  func.func @transform_3(%arg0: i32) -> (i32, i32, i32, i32) {
    %c0_i32 = arith.constant 0 : i32
    %c0_i32_0 = arith.constant 0 : i32
    %c0_i32_1 = arith.constant 0 : i32
    %c0_i32_2 = arith.constant 0 : i32
    return %arg0, %c0_i32, %c0_i32_0, %c0_i32_1 : i32, i32, i32, i32
  }
}

module attributes {stable_mosaic.version = 11 : i64} {
  func.func @_fc_head_kernel(%arg0: i32, %arg1: memref<8x1600xbf16, #tpu.memory_space<vmem>>, %arg2: memref<1600x512xbf16, #tpu.memory_space<vmem>>, %arg3: memref<1x512xf32, #tpu.memory_space<vmem>>, %arg4: memref<512x128xbf16, #tpu.memory_space<vmem>>, %arg5: memref<1x128xf32, #tpu.memory_space<vmem>>, %arg6: memref<8x128xf32, #tpu.memory_space<vmem>>) attributes {dimension_semantics = [#tpu.dimension_semantics<parallel>], iteration_bounds = array<i64: 2>, scalar_prefetch = 0 : i64, scratch_operands = 0 : i64, tpu.core_type = #tpu.core_type<tc>, window_params = [{transform_indices = @transform_0, window_bounds = array<i64: 8, 1600>}, {pipeline_mode = #tpu.pipeline_mode<synchronous>, transform_indices = @transform_1, window_bounds = array<i64: 1600, 512>}, {pipeline_mode = #tpu.pipeline_mode<synchronous>, transform_indices = @transform_2, window_bounds = array<i64: 1, 512>}, {pipeline_mode = #tpu.pipeline_mode<synchronous>, transform_indices = @transform_3, window_bounds = array<i64: 512, 128>}, {pipeline_mode = #tpu.pipeline_mode<synchronous>, transform_indices = @transform_4, window_bounds = array<i64: 1, 128>}, {transform_indices = @transform_5, window_bounds = array<i64: 8, 128>}]} {
    %c0 = arith.constant 0 : index
    %c0_0 = arith.constant 0 : index
    %0 = vector.load %arg1[%c0, %c0_0] : memref<8x1600xbf16, #tpu.memory_space<vmem>>, vector<8x1600xbf16>
    %c0_1 = arith.constant 0 : index
    %c0_2 = arith.constant 0 : index
    %1 = vector.load %arg2[%c0_1, %c0_2] : memref<1600x512xbf16, #tpu.memory_space<vmem>>, vector<1600x512xbf16>
    %cst = arith.constant dense<0.000000e+00> : vector<8x512xf32>
    %2 = tpu.matmul %0, %1, %cst {dimension_numbers = #tpu.dot_dimension_numbers<[1], [0], [0], [1], [0, 0, 1, 1], [], []>} : vector<8x1600xbf16>, vector<1600x512xbf16>, vector<8x512xf32> -> vector<8x512xf32>
    %c0_3 = arith.constant 0 : index
    %c0_4 = arith.constant 0 : index
    %3 = vector.load %arg3[%c0_3, %c0_4] : memref<1x512xf32, #tpu.memory_space<vmem>>, vector<1x512xf32>
    %4 = vector.broadcast %3 : vector<1x512xf32> to vector<8x512xf32>
    %5 = arith.addf %2, %4 : vector<8x512xf32>
    %cst_5 = arith.constant 0.000000e+00 : f32
    %6 = vector.broadcast %cst_5 : f32 to vector<8x512xf32>
    %7 = arith.maximumf %5, %6 : vector<8x512xf32>
    %8 = arith.truncf %7 : vector<8x512xf32> to vector<8x512xbf16>
    %c0_6 = arith.constant 0 : index
    %c0_7 = arith.constant 0 : index
    %9 = vector.load %arg4[%c0_6, %c0_7] : memref<512x128xbf16, #tpu.memory_space<vmem>>, vector<512x128xbf16>
    %cst_8 = arith.constant dense<0.000000e+00> : vector<8x128xf32>
    %10 = tpu.matmul %8, %9, %cst_8 {dimension_numbers = #tpu.dot_dimension_numbers<[1], [0], [0], [1], [0, 0, 1, 1], [], []>} : vector<8x512xbf16>, vector<512x128xbf16>, vector<8x128xf32> -> vector<8x128xf32>
    %c0_9 = arith.constant 0 : index
    %c0_10 = arith.constant 0 : index
    %11 = vector.load %arg5[%c0_9, %c0_10] : memref<1x128xf32, #tpu.memory_space<vmem>>, vector<1x128xf32>
    %12 = vector.broadcast %11 : vector<1x128xf32> to vector<8x128xf32>
    %13 = arith.addf %10, %12 : vector<8x128xf32>
    %cst_11 = arith.constant 0.000000e+00 : f32
    %14 = vector.broadcast %cst_11 : f32 to vector<8x128xf32>
    %15 = arith.maximumf %13, %14 : vector<8x128xf32>
    %c0_12 = arith.constant 0 : index
    %c0_13 = arith.constant 0 : index
    %16 = vector.load %arg6[%c0_12, %c0_13] : memref<8x128xf32, #tpu.memory_space<vmem>>, vector<8x128xf32>
    tpu.vector_store %arg6[%c0_12, %c0_13], %15 {strides = array<i32>} : memref<8x128xf32, #tpu.memory_space<vmem>>, vector<8x128xf32>,
    return
  }
  func.func @transform_0(%arg0: i32) -> (i32, i32) {
    %c0_i32 = arith.constant 0 : i32
    %c0_i32_0 = arith.constant 0 : i32
    return %arg0, %c0_i32 : i32, i32
  }
  func.func @transform_1(%arg0: i32) -> (i32, i32) {
    %c0_i32 = arith.constant 0 : i32
    %c0_i32_0 = arith.constant 0 : i32
    %c0_i32_1 = arith.constant 0 : i32
    return %c0_i32, %c0_i32_0 : i32, i32
  }
  func.func @transform_2(%arg0: i32) -> (i32, i32) {
    %c0_i32 = arith.constant 0 : i32
    %c0_i32_0 = arith.constant 0 : i32
    %c0_i32_1 = arith.constant 0 : i32
    return %c0_i32, %c0_i32_0 : i32, i32
  }
  func.func @transform_3(%arg0: i32) -> (i32, i32) {
    %c0_i32 = arith.constant 0 : i32
    %c0_i32_0 = arith.constant 0 : i32
    %c0_i32_1 = arith.constant 0 : i32
    return %c0_i32, %c0_i32_0 : i32, i32
  }
  func.func @transform_4(%arg0: i32) -> (i32, i32) {
    %c0_i32 = arith.constant 0 : i32
    %c0_i32_0 = arith.constant 0 : i32
    %c0_i32_1 = arith.constant 0 : i32
    return %c0_i32, %c0_i32_0 : i32, i32
  }
  func.func @transform_5(%arg0: i32) -> (i32, i32) {
    %c0_i32 = arith.constant 0 : i32
    %c0_i32_0 = arith.constant 0 : i32
    return %arg0, %c0_i32 : i32, i32
  }
}

</mosaic_0001>

<llo_original>
// kernel: net_forward.3
$region0: #{net_forward.3}
  #allocation0 [shape = 'u32[]', space=smem, size = 0x4, offset = 0x4, fixed_abs, tag = 'smem constant byte address 0x4 - core index']
  #allocation1 [shape = 'u32[144,128]{1,0:T(1,128)}', space=vmem, size = 0x12000, scoped, tag = 'internal scratch']
  #allocation2 [shape = 'f32[1,30,16,128]{3,2,1,0:T(8,128)}', space=vmem, size = 0x3c000, scoped, tag = 'scratch operand']
  %s0 = inlined_call_operand.vmem [shape: bf16[2,30,16,36], index: 0, kind: input, shape index: {}]
  %s1 = inlined_call_operand.vmem [shape: bf16[36,128], index: 1, kind: input, shape index: {}]
  %s2 = inlined_call_operand.vmem [shape: f32[1,128], index: 2, kind: input, shape index: {}]
  %s3 = inlined_call_operand.vmem [shape: bf16[2,14,14,64], index: 3, kind: output, shape index: {}]
  %s4 = sld [smem:[#allocation0]]
  $region45: #{net_forward.3} parent=0
    _
  %s6 = ssub.s32 1, %s4
  %s7 = scalar_select 0, %s6, %s4
  loop: start=0, step=1, limit=4
  $region2: #{net_forward.3} parent=0 // loop_pre_header
    _
  $region3: #{net_forward.3} parent=0 // loop_header
    %s9 = sphi 0, %s13
    %p10 = scmp.ge.s32.totalorder %s9, 4
    %s19 = sphi 0, %s21
    %s22 = sphi 0, %s19
    %s23 = sphi 0, %s22
    %s39 = sphi 0, %s23
    %s43 = sphi 0, %s43
    %s45 = sphi 0, %s43
    %s46 = sphi 0, %s45
    %s60 = sphi 0, %s46
    %s64 = sphi 0, %s64
    %s66 = sphi 0, %s64
    %s67 = sphi 0, %s66
    %s81 = sphi 0, %s67
    %s87 = sphi 0, %s89
    %s90 = sphi 0, %s87
    %s91 = sphi 0, %s90
    %s107 = sphi 0, %s91
  $region4: #{net_forward.3} parent=0 // loop_header_branch
    %12 = sbr.rel (%p10) target = $region8
  $region5: #{net_forward.3} parent=0 // loop_body
    %s14 = ssub.s32 %s9, 1
    %s15 = ssub.s32 %s9, 2
    %s16 = sadd.s32 %s9, 1
    %s17 = ssub.s32 %s9, %s16
    %p18 = scmp.eq.s32.totalorder %s17, 0
    %s20 = sadd.s32 %s19, 1
    %s21 = scalar_select %p18, %s19, %s20
    %p24 = pneg %p18
    %p25 = scmp.eq.s32.totalorder %s9, 1
    %p26 = por %p24, %p25
    %p27 = scmp.ne.s32.totalorder %s19, %s22
    %p28 = scmp.eq.s32.totalorder %s9, 0
    %p29 = por %p27, %p28
    %p30 = scmp.ne.s32.totalorder %s19, %s22
    %p31 = scmp.eq.s32.totalorder %s14, 1
    %p32 = por %p30, %p31
    %p33 = scmp.ne.s32.totalorder %s22, %s23
    %p34 = scmp.eq.s32.totalorder %s14, 0
    %p35 = por %p33, %p34
    %p36 = scmp.ne.s32.totalorder %s22, %s23
    %p37 = scmp.eq.s32.totalorder %s15, 1
    %p38 = por %p36, %p37
    %p40 = scmp.ne.s32.totalorder %s23, %s39
    %p41 = scmp.eq.s32.totalorder %s15, 0
    %p42 = por %p40, %p41
    %s44 = sadd.s32 %s43, 1
    %p47 = scmp.eq.s32.totalorder %s9, 1
    %p48 = scmp.ne.s32.totalorder %s43, %s45
    %p49 = scmp.eq.s32.totalorder %s9, 0
    %p50 = por %p48, %p49
    %p51 = scmp.ne.s32.totalorder %s43, %s45
    %p52 = scmp.eq.s32.totalorder %s14, 1
    %p53 = por %p51, %p52
    %p54 = scmp.ne.s32.totalorder %s45, %s46
    %p55 = scmp.eq.s32.totalorder %s14, 0
    %p56 = por %p54, %p55
    %p57 = scmp.ne.s32.totalorder %s45, %s46
    %p58 = scmp.eq.s32.totalorder %s15, 1
    %p59 = por %p57, %p58
    %p61 = scmp.ne.s32.totalorder %s46, %s60
    %p62 = scmp.eq.s32.totalorder %s15, 0
    %p63 = por %p61, %p62
    %s65 = sadd.s32 %s64, 1
    %p68 = scmp.eq.s32.totalorder %s9, 1
    %p69 = scmp.ne.s32.totalorder %s64, %s66
    %p70 = scmp.eq.s32.totalorder %s9, 0
    %p71 = por %p69, %p70
    %p72 = scmp.ne.s32.totalorder %s64, %s66
    %p73 = scmp.eq.s32.totalorder %s14, 1
    %p74 = por %p72, %p73
    %p75 = scmp.ne.s32.totalorder %s66, %s67
    %p76 = scmp.eq.s32.totalorder %s14, 0
    %p77 = por %p75, %p76
    %p78 = scmp.ne.s32.totalorder %s66, %s67
    %p79 = scmp.eq.s32.totalorder %s15, 1
    %p80 = por %p78, %p79
    %p82 = scmp.ne.s32.totalorder %s67, %s81
    %p83 = scmp.eq.s32.totalorder %s15, 0
    %p84 = por %p82, %p83
    %s85 = ssub.s32 %s9, %s16
    %p86 = scmp.eq.s32.totalorder %s85, 0
    %s88 = sadd.s32 %s87, 1
    %s89 = scalar_select %p86, %s87, %s88
    %p92 = pneg %p86
    %p93 = scmp.eq.s32.totalorder %s9, 1
    %p94 = por %p92, %p93
    %p95 = scmp.ne.s32.totalorder %s87, %s90
    %p96 = scmp.eq.s32.totalorder %s9, 0
    %p97 = por %p95, %p96
    %p98 = scmp.ne.s32.totalorder %s87, %s90
    %p99 = scmp.eq.s32.totalorder %s14, 1
    %p100 = por %p98, %p99
    %p101 = scmp.ne.s32.totalorder %s90, %s91
    %p102 = scmp.eq.s32.totalorder %s14, 0
    %p103 = por %p101, %p102
    %p104 = scmp.ne.s32.totalorder %s90, %s91
    %p105 = scmp.eq.s32.totalorder %s15, 1
    %p106 = por %p104, %p105
    %p108 = scmp.ne.s32.totalorder %s91, %s107
    %p109 = scmp.eq.s32.totalorder %s15, 0
    %p110 = por %p108, %p109
    %p111 = scmp.le.s32.totalorder 1, %s9
    %p112 = scmp.lt.s32.totalorder %s9, 3
    %p113 = pnand %p111, %p112
    %p114 = pneg %p113
    // Predicated region
    $region9: #{net_forward.3} parent=5 // pred_check
      _
    $region10: #{net_forward.3} parent=5 // pred_check_branch
      %116 = sbr.rel (%p113) target = $region12
    $region11: #{net_forward.3} parent=5 // pred_region
      %s117 = ssub.s32 %s9, 1
      // Predicated region
      $region13: #{net_forward.3} parent=11 // pred_check
        %p118 = pneg %p56
      $region14: #{net_forward.3} parent=11 // pred_check_branch
        %120 = sbr.rel (%p118) target = $region16
      $region15: #{net_forward.3} parent=11 // pred_region
        _
      $region16: #{net_forward.3} parent=11 // pred_fallthru
        _
      // Predicated region
      $region17: #{net_forward.3} parent=11 // pred_check
        %p121 = pneg %p77
      $region18: #{net_forward.3} parent=11 // pred_check_branch
        %123 = sbr.rel (%p121) target = $region20
      $region19: #{net_forward.3} parent=11 // pred_region
        _
      $region20: #{net_forward.3} parent=11 // pred_fallthru
        _
    $region12: #{net_forward.3} parent=5 // pred_fallthru
      _
    %p124 = scmp.lt.s32.totalorder %s9, 2
    // Predicated region
    $region21: #{net_forward.3} parent=5 // pred_check
      %p125 = pneg %p124
    $region22: #{net_forward.3} parent=5 // pred_check_branch
      %127 = sbr.rel (%p125) target = $region24
    $region23: #{net_forward.3} parent=5 // pred_region
      // Predicated region
      $region25: #{net_forward.3} parent=23 // pred_check
        %p128 = pneg %p29
      $region26: #{net_forward.3} parent=23 // pred_check_branch
        %130 = sbr.rel (%p128) target = $region28
      $region27: #{net_forward.3} parent=23 // pred_region
        %p131 = scmp.lt.s32.totalorder %s9, 1
        %s132 = scalar_select %p131, %s9, 1
        %s133 = smul.addr %s132, 60
        %s134 = smul.addr %s133, 4
        %s135 = scalar_lea.vmem %s0, %s134
      $region28: #{net_forward.3} parent=23 // pred_fallthru
        _
    $region24: #{net_forward.3} parent=5 // pred_fallthru
      _
    %p136 = scmp.le.s32.totalorder 1, %s9
    %p137 = scmp.lt.s32.totalorder %s9, 3
    %p138 = pnand %p136, %p137
    %p139 = pneg %p138
    // Predicated region
    $region29: #{net_forward.3} parent=5 // pred_check
      _
    $region30: #{net_forward.3} parent=5 // pred_check_branch
      %141 = sbr.rel (%p138) target = $region32
    $region31: #{net_forward.3} parent=5 // pred_region
      %s142 = ssub.s32 %s9, 1
      %p143 = scmp.lt.s32.totalorder %s14, 1
      %s144 = scalar_select %p143, %s14, 1
      %s145 = smul.addr %s144, 60
      %s146 = smul.addr %s145, 4
      %s147 = scalar_lea.vmem %s0, %s146
      %p148 = pneg %p35
      %p149 = pneg %p32
      %p150 = pneg %p56
      %p151 = pneg %p53
      %p152 = pneg %p77
      %p153 = pneg %p74
      %p154 = pneg %p103
      %p155 = pneg %p100
      %p156 = scmp.lt.s32.totalorder %s14, 1
      %s157 = scalar_select %p156, %s14, 1
      %s158 = smul.addr %s157, 28
      %s159 = smul.addr %s158, 4
      %s160 = scalar_lea.vmem %s3, %s159
      %p161 = scmp.lt.s32.totalorder %s14, 1
      %s162 = scalar_select %p161, %s14, 1
      %s163 = smul.addr %s162, 60
      %s164 = smul.addr %s163, 4
      %s165 = scalar_lea.vmem %s0, %s164
      %p166 = scmp.lt.s32.totalorder %s14, 1
      %s167 = scalar_select %p166, %s14, 1
      %s168 = smul.addr %s167, 28
      %s169 = smul.addr %s168, 4
      %s170 = scalar_lea.vmem %s3, %s169
      %v172 = vld [vmem:[%s165] sm:$0xf]
      %v173 = vld [vmem:[%s165 + $0x4] sm:$0xf]
      %v174 = vld [vmem:[%s165 + $0x8] sm:$0xf]
      %v175 = vld [vmem:[%s165 + $0xc] sm:$0xf]
      %v176 = vld [vmem:[%s165 + $0x10] sm:$0xf]
      %v177 = vld [vmem:[%s165 + $0x14] sm:$0xf]
      %v178 = vld [vmem:[%s165 + $0x18] sm:$0xf]
      %v179 = vld [vmem:[%s165 + $0x1c] sm:$0xf]
      %v180 = vld [vmem:[%s165 + $0x20] sm:$0xf]
      %v181 = vld [vmem:[%s165 + $0x24] sm:$0xf]
      %v182 = vld [vmem:[%s165 + $0x28] sm:$0xf]
      %v183 = vld [vmem:[%s165 + $0x2c] sm:$0xf]
      %v184 = vld [vmem:[%s165 + $0x30] sm:$0xf]
      %v185 = vld [vmem:[%s165 + $0x34] sm:$0xf]
      %v186 = vld [vmem:[%s165 + $0x38] sm:$0xf]
      %v187 = vld [vmem:[%s165 + $0x3c] sm:$0xf]
      %v188 = vld [vmem:[%s165 + $0x40] sm:$0xf]
      %v189 = vld [vmem:[%s165 + $0x44] sm:$0xf]
      %v190 = vld [vmem:[%s165 + $0x48] sm:$0xf]
      %v191 = vld [vmem:[%s165 + $0x4c] sm:$0xf]
      %v192 = vld [vmem:[%s165 + $0x50] sm:$0xf]
      %v193 = vld [vmem:[%s165 + $0x54] sm:$0xf]
      %v194 = vld [vmem:[%s165 + $0x58] sm:$0xf]
      %v195 = vld [vmem:[%s165 + $0x5c] sm:$0xf]
      %v196 = vld [vmem:[%s165 + $0x60] sm:$0xf]
      %v197 = vld [vmem:[%s165 + $0x64] sm:$0xf]
      %v198 = vld [vmem:[%s165 + $0x68] sm:$0xf]
      %v199 = vld [vmem:[%s165 + $0x6c] sm:$0xf]
      %v200 = vld [vmem:[%s165 + $0x70] sm:$0xf]
      %v201 = vld [vmem:[%s165 + $0x74] sm:$0xf]
      %v202 = vld [vmem:[%s165 + $0x78] sm:$0xf]
      %v203 = vld [vmem:[%s165 + $0x7c] sm:$0xf]
      %v204 = vld [vmem:[%s165 + $0x80] sm:$0xf]
      %v205 = vld [vmem:[%s165 + $0x84] sm:$0xf]
      %v206 = vld [vmem:[%s165 + $0x88] sm:$0xf]
      %v207 = vld [vmem:[%s165 + $0x8c] sm:$0xf]
      %v208 = vld [vmem:[%s165 + $0x90] sm:$0xf]
      %v209 = vld [vmem:[%s165 + $0x94] sm:$0xf]
      %v210 = vld [vmem:[%s165 + $0x98] sm:$0xf]
      %v211 = vld [vmem:[%s165 + $0x9c] sm:$0xf]
      %v212 = vld [vmem:[%s165 + $0xa0] sm:$0xf]
      %v213 = vld [vmem:[%s165 + $0xa4] sm:$0xf]
      %v214 = vld [vmem:[%s165 + $0xa8] sm:$0xf]
      %v215 = vld [vmem:[%s165 + $0xac] sm:$0xf]
      %v216 = vld [vmem:[%s165 + $0xb0] sm:$0xf]
      %v217 = vld [vmem:[%s165 + $0xb4] sm:$0xf]
      %v218 = vld [vmem:[%s165 + $0xb8] sm:$0xf]
      %v219 = vld [vmem:[%s165 + $0xbc] sm:$0xf]
      %v220 = vld [vmem:[%s165 + $0xc0] sm:$0xf]
      %v221 = vld [vmem:[%s165 + $0xc4] sm:$0xf]
      %v222 = vld [vmem:[%s165 + $0xc8] sm:$0xf]
      %v223 = vld [vmem:[%s165 + $0xcc] sm:$0xf]
      %v224 = vld [vmem:[%s165 + $0xd0] sm:$0xf]
      %v225 = vld [vmem:[%s165 + $0xd4] sm:$0xf]
      %v226 = vld [vmem:[%s165 + $0xd8] sm:$0xf]
      %v227 = vld [vmem:[%s165 + $0xdc] sm:$0xf]
      %v228 = vld [vmem:[%s165 + $0xe0] sm:$0xf]
      %v229 = vld [vmem:[%s165 + $0xe4] sm:$0xf]
      %v230 = vld [vmem:[%s165 + $0xe8] sm:$0xf]
      %v231 = vld [vmem:[%s165 + $0xec] sm:$0xf]
      %v232 = vld [vmem:[%s1] sm:$0xf]
      %v233 = vld [vmem:[%s1 + $0x4] sm:$0xf]
      %v234 = vld [vmem:[%s1 + $0x8] sm:$0xf]
      %v235 = vld [vmem:[%s1 + $0xc] sm:$0xf]
      %v236 = vld [vmem:[%s1 + $0x10] sm:$0x3]
      %v297 = vunpack.c.l.b16 %v172
      %v298 = vunpack.c.l.b16 %v173
      %v299 = vunpack.c.l.b16 %v174
      %v300 = vunpack.c.l.b16 %v175
      %v301 = vunpack.c.l.b16 %v176
      %v302 = vunpack.c.l.b16 %v177
      %v303 = vunpack.c.l.b16 %v178
      %v304 = vunpack.c.l.b16 %v179
      %v305 = vunpack.c.l.b16 %v180
      %v306 = vunpack.c.l.b16 %v181
      %v307 = vunpack.c.l.b16 %v182
      %v308 = vunpack.c.l.b16 %v183
      %v309 = vunpack.c.l.b16 %v184
      %v310 = vunpack.c.l.b16 %v185
      %v311 = vunpack.c.l.b16 %v186
      %v312 = vunpack.c.l.b16 %v187
      %v313 = vunpack.c.l.b16 %v188
      %v314 = vunpack.c.l.b16 %v189
      %v315 = vunpack.c.l.b16 %v190
      %v316 = vunpack.c.l.b16 %v191
      %v317 = vunpack.c.l.b16 %v192
      %v318 = vunpack.c.l.b16 %v193
      %v319 = vunpack.c.l.b16 %v194
      %v320 = vunpack.c.l.b16 %v195
      %v321 = vunpack.c.l.b16 %v196
      %v322 = vunpack.c.l.b16 %v197
      %v323 = vunpack.c.l.b16 %v198
      %v324 = vunpack.c.l.b16 %v199
      %v325 = vunpack.c.l.b16 %v200
      %v326 = vunpack.c.l.b16 %v201
      %v327 = vunpack.c.l.b16 %v202
      %v328 = vunpack.c.l.b16 %v203
      %v329 = vunpack.c.l.b16 %v204
      %v330 = vunpack.c.l.b16 %v205
      %v331 = vunpack.c.l.b16 %v206
      %v332 = vunpack.c.l.b16 %v207
      %v333 = vunpack.c.l.b16 %v208
      %v334 = vunpack.c.l.b16 %v209
      %v335 = vunpack.c.l.b16 %v210
      %v336 = vunpack.c.l.b16 %v211
      %v337 = vunpack.c.l.b16 %v212
      %v338 = vunpack.c.l.b16 %v213
      %v339 = vunpack.c.l.b16 %v214
      %v340 = vunpack.c.l.b16 %v215
      %v341 = vunpack.c.l.b16 %v216
      %v342 = vunpack.c.l.b16 %v217
      %v343 = vunpack.c.l.b16 %v218
      %v344 = vunpack.c.l.b16 %v219
      %v345 = vunpack.c.l.b16 %v220
      %v346 = vunpack.c.l.b16 %v221
      %v347 = vunpack.c.l.b16 %v222
      %v348 = vunpack.c.l.b16 %v223
      %v349 = vunpack.c.l.b16 %v224
      %v350 = vunpack.c.l.b16 %v225
      %v351 = vunpack.c.l.b16 %v226
      %v352 = vunpack.c.l.b16 %v227
      %v353 = vunpack.c.l.b16 %v228
      %v354 = vunpack.c.l.b16 %v229
      %v355 = vunpack.c.l.b16 %v230
      %v356 = vunpack.c.l.b16 %v231
      %v357 = vpack.c.b16 %v298, %v297
      %v358 = vpack.c.b16 %v300, %v299
      %v359 = vpack.c.b16 %v302, %v301
      %v360 = vpack.c.b16 %v304, %v303
      %v361 = vpack.c.b16 %v306, %v305
      %v362 = vpack.c.b16 %v308, %v307
      %v363 = vpack.c.b16 %v310, %v309
      %v364 = vpack.c.b16 %v312, %v311
      %v365 = vpack.c.b16 %v314, %v313
      %v366 = vpack.c.b16 %v316, %v315
      %v367 = vpack.c.b16 %v318, %v317
      %v368 = vpack.c.b16 %v320, %v319
      %v369 = vpack.c.b16 %v322, %v321
      %v370 = vpack.c.b16 %v324, %v323
      %v371 = vpack.c.b16 %v326, %v325
      %v372 = vpack.c.b16 %v328, %v327
      %v373 = vpack.c.b16 %v330, %v329
      %v374 = vpack.c.b16 %v332, %v331
      %v375 = vpack.c.b16 %v334, %v333
      %v376 = vpack.c.b16 %v336, %v335
      %v377 = vpack.c.b16 %v338, %v337
      %v378 = vpack.c.b16 %v340, %v339
      %v379 = vpack.c.b16 %v342, %v341
      %v380 = vpack.c.b16 %v344, %v343
      %v381 = vpack.c.b16 %v346, %v345
      %v382 = vpack.c.b16 %v348, %v347
      %v383 = vpack.c.b16 %v350, %v349
      %v384 = vpack.c.b16 %v352, %v351
      %v385 = vpack.c.b16 %v354, %v353
      %v386 = vpack.c.b16 %v356, %v355
      %v392 = vunpack.c.l.b16 %v232
      %v393 = vunpack.c.l.b16 %v233
      %v394 = vunpack.c.l.b16 %v234
      %v395 = vunpack.c.l.b16 %v235
      %v396 = vunpack.c.l.b16 %v236
      %v397 = vpack.c.b16 %v393, %v392
      %v398 = vpack.c.b16 %v395, %v394
      %v399 = vpack.c.b16 %v396, %v396
      %vm402 = vcmask 293888
      %v404 = vsel %vm402, %v357, 0
      %v407 = vsel %vm402, %v358, 0
      %v410 = vsel %vm402, %v359, 0
      %v413 = vsel %vm402, %v360, 0
      %v416 = vsel %vm402, %v361, 0
      %v419 = vsel %vm402, %v362, 0
      %v422 = vsel %vm402, %v363, 0
      %v425 = vsel %vm402, %v364, 0
      %v428 = vsel %vm402, %v365, 0
      %v431 = vsel %vm402, %v366, 0
      %v434 = vsel %vm402, %v367, 0
      %v437 = vsel %vm402, %v368, 0
      %v440 = vsel %vm402, %v369, 0
      %v443 = vsel %vm402, %v370, 0
      %v446 = vsel %vm402, %v371, 0
      %v449 = vsel %vm402, %v372, 0
      %v452 = vsel %vm402, %v373, 0
      %v455 = vsel %vm402, %v374, 0
      %v458 = vsel %vm402, %v375, 0
      %v461 = vsel %vm402, %v376, 0
      %v464 = vsel %vm402, %v377, 0
      %v467 = vsel %vm402, %v378, 0
      %v470 = vsel %vm402, %v379, 0
      %v473 = vsel %vm402, %v380, 0
      %v476 = vsel %vm402, %v381, 0
      %v479 = vsel %vm402, %v382, 0
      %v482 = vsel %vm402, %v383, 0
      %v485 = vsel %vm402, %v384, 0
      %v488 = vsel %vm402, %v385, 0
      %v491 = vsel %vm402, %v386, 0
      %vm493 = vcmask 1041408
      %v495 = vsel %vm493, %v399, 0
      %497 = vmatprep.subr.bf16.mxu0 0
      %498 = vmatpush1.bf16.msra.mxu0 %v397
      %499 = vmatprep.subr.bf16.mxu0 0
      %500 = vmatpush1.bf16.msra.mxu0 %v398
      %501 = vmatprep.subr.bf16.mxu0 0
      %502 = vmatpush1.bf16.msra.mxu0 %v495
      %503 = vmatprep.subr.bf16.mxu0 0
      %504 = vmatpush1.bf16.msra.mxu0 0
      %505 = vmatprep.subr.bf16.mxu0 0
      %506 = vmatpush1.bf16.msra.mxu0 0
      %507 = vmatprep.subr.bf16.mxu0 0
      %508 = vmatpush1.bf16.msra.mxu0 0
      %509 = vmatprep.subr.bf16.mxu0 0
      %510 = vmatpush1.bf16.msra.mxu0 0
      %511 = vmatprep.subr.bf16.mxu0 0
      %512 = vmatpush1.bf16.msra.mxu0 0
      %513 = vmatprep.subr.bf16.mxu0 0
      %514 = vmatpush1.bf16.msra.mxu0 0
      %515 = vmatprep.subr.bf16.mxu0 0
      %516 = vmatpush1.bf16.msra.mxu0 0
      %517 = vmatprep.subr.bf16.mxu0 0
      %518 = vmatpush1.bf16.msra.mxu0 0
      %519 = vmatprep.subr.bf16.mxu0 0
      %520 = vmatpush1.bf16.msra.mxu0 0
      %521 = vmatprep.subr.bf16.mxu0 0
      %522 = vmatpush1.bf16.msra.mxu0 0
      %523 = vmatprep.subr.bf16.mxu0 0
      %524 = vmatpush1.bf16.msra.mxu0 0
      %525 = vmatprep.subr.bf16.mxu0 0
      %526 = vmatpush1.bf16.msra.mxu0 0
      %527 = vmatprep.subr.bf16.mxu0 0
      %528 = vmatpush1.bf16.msra.mxu0 0
      %529 = vmatprep.mubr.bf16.mxu0 0
      %530 = vmatmul.mubr.bf16.gmra.mrb[0].mxu0 %v404
      %v531 = vpop.f32.mrb[0].mxu0
      %v532 = vadd.f32 0.0, %v531
      %v533 = vpop.f32.mrb[0].mxu0
      %v534 = vpop.f32.mrb[0].mxu0
      %v535 = vadd.f32 0.0, %v534
      %v536 = vpop.f32.mrb[0].mxu0
      %537 = vmatprep.mubr.bf16.mxu0 0
      %538 = vmatmul.mubr.bf16.gmra.mrb[0].mxu0 %v407
      %v539 = vpop.f32.mrb[0].mxu0
      %v540 = vadd.f32 0.0, %v539
      %v541 = vpop.f32.mrb[0].mxu0
      %v542 = vpop.f32.mrb[0].mxu0
      %v543 = vadd.f32 0.0, %v542
      %v544 = vpop.f32.mrb[0].mxu0
      %545 = vmatprep.mubr.bf16.mxu0 0
      %546 = vmatmul.mubr.bf16.gmra.mrb[0].mxu0 %v410
      %v547 = vpop.f32.mrb[0].mxu0
      %v548 = vadd.f32 0.0, %v547
      %v549 = vpop.f32.mrb[0].mxu0
      %v550 = vpop.f32.mrb[0].mxu0
      %v551 = vadd.f32 0.0, %v550
      %v552 = vpop.f32.mrb[0].mxu0
      %553 = vmatprep.mubr.bf16.mxu0 0
      %554 = vmatmul.mubr.bf16.gmra.mrb[0].mxu0 %v413
      %v555 = vpop.f32.mrb[0].mxu0
      %v556 = vadd.f32 0.0, %v555
      %v557 = vpop.f32.mrb[0].mxu0
      %v558 = vpop.f32.mrb[0].mxu0
      %v559 = vadd.f32 0.0, %v558
      %v560 = vpop.f32.mrb[0].mxu0
      %561 = vmatprep.mubr.bf16.mxu0 0
      %562 = vmatmul.mubr.bf16.gmra.mrb[0].mxu0 %v416
      %v563 = vpop.f32.mrb[0].mxu0
      %v564 = vadd.f32 0.0, %v563
      %v565 = vpop.f32.mrb[0].mxu0
      %v566 = vpop.f32.mrb[0].mxu0
      %v567 = vadd.f32 0.0, %v566
      %v568 = vpop.f32.mrb[0].mxu0
      %569 = vmatprep.mubr.bf16.mxu0 0
      %570 = vmatmul.mubr.bf16.gmra.mrb[0].mxu0 %v419
      %v571 = vpop.f32.mrb[0].mxu0
      %v572 = vadd.f32 0.0, %v571
      %v573 = vpop.f32.mrb[0].mxu0
      %v574 = vpop.f32.mrb[0].mxu0
      %v575 = vadd.f32 0.0, %v574
      %v576 = vpop.f32.mrb[0].mxu0
      %577 = vmatprep.mubr.bf16.mxu0 0
      %578 = vmatmul.mubr.bf16.gmra.mrb[0].mxu0 %v422
      %v579 = vpop.f32.mrb[0].mxu0
      %v580 = vadd.f32 0.0, %v579
      %v581 = vpop.f32.mrb[0].mxu0
      %v582 = vpop.f32.mrb[0].mxu0
      %v583 = vadd.f32 0.0, %v582
      %v584 = vpop.f32.mrb[0].mxu0
      %585 = vmatprep.mubr.bf16.mxu0 0
      %586 = vmatmul.mubr.bf16.gmra.mrb[0].mxu0 %v425
      %v587 = vpop.f32.mrb[0].mxu0
      %v588 = vadd.f32 0.0, %v587
      %v589 = vpop.f32.mrb[0].mxu0
      %v590 = vpop.f32.mrb[0].mxu0
      %v591 = vadd.f32 0.0, %v590
      %v592 = vpop.f32.mrb[0].mxu0
      %593 = vmatprep.mubr.bf16.mxu0 0
      %594 = vmatmul.mubr.bf16.gmra.mrb[0].mxu0 %v428
      %v595 = vpop.f32.mrb[0].mxu0
      %v596 = vadd.f32 0.0, %v595
      %v597 = vpop.f32.mrb[0].mxu0
      %v598 = vpop.f32.mrb[0].mxu0
      %v599 = vadd.f32 0.0, %v598
      %v600 = vpop.f32.mrb[0].mxu0
      %601 = vmatprep.mubr.bf16.mxu0 0
      %602 = vmatmul.mubr.bf16.gmra.mrb[0].mxu0 %v431
      %v603 = vpop.f32.mrb[0].mxu0
      %v604 = vadd.f32 0.0, %v603
      %v605 = vpop.f32.mrb[0].mxu0
      %v606 = vpop.f32.mrb[0].mxu0
      %v607 = vadd.f32 0.0, %v606
      %v608 = vpop.f32.mrb[0].mxu0
      %609 = vmatprep.mubr.bf16.mxu0 0
      %610 = vmatmul.mubr.bf16.gmra.mrb[0].mxu0 %v434
      %v611 = vpop.f32.mrb[0].mxu0
      %v612 = vadd.f32 0.0, %v611
      %v613 = vpop.f32.mrb[0].mxu0
      %v614 = vpop.f32.mrb[0].mxu0
      %v615 = vadd.f32 0.0, %v614
      %v616 = vpop.f32.mrb[0].mxu0
      %617 = vmatprep.mubr.bf16.mxu0 0
      %618 = vmatmul.mubr.bf16.gmra.mrb[0].mxu0 %v437
      %v619 = vpop.f32.mrb[0].mxu0
      %v620 = vadd.f32 0.0, %v619
      %v621 = vpop.f32.mrb[0].mxu0
      %v622 = vpop.f32.mrb[0].mxu0
      %v623 = vadd.f32 0.0, %v622
      %v624 = vpop.f32.mrb[0].mxu0
      %625 = vmatprep.mubr.bf16.mxu0 0
      %626 = vmatmul.mubr.bf16.gmra.mrb[0].mxu0 %v440
      %v627 = vpop.f32.mrb[0].mxu0
      %v628 = vadd.f32 0.0, %v627
      %v629 = vpop.f32.mrb[0].mxu0
      %v630 = vpop.f32.mrb[0].mxu0
      %v631 = vadd.f32 0.0, %v630
      %v632 = vpop.f32.mrb[0].mxu0
      %633 = vmatprep.mubr.bf16.mxu0 0
      %634 = vmatmul.mubr.bf16.gmra.mrb[0].mxu0 %v443
      %v635 = vpop.f32.mrb[0].mxu0
      %v636 = vadd.f32 0.0, %v635
      %v637 = vpop.f32.mrb[0].mxu0
      %v638 = vpop.f32.mrb[0].mxu0
      %v639 = vadd.f32 0.0, %v638
      %v640 = vpop.f32.mrb[0].mxu0
      %641 = vmatprep.mubr.bf16.mxu0 0
      %642 = vmatmul.mubr.bf16.gmra.mrb[0].mxu0 %v446
      %v643 = vpop.f32.mrb[0].mxu0
      %v644 = vadd.f32 0.0, %v643
      %v645 = vpop.f32.mrb[0].mxu0
      %v646 = vpop.f32.mrb[0].mxu0
      %v647 = vadd.f32 0.0, %v646
      %v648 = vpop.f32.mrb[0].mxu0
      %649 = vmatprep.mubr.bf16.mxu0 0
      %650 = vmatmul.mubr.bf16.gmra.mrb[0].mxu0 %v449
      %v651 = vpop.f32.mrb[0].mxu0
      %v652 = vadd.f32 0.0, %v651
      %v653 = vpop.f32.mrb[0].mxu0
      %v654 = vpop.f32.mrb[0].mxu0
      %v655 = vadd.f32 0.0, %v654
      %v656 = vpop.f32.mrb[0].mxu0
      %657 = vmatprep.mubr.bf16.mxu0 0
      %658 = vmatmul.mubr.bf16.gmra.mrb[0].mxu0 %v452
      %v659 = vpop.f32.mrb[0].mxu0
      %v660 = vadd.f32 0.0, %v659
      %v661 = vpop.f32.mrb[0].mxu0
      %v662 = vpop.f32.mrb[0].mxu0
      %v663 = vadd.f32 0.0, %v662
      %v664 = vpop.f32.mrb[0].mxu0
      %665 = vmatprep.mubr.bf16.mxu0 0
      %666 = vmatmul.mubr.bf16.gmra.mrb[0].mxu0 %v455
      %v667 = vpop.f32.mrb[0].mxu0
      %v668 = vadd.f32 0.0, %v667
      %v669 = vpop.f32.mrb[0].mxu0
      %v670 = vpop.f32.mrb[0].mxu0
      %v671 = vadd.f32 0.0, %v670
      %v672 = vpop.f32.mrb[0].mxu0
      %673 = vmatprep.mubr.bf16.mxu0 0
      %674 = vmatmul.mubr.bf16.gmra.mrb[0].mxu0 %v458
      %v675 = vpop.f32.mrb[0].mxu0
      %v676 = vadd.f32 0.0, %v675
      %v677 = vpop.f32.mrb[0].mxu0
      %v678 = vpop.f32.mrb[0].mxu0
      %v679 = vadd.f32 0.0, %v678
      %v680 = vpop.f32.mrb[0].mxu0
      %681 = vmatprep.mubr.bf16.mxu0 0
      %682 = vmatmul.mubr.bf16.gmra.mrb[0].mxu0 %v461
      %v683 = vpop.f32.mrb[0].mxu0
      %v684 = vadd.f32 0.0, %v683
      %v685 = vpop.f32.mrb[0].mxu0
      %v686 = vpop.f32.mrb[0].mxu0
      %v687 = vadd.f32 0.0, %v686
      %v688 = vpop.f32.mrb[0].mxu0
      %689 = vmatprep.mubr.bf16.mxu0 0
      %690 = vmatmul.mubr.bf16.gmra.mrb[0].mxu0 %v464
      %v691 = vpop.f32.mrb[0].mxu0
      %v692 = vadd.f32 0.0, %v691
      %v693 = vpop.f32.mrb[0].mxu0
      %v694 = vpop.f32.mrb[0].mxu0
      %v695 = vadd.f32 0.0, %v694
      %v696 = vpop.f32.mrb[0].mxu0
      %697 = vmatprep.mubr.bf16.mxu0 0
      %698 = vmatmul.mubr.bf16.gmra.mrb[0].mxu0 %v467
      %v699 = vpop.f32.mrb[0].mxu0
      %v700 = vadd.f32 0.0, %v699
      %v701 = vpop.f32.mrb[0].mxu0
      %v702 = vpop.f32.mrb[0].mxu0
      %v703 = vadd.f32 0.0, %v702
      %v704 = vpop.f32.mrb[0].mxu0
      %705 = vmatprep.mubr.bf16.mxu0 0
      %706 = vmatmul.mubr.bf16.gmra.mrb[0].mxu0 %v470
      %v707 = vpop.f32.mrb[0].mxu0
      %v708 = vadd.f32 0.0, %v707
      %v709 = vpop.f32.mrb[0].mxu0
      %v710 = vpop.f32.mrb[0].mxu0
      %v711 = vadd.f32 0.0, %v710
      %v712 = vpop.f32.mrb[0].mxu0
      %713 = vmatprep.mubr.bf16.mxu0 0
      %714 = vmatmul.mubr.bf16.gmra.mrb[0].mxu0 %v473
      %v715 = vpop.f32.mrb[0].mxu0
      %v716 = vadd.f32 0.0, %v715
      %v717 = vpop.f32.mrb[0].mxu0
      %v718 = vpop.f32.mrb[0].mxu0
      %v719 = vadd.f32 0.0, %v718
      %v720 = vpop.f32.mrb[0].mxu0
      %721 = vmatprep.mubr.bf16.mxu0 0
      %722 = vmatmul.mubr.bf16.gmra.mrb[0].mxu0 %v476
      %v723 = vpop.f32.mrb[0].mxu0
      %v724 = vadd.f32 0.0, %v723
      %v725 = vpop.f32.mrb[0].mxu0
      %v726 = vpop.f32.mrb[0].mxu0
      %v727 = vadd.f32 0.0, %v726
      %v728 = vpop.f32.mrb[0].mxu0
      %729 = vmatprep.mubr.bf16.mxu0 0
      %730 = vmatmul.mubr.bf16.gmra.mrb[0].mxu0 %v479
      %v731 = vpop.f32.mrb[0].mxu0
      %v732 = vadd.f32 0.0, %v731
      %v733 = vpop.f32.mrb[0].mxu0
      %v734 = vpop.f32.mrb[0].mxu0
      %v735 = vadd.f32 0.0, %v734
      %v736 = vpop.f32.mrb[0].mxu0
      %737 = vmatprep.mubr.bf16.mxu0 0
      %738 = vmatmul.mubr.bf16.gmra.mrb[0].mxu0 %v482
      %v739 = vpop.f32.mrb[0].mxu0
      %v740 = vadd.f32 0.0, %v739
      %v741 = vpop.f32.mrb[0].mxu0
      %v742 = vpop.f32.mrb[0].mxu0
      %v743 = vadd.f32 0.0, %v742
      %v744 = vpop.f32.mrb[0].mxu0
      %745 = vmatprep.mubr.bf16.mxu0 0
      %746 = vmatmul.mubr.bf16.gmra.mrb[0].mxu0 %v485
      %v747 = vpop.f32.mrb[0].mxu0
      %v748 = vadd.f32 0.0, %v747
      %v749 = vpop.f32.mrb[0].mxu0
      %v750 = vpop.f32.mrb[0].mxu0
      %v751 = vadd.f32 0.0, %v750
      %v752 = vpop.f32.mrb[0].mxu0
      %753 = vmatprep.mubr.bf16.mxu0 0
      %754 = vmatmul.mubr.bf16.gmra.mrb[0].mxu0 %v488
      %v755 = vpop.f32.mrb[0].mxu0
      %v756 = vadd.f32 0.0, %v755
      %v757 = vpop.f32.mrb[0].mxu0
      %v758 = vpop.f32.mrb[0].mxu0
      %v759 = vadd.f32 0.0, %v758
      %v760 = vpop.f32.mrb[0].mxu0
      %761 = vmatprep.mubr.bf16.mxu0 0
      %762 = vmatmul.mubr.bf16.gmra.mrb[0].mxu0 %v491
      %v763 = vpop.f32.mrb[0].mxu0
      %v764 = vadd.f32 0.0, %v763
      %v765 = vpop.f32.mrb[0].mxu0
      %v766 = vpop.f32.mrb[0].mxu0
      %v767 = vadd.f32 0.0, %v766
      %v768 = vpop.f32.mrb[0].mxu0
      %769 = vdwg.mxu0
      %v770 = vld [vmem:[%s2] sm:$0x1]
      %v772 = vlaneseq
      %v773 = vshrl.u32 %v772, 7
      %v774 = vsub.s32 0, %v773
      %v775 = vrot.slane %v770, %v774
      %v777 = vadd.f32 %v532, %v775
      %v778 = vadd.f32 %v535, %v775
      %v779 = vadd.f32 %v540, %v775
      %v780 = vadd.f32 %v543, %v775
      %v781 = vadd.f32 %v548, %v775
      %v782 = vadd.f32 %v551, %v775
      %v783 = vadd.f32 %v556, %v775
      %v784 = vadd.f32 %v559, %v775
      %v785 = vadd.f32 %v564, %v775
      %v786 = vadd.f32 %v567, %v775
      %v787 = vadd.f32 %v572, %v775
      %v788 = vadd.f32 %v575, %v775
      %v789 = vadd.f32 %v580, %v775
      %v790 = vadd.f32 %v583, %v775
      %v791 = vadd.f32 %v588, %v775
      %v792 = vadd.f32 %v591, %v775
      %v793 = vadd.f32 %v596, %v775
      %v794 = vadd.f32 %v599, %v775
      %v795 = vadd.f32 %v604, %v775
      %v796 = vadd.f32 %v607, %v775
      %v797 = vadd.f32 %v612, %v775
      %v798 = vadd.f32 %v615, %v775
      %v799 = vadd.f32 %v620, %v775
      %v800 = vadd.f32 %v623, %v775
      %v801 = vadd.f32 %v628, %v775
      %v802 = vadd.f32 %v631, %v775
      %v803 = vadd.f32 %v636, %v775
      %v804 = vadd.f32 %v639, %v775
      %v805 = vadd.f32 %v644, %v775
      %v806 = vadd.f32 %v647, %v775
      %v807 = vadd.f32 %v652, %v775
      %v808 = vadd.f32 %v655, %v775
      %v809 = vadd.f32 %v660, %v775
      %v810 = vadd.f32 %v663, %v775
      %v811 = vadd.f32 %v668, %v775
      %v812 = vadd.f32 %v671, %v775
      %v813 = vadd.f32 %v676, %v775
      %v814 = vadd.f32 %v679, %v775
      %v815 = vadd.f32 %v684, %v775
      %v816 = vadd.f32 %v687, %v775
      %v817 = vadd.f32 %v692, %v775
      %v818 = vadd.f32 %v695, %v775
      %v819 = vadd.f32 %v700, %v775
      %v820 = vadd.f32 %v703, %v775
      %v821 = vadd.f32 %v708, %v775
      %v822 = vadd.f32 %v711, %v775
      %v823 = vadd.f32 %v716, %v775
      %v824 = vadd.f32 %v719, %v775
      %v825 = vadd.f32 %v724, %v775
      %v826 = vadd.f32 %v727, %v775
      %v827 = vadd.f32 %v732, %v775
      %v828 = vadd.f32 %v735, %v775
      %v829 = vadd.f32 %v740, %v775
      %v830 = vadd.f32 %v743, %v775
      %v831 = vadd.f32 %v748, %v775
      %v832 = vadd.f32 %v751, %v775
      %v833 = vadd.f32 %v756, %v775
      %v834 = vadd.f32 %v759, %v775
      %v835 = vadd.f32 %v764, %v775
      %v836 = vadd.f32 %v767, %v775
      %v837 = vmax.f32 %v777, 0.0
      %v838 = vmax.f32 %v778, 0.0
      %v839 = vmax.f32 %v779, 0.0
      %v840 = vmax.f32 %v780, 0.0
      %v841 = vmax.f32 %v781, 0.0
      %v842 = vmax.f32 %v782, 0.0
      %v843 = vmax.f32 %v783, 0.0
      %v844 = vmax.f32 %v784, 0.0
      %v845 = vmax.f32 %v785, 0.0
      %v846 = vmax.f32 %v786, 0.0
      %v847 = vmax.f32 %v787, 0.0
      %v848 = vmax.f32 %v788, 0.0
      %v849 = vmax.f32 %v789, 0.0
      %v850 = vmax.f32 %v790, 0.0
      %v851 = vmax.f32 %v791, 0.0
      %v852 = vmax.f32 %v792, 0.0
      %v853 = vmax.f32 %v793, 0.0
      %v854 = vmax.f32 %v794, 0.0
      %v855 = vmax.f32 %v795, 0.0
      %v856 = vmax.f32 %v796, 0.0
      %v857 = vmax.f32 %v797, 0.0
      %v858 = vmax.f32 %v798, 0.0
      %v859 = vmax.f32 %v799, 0.0
      %v860 = vmax.f32 %v800, 0.0
      %v861 = vmax.f32 %v801, 0.0
      %v862 = vmax.f32 %v802, 0.0
      %v863 = vmax.f32 %v803, 0.0
      %v864 = vmax.f32 %v804, 0.0
      %v865 = vmax.f32 %v805, 0.0
      %v866 = vmax.f32 %v806, 0.0
      %v867 = vmax.f32 %v807, 0.0
      %v868 = vmax.f32 %v808, 0.0
      %v869 = vmax.f32 %v809, 0.0
      %v870 = vmax.f32 %v810, 0.0
      %v871 = vmax.f32 %v811, 0.0
      %v872 = vmax.f32 %v812, 0.0
      %v873 = vmax.f32 %v813, 0.0
      %v874 = vmax.f32 %v814, 0.0
      %v875 = vmax.f32 %v815, 0.0
      %v876 = vmax.f32 %v816, 0.0
      %v877 = vmax.f32 %v817, 0.0
      %v878 = vmax.f32 %v818, 0.0
      %v879 = vmax.f32 %v819, 0.0
      %v880 = vmax.f32 %v820, 0.0
      %v881 = vmax.f32 %v821, 0.0
      %v882 = vmax.f32 %v822, 0.0
      %v883 = vmax.f32 %v823, 0.0
      %v884 = vmax.f32 %v824, 0.0
      %v885 = vmax.f32 %v825, 0.0
      %v886 = vmax.f32 %v826, 0.0
      %v887 = vmax.f32 %v827, 0.0
      %v888 = vmax.f32 %v828, 0.0
      %v889 = vmax.f32 %v829, 0.0
      %v890 = vmax.f32 %v830, 0.0
      %v891 = vmax.f32 %v831, 0.0
      %v892 = vmax.f32 %v832, 0.0
      %v893 = vmax.f32 %v833, 0.0
      %v894 = vmax.f32 %v834, 0.0
      %v895 = vmax.f32 %v835, 0.0
      %v896 = vmax.f32 %v836, 0.0
      %897 = vst [vmem:[#allocation2] sm:$0xff] %v837
      %898 = vst [vmem:[#allocation2 + $0x8] sm:$0xff] %v838
      %899 = vst [vmem:[#allocation2 + $0x10] sm:$0xff] %v839
      %900 = vst [vmem:[#allocation2 + $0x18] sm:$0xff] %v840
      %901 = vst [vmem:[#allocation2 + $0x20] sm:$0xff] %v841
      %902 = vst [vmem:[#allocation2 + $0x28] sm:$0xff] %v842
      %903 = vst [vmem:[#allocation2 + $0x30] sm:$0xff] %v843
      %904 = vst [vmem:[#allocation2 + $0x38] sm:$0xff] %v844
      %905 = vst [vmem:[#allocation2 + $0x40] sm:$0xff] %v845
      %906 = vst [vmem:[#allocation2 + $0x48] sm:$0xff] %v846
      %907 = vst [vmem:[#allocation2 + $0x50] sm:$0xff] %v847
      %908 = vst [vmem:[#allocation2 + $0x58] sm:$0xff] %v848
      %909 = vst [vmem:[#allocation2 + $0x60] sm:$0xff] %v849
      %910 = vst [vmem:[#allocation2 + $0x68] sm:$0xff] %v850
      %911 = vst [vmem:[#allocation2 + $0x70] sm:$0xff] %v851
      %912 = vst [vmem:[#allocation2 + $0x78] sm:$0xff] %v852
      %913 = vst [vmem:[#allocation2 + $0x80] sm:$0xff] %v853
      %914 = vst [vmem:[#allocation2 + $0x88] sm:$0xff] %v854
      %915 = vst [vmem:[#allocation2 + $0x90] sm:$0xff] %v855
      %916 = vst [vmem:[#allocation2 + $0x98] sm:$0xff] %v856
      %917 = vst [vmem:[#allocation2 + $0xa0] sm:$0xff] %v857
      %918 = vst [vmem:[#allocation2 + $0xa8] sm:$0xff] %v858
      %919 = vst [vmem:[#allocation2 + $0xb0] sm:$0xff] %v859
      %920 = vst [vmem:[#allocation2 + $0xb8] sm:$0xff] %v860
      %921 = vst [vmem:[#allocation2 + $0xc0] sm:$0xff] %v861
      %922 = vst [vmem:[#allocation2 + $0xc8] sm:$0xff] %v862
      %923 = vst [vmem:[#allocation2 + $0xd0] sm:$0xff] %v863
      %924 = vst [vmem:[#allocation2 + $0xd8] sm:$0xff] %v864
      %925 = vst [vmem:[#allocation2 + $0xe0] sm:$0xff] %v865
      %926 = vst [vmem:[#allocation2 + $0xe8] sm:$0xff] %v866
      %927 = vst [vmem:[#allocation2 + $0xf0] sm:$0xff] %v867
      %928 = vst [vmem:[#allocation2 + $0xf8] sm:$0xff] %v868
      %929 = vst [vmem:[#allocation2 + $0x100] sm:$0xff] %v869
      %930 = vst [vmem:[#allocation2 + $0x108] sm:$0xff] %v870
      %931 = vst [vmem:[#allocation2 + $0x110] sm:$0xff] %v871
      %932 = vst [vmem:[#allocation2 + $0x118] sm:$0xff] %v872
      %933 = vst [vmem:[#allocation2 + $0x120] sm:$0xff] %v873
      %934 = vst [vmem:[#allocation2 + $0x128] sm:$0xff] %v874
      %935 = vst [vmem:[#allocation2 + $0x130] sm:$0xff] %v875
      %936 = vst [vmem:[#allocation2 + $0x138] sm:$0xff] %v876
      %937 = vst [vmem:[#allocation2 + $0x140] sm:$0xff] %v877
      %938 = vst [vmem:[#allocation2 + $0x148] sm:$0xff] %v878
      %939 = vst [vmem:[#allocation2 + $0x150] sm:$0xff] %v879
      %940 = vst [vmem:[#allocation2 + $0x158] sm:$0xff] %v880
      %941 = vst [vmem:[#allocation2 + $0x160] sm:$0xff] %v881
      %942 = vst [vmem:[#allocation2 + $0x168] sm:$0xff] %v882
      %943 = vst [vmem:[#allocation2 + $0x170] sm:$0xff] %v883
      %944 = vst [vmem:[#allocation2 + $0x178] sm:$0xff] %v884
      %945 = vst [vmem:[#allocation2 + $0x180] sm:$0xff] %v885
      %946 = vst [vmem:[#allocation2 + $0x188] sm:$0xff] %v886
      %947 = vst [vmem:[#allocation2 + $0x190] sm:$0xff] %v887
      %948 = vst [vmem:[#allocation2 + $0x198] sm:$0xff] %v888
      %949 = vst [vmem:[#allocation2 + $0x1a0] sm:$0xff] %v889
      %950 = vst [vmem:[#allocation2 + $0x1a8] sm:$0xff] %v890
      %951 = vst [vmem:[#allocation2 + $0x1b0] sm:$0xff] %v891
      %952 = vst [vmem:[#allocation2 + $0x1b8] sm:$0xff] %v892
      %953 = vst [vmem:[#allocation2 + $0x1c0] sm:$0xff] %v893
      %954 = vst [vmem:[#allocation2 + $0x1c8] sm:$0xff] %v894
      %955 = vst [vmem:[#allocation2 + $0x1d0] sm:$0xff] %v895
      %956 = vst [vmem:[#allocation2 + $0x1d8] sm:$0xff] %v896
      %v957 = vld [vmem:[#allocation2] sm:$0xff]
      %v958 = vld [vmem:[#allocation2 + $0x8] sm:$0xff]
      %s959 = scalar_lea.vmem [#allocation2], 16
      %v960 = vld [vmem:[%s959] sm:$0xff]
      %v961 = vld [vmem:[%s959 + $0x8] sm:$0xff]
      %s962 = scalar_lea.vmem [#allocation2], 32
      %v963 = vld [vmem:[%s962] sm:$0xff]
      %v964 = vld [vmem:[%s962 + $0x8] sm:$0xff]
      %v965 = vmax.f32 %v957, %v960
      %v966 = vmax.f32 %v958, %v961
      %v967 = vmax.f32 %v965, %v963
      %v968 = vmax.f32 %v966, %v964
      %971 = vrot.lane.b32.xlu0 %v967, 64
      %v972 = vpop.permute.xlu0 %971
      %973 = vrot.lane.b32.xlu0 %v968, 64
      %v974 = vpop.permute.xlu0 %973
      %v977 = vmax.f32 %v967, %v972
      %v978 = vmax.f32 %v968, %v974
      %vm979 = vcmask 1046528
      %v980 = vrot.slane %v967, 1
      %v981 = vrot.slane %v968, 1
      %v982 = vsel %vm979, %v980, %v981
      %v985 = vmax.f32 %v977, %v982
      %v986 = vmax.f32 %v978, %v981
      %v987 = vpack.c.bf16 %v986, %v985
      %v989 = vunpack.c.l.b16 %v987
      %v990 = vunpack.c.h.b16 %v987
      %v991 = vpack.c.b16 %v989, %v989
      %v992 = vpack.c.b16 %v990, %v990
      %vm995 = vcmask 519168
      %996 = vst.msk [vmem:[%s170] sm:$0xf] %vm995, %v991
      %vm997 = vcmask 518144
      %998 = vst.msk [vmem:[%s170 + $0x4] sm:$0x7] %vm997, %v992
      %v999 = vld [vmem:[%s962] sm:$0xff]
      %v1000 = vld [vmem:[%s962 + $0x8] sm:$0xff]
      %s1001 = scalar_lea.vmem [#allocation2], 48
      %v1002 = vld [vmem:[%s1001] sm:$0xff]
      %v1003 = vld [vmem:[%s1001 + $0x8] sm:$0xff]
      %s1004 = scalar_lea.vmem [#allocation2], 64
      %v1005 = vld [vmem:[%s1004] sm:$0xff]
      %v1006 = vld [vmem:[%s1004 + $0x8] sm:$0xff]
      %v1007 = vmax.f32 %v999, %v1002
      %v1008 = vmax.f32 %v1000, %v1003
      %v1009 = vmax.f32 %v1007, %v1005
      %v1010 = vmax.f32 %v1008, %v1006
      %1013 = vrot.lane.b32.xlu0 %v1009, 64
      %v1014 = vpop.permute.xlu0 %1013
      %1015 = vrot.lane.b32.xlu0 %v1010, 64
      %v1016 = vpop.permute.xlu0 %1015
      %v1019 = vmax.f32 %v1009, %v1014
      %v1020 = vmax.f32 %v1010, %v1016
      %v1021 = vrot.slane %v1009, 1
      %v1022 = vrot.slane %v1010, 1
      %v1023 = vsel %vm979, %v1021, %v1022
      %v1026 = vmax.f32 %v1019, %v1023
      %v1027 = vmax.f32 %v1020, %v1022
      %v1028 = vpack.c.bf16 %v1027, %v1026
      %v1030 = vunpack.c.l.b16 %v1028
      %v1031 = vunpack.c.h.b16 %v1028
      %v1032 = vpack.c.b16 %v1030, %v1030
      %v1033 = vpack.c.b16 %v1031, %v1031
      %s1036 = scalar_lea.vmem %s170, 8
      %1037 = vst.msk [vmem:[%s1036] sm:$0xf] %vm995, %v1032
      %1038 = vst.msk [vmem:[%s1036 + $0x4] sm:$0x7] %vm997, %v1033
      %v1039 = vld [vmem:[%s1004] sm:$0xff]
      %v1040 = vld [vmem:[%s1004 + $0x8] sm:$0xff]
      %s1041 = scalar_lea.vmem [#allocation2], 80
      %v1042 = vld [vmem:[%s1041] sm:$0xff]
      %v1043 = vld [vmem:[%s1041 + $0x8] sm:$0xff]
      %s1044 = scalar_lea.vmem [#allocation2], 96
      %v1045 = vld [vmem:[%s1044] sm:$0xff]
      %v1046 = vld [vmem:[%s1044 + $0x8] sm:$0xff]
      %v1047 = vmax.f32 %v1039, %v1042
      %v1048 = vmax.f32 %v1040, %v1043
      %v1049 = vmax.f32 %v1047, %v1045
      %v1050 = vmax.f32 %v1048, %v1046
      %1053 = vrot.lane.b32.xlu0 %v1049, 64
      %v1054 = vpop.permute.xlu0 %1053
      %1055 = vrot.lane.b32.xlu0 %v1050, 64
      %v1056 = vpop.permute.xlu0 %1055
      %v1059 = vmax.f32 %v1049, %v1054
      %v1060 = vmax.f32 %v1050, %v1056
      %v1061 = vrot.slane %v1049, 1
      %v1062 = vrot.slane %v1050, 1
      %v1063 = vsel %vm979, %v1061, %v1062
      %v1066 = vmax.f32 %v1059, %v1063
      %v1067 = vmax.f32 %v1060, %v1062
      %v1068 = vpack.c.bf16 %v1067, %v1066
      %v1070 = vunpack.c.l.b16 %v1068
      %v1071 = vunpack.c.h.b16 %v1068
      %v1072 = vpack.c.b16 %v1070, %v1070
      %v1073 = vpack.c.b16 %v1071, %v1071
      %s1076 = scalar_lea.vmem %s170, 16
      %1077 = vst.msk [vmem:[%s1076] sm:$0xf] %vm995, %v1072
      %1078 = vst.msk [vmem:[%s1076 + $0x4] sm:$0x7] %vm997, %v1073
      %v1079 = vld [vmem:[%s1044] sm:$0xff]
      %v1080 = vld [vmem:[%s1044 + $0x8] sm:$0xff]
      %s1081 = scalar_lea.vmem [#allocation2], 112
      %v1082 = vld [vmem:[%s1081] sm:$0xff]
      %v1083 = vld [vmem:[%s1081 + $0x8] sm:$0xff]
      %s1084 = scalar_lea.vmem [#allocation2], 128
      %v1085 = vld [vmem:[%s1084] sm:$0xff]
      %v1086 = vld [vmem:[%s1084 + $0x8] sm:$0xff]
      %v1087 = vmax.f32 %v1079, %v1082
      %v1088 = vmax.f32 %v1080, %v1083
      %v1089 = vmax.f32 %v1087, %v1085
      %v1090 = vmax.f32 %v1088, %v1086
      %1093 = vrot.lane.b32.xlu0 %v1089, 64
      %v1094 = vpop.permute.xlu0 %1093
      %1095 = vrot.lane.b32.xlu0 %v1090, 64
      %v1096 = vpop.permute.xlu0 %1095
      %v1099 = vmax.f32 %v1089, %v1094
      %v1100 = vmax.f32 %v1090, %v1096
      %v1101 = vrot.slane %v1089, 1
      %v1102 = vrot.slane %v1090, 1
      %v1103 = vsel %vm979, %v1101, %v1102
      %v1106 = vmax.f32 %v1099, %v1103
      %v1107 = vmax.f32 %v1100, %v1102
      %v1108 = vpack.c.bf16 %v1107, %v1106
      %v1110 = vunpack.c.l.b16 %v1108
      %v1111 = vunpack.c.h.b16 %v1108
      %v1112 = vpack.c.b16 %v1110, %v1110
      %v1113 = vpack.c.b16 %v1111, %v1111
      %s1116 = scalar_lea.vmem %s170, 24
      %1117 = vst.msk [vmem:[%s1116] sm:$0xf] %vm995, %v1112
      %1118 = vst.msk [vmem:[%s1116 + $0x4] sm:$0x7] %vm997, %v1113
      %v1119 = vld [vmem:[%s1084] sm:$0xff]
      %v1120 = vld [vmem:[%s1084 + $0x8] sm:$0xff]
      %s1121 = scalar_lea.vmem [#allocation2], 144
      %v1122 = vld [vmem:[%s1121] sm:$0xff]
      %v1123 = vld [vmem:[%s1121 + $0x8] sm:$0xff]
      %s1124 = scalar_lea.vmem [#allocation2], 160
      %v1125 = vld [vmem:[%s1124] sm:$0xff]
      %v1126 = vld [vmem:[%s1124 + $0x8] sm:$0xff]
      %v1127 = vmax.f32 %v1119, %v1122
      %v1128 = vmax.f32 %v1120, %v1123
      %v1129 = vmax.f32 %v1127, %v1125
      %v1130 = vmax.f32 %v1128, %v1126
      %1133 = vrot.lane.b32.xlu0 %v1129, 64
      %v1134 = vpop.permute.xlu0 %1133
      %1135 = vrot.lane.b32.xlu0 %v1130, 64
      %v1136 = vpop.permute.xlu0 %1135
      %v1139 = vmax.f32 %v1129, %v1134
      %v1140 = vmax.f32 %v1130, %v1136
      %v1141 = vrot.slane %v1129, 1
      %v1142 = vrot.slane %v1130, 1
      %v1143 = vsel %vm979, %v1141, %v1142
      %v1146 = vmax.f32 %v1139, %v1143
      %v1147 = vmax.f32 %v1140, %v1142
      %v1148 = vpack.c.bf16 %v1147, %v1146
      %v1150 = vunpack.c.l.b16 %v1148
      %v1151 = vunpack.c.h.b16 %v1148
      %v1152 = vpack.c.b16 %v1150, %v1150
      %v1153 = vpack.c.b16 %v1151, %v1151
      %s1156 = scalar_lea.vmem %s170, 32
      %1157 = vst.msk [vmem:[%s1156] sm:$0xf] %vm995, %v1152
      %1158 = vst.msk [vmem:[%s1156 + $0x4] sm:$0x7] %vm997, %v1153
      %v1159 = vld [vmem:[%s1124] sm:$0xff]
      %v1160 = vld [vmem:[%s1124 + $0x8] sm:$0xff]
      %s1161 = scalar_lea.vmem [#allocation2], 176
      %v1162 = vld [vmem:[%s1161] sm:$0xff]
      %v1163 = vld [vmem:[%s1161 + $0x8] sm:$0xff]
      %s1164 = scalar_lea.vmem [#allocation2], 192
      %v1165 = vld [vmem:[%s1164] sm:$0xff]
      %v1166 = vld [vmem:[%s1164 + $0x8] sm:$0xff]
      %v1167 = vmax.f32 %v1159, %v1162
      %v1168 = vmax.f32 %v1160, %v1163
      %v1169 = vmax.f32 %v1167, %v1165
      %v1170 = vmax.f32 %v1168, %v1166
      %1173 = vrot.lane.b32.xlu0 %v1169, 64
      %v1174 = vpop.permute.xlu0 %1173
      %1175 = vrot.lane.b32.xlu0 %v1170, 64
      %v1176 = vpop.permute.xlu0 %1175
      %v1179 = vmax.f32 %v1169, %v1174
      %v1180 = vmax.f32 %v1170, %v1176
      %v1181 = vrot.slane %v1169, 1
      %v1182 = vrot.slane %v1170, 1
      %v1183 = vsel %vm979, %v1181, %v1182
      %v1186 = vmax.f32 %v1179, %v1183
      %v1187 = vmax.f32 %v1180, %v1182
      %v1188 = vpack.c.bf16 %v1187, %v1186
      %v1190 = vunpack.c.l.b16 %v1188
      %v1191 = vunpack.c.h.b16 %v1188
      %v1192 = vpack.c.b16 %v1190, %v1190
      %v1193 = vpack.c.b16 %v1191, %v1191
      %s1196 = scalar_lea.vmem %s170, 40
      %1197 = vst.msk [vmem:[%s1196] sm:$0xf] %vm995, %v1192
      %1198 = vst.msk [vmem:[%s1196 + $0x4] sm:$0x7] %vm997, %v1193
      %v1199 = vld [vmem:[%s1164] sm:$0xff]
      %v1200 = vld [vmem:[%s1164 + $0x8] sm:$0xff]
      %s1201 = scalar_lea.vmem [#allocation2], 208
      %v1202 = vld [vmem:[%s1201] sm:$0xff]
      %v1203 = vld [vmem:[%s1201 + $0x8] sm:$0xff]
      %s1204 = scalar_lea.vmem [#allocation2], 224
      %v1205 = vld [vmem:[%s1204] sm:$0xff]
      %v1206 = vld [vmem:[%s1204 + $0x8] sm:$0xff]
      %v1207 = vmax.f32 %v1199, %v1202
      %v1208 = vmax.f32 %v1200, %v1203
      %v1209 = vmax.f32 %v1207, %v1205
      %v1210 = vmax.f32 %v1208, %v1206
      %1213 = vrot.lane.b32.xlu0 %v1209, 64
      %v1214 = vpop.permute.xlu0 %1213
      %1215 = vrot.lane.b32.xlu0 %v1210, 64
      %v1216 = vpop.permute.xlu0 %1215
      %v1219 = vmax.f32 %v1209, %v1214
      %v1220 = vmax.f32 %v1210, %v1216
      %v1221 = vrot.slane %v1209, 1
      %v1222 = vrot.slane %v1210, 1
      %v1223 = vsel %vm979, %v1221, %v1222
      %v1226 = vmax.f32 %v1219, %v1223
      %v1227 = vmax.f32 %v1220, %v1222
      %v1228 = vpack.c.bf16 %v1227, %v1226
      %v1230 = vunpack.c.l.b16 %v1228
      %v1231 = vunpack.c.h.b16 %v1228
      %v1232 = vpack.c.b16 %v1230, %v1230
      %v1233 = vpack.c.b16 %v1231, %v1231
      %s1236 = scalar_lea.vmem %s170, 48
      %1237 = vst.msk [vmem:[%s1236] sm:$0xf] %vm995, %v1232
      %1238 = vst.msk [vmem:[%s1236 + $0x4] sm:$0x7] %vm997, %v1233
      %v1239 = vld [vmem:[%s1204] sm:$0xff]
      %v1240 = vld [vmem:[%s1204 + $0x8] sm:$0xff]
      %s1241 = scalar_lea.vmem [#allocation2], 240
      %v1242 = vld [vmem:[%s1241] sm:$0xff]
      %v1243 = vld [vmem:[%s1241 + $0x8] sm:$0xff]
      %s1244 = scalar_lea.vmem [#allocation2], 256
      %v1245 = vld [vmem:[%s1244] sm:$0xff]
      %v1246 = vld [vmem:[%s1244 + $0x8] sm:$0xff]
      %v1247 = vmax.f32 %v1239, %v1242
      %v1248 = vmax.f32 %v1240, %v1243
      %v1249 = vmax.f32 %v1247, %v1245
      %v1250 = vmax.f32 %v1248, %v1246
      %1253 = vrot.lane.b32.xlu0 %v1249, 64
      %v1254 = vpop.permute.xlu0 %1253
      %1255 = vrot.lane.b32.xlu0 %v1250, 64
      %v1256 = vpop.permute.xlu0 %1255
      %v1259 = vmax.f32 %v1249, %v1254
      %v1260 = vmax.f32 %v1250, %v1256
      %v1261 = vrot.slane %v1249, 1
      %v1262 = vrot.slane %v1250, 1
      %v1263 = vsel %vm979, %v1261, %v1262
      %v1266 = vmax.f32 %v1259, %v1263
      %v1267 = vmax.f32 %v1260, %v1262
      %v1268 = vpack.c.bf16 %v1267, %v1266
      %v1270 = vunpack.c.l.b16 %v1268
      %v1271 = vunpack.c.h.b16 %v1268
      %v1272 = vpack.c.b16 %v1270, %v1270
      %v1273 = vpack.c.b16 %v1271, %v1271
      %s1276 = scalar_lea.vmem %s170, 56
      %1277 = vst.msk [vmem:[%s1276] sm:$0xf] %vm995, %v1272
      %1278 = vst.msk [vmem:[%s1276 + $0x4] sm:$0x7] %vm997, %v1273
      %v1279 = vld [vmem:[%s1244] sm:$0xff]
      %v1280 = vld [vmem:[%s1244 + $0x8] sm:$0xff]
      %s1281 = scalar_lea.vmem [#allocation2], 272
      %v1282 = vld [vmem:[%s1281] sm:$0xff]
      %v1283 = vld [vmem:[%s1281 + $0x8] sm:$0xff]
      %s1284 = scalar_lea.vmem [#allocation2], 288
      %v1285 = vld [vmem:[%s1284] sm:$0xff]
      %v1286 = vld [vmem:[%s1284 + $0x8] sm:$0xff]
      %v1287 = vmax.f32 %v1279, %v1282
      %v1288 = vmax.f32 %v1280, %v1283
      %v1289 = vmax.f32 %v1287, %v1285
      %v1290 = vmax.f32 %v1288, %v1286
      %1293 = vrot.lane.b32.xlu0 %v1289, 64
      %v1294 = vpop.permute.xlu0 %1293
      %1295 = vrot.lane.b32.xlu0 %v1290, 64
      %v1296 = vpop.permute.xlu0 %1295
      %v1299 = vmax.f32 %v1289, %v1294
      %v1300 = vmax.f32 %v1290, %v1296
      %v1301 = vrot.slane %v1289, 1
      %v1302 = vrot.slane %v1290, 1
      %v1303 = vsel %vm979, %v1301, %v1302
      %v1306 = vmax.f32 %v1299, %v1303
      %v1307 = vmax.f32 %v1300, %v1302
      %v1308 = vpack.c.bf16 %v1307, %v1306
      %v1310 = vunpack.c.l.b16 %v1308
      %v1311 = vunpack.c.h.b16 %v1308
      %v1312 = vpack.c.b16 %v1310, %v1310
      %v1313 = vpack.c.b16 %v1311, %v1311
      %s1316 = scalar_lea.vmem %s170, 64
      %1317 = vst.msk [vmem:[%s1316] sm:$0xf] %vm995, %v1312
      %1318 = vst.msk [vmem:[%s1316 + $0x4] sm:$0x7] %vm997, %v1313
      %v1319 = vld [vmem:[%s1284] sm:$0xff]
      %v1320 = vld [vmem:[%s1284 + $0x8] sm:$0xff]
      %s1321 = scalar_lea.vmem [#allocation2], 304
      %v1322 = vld [vmem:[%s1321] sm:$0xff]
      %v1323 = vld [vmem:[%s1321 + $0x8] sm:$0xff]
      %s1324 = scalar_lea.vmem [#allocation2], 320
      %v1325 = vld [vmem:[%s1324] sm:$0xff]
      %v1326 = vld [vmem:[%s1324 + $0x8] sm:$0xff]
      %v1327 = vmax.f32 %v1319, %v1322
      %v1328 = vmax.f32 %v1320, %v1323
      %v1329 = vmax.f32 %v1327, %v1325
      %v1330 = vmax.f32 %v1328, %v1326
      %1333 = vrot.lane.b32.xlu0 %v1329, 64
      %v1334 = vpop.permute.xlu0 %1333
      %1335 = vrot.lane.b32.xlu0 %v1330, 64
      %v1336 = vpop.permute.xlu0 %1335
      %v1339 = vmax.f32 %v1329, %v1334
      %v1340 = vmax.f32 %v1330, %v1336
      %v1341 = vrot.slane %v1329, 1
      %v1342 = vrot.slane %v1330, 1
      %v1343 = vsel %vm979, %v1341, %v1342
      %v1346 = vmax.f32 %v1339, %v1343
      %v1347 = vmax.f32 %v1340, %v1342
      %v1348 = vpack.c.bf16 %v1347, %v1346
      %v1350 = vunpack.c.l.b16 %v1348
      %v1351 = vunpack.c.h.b16 %v1348
      %v1352 = vpack.c.b16 %v1350, %v1350
      %v1353 = vpack.c.b16 %v1351, %v1351
      %s1356 = scalar_lea.vmem %s170, 72
      %1357 = vst.msk [vmem:[%s1356] sm:$0xf] %vm995, %v1352
      %1358 = vst.msk [vmem:[%s1356 + $0x4] sm:$0x7] %vm997, %v1353
      %v1359 = vld [vmem:[%s1324] sm:$0xff]
      %v1360 = vld [vmem:[%s1324 + $0x8] sm:$0xff]
      %s1361 = scalar_lea.vmem [#allocation2], 336
      %v1362 = vld [vmem:[%s1361] sm:$0xff]
      %v1363 = vld [vmem:[%s1361 + $0x8] sm:$0xff]
      %s1364 = scalar_lea.vmem [#allocation2], 352
      %v1365 = vld [vmem:[%s1364] sm:$0xff]
      %v1366 = vld [vmem:[%s1364 + $0x8] sm:$0xff]
      %v1367 = vmax.f32 %v1359, %v1362
      %v1368 = vmax.f32 %v1360, %v1363
      %v1369 = vmax.f32 %v1367, %v1365
      %v1370 = vmax.f32 %v1368, %v1366
      %1373 = vrot.lane.b32.xlu0 %v1369, 64
      %v1374 = vpop.permute.xlu0 %1373
      %1375 = vrot.lane.b32.xlu0 %v1370, 64
      %v1376 = vpop.permute.xlu0 %1375
      %v1379 = vmax.f32 %v1369, %v1374
      %v1380 = vmax.f32 %v1370, %v1376
      %v1381 = vrot.slane %v1369, 1
      %v1382 = vrot.slane %v1370, 1
      %v1383 = vsel %vm979, %v1381, %v1382
      %v1386 = vmax.f32 %v1379, %v1383
      %v1387 = vmax.f32 %v1380, %v1382
      %v1388 = vpack.c.bf16 %v1387, %v1386
      %v1390 = vunpack.c.l.b16 %v1388
      %v1391 = vunpack.c.h.b16 %v1388
      %v1392 = vpack.c.b16 %v1390, %v1390
      %v1393 = vpack.c.b16 %v1391, %v1391
      %s1396 = scalar_lea.vmem %s170, 80
      %1397 = vst.msk [vmem:[%s1396] sm:$0xf] %vm995, %v1392
      %1398 = vst.msk [vmem:[%s1396 + $0x4] sm:$0x7] %vm997, %v1393
      %v1399 = vld [vmem:[%s1364] sm:$0xff]
      %v1400 = vld [vmem:[%s1364 + $0x8] sm:$0xff]
      %s1401 = scalar_lea.vmem [#allocation2], 368
      %v1402 = vld [vmem:[%s1401] sm:$0xff]
      %v1403 = vld [vmem:[%s1401 + $0x8] sm:$0xff]
      %s1404 = scalar_lea.vmem [#allocation2], 384
      %v1405 = vld [vmem:[%s1404] sm:$0xff]
      %v1406 = vld [vmem:[%s1404 + $0x8] sm:$0xff]
      %v1407 = vmax.f32 %v1399, %v1402
      %v1408 = vmax.f32 %v1400, %v1403
      %v1409 = vmax.f32 %v1407, %v1405
      %v1410 = vmax.f32 %v1408, %v1406
      %1413 = vrot.lane.b32.xlu0 %v1409, 64
      %v1414 = vpop.permute.xlu0 %1413
      %1415 = vrot.lane.b32.xlu0 %v1410, 64
      %v1416 = vpop.permute.xlu0 %1415
      %v1419 = vmax.f32 %v1409, %v1414
      %v1420 = vmax.f32 %v1410, %v1416
      %v1421 = vrot.slane %v1409, 1
      %v1422 = vrot.slane %v1410, 1
      %v1423 = vsel %vm979, %v1421, %v1422
      %v1426 = vmax.f32 %v1419, %v1423
      %v1427 = vmax.f32 %v1420, %v1422
      %v1428 = vpack.c.bf16 %v1427, %v1426
      %v1430 = vunpack.c.l.b16 %v1428
      %v1431 = vunpack.c.h.b16 %v1428
      %v1432 = vpack.c.b16 %v1430, %v1430
      %v1433 = vpack.c.b16 %v1431, %v1431
      %s1436 = scalar_lea.vmem %s170, 88
      %1437 = vst.msk [vmem:[%s1436] sm:$0xf] %vm995, %v1432
      %1438 = vst.msk [vmem:[%s1436 + $0x4] sm:$0x7] %vm997, %v1433
      %v1439 = vld [vmem:[%s1404] sm:$0xff]
      %v1440 = vld [vmem:[%s1404 + $0x8] sm:$0xff]
      %s1441 = scalar_lea.vmem [#allocation2], 400
      %v1442 = vld [vmem:[%s1441] sm:$0xff]
      %v1443 = vld [vmem:[%s1441 + $0x8] sm:$0xff]
      %s1444 = scalar_lea.vmem [#allocation2], 416
      %v1445 = vld [vmem:[%s1444] sm:$0xff]
      %v1446 = vld [vmem:[%s1444 + $0x8] sm:$0xff]
      %v1447 = vmax.f32 %v1439, %v1442
      %v1448 = vmax.f32 %v1440, %v1443
      %v1449 = vmax.f32 %v1447, %v1445
      %v1450 = vmax.f32 %v1448, %v1446
      %1453 = vrot.lane.b32.xlu0 %v1449, 64
      %v1454 = vpop.permute.xlu0 %1453
      %1455 = vrot.lane.b32.xlu0 %v1450, 64
      %v1456 = vpop.permute.xlu0 %1455
      %v1459 = vmax.f32 %v1449, %v1454
      %v1460 = vmax.f32 %v1450, %v1456
      %v1461 = vrot.slane %v1449, 1
      %v1462 = vrot.slane %v1450, 1
      %v1463 = vsel %vm979, %v1461, %v1462
      %v1466 = vmax.f32 %v1459, %v1463
      %v1467 = vmax.f32 %v1460, %v1462
      %v1468 = vpack.c.bf16 %v1467, %v1466
      %v1470 = vunpack.c.l.b16 %v1468
      %v1471 = vunpack.c.h.b16 %v1468
      %v1472 = vpack.c.b16 %v1470, %v1470
      %v1473 = vpack.c.b16 %v1471, %v1471
      %s1476 = scalar_lea.vmem %s170, 96
      %1477 = vst.msk [vmem:[%s1476] sm:$0xf] %vm995, %v1472
      %1478 = vst.msk [vmem:[%s1476 + $0x4] sm:$0x7] %vm997, %v1473
      %v1479 = vld [vmem:[%s1444] sm:$0xff]
      %v1480 = vld [vmem:[%s1444 + $0x8] sm:$0xff]
      %s1481 = scalar_lea.vmem [#allocation2], 432
      %v1482 = vld [vmem:[%s1481] sm:$0xff]
      %v1483 = vld [vmem:[%s1481 + $0x8] sm:$0xff]
      %s1484 = scalar_lea.vmem [#allocation2], 448
      %v1485 = vld [vmem:[%s1484] sm:$0xff]
      %v1486 = vld [vmem:[%s1484 + $0x8] sm:$0xff]
      %v1487 = vmax.f32 %v1479, %v1482
      %v1488 = vmax.f32 %v1480, %v1483
      %v1489 = vmax.f32 %v1487, %v1485
      %v1490 = vmax.f32 %v1488, %v1486
      %1493 = vrot.lane.b32.xlu0 %v1489, 64
      %v1494 = vpop.permute.xlu0 %1493
      %1495 = vrot.lane.b32.xlu0 %v1490, 64
      %v1496 = vpop.permute.xlu0 %1495
      %v1499 = vmax.f32 %v1489, %v1494
      %v1500 = vmax.f32 %v1490, %v1496
      %v1501 = vrot.slane %v1489, 1
      %v1502 = vrot.slane %v1490, 1
      %v1503 = vsel %vm979, %v1501, %v1502
      %v1506 = vmax.f32 %v1499, %v1503
      %v1507 = vmax.f32 %v1500, %v1502
      %v1508 = vpack.c.bf16 %v1507, %v1506
      %v1510 = vunpack.c.l.b16 %v1508
      %v1511 = vunpack.c.h.b16 %v1508
      %v1512 = vpack.c.b16 %v1510, %v1510
      %v1513 = vpack.c.b16 %v1511, %v1511
      %s1516 = scalar_lea.vmem %s170, 104
      %1517 = vst.msk [vmem:[%s1516] sm:$0xf] %vm995, %v1512
      %1518 = vst.msk [vmem:[%s1516 + $0x4] sm:$0x7] %vm997, %v1513
      %p1519 = scmp.lt.s32.totalorder %s14, 1
      %s1520 = scalar_select %p1519, %s14, 1
      %s1521 = smul.addr %s1520, 28
      %s1522 = smul.addr %s1521, 4
      %s1523 = scalar_lea.vmem %s3, %s1522
      // Predicated region
      $region33: #{net_forward.3} parent=31 // pred_check
        %p1524 = pneg %p100
      $region34: #{net_forward.3} parent=31 // pred_check_branch
        %1526 = sbr.rel (%p1524) target = $region36
      $region35: #{net_forward.3} parent=31 // pred_region
        _
      $region36: #{net_forward.3} parent=31 // pred_fallthru
        _
    $region32: #{net_forward.3} parent=5 // pred_fallthru
      _
    %p1527 = scmp.le.s32.totalorder 2, %s9
    // Predicated region
    $region37: #{net_forward.3} parent=5 // pred_check
      %p1528 = pneg %p1527
    $region38: #{net_forward.3} parent=5 // pred_check_branch
      %1530 = sbr.rel (%p1528) target = $region40
    $region39: #{net_forward.3} parent=5 // pred_region
      %s1531 = ssub.s32 %s9, 2
      // Predicated region
      $region41: #{net_forward.3} parent=39 // pred_check
        %p1532 = pneg %p106
      $region42: #{net_forward.3} parent=39 // pred_check_branch
        %1534 = sbr.rel (%p1532) target = $region44
      $region43: #{net_forward.3} parent=39 // pred_region
        %p1535 = scmp.lt.s32.totalorder %s15, 1
        %s1536 = scalar_select %p1535, %s15, 1
        %s1537 = smul.addr %s1536, 28
        %s1538 = smul.addr %s1537, 4
        %s1539 = scalar_lea.vmem %s3, %s1538
      $region44: #{net_forward.3} parent=39 // pred_fallthru
        _
    $region40: #{net_forward.3} parent=5 // pred_fallthru
      _
  $region6: #{net_forward.3} parent=0 // loop_footer
    %s13 = sadd.s32 1, %s9
  $region7: #{net_forward.3} parent=0 // loop_footer_branch
    %8 = sbr.rel target = $region3
  $region8: #{net_forward.3} parent=0 // loop_exit
    _

// kernel: net_forward.4
$region0: #{net_forward.4}
  #allocation0 [shape = 'u32[]', space=smem, size = 0x4, offset = 0x4, fixed_abs, tag = 'smem constant byte address 0x4 - core index']
  #allocation1 [shape = 'u32[144,128]{1,0:T(1,128)}', space=vmem, size = 0x12000, scoped, tag = 'internal scratch']
  #allocation2 [shape = 'f32[1,12,8,128]{3,2,1,0:T(8,128)}', space=vmem, size = 0xc000, scoped, tag = 'scratch operand']
  %s0 = inlined_call_operand.vmem [shape: bf16[2,12,8,768], index: 0, kind: input, shape index: {}]
  %s1 = inlined_call_operand.vmem [shape: bf16[768,128], index: 1, kind: input, shape index: {}]
  %s2 = inlined_call_operand.vmem [shape: f32[1,128], index: 2, kind: input, shape index: {}]
  %s3 = inlined_call_operand.vmem [shape: bf16[2,5,5,64], index: 3, kind: output, shape index: {}]
  %s4 = sld [smem:[#allocation0]]
  $region45: #{net_forward.4} parent=0
    _
  %s6 = ssub.s32 1, %s4
  %s7 = scalar_select 0, %s6, %s4
  loop: start=0, step=1, limit=4
  $region2: #{net_forward.4} parent=0 // loop_pre_header
    _
  $region3: #{net_forward.4} parent=0 // loop_header
    %s9 = sphi 0, %s13
    %p10 = scmp.ge.s32.totalorder %s9, 4
    %s19 = sphi 0, %s21
    %s22 = sphi 0, %s19
    %s23 = sphi 0, %s22
    %s39 = sphi 0, %s23
    %s43 = sphi 0, %s43
    %s45 = sphi 0, %s43
    %s46 = sphi 0, %s45
    %s60 = sphi 0, %s46
    %s64 = sphi 0, %s64
    %s66 = sphi 0, %s64
    %s67 = sphi 0, %s66
    %s81 = sphi 0, %s67
    %s87 = sphi 0, %s89
    %s90 = sphi 0, %s87
    %s91 = sphi 0, %s90
    %s107 = sphi 0, %s91
  $region4: #{net_forward.4} parent=0 // loop_header_branch
    %12 = sbr.rel (%p10) target = $region8
  $region5: #{net_forward.4} parent=0 // loop_body
    %s14 = ssub.s32 %s9, 1
    %s15 = ssub.s32 %s9, 2
    %s16 = sadd.s32 %s9, 1
    %s17 = ssub.s32 %s9, %s16
    %p18 = scmp.eq.s32.totalorder %s17, 0
    %s20 = sadd.s32 %s19, 1
    %s21 = scalar_select %p18, %s19, %s20
    %p24 = pneg %p18
    %p25 = scmp.eq.s32.totalorder %s9, 1
    %p26 = por %p24, %p25
    %p27 = scmp.ne.s32.totalorder %s19, %s22
    %p28 = scmp.eq.s32.totalorder %s9, 0
    %p29 = por %p27, %p28
    %p30 = scmp.ne.s32.totalorder %s19, %s22
    %p31 = scmp.eq.s32.totalorder %s14, 1
    %p32 = por %p30, %p31
    %p33 = scmp.ne.s32.totalorder %s22, %s23
    %p34 = scmp.eq.s32.totalorder %s14, 0
    %p35 = por %p33, %p34
    %p36 = scmp.ne.s32.totalorder %s22, %s23
    %p37 = scmp.eq.s32.totalorder %s15, 1
    %p38 = por %p36, %p37
    %p40 = scmp.ne.s32.totalorder %s23, %s39
    %p41 = scmp.eq.s32.totalorder %s15, 0
    %p42 = por %p40, %p41
    %s44 = sadd.s32 %s43, 1
    %p47 = scmp.eq.s32.totalorder %s9, 1
    %p48 = scmp.ne.s32.totalorder %s43, %s45
    %p49 = scmp.eq.s32.totalorder %s9, 0
    %p50 = por %p48, %p49
    %p51 = scmp.ne.s32.totalorder %s43, %s45
    %p52 = scmp.eq.s32.totalorder %s14, 1
    %p53 = por %p51, %p52
    %p54 = scmp.ne.s32.totalorder %s45, %s46
    %p55 = scmp.eq.s32.totalorder %s14, 0
    %p56 = por %p54, %p55
    %p57 = scmp.ne.s32.totalorder %s45, %s46
    %p58 = scmp.eq.s32.totalorder %s15, 1
    %p59 = por %p57, %p58
    %p61 = scmp.ne.s32.totalorder %s46, %s60
    %p62 = scmp.eq.s32.totalorder %s15, 0
    %p63 = por %p61, %p62
    %s65 = sadd.s32 %s64, 1
    %p68 = scmp.eq.s32.totalorder %s9, 1
    %p69 = scmp.ne.s32.totalorder %s64, %s66
    %p70 = scmp.eq.s32.totalorder %s9, 0
    %p71 = por %p69, %p70
    %p72 = scmp.ne.s32.totalorder %s64, %s66
    %p73 = scmp.eq.s32.totalorder %s14, 1
    %p74 = por %p72, %p73
    %p75 = scmp.ne.s32.totalorder %s66, %s67
    %p76 = scmp.eq.s32.totalorder %s14, 0
    %p77 = por %p75, %p76
    %p78 = scmp.ne.s32.totalorder %s66, %s67
    %p79 = scmp.eq.s32.totalorder %s15, 1
    %p80 = por %p78, %p79
    %p82 = scmp.ne.s32.totalorder %s67, %s81
    %p83 = scmp.eq.s32.totalorder %s15, 0
    %p84 = por %p82, %p83
    %s85 = ssub.s32 %s9, %s16
    %p86 = scmp.eq.s32.totalorder %s85, 0
    %s88 = sadd.s32 %s87, 1
    %s89 = scalar_select %p86, %s87, %s88
    %p92 = pneg %p86
    %p93 = scmp.eq.s32.totalorder %s9, 1
    %p94 = por %p92, %p93
    %p95 = scmp.ne.s32.totalorder %s87, %s90
    %p96 = scmp.eq.s32.totalorder %s9, 0
    %p97 = por %p95, %p96
    %p98 = scmp.ne.s32.totalorder %s87, %s90
    %p99 = scmp.eq.s32.totalorder %s14, 1
    %p100 = por %p98, %p99
    %p101 = scmp.ne.s32.totalorder %s90, %s91
    %p102 = scmp.eq.s32.totalorder %s14, 0
    %p103 = por %p101, %p102
    %p104 = scmp.ne.s32.totalorder %s90, %s91
    %p105 = scmp.eq.s32.totalorder %s15, 1
    %p106 = por %p104, %p105
    %p108 = scmp.ne.s32.totalorder %s91, %s107
    %p109 = scmp.eq.s32.totalorder %s15, 0
    %p110 = por %p108, %p109
    %p111 = scmp.le.s32.totalorder 1, %s9
    %p112 = scmp.lt.s32.totalorder %s9, 3
    %p113 = pnand %p111, %p112
    %p114 = pneg %p113
    // Predicated region
    $region9: #{net_forward.4} parent=5 // pred_check
      _
    $region10: #{net_forward.4} parent=5 // pred_check_branch
      %116 = sbr.rel (%p113) target = $region12
    $region11: #{net_forward.4} parent=5 // pred_region
      %s117 = ssub.s32 %s9, 1
      // Predicated region
      $region13: #{net_forward.4} parent=11 // pred_check
        %p118 = pneg %p56
      $region14: #{net_forward.4} parent=11 // pred_check_branch
        %120 = sbr.rel (%p118) target = $region16
      $region15: #{net_forward.4} parent=11 // pred_region
        _
      $region16: #{net_forward.4} parent=11 // pred_fallthru
        _
      // Predicated region
      $region17: #{net_forward.4} parent=11 // pred_check
        %p121 = pneg %p77
      $region18: #{net_forward.4} parent=11 // pred_check_branch
        %123 = sbr.rel (%p121) target = $region20
      $region19: #{net_forward.4} parent=11 // pred_region
        _
      $region20: #{net_forward.4} parent=11 // pred_fallthru
        _
    $region12: #{net_forward.4} parent=5 // pred_fallthru
      _
    %p124 = scmp.lt.s32.totalorder %s9, 2
    // Predicated region
    $region21: #{net_forward.4} parent=5 // pred_check
      %p125 = pneg %p124
    $region22: #{net_forward.4} parent=5 // pred_check_branch
      %127 = sbr.rel (%p125) target = $region24
    $region23: #{net_forward.4} parent=5 // pred_region
      // Predicated region
      $region25: #{net_forward.4} parent=23 // pred_check
        %p128 = pneg %p29
      $region26: #{net_forward.4} parent=23 // pred_check_branch
        %130 = sbr.rel (%p128) target = $region28
      $region27: #{net_forward.4} parent=23 // pred_region
        %p131 = scmp.lt.s32.totalorder %s9, 1
        %s132 = scalar_select %p131, %s9, 1
        %s133 = smul.addr %s132, 72
        %s134 = smul.addr %s133, 4
        %s135 = scalar_lea.vmem %s0, %s134
      $region28: #{net_forward.4} parent=23 // pred_fallthru
        _
    $region24: #{net_forward.4} parent=5 // pred_fallthru
      _
    %p136 = scmp.le.s32.totalorder 1, %s9
    %p137 = scmp.lt.s32.totalorder %s9, 3
    %p138 = pnand %p136, %p137
    %p139 = pneg %p138
    // Predicated region
    $region29: #{net_forward.4} parent=5 // pred_check
      _
    $region30: #{net_forward.4} parent=5 // pred_check_branch
      %141 = sbr.rel (%p138) target = $region32
    $region31: #{net_forward.4} parent=5 // pred_region
      %s142 = ssub.s32 %s9, 1
      %p143 = scmp.lt.s32.totalorder %s14, 1
      %s144 = scalar_select %p143, %s14, 1
      %s145 = smul.addr %s144, 72
      %s146 = smul.addr %s145, 4
      %s147 = scalar_lea.vmem %s0, %s146
      %p148 = pneg %p35
      %p149 = pneg %p32
      %p150 = pneg %p56
      %p151 = pneg %p53
      %p152 = pneg %p77
      %p153 = pneg %p74
      %p154 = pneg %p103
      %p155 = pneg %p100
      %p156 = scmp.lt.s32.totalorder %s14, 1
      %s157 = scalar_select %p156, %s14, 1
      %s158 = smul.addr %s157, 5
      %s159 = smul.addr %s158, 4
      %s160 = scalar_lea.vmem %s3, %s159
      %p161 = scmp.lt.s32.totalorder %s14, 1
      %s162 = scalar_select %p161, %s14, 1
      %s163 = smul.addr %s162, 72
      %s164 = smul.addr %s163, 4
      %s165 = scalar_lea.vmem %s0, %s164
      %p166 = scmp.lt.s32.totalorder %s14, 1
      %s167 = scalar_select %p166, %s14, 1
      %s168 = smul.addr %s167, 5
      %s169 = smul.addr %s168, 4
      %s170 = scalar_lea.vmem %s3, %s169
      %v172 = vld [vmem:[%s165] sm:$0xff]
      %v173 = vld [vmem:[%s165 + $0x8] sm:$0xff]
      %v174 = vld [vmem:[%s165 + $0x10] sm:$0xff]
      %v175 = vld [vmem:[%s165 + $0x18] sm:$0xff]
      %v176 = vld [vmem:[%s165 + $0x20] sm:$0xff]
      %v177 = vld [vmem:[%s165 + $0x28] sm:$0xff]
      %v178 = vld [vmem:[%s165 + $0x30] sm:$0xff]
      %v179 = vld [vmem:[%s165 + $0x38] sm:$0xff]
      %v180 = vld [vmem:[%s165 + $0x40] sm:$0xff]
      %v181 = vld [vmem:[%s165 + $0x48] sm:$0xff]
      %v182 = vld [vmem:[%s165 + $0x50] sm:$0xff]
      %v183 = vld [vmem:[%s165 + $0x58] sm:$0xff]
      %v184 = vld [vmem:[%s165 + $0x60] sm:$0xff]
      %v185 = vld [vmem:[%s165 + $0x68] sm:$0xff]
      %v186 = vld [vmem:[%s165 + $0x70] sm:$0xff]
      %v187 = vld [vmem:[%s165 + $0x78] sm:$0xff]
      %v188 = vld [vmem:[%s165 + $0x80] sm:$0xff]
      %v189 = vld [vmem:[%s165 + $0x88] sm:$0xff]
      %v190 = vld [vmem:[%s165 + $0x90] sm:$0xff]
      %v191 = vld [vmem:[%s165 + $0x98] sm:$0xff]
      %v192 = vld [vmem:[%s165 + $0xa0] sm:$0xff]
      %v193 = vld [vmem:[%s165 + $0xa8] sm:$0xff]
      %v194 = vld [vmem:[%s165 + $0xb0] sm:$0xff]
      %v195 = vld [vmem:[%s165 + $0xb8] sm:$0xff]
      %v196 = vld [vmem:[%s165 + $0xc0] sm:$0xff]
      %v197 = vld [vmem:[%s165 + $0xc8] sm:$0xff]
      %v198 = vld [vmem:[%s165 + $0xd0] sm:$0xff]
      %v199 = vld [vmem:[%s165 + $0xd8] sm:$0xff]
      %v200 = vld [vmem:[%s165 + $0xe0] sm:$0xff]
      %v201 = vld [vmem:[%s165 + $0xe8] sm:$0xff]
      %v202 = vld [vmem:[%s165 + $0xf0] sm:$0xff]
      %v203 = vld [vmem:[%s165 + $0xf8] sm:$0xff]
      %v204 = vld [vmem:[%s165 + $0x100] sm:$0xff]
      %v205 = vld [vmem:[%s165 + $0x108] sm:$0xff]
      %v206 = vld [vmem:[%s165 + $0x110] sm:$0xff]
      %v207 = vld [vmem:[%s165 + $0x118] sm:$0xff]
      %v208 = vld [vmem:[%s1] sm:$0xf]
      %v209 = vld [vmem:[%s1 + $0x4] sm:$0xf]
      %v210 = vld [vmem:[%s1 + $0x8] sm:$0xf]
      %v211 = vld [vmem:[%s1 + $0xc] sm:$0xf]
      %v212 = vld [vmem:[%s1 + $0x10] sm:$0xf]
      %v213 = vld [vmem:[%s1 + $0x14] sm:$0xf]
      %v214 = vld [vmem:[%s1 + $0x18] sm:$0xf]
      %v215 = vld [vmem:[%s1 + $0x1c] sm:$0xf]
      %v216 = vld [vmem:[%s1 + $0x20] sm:$0xf]
      %v217 = vld [vmem:[%s1 + $0x24] sm:$0xf]
      %v218 = vld [vmem:[%s1 + $0x28] sm:$0xf]
      %v219 = vld [vmem:[%s1 + $0x2c] sm:$0xf]
      %v220 = vld [vmem:[%s1 + $0x30] sm:$0xf]
      %v221 = vld [vmem:[%s1 + $0x34] sm:$0xf]
      %v222 = vld [vmem:[%s1 + $0x38] sm:$0xf]
      %v223 = vld [vmem:[%s1 + $0x3c] sm:$0xf]
      %v224 = vld [vmem:[%s1 + $0x40] sm:$0xf]
      %v225 = vld [vmem:[%s1 + $0x44] sm:$0xf]
      %v226 = vld [vmem:[%s1 + $0x48] sm:$0xf]
      %v227 = vld [vmem:[%s1 + $0x4c] sm:$0xf]
      %v228 = vld [vmem:[%s1 + $0x50] sm:$0xf]
      %v229 = vld [vmem:[%s1 + $0x54] sm:$0xf]
      %v230 = vld [vmem:[%s1 + $0x58] sm:$0xf]
      %v231 = vld [vmem:[%s1 + $0x5c] sm:$0xf]
      %v232 = vld [vmem:[%s1 + $0x60] sm:$0xf]
      %v233 = vld [vmem:[%s1 + $0x64] sm:$0xf]
      %v234 = vld [vmem:[%s1 + $0x68] sm:$0xf]
      %v235 = vld [vmem:[%s1 + $0x6c] sm:$0xf]
      %v236 = vld [vmem:[%s1 + $0x70] sm:$0xf]
      %v237 = vld [vmem:[%s1 + $0x74] sm:$0xf]
      %v238 = vld [vmem:[%s1 + $0x78] sm:$0xf]
      %v239 = vld [vmem:[%s1 + $0x7c] sm:$0xf]
      %v240 = vld [vmem:[%s1 + $0x80] sm:$0xf]
      %v241 = vld [vmem:[%s1 + $0x84] sm:$0xf]
      %v242 = vld [vmem:[%s1 + $0x88] sm:$0xf]
      %v243 = vld [vmem:[%s1 + $0x8c] sm:$0xf]
      %v244 = vld [vmem:[%s1 + $0x90] sm:$0xf]
      %v245 = vld [vmem:[%s1 + $0x94] sm:$0xf]
      %v246 = vld [vmem:[%s1 + $0x98] sm:$0xf]
      %v247 = vld [vmem:[%s1 + $0x9c] sm:$0xf]
      %v248 = vld [vmem:[%s1 + $0xa0] sm:$0xf]
      %v249 = vld [vmem:[%s1 + $0xa4] sm:$0xf]
      %v250 = vld [vmem:[%s1 + $0xa8] sm:$0xf]
      %v251 = vld [vmem:[%s1 + $0xac] sm:$0xf]
      %v252 = vld [vmem:[%s1 + $0xb0] sm:$0xf]
      %v253 = vld [vmem:[%s1 + $0xb4] sm:$0xf]
      %v254 = vld [vmem:[%s1 + $0xb8] sm:$0xf]
      %v255 = vld [vmem:[%s1 + $0xbc] sm:$0xf]
      %v256 = vld [vmem:[%s1 + $0xc0] sm:$0xf]
      %v257 = vld [vmem:[%s1 + $0xc4] sm:$0xf]
      %v258 = vld [vmem:[%s1 + $0xc8] sm:$0xf]
      %v259 = vld [vmem:[%s1 + $0xcc] sm:$0xf]
      %v260 = vld [vmem:[%s1 + $0xd0] sm:$0xf]
      %v261 = vld [vmem:[%s1 + $0xd4] sm:$0xf]
      %v262 = vld [vmem:[%s1 + $0xd8] sm:$0xf]
      %v263 = vld [vmem:[%s1 + $0xdc] sm:$0xf]
      %v264 = vld [vmem:[%s1 + $0xe0] sm:$0xf]
      %v265 = vld [vmem:[%s1 + $0xe4] sm:$0xf]
      %v266 = vld [vmem:[%s1 + $0xe8] sm:$0xf]
      %v267 = vld [vmem:[%s1 + $0xec] sm:$0xf]
      %v268 = vld [vmem:[%s1 + $0xf0] sm:$0xf]
      %v269 = vld [vmem:[%s1 + $0xf4] sm:$0xf]
      %v270 = vld [vmem:[%s1 + $0xf8] sm:$0xf]
      %v271 = vld [vmem:[%s1 + $0xfc] sm:$0xf]
      %v272 = vld [vmem:[%s1 + $0x100] sm:$0xf]
      %v273 = vld [vmem:[%s1 + $0x104] sm:$0xf]
      %v274 = vld [vmem:[%s1 + $0x108] sm:$0xf]
      %v275 = vld [vmem:[%s1 + $0x10c] sm:$0xf]
      %v276 = vld [vmem:[%s1 + $0x110] sm:$0xf]
      %v277 = vld [vmem:[%s1 + $0x114] sm:$0xf]
      %v278 = vld [vmem:[%s1 + $0x118] sm:$0xf]
      %v279 = vld [vmem:[%s1 + $0x11c] sm:$0xf]
      %v280 = vld [vmem:[%s1 + $0x120] sm:$0xf]
      %v281 = vld [vmem:[%s1 + $0x124] sm:$0xf]
      %v282 = vld [vmem:[%s1 + $0x128] sm:$0xf]
      %v283 = vld [vmem:[%s1 + $0x12c] sm:$0xf]
      %v284 = vld [vmem:[%s1 + $0x130] sm:$0xf]
      %v285 = vld [vmem:[%s1 + $0x134] sm:$0xf]
      %v286 = vld [vmem:[%s1 + $0x138] sm:$0xf]
      %v287 = vld [vmem:[%s1 + $0x13c] sm:$0xf]
      %v288 = vld [vmem:[%s1 + $0x140] sm:$0xf]
      %v289 = vld [vmem:[%s1 + $0x144] sm:$0xf]
      %v290 = vld [vmem:[%s1 + $0x148] sm:$0xf]
      %v291 = vld [vmem:[%s1 + $0x14c] sm:$0xf]
      %v292 = vld [vmem:[%s1 + $0x150] sm:$0xf]
      %v293 = vld [vmem:[%s1 + $0x154] sm:$0xf]
      %v294 = vld [vmem:[%s1 + $0x158] sm:$0xf]
      %v295 = vld [vmem:[%s1 + $0x15c] sm:$0xf]
      %v296 = vld [vmem:[%s1 + $0x160] sm:$0xf]
      %v297 = vld [vmem:[%s1 + $0x164] sm:$0xf]
      %v298 = vld [vmem:[%s1 + $0x168] sm:$0xf]
      %v299 = vld [vmem:[%s1 + $0x16c] sm:$0xf]
      %v300 = vld [vmem:[%s1 + $0x170] sm:$0xf]
      %v301 = vld [vmem:[%s1 + $0x174] sm:$0xf]
      %v302 = vld [vmem:[%s1 + $0x178] sm:$0xf]
      %v303 = vld [vmem:[%s1 + $0x17c] sm:$0xf]
      %v340 = vunpack.c.l.b16 %v172
      %v341 = vunpack.c.h.b16 %v172
      %v342 = vunpack.c.l.b16 %v173
      %v343 = vunpack.c.h.b16 %v173
      %v344 = vunpack.c.l.b16 %v174
      %v345 = vunpack.c.h.b16 %v174
      %v346 = vunpack.c.l.b16 %v175
      %v347 = vunpack.c.h.b16 %v175
      %v348 = vunpack.c.l.b16 %v176
      %v349 = vunpack.c.h.b16 %v176
      %v350 = vunpack.c.l.b16 %v177
      %v351 = vunpack.c.h.b16 %v177
      %v352 = vunpack.c.l.b16 %v178
      %v353 = vunpack.c.h.b16 %v178
      %v354 = vunpack.c.l.b16 %v179
      %v355 = vunpack.c.h.b16 %v179
      %v356 = vunpack.c.l.b16 %v180
      %v357 = vunpack.c.h.b16 %v180
      %v358 = vunpack.c.l.b16 %v181
      %v359 = vunpack.c.h.b16 %v181
      %v360 = vunpack.c.l.b16 %v182
      %v361 = vunpack.c.h.b16 %v182
      %v362 = vunpack.c.l.b16 %v183
      %v363 = vunpack.c.h.b16 %v183
      %v364 = vunpack.c.l.b16 %v184
      %v365 = vunpack.c.h.b16 %v184
      %v366 = vunpack.c.l.b16 %v185
      %v367 = vunpack.c.h.b16 %v185
      %v368 = vunpack.c.l.b16 %v186
      %v369 = vunpack.c.h.b16 %v186
      %v370 = vunpack.c.l.b16 %v187
      %v371 = vunpack.c.h.b16 %v187
      %v372 = vunpack.c.l.b16 %v188
      %v373 = vunpack.c.h.b16 %v188
      %v374 = vunpack.c.l.b16 %v189
      %v375 = vunpack.c.h.b16 %v189
      %v376 = vunpack.c.l.b16 %v190
      %v377 = vunpack.c.h.b16 %v190
      %v378 = vunpack.c.l.b16 %v191
      %v379 = vunpack.c.h.b16 %v191
      %v380 = vunpack.c.l.b16 %v192
      %v381 = vunpack.c.h.b16 %v192
      %v382 = vunpack.c.l.b16 %v193
      %v383 = vunpack.c.h.b16 %v193
      %v384 = vunpack.c.l.b16 %v194
      %v385 = vunpack.c.h.b16 %v194
      %v386 = vunpack.c.l.b16 %v195
      %v387 = vunpack.c.h.b16 %v195
      %v388 = vunpack.c.l.b16 %v196
      %v389 = vunpack.c.h.b16 %v196
      %v390 = vunpack.c.l.b16 %v197
      %v391 = vunpack.c.h.b16 %v197
      %v392 = vunpack.c.l.b16 %v198
      %v393 = vunpack.c.h.b16 %v198
      %v394 = vunpack.c.l.b16 %v199
      %v395 = vunpack.c.h.b16 %v199
      %v396 = vunpack.c.l.b16 %v200
      %v397 = vunpack.c.h.b16 %v200
      %v398 = vunpack.c.l.b16 %v201
      %v399 = vunpack.c.h.b16 %v201
      %v400 = vunpack.c.l.b16 %v202
      %v401 = vunpack.c.h.b16 %v202
      %v402 = vunpack.c.l.b16 %v203
      %v403 = vunpack.c.h.b16 %v203
      %v404 = vunpack.c.l.b16 %v204
      %v405 = vunpack.c.h.b16 %v204
      %v406 = vunpack.c.l.b16 %v205
      %v407 = vunpack.c.h.b16 %v205
      %v408 = vunpack.c.l.b16 %v206
      %v409 = vunpack.c.h.b16 %v206
      %v410 = vunpack.c.l.b16 %v207
      %v411 = vunpack.c.h.b16 %v207
      %v412 = vpack.c.b16 %v346, %v340
      %v413 = vpack.c.b16 %v347, %v341
      %v414 = vpack.c.b16 %v348, %v342
      %v415 = vpack.c.b16 %v349, %v343
      %v416 = vpack.c.b16 %v350, %v344
      %v417 = vpack.c.b16 %v351, %v345
      %v418 = vpack.c.b16 %v358, %v352
      %v419 = vpack.c.b16 %v359, %v353
      %v420 = vpack.c.b16 %v360, %v354
      %v421 = vpack.c.b16 %v361, %v355
      %v422 = vpack.c.b16 %v362, %v356
      %v423 = vpack.c.b16 %v363, %v357
      %v424 = vpack.c.b16 %v370, %v364
      %v425 = vpack.c.b16 %v371, %v365
      %v426 = vpack.c.b16 %v372, %v366
      %v427 = vpack.c.b16 %v373, %v367
      %v428 = vpack.c.b16 %v374, %v368
      %v429 = vpack.c.b16 %v375, %v369
      %v430 = vpack.c.b16 %v382, %v376
      %v431 = vpack.c.b16 %v383, %v377
      %v432 = vpack.c.b16 %v384, %v378
      %v433 = vpack.c.b16 %v385, %v379
      %v434 = vpack.c.b16 %v386, %v380
      %v435 = vpack.c.b16 %v387, %v381
      %v436 = vpack.c.b16 %v394, %v388
      %v437 = vpack.c.b16 %v395, %v389
      %v438 = vpack.c.b16 %v396, %v390
      %v439 = vpack.c.b16 %v397, %v391
      %v440 = vpack.c.b16 %v398, %v392
      %v441 = vpack.c.b16 %v399, %v393
      %v442 = vpack.c.b16 %v406, %v400
      %v443 = vpack.c.b16 %v407, %v401
      %v444 = vpack.c.b16 %v408, %v402
      %v445 = vpack.c.b16 %v409, %v403
      %v446 = vpack.c.b16 %v410, %v404
      %v447 = vpack.c.b16 %v411, %v405
      %v580 = vunpack.c.l.b16 %v208
      %v581 = vunpack.c.l.b16 %v209
      %v582 = vunpack.c.l.b16 %v210
      %v583 = vunpack.c.l.b16 %v211
      %v584 = vunpack.c.l.b16 %v212
      %v585 = vunpack.c.l.b16 %v213
      %v586 = vunpack.c.l.b16 %v214
      %v587 = vunpack.c.l.b16 %v215
      %v588 = vunpack.c.l.b16 %v216
      %v589 = vunpack.c.l.b16 %v217
      %v590 = vunpack.c.l.b16 %v218
      %v591 = vunpack.c.l.b16 %v219
      %v592 = vunpack.c.l.b16 %v220
      %v593 = vunpack.c.l.b16 %v221
      %v594 = vunpack.c.l.b16 %v222
      %v595 = vunpack.c.l.b16 %v223
      %v596 = vunpack.c.l.b16 %v224
      %v597 = vunpack.c.l.b16 %v225
      %v598 = vunpack.c.l.b16 %v226
      %v599 = vunpack.c.l.b16 %v227
      %v600 = vunpack.c.l.b16 %v228
      %v601 = vunpack.c.l.b16 %v229
      %v602 = vunpack.c.l.b16 %v230
      %v603 = vunpack.c.l.b16 %v231
      %v604 = vunpack.c.l.b16 %v232
      %v605 = vunpack.c.l.b16 %v233
      %v606 = vunpack.c.l.b16 %v234
      %v607 = vunpack.c.l.b16 %v235
      %v608 = vunpack.c.l.b16 %v236
      %v609 = vunpack.c.l.b16 %v237
      %v610 = vunpack.c.l.b16 %v238
      %v611 = vunpack.c.l.b16 %v239
      %v612 = vunpack.c.l.b16 %v240
      %v613 = vunpack.c.l.b16 %v241
      %v614 = vunpack.c.l.b16 %v242
      %v615 = vunpack.c.l.b16 %v243
      %v616 = vunpack.c.l.b16 %v244
      %v617 = vunpack.c.l.b16 %v245
      %v618 = vunpack.c.l.b16 %v246
      %v619 = vunpack.c.l.b16 %v247
      %v620 = vunpack.c.l.b16 %v248
      %v621 = vunpack.c.l.b16 %v249
      %v622 = vunpack.c.l.b16 %v250
      %v623 = vunpack.c.l.b16 %v251
      %v624 = vunpack.c.l.b16 %v252
      %v625 = vunpack.c.l.b16 %v253
      %v626 = vunpack.c.l.b16 %v254
      %v627 = vunpack.c.l.b16 %v255
      %v628 = vunpack.c.l.b16 %v256
      %v629 = vunpack.c.l.b16 %v257
      %v630 = vunpack.c.l.b16 %v258
      %v631 = vunpack.c.l.b16 %v259
      %v632 = vunpack.c.l.b16 %v260
      %v633 = vunpack.c.l.b16 %v261
      %v634 = vunpack.c.l.b16 %v262
      %v635 = vunpack.c.l.b16 %v263
      %v636 = vunpack.c.l.b16 %v264
      %v637 = vunpack.c.l.b16 %v265
      %v638 = vunpack.c.l.b16 %v266
      %v639 = vunpack.c.l.b16 %v267
      %v640 = vunpack.c.l.b16 %v268
      %v641 = vunpack.c.l.b16 %v269
      %v642 = vunpack.c.l.b16 %v270
      %v643 = vunpack.c.l.b16 %v271
      %v644 = vunpack.c.l.b16 %v272
      %v645 = vunpack.c.l.b16 %v273
      %v646 = vunpack.c.l.b16 %v274
      %v647 = vunpack.c.l.b16 %v275
      %v648 = vunpack.c.l.b16 %v276
      %v649 = vunpack.c.l.b16 %v277
      %v650 = vunpack.c.l.b16 %v278
      %v651 = vunpack.c.l.b16 %v279
      %v652 = vunpack.c.l.b16 %v280
      %v653 = vunpack.c.l.b16 %v281
      %v654 = vunpack.c.l.b16 %v282
      %v655 = vunpack.c.l.b16 %v283
      %v656 = vunpack.c.l.b16 %v284
      %v657 = vunpack.c.l.b16 %v285
      %v658 = vunpack.c.l.b16 %v286
      %v659 = vunpack.c.l.b16 %v287
      %v660 = vunpack.c.l.b16 %v288
      %v661 = vunpack.c.l.b16 %v289
      %v662 = vunpack.c.l.b16 %v290
      %v663 = vunpack.c.l.b16 %v291
      %v664 = vunpack.c.l.b16 %v292
      %v665 = vunpack.c.l.b16 %v293
      %v666 = vunpack.c.l.b16 %v294
      %v667 = vunpack.c.l.b16 %v295
      %v668 = vunpack.c.l.b16 %v296
      %v669 = vunpack.c.l.b16 %v297
      %v670 = vunpack.c.l.b16 %v298
      %v671 = vunpack.c.l.b16 %v299
      %v672 = vunpack.c.l.b16 %v300
      %v673 = vunpack.c.l.b16 %v301
      %v674 = vunpack.c.l.b16 %v302
      %v675 = vunpack.c.l.b16 %v303
      %v676 = vpack.c.b16 %v581, %v580
      %v677 = vpack.c.b16 %v583, %v582
      %v678 = vpack.c.b16 %v585, %v584
      %v679 = vpack.c.b16 %v587, %v586
      %v680 = vpack.c.b16 %v589, %v588
      %v681 = vpack.c.b16 %v591, %v590
      %v682 = vpack.c.b16 %v593, %v592
      %v683 = vpack.c.b16 %v595, %v594
      %v684 = vpack.c.b16 %v597, %v596
      %v685 = vpack.c.b16 %v599, %v598
      %v686 = vpack.c.b16 %v601, %v600
      %v687 = vpack.c.b16 %v603, %v602
      %v688 = vpack.c.b16 %v605, %v604
      %v689 = vpack.c.b16 %v607, %v606
      %v690 = vpack.c.b16 %v609, %v608
      %v691 = vpack.c.b16 %v611, %v610
      %v692 = vpack.c.b16 %v613, %v612
      %v693 = vpack.c.b16 %v615, %v614
      %v694 = vpack.c.b16 %v617, %v616
      %v695 = vpack.c.b16 %v619, %v618
      %v696 = vpack.c.b16 %v621, %v620
      %v697 = vpack.c.b16 %v623, %v622
      %v698 = vpack.c.b16 %v625, %v624
      %v699 = vpack.c.b16 %v627, %v626
      %v700 = vpack.c.b16 %v629, %v628
      %v701 = vpack.c.b16 %v631, %v630
      %v702 = vpack.c.b16 %v633, %v632
      %v703 = vpack.c.b16 %v635, %v634
      %v704 = vpack.c.b16 %v637, %v636
      %v705 = vpack.c.b16 %v639, %v638
      %v706 = vpack.c.b16 %v641, %v640
      %v707 = vpack.c.b16 %v643, %v642
      %v708 = vpack.c.b16 %v645, %v644
      %v709 = vpack.c.b16 %v647, %v646
      %v710 = vpack.c.b16 %v649, %v648
      %v711 = vpack.c.b16 %v651, %v650
      %v712 = vpack.c.b16 %v653, %v652
      %v713 = vpack.c.b16 %v655, %v654
      %v714 = vpack.c.b16 %v657, %v656
      %v715 = vpack.c.b16 %v659, %v658
      %v716 = vpack.c.b16 %v661, %v660
      %v717 = vpack.c.b16 %v663, %v662
      %v718 = vpack.c.b16 %v665, %v664
      %v719 = vpack.c.b16 %v667, %v666
      %v720 = vpack.c.b16 %v669, %v668
      %v721 = vpack.c.b16 %v671, %v670
      %v722 = vpack.c.b16 %v673, %v672
      %v723 = vpack.c.b16 %v675, %v674
      %772 = vmatprep.subr.bf16.mxu0 0
      %773 = vmatpush1.bf16.msra.mxu0 %v676
      %774 = vmatprep.subr.bf16.mxu0 0
      %775 = vmatpush1.bf16.msra.mxu0 %v677
      %776 = vmatprep.subr.bf16.mxu0 0
      %777 = vmatpush1.bf16.msra.mxu0 %v678
      %778 = vmatprep.subr.bf16.mxu0 0
      %779 = vmatpush1.bf16.msra.mxu0 %v679
      %780 = vmatprep.subr.bf16.mxu0 0
      %781 = vmatpush1.bf16.msra.mxu0 %v680
      %782 = vmatprep.subr.bf16.mxu0 0
      %783 = vmatpush1.bf16.msra.mxu0 %v681
      %784 = vmatprep.subr.bf16.mxu0 0
      %785 = vmatpush1.bf16.msra.mxu0 %v682
      %786 = vmatprep.subr.bf16.mxu0 0
      %787 = vmatpush1.bf16.msra.mxu0 %v683
      %788 = vmatprep.subr.bf16.mxu0 0
      %789 = vmatpush1.bf16.msra.mxu0 %v684
      %790 = vmatprep.subr.bf16.mxu0 0
      %791 = vmatpush1.bf16.msra.mxu0 %v685
      %792 = vmatprep.subr.bf16.mxu0 0
      %793 = vmatpush1.bf16.msra.mxu0 %v686
      %794 = vmatprep.subr.bf16.mxu0 0
      %795 = vmatpush1.bf16.msra.mxu0 %v687
      %796 = vmatprep.subr.bf16.mxu0 0
      %797 = vmatpush1.bf16.msra.mxu0 %v688
      %798 = vmatprep.subr.bf16.mxu0 0
      %799 = vmatpush1.bf16.msra.mxu0 %v689
      %800 = vmatprep.subr.bf16.mxu0 0
      %801 = vmatpush1.bf16.msra.mxu0 %v690
      %802 = vmatprep.subr.bf16.mxu0 0
      %803 = vmatpush1.bf16.msra.mxu0 %v691
      %804 = vmatprep.mubr.bf16.mxu0 %v413
      %805 = vmatmul.mubr.bf16.gmra.mrb[0].mxu0 %v412
      %v806 = vpop.f32.mrb[0].mxu0
      %v807 = vadd.f32 0.0, %v806
      %v808 = vpop.f32.mrb[0].mxu0
      %v809 = vpop.f32.mrb[0].mxu0
      %v810 = vadd.f32 0.0, %v809
      %v811 = vpop.f32.mrb[0].mxu0
      %812 = vmatprep.mubr.bf16.mxu0 %v419
      %813 = vmatmul.mubr.bf16.gmra.mrb[0].mxu0 %v418
      %v814 = vpop.f32.mrb[0].mxu0
      %v815 = vadd.f32 0.0, %v814
      %v816 = vpop.f32.mrb[0].mxu0
      %v817 = vpop.f32.mrb[0].mxu0
      %v818 = vadd.f32 0.0, %v817
      %v819 = vpop.f32.mrb[0].mxu0
      %820 = vmatprep.mubr.bf16.mxu0 %v425
      %821 = vmatmul.mubr.bf16.gmra.mrb[0].mxu0 %v424
      %v822 = vpop.f32.mrb[0].mxu0
      %v823 = vadd.f32 0.0, %v822
      %v824 = vpop.f32.mrb[0].mxu0
      %v825 = vpop.f32.mrb[0].mxu0
      %v826 = vadd.f32 0.0, %v825
      %v827 = vpop.f32.mrb[0].mxu0
      %828 = vmatprep.mubr.bf16.mxu0 %v431
      %829 = vmatmul.mubr.bf16.gmra.mrb[0].mxu0 %v430
      %v830 = vpop.f32.mrb[0].mxu0
      %v831 = vadd.f32 0.0, %v830
      %v832 = vpop.f32.mrb[0].mxu0
      %v833 = vpop.f32.mrb[0].mxu0
      %v834 = vadd.f32 0.0, %v833
      %v835 = vpop.f32.mrb[0].mxu0
      %836 = vmatprep.mubr.bf16.mxu0 %v437
      %837 = vmatmul.mubr.bf16.gmra.mrb[0].mxu0 %v436
      %v838 = vpop.f32.mrb[0].mxu0
      %v839 = vadd.f32 0.0, %v838
      %v840 = vpop.f32.mrb[0].mxu0
      %v841 = vpop.f32.mrb[0].mxu0
      %v842 = vadd.f32 0.0, %v841
      %v843 = vpop.f32.mrb[0].mxu0
      %844 = vmatprep.mubr.bf16.mxu0 %v443
      %845 = vmatmul.mubr.bf16.gmra.mrb[0].mxu0 %v442
      %v846 = vpop.f32.mrb[0].mxu0
      %v847 = vadd.f32 0.0, %v846
      %v848 = vpop.f32.mrb[0].mxu0
      %v849 = vpop.f32.mrb[0].mxu0
      %v850 = vadd.f32 0.0, %v849
      %v851 = vpop.f32.mrb[0].mxu0
      %852 = vdwg.mxu0
      %853 = vmatprep.subr.bf16.mxu0 0
      %854 = vmatpush1.bf16.msra.mxu0 %v692
      %855 = vmatprep.subr.bf16.mxu0 0
      %856 = vmatpush1.bf16.msra.mxu0 %v693
      %857 = vmatprep.subr.bf16.mxu0 0
      %858 = vmatpush1.bf16.msra.mxu0 %v694
      %859 = vmatprep.subr.bf16.mxu0 0
      %860 = vmatpush1.bf16.msra.mxu0 %v695
      %861 = vmatprep.subr.bf16.mxu0 0
      %862 = vmatpush1.bf16.msra.mxu0 %v696
      %863 = vmatprep.subr.bf16.mxu0 0
      %864 = vmatpush1.bf16.msra.mxu0 %v697
      %865 = vmatprep.subr.bf16.mxu0 0
      %866 = vmatpush1.bf16.msra.mxu0 %v698
      %867 = vmatprep.subr.bf16.mxu0 0
      %868 = vmatpush1.bf16.msra.mxu0 %v699
      %869 = vmatprep.subr.bf16.mxu0 0
      %870 = vmatpush1.bf16.msra.mxu0 %v700
      %871 = vmatprep.subr.bf16.mxu0 0
      %872 = vmatpush1.bf16.msra.mxu0 %v701
      %873 = vmatprep.subr.bf16.mxu0 0
      %874 = vmatpush1.bf16.msra.mxu0 %v702
      %875 = vmatprep.subr.bf16.mxu0 0
      %876 = vmatpush1.bf16.msra.mxu0 %v703
      %877 = vmatprep.subr.bf16.mxu0 0
      %878 = vmatpush1.bf16.msra.mxu0 %v704
      %879 = vmatprep.subr.bf16.mxu0 0
      %880 = vmatpush1.bf16.msra.mxu0 %v705
      %881 = vmatprep.subr.bf16.mxu0 0
      %882 = vmatpush1.bf16.msra.mxu0 %v706
      %883 = vmatprep.subr.bf16.mxu0 0
      %884 = vmatpush1.bf16.msra.mxu0 %v707
      %885 = vmatprep.mubr.bf16.mxu0 %v415
      %886 = vmatmul.mubr.bf16.gmra.mrb[0].mxu0 %v414
      %v887 = vpop.f32.mrb[0].mxu0
      %v888 = vadd.f32 %v807, %v887
      %v889 = vpop.f32.mrb[0].mxu0
      %v890 = vpop.f32.mrb[0].mxu0
      %v891 = vadd.f32 %v810, %v890
      %v892 = vpop.f32.mrb[0].mxu0
      %893 = vmatprep.mubr.bf16.mxu0 %v421
      %894 = vmatmul.mubr.bf16.gmra.mrb[0].mxu0 %v420
      %v895 = vpop.f32.mrb[0].mxu0
      %v896 = vadd.f32 %v815, %v895
      %v897 = vpop.f32.mrb[0].mxu0
      %v898 = vpop.f32.mrb[0].mxu0
      %v899 = vadd.f32 %v818, %v898
      %v900 = vpop.f32.mrb[0].mxu0
      %901 = vmatprep.mubr.bf16.mxu0 %v427
      %902 = vmatmul.mubr.bf16.gmra.mrb[0].mxu0 %v426
      %v903 = vpop.f32.mrb[0].mxu0
      %v904 = vadd.f32 %v823, %v903
      %v905 = vpop.f32.mrb[0].mxu0
      %v906 = vpop.f32.mrb[0].mxu0
      %v907 = vadd.f32 %v826, %v906
      %v908 = vpop.f32.mrb[0].mxu0
      %909 = vmatprep.mubr.bf16.mxu0 %v433
      %910 = vmatmul.mubr.bf16.gmra.mrb[0].mxu0 %v432
      %v911 = vpop.f32.mrb[0].mxu0
      %v912 = vadd.f32 %v831, %v911
      %v913 = vpop.f32.mrb[0].mxu0
      %v914 = vpop.f32.mrb[0].mxu0
      %v915 = vadd.f32 %v834, %v914
      %v916 = vpop.f32.mrb[0].mxu0
      %917 = vmatprep.mubr.bf16.mxu0 %v439
      %918 = vmatmul.mubr.bf16.gmra.mrb[0].mxu0 %v438
      %v919 = vpop.f32.mrb[0].mxu0
      %v920 = vadd.f32 %v839, %v919
      %v921 = vpop.f32.mrb[0].mxu0
      %v922 = vpop.f32.mrb[0].mxu0
      %v923 = vadd.f32 %v842, %v922
      %v924 = vpop.f32.mrb[0].mxu0
      %925 = vmatprep.mubr.bf16.mxu0 %v445
      %926 = vmatmul.mubr.bf16.gmra.mrb[0].mxu0 %v444
      %v927 = vpop.f32.mrb[0].mxu0
      %v928 = vadd.f32 %v847, %v927
      %v929 = vpop.f32.mrb[0].mxu0
      %v930 = vpop.f32.mrb[0].mxu0
      %v931 = vadd.f32 %v850, %v930
      %v932 = vpop.f32.mrb[0].mxu0
      %933 = vdwg.mxu0
      %934 = vmatprep.subr.bf16.mxu0 0
      %935 = vmatpush1.bf16.msra.mxu0 %v708
      %936 = vmatprep.subr.bf16.mxu0 0
      %937 = vmatpush1.bf16.msra.mxu0 %v709
      %938 = vmatprep.subr.bf16.mxu0 0
      %939 = vmatpush1.bf16.msra.mxu0 %v710
      %940 = vmatprep.subr.bf16.mxu0 0
      %941 = vmatpush1.bf16.msra.mxu0 %v711
      %942 = vmatprep.subr.bf16.mxu0 0
      %943 = vmatpush1.bf16.msra.mxu0 %v712
      %944 = vmatprep.subr.bf16.mxu0 0
      %945 = vmatpush1.bf16.msra.mxu0 %v713
      %946 = vmatprep.subr.bf16.mxu0 0
      %947 = vmatpush1.bf16.msra.mxu0 %v714
      %948 = vmatprep.subr.bf16.mxu0 0
      %949 = vmatpush1.bf16.msra.mxu0 %v715
      %950 = vmatprep.subr.bf16.mxu0 0
      %951 = vmatpush1.bf16.msra.mxu0 %v716
      %952 = vmatprep.subr.bf16.mxu0 0
      %953 = vmatpush1.bf16.msra.mxu0 %v717
      %954 = vmatprep.subr.bf16.mxu0 0
      %955 = vmatpush1.bf16.msra.mxu0 %v718
      %956 = vmatprep.subr.bf16.mxu0 0
      %957 = vmatpush1.bf16.msra.mxu0 %v719
      %958 = vmatprep.subr.bf16.mxu0 0
      %959 = vmatpush1.bf16.msra.mxu0 %v720
      %960 = vmatprep.subr.bf16.mxu0 0
      %961 = vmatpush1.bf16.msra.mxu0 %v721
      %962 = vmatprep.subr.bf16.mxu0 0
      %963 = vmatpush1.bf16.msra.mxu0 %v722
      %964 = vmatprep.subr.bf16.mxu0 0
      %965 = vmatpush1.bf16.msra.mxu0 %v723
      %966 = vmatprep.mubr.bf16.mxu0 %v417
      %967 = vmatmul.mubr.bf16.gmra.mrb[0].mxu0 %v416
      %v968 = vpop.f32.mrb[0].mxu0
      %v969 = vadd.f32 %v888, %v968
      %v970 = vpop.f32.mrb[0].mxu0
      %v971 = vpop.f32.mrb[0].mxu0
      %v972 = vadd.f32 %v891, %v971
      %v973 = vpop.f32.mrb[0].mxu0
      %974 = vmatprep.mubr.bf16.mxu0 %v423
      %975 = vmatmul.mubr.bf16.gmra.mrb[0].mxu0 %v422
      %v976 = vpop.f32.mrb[0].mxu0
      %v977 = vadd.f32 %v896, %v976
      %v978 = vpop.f32.mrb[0].mxu0
      %v979 = vpop.f32.mrb[0].mxu0
      %v980 = vadd.f32 %v899, %v979
      %v981 = vpop.f32.mrb[0].mxu0
      %982 = vmatprep.mubr.bf16.mxu0 %v429
      %983 = vmatmul.mubr.bf16.gmra.mrb[0].mxu0 %v428
      %v984 = vpop.f32.mrb[0].mxu0
      %v985 = vadd.f32 %v904, %v984
      %v986 = vpop.f32.mrb[0].mxu0
      %v987 = vpop.f32.mrb[0].mxu0
      %v988 = vadd.f32 %v907, %v987
      %v989 = vpop.f32.mrb[0].mxu0
      %990 = vmatprep.mubr.bf16.mxu0 %v435
      %991 = vmatmul.mubr.bf16.gmra.mrb[0].mxu0 %v434
      %v992 = vpop.f32.mrb[0].mxu0
      %v993 = vadd.f32 %v912, %v992
      %v994 = vpop.f32.mrb[0].mxu0
      %v995 = vpop.f32.mrb[0].mxu0
      %v996 = vadd.f32 %v915, %v995
      %v997 = vpop.f32.mrb[0].mxu0
      %998 = vmatprep.mubr.bf16.mxu0 %v441
      %999 = vmatmul.mubr.bf16.gmra.mrb[0].mxu0 %v440
      %v1000 = vpop.f32.mrb[0].mxu0
      %v1001 = vadd.f32 %v920, %v1000
      %v1002 = vpop.f32.mrb[0].mxu0
      %v1003 = vpop.f32.mrb[0].mxu0
      %v1004 = vadd.f32 %v923, %v1003
      %v1005 = vpop.f32.mrb[0].mxu0
      %1006 = vmatprep.mubr.bf16.mxu0 %v447
      %1007 = vmatmul.mubr.bf16.gmra.mrb[0].mxu0 %v446
      %v1008 = vpop.f32.mrb[0].mxu0
      %v1009 = vadd.f32 %v928, %v1008
      %v1010 = vpop.f32.mrb[0].mxu0
      %v1011 = vpop.f32.mrb[0].mxu0
      %v1012 = vadd.f32 %v931, %v1011
      %v1013 = vpop.f32.mrb[0].mxu0
      %1014 = vdwg.mxu0
      %v1015 = vld [vmem:[%s2] sm:$0x1]
      %v1017 = vlaneseq
      %v1018 = vshrl.u32 %v1017, 7
      %v1019 = vsub.s32 0, %v1018
      %v1020 = vrot.slane %v1015, %v1019
      %v1022 = vadd.f32 %v969, %v1020
      %v1023 = vadd.f32 %v972, %v1020
      %v1024 = vadd.f32 %v977, %v1020
      %v1025 = vadd.f32 %v980, %v1020
      %v1026 = vadd.f32 %v985, %v1020
      %v1027 = vadd.f32 %v988, %v1020
      %v1028 = vadd.f32 %v993, %v1020
      %v1029 = vadd.f32 %v996, %v1020
      %v1030 = vadd.f32 %v1001, %v1020
      %v1031 = vadd.f32 %v1004, %v1020
      %v1032 = vadd.f32 %v1009, %v1020
      %v1033 = vadd.f32 %v1012, %v1020
      %v1034 = vmax.f32 %v1022, 0.0
      %v1035 = vmax.f32 %v1023, 0.0
      %v1036 = vmax.f32 %v1024, 0.0
      %v1037 = vmax.f32 %v1025, 0.0
      %v1038 = vmax.f32 %v1026, 0.0
      %v1039 = vmax.f32 %v1027, 0.0
      %v1040 = vmax.f32 %v1028, 0.0
      %v1041 = vmax.f32 %v1029, 0.0
      %v1042 = vmax.f32 %v1030, 0.0
      %v1043 = vmax.f32 %v1031, 0.0
      %v1044 = vmax.f32 %v1032, 0.0
      %v1045 = vmax.f32 %v1033, 0.0
      %1046 = vst [vmem:[#allocation2] sm:$0xff] %v1034
      %1047 = vst [vmem:[#allocation2 + $0x8] sm:$0xff] %v1035
      %1048 = vst [vmem:[#allocation2 + $0x10] sm:$0xff] %v1036
      %1049 = vst [vmem:[#allocation2 + $0x18] sm:$0xff] %v1037
      %1050 = vst [vmem:[#allocation2 + $0x20] sm:$0xff] %v1038
      %1051 = vst [vmem:[#allocation2 + $0x28] sm:$0xff] %v1039
      %1052 = vst [vmem:[#allocation2 + $0x30] sm:$0xff] %v1040
      %1053 = vst [vmem:[#allocation2 + $0x38] sm:$0xff] %v1041
      %1054 = vst [vmem:[#allocation2 + $0x40] sm:$0xff] %v1042
      %1055 = vst [vmem:[#allocation2 + $0x48] sm:$0xff] %v1043
      %1056 = vst [vmem:[#allocation2 + $0x50] sm:$0xff] %v1044
      %1057 = vst [vmem:[#allocation2 + $0x58] sm:$0xff] %v1045
      %v1058 = vld [vmem:[#allocation2] sm:$0xff]
      %s1059 = scalar_lea.vmem [#allocation2], 8
      %v1060 = vld [vmem:[%s1059] sm:$0xff]
      %s1061 = scalar_lea.vmem [#allocation2], 16
      %v1062 = vld [vmem:[%s1061] sm:$0xff]
      %v1063 = vmax.f32 %v1058, %v1060
      %v1064 = vmax.f32 %v1063, %v1062
      %1066 = vrot.lane.b32.xlu0 %v1064, 64
      %v1067 = vpop.permute.xlu0 %1066
      %v1069 = vmax.f32 %v1064, %v1067
      %v1070 = vrot.slane %v1064, 1
      %v1072 = vmax.f32 %v1069, %v1070
      %v1073 = vpack.c.bf16 %v1072, %v1072
      %vm1074 = vcmask 518144
      %vm1075 = vsmask.f32 2304
      %vm1076 = vmand %vm1074, %vm1075
      %v1077 = vld [vmem:[%s170] sm:$0x7]
      %v1078 = vsel %vm1076, %v1073, %v1077
      %1079 = vst [vmem:[%s170] sm:$0x7] %v1078
      %v1080 = vld [vmem:[%s1061] sm:$0xff]
      %s1081 = scalar_lea.vmem [#allocation2], 24
      %v1082 = vld [vmem:[%s1081] sm:$0xff]
      %s1083 = scalar_lea.vmem [#allocation2], 32
      %v1084 = vld [vmem:[%s1083] sm:$0xff]
      %v1085 = vmax.f32 %v1080, %v1082
      %v1086 = vmax.f32 %v1085, %v1084
      %1088 = vrot.lane.b32.xlu0 %v1086, 64
      %v1089 = vpop.permute.xlu0 %1088
      %v1091 = vmax.f32 %v1086, %v1089
      %v1092 = vrot.slane %v1086, 1
      %v1094 = vmax.f32 %v1091, %v1092
      %v1095 = vpack.c.bf16 %v1094, %v1094
      %s1096 = scalar_lea.vmem %s170, 4
      %v1097 = vld [vmem:[%s1096] sm:$0x7]
      %v1098 = vsel %vm1076, %v1095, %v1097
      %1099 = vst [vmem:[%s1096] sm:$0x7] %v1098
      %v1100 = vld [vmem:[%s1083] sm:$0xff]
      %s1101 = scalar_lea.vmem [#allocation2], 40
      %v1102 = vld [vmem:[%s1101] sm:$0xff]
      %s1103 = scalar_lea.vmem [#allocation2], 48
      %v1104 = vld [vmem:[%s1103] sm:$0xff]
      %v1105 = vmax.f32 %v1100, %v1102
      %v1106 = vmax.f32 %v1105, %v1104
      %1108 = vrot.lane.b32.xlu0 %v1106, 64
      %v1109 = vpop.permute.xlu0 %1108
      %v1111 = vmax.f32 %v1106, %v1109
      %v1112 = vrot.slane %v1106, 1
      %v1114 = vmax.f32 %v1111, %v1112
      %v1115 = vpack.c.bf16 %v1114, %v1114
      %s1116 = scalar_lea.vmem %s170, 8
      %v1117 = vld [vmem:[%s1116] sm:$0x7]
      %v1118 = vsel %vm1076, %v1115, %v1117
      %1119 = vst [vmem:[%s1116] sm:$0x7] %v1118
      %v1120 = vld [vmem:[%s1103] sm:$0xff]
      %s1121 = scalar_lea.vmem [#allocation2], 56
      %v1122 = vld [vmem:[%s1121] sm:$0xff]
      %s1123 = scalar_lea.vmem [#allocation2], 64
      %v1124 = vld [vmem:[%s1123] sm:$0xff]
      %v1125 = vmax.f32 %v1120, %v1122
      %v1126 = vmax.f32 %v1125, %v1124
      %1128 = vrot.lane.b32.xlu0 %v1126, 64
      %v1129 = vpop.permute.xlu0 %1128
      %v1131 = vmax.f32 %v1126, %v1129
      %v1132 = vrot.slane %v1126, 1
      %v1134 = vmax.f32 %v1131, %v1132
      %v1135 = vpack.c.bf16 %v1134, %v1134
      %s1136 = scalar_lea.vmem %s170, 12
      %v1137 = vld [vmem:[%s1136] sm:$0x7]
      %v1138 = vsel %vm1076, %v1135, %v1137
      %1139 = vst [vmem:[%s1136] sm:$0x7] %v1138
      %v1140 = vld [vmem:[%s1123] sm:$0xff]
      %s1141 = scalar_lea.vmem [#allocation2], 72
      %v1142 = vld [vmem:[%s1141] sm:$0xff]
      %s1143 = scalar_lea.vmem [#allocation2], 80
      %v1144 = vld [vmem:[%s1143] sm:$0xff]
      %v1145 = vmax.f32 %v1140, %v1142
      %v1146 = vmax.f32 %v1145, %v1144
      %1148 = vrot.lane.b32.xlu0 %v1146, 64
      %v1149 = vpop.permute.xlu0 %1148
      %v1151 = vmax.f32 %v1146, %v1149
      %v1152 = vrot.slane %v1146, 1
      %v1154 = vmax.f32 %v1151, %v1152
      %v1155 = vpack.c.bf16 %v1154, %v1154
      %s1156 = scalar_lea.vmem %s170, 16
      %v1157 = vld [vmem:[%s1156] sm:$0x7]
      %v1158 = vsel %vm1076, %v1155, %v1157
      %1159 = vst [vmem:[%s1156] sm:$0x7] %v1158
      %p1160 = scmp.lt.s32.totalorder %s14, 1
      %s1161 = scalar_select %p1160, %s14, 1
      %s1162 = smul.addr %s1161, 5
      %s1163 = smul.addr %s1162, 4
      %s1164 = scalar_lea.vmem %s3, %s1163
      // Predicated region
      $region33: #{net_forward.4} parent=31 // pred_check
        %p1165 = pneg %p100
      $region34: #{net_forward.4} parent=31 // pred_check_branch
        %1167 = sbr.rel (%p1165) target = $region36
      $region35: #{net_forward.4} parent=31 // pred_region
        _
      $region36: #{net_forward.4} parent=31 // pred_fallthru
        _
    $region32: #{net_forward.4} parent=5 // pred_fallthru
      _
    %p1168 = scmp.le.s32.totalorder 2, %s9
    // Predicated region
    $region37: #{net_forward.4} parent=5 // pred_check
      %p1169 = pneg %p1168
    $region38: #{net_forward.4} parent=5 // pred_check_branch
      %1171 = sbr.rel (%p1169) target = $region40
    $region39: #{net_forward.4} parent=5 // pred_region
      %s1172 = ssub.s32 %s9, 2
      // Predicated region
      $region41: #{net_forward.4} parent=39 // pred_check
        %p1173 = pneg %p106
      $region42: #{net_forward.4} parent=39 // pred_check_branch
        %1175 = sbr.rel (%p1173) target = $region44
      $region43: #{net_forward.4} parent=39 // pred_region
        %p1176 = scmp.lt.s32.totalorder %s15, 1
        %s1177 = scalar_select %p1176, %s15, 1
        %s1178 = smul.addr %s1177, 5
        %s1179 = smul.addr %s1178, 4
        %s1180 = scalar_lea.vmem %s3, %s1179
      $region44: #{net_forward.4} parent=39 // pred_fallthru
        _
    $region40: #{net_forward.4} parent=5 // pred_fallthru
      _
  $region6: #{net_forward.4} parent=0 // loop_footer
    %s13 = sadd.s32 1, %s9
  $region7: #{net_forward.4} parent=0 // loop_footer_branch
    %8 = sbr.rel target = $region3
  $region8: #{net_forward.4} parent=0 // loop_exit
    _

// kernel: net_forward.5
$region0: #{net_forward.5}
  #allocation0 [shape = 'u32[]', space=smem, size = 0x4, offset = 0x4, fixed_abs, tag = 'smem constant byte address 0x4 - core index']
  #allocation1 [shape = 'u32[144,128]{1,0:T(1,128)}', space=vmem, size = 0x12000, scoped, tag = 'internal scratch']
  %s0 = inlined_call_operand.vmem [shape: bf16[16,1600], index: 0, kind: input, shape index: {}]
  %s1 = inlined_call_operand.vmem [shape: bf16[1600,512], index: 1, kind: input, shape index: {}]
  %s2 = inlined_call_operand.vmem [shape: f32[1,512], index: 2, kind: input, shape index: {}]
  %s3 = inlined_call_operand.vmem [shape: bf16[512,128], index: 3, kind: input, shape index: {}]
  %s4 = inlined_call_operand.vmem [shape: f32[1,128], index: 4, kind: input, shape index: {}]
  %s5 = inlined_call_operand.vmem [shape: f32[16,128], index: 5, kind: output, shape index: {}]
  %s6 = sld [smem:[#allocation0]]
  $region53: #{net_forward.5} parent=0
    _
  %s8 = ssub.s32 1, %s6
  %s9 = scalar_select 0, %s8, %s6
  loop: start=0, step=1, limit=4
  $region2: #{net_forward.5} parent=0 // loop_pre_header
    _
  $region3: #{net_forward.5} parent=0 // loop_header
    %s11 = sphi 0, %s15
    %p12 = scmp.ge.s32.totalorder %s11, 4
    %s21 = sphi 0, %s23
    %s24 = sphi 0, %s21
    %s25 = sphi 0, %s24
    %s41 = sphi 0, %s25
    %s45 = sphi 0, %s45
    %s47 = sphi 0, %s45
    %s48 = sphi 0, %s47
    %s62 = sphi 0, %s48
    %s66 = sphi 0, %s66
    %s68 = sphi 0, %s66
    %s69 = sphi 0, %s68
    %s83 = sphi 0, %s69
    %s87 = sphi 0, %s87
    %s89 = sphi 0, %s87
    %s90 = sphi 0, %s89
    %s104 = sphi 0, %s90
    %s108 = sphi 0, %s108
    %s110 = sphi 0, %s108
    %s111 = sphi 0, %s110
    %s125 = sphi 0, %s111
    %s131 = sphi 0, %s133
    %s134 = sphi 0, %s131
    %s135 = sphi 0, %s134
    %s151 = sphi 0, %s135
  $region4: #{net_forward.5} parent=0 // loop_header_branch
    %14 = sbr.rel (%p12) target = $region8
  $region5: #{net_forward.5} parent=0 // loop_body
    %s16 = ssub.s32 %s11, 1
    %s17 = ssub.s32 %s11, 2
    %s18 = sadd.s32 %s11, 1
    %s19 = ssub.s32 %s11, %s18
    %p20 = scmp.eq.s32.totalorder %s19, 0
    %s22 = sadd.s32 %s21, 1
    %s23 = scalar_select %p20, %s21, %s22
    %p26 = pneg %p20
    %p27 = scmp.eq.s32.totalorder %s11, 1
    %p28 = por %p26, %p27
    %p29 = scmp.ne.s32.totalorder %s21, %s24
    %p30 = scmp.eq.s32.totalorder %s11, 0
    %p31 = por %p29, %p30
    %p32 = scmp.ne.s32.totalorder %s21, %s24
    %p33 = scmp.eq.s32.totalorder %s16, 1
    %p34 = por %p32, %p33
    %p35 = scmp.ne.s32.totalorder %s24, %s25
    %p36 = scmp.eq.s32.totalorder %s16, 0
    %p37 = por %p35, %p36
    %p38 = scmp.ne.s32.totalorder %s24, %s25
    %p39 = scmp.eq.s32.totalorder %s17, 1
    %p40 = por %p38, %p39
    %p42 = scmp.ne.s32.totalorder %s25, %s41
    %p43 = scmp.eq.s32.totalorder %s17, 0
    %p44 = por %p42, %p43
    %s46 = sadd.s32 %s45, 1
    %p49 = scmp.eq.s32.totalorder %s11, 1
    %p50 = scmp.ne.s32.totalorder %s45, %s47
    %p51 = scmp.eq.s32.totalorder %s11, 0
    %p52 = por %p50, %p51
    %p53 = scmp.ne.s32.totalorder %s45, %s47
    %p54 = scmp.eq.s32.totalorder %s16, 1
    %p55 = por %p53, %p54
    %p56 = scmp.ne.s32.totalorder %s47, %s48
    %p57 = scmp.eq.s32.totalorder %s16, 0
    %p58 = por %p56, %p57
    %p59 = scmp.ne.s32.totalorder %s47, %s48
    %p60 = scmp.eq.s32.totalorder %s17, 1
    %p61 = por %p59, %p60
    %p63 = scmp.ne.s32.totalorder %s48, %s62
    %p64 = scmp.eq.s32.totalorder %s17, 0
    %p65 = por %p63, %p64
    %s67 = sadd.s32 %s66, 1
    %p70 = scmp.eq.s32.totalorder %s11, 1
    %p71 = scmp.ne.s32.totalorder %s66, %s68
    %p72 = scmp.eq.s32.totalorder %s11, 0
    %p73 = por %p71, %p72
    %p74 = scmp.ne.s32.totalorder %s66, %s68
    %p75 = scmp.eq.s32.totalorder %s16, 1
    %p76 = por %p74, %p75
    %p77 = scmp.ne.s32.totalorder %s68, %s69
    %p78 = scmp.eq.s32.totalorder %s16, 0
    %p79 = por %p77, %p78
    %p80 = scmp.ne.s32.totalorder %s68, %s69
    %p81 = scmp.eq.s32.totalorder %s17, 1
    %p82 = por %p80, %p81
    %p84 = scmp.ne.s32.totalorder %s69, %s83
    %p85 = scmp.eq.s32.totalorder %s17, 0
    %p86 = por %p84, %p85
    %s88 = sadd.s32 %s87, 1
    %p91 = scmp.eq.s32.totalorder %s11, 1
    %p92 = scmp.ne.s32.totalorder %s87, %s89
    %p93 = scmp.eq.s32.totalorder %s11, 0
    %p94 = por %p92, %p93
    %p95 = scmp.ne.s32.totalorder %s87, %s89
    %p96 = scmp.eq.s32.totalorder %s16, 1
    %p97 = por %p95, %p96
    %p98 = scmp.ne.s32.totalorder %s89, %s90
    %p99 = scmp.eq.s32.totalorder %s16, 0
    %p100 = por %p98, %p99
    %p101 = scmp.ne.s32.totalorder %s89, %s90
    %p102 = scmp.eq.s32.totalorder %s17, 1
    %p103 = por %p101, %p102
    %p105 = scmp.ne.s32.totalorder %s90, %s104
    %p106 = scmp.eq.s32.totalorder %s17, 0
    %p107 = por %p105, %p106
    %s109 = sadd.s32 %s108, 1
    %p112 = scmp.eq.s32.totalorder %s11, 1
    %p113 = scmp.ne.s32.totalorder %s108, %s110
    %p114 = scmp.eq.s32.totalorder %s11, 0
    %p115 = por %p113, %p114
    %p116 = scmp.ne.s32.totalorder %s108, %s110
    %p117 = scmp.eq.s32.totalorder %s16, 1
    %p118 = por %p116, %p117
    %p119 = scmp.ne.s32.totalorder %s110, %s111
    %p120 = scmp.eq.s32.totalorder %s16, 0
    %p121 = por %p119, %p120
    %p122 = scmp.ne.s32.totalorder %s110, %s111
    %p123 = scmp.eq.s32.totalorder %s17, 1
    %p124 = por %p122, %p123
    %p126 = scmp.ne.s32.totalorder %s111, %s125
    %p127 = scmp.eq.s32.totalorder %s17, 0
    %p128 = por %p126, %p127
    %s129 = ssub.s32 %s11, %s18
    %p130 = scmp.eq.s32.totalorder %s129, 0
    %s132 = sadd.s32 %s131, 1
    %s133 = scalar_select %p130, %s131, %s132
    %p136 = pneg %p130
    %p137 = scmp.eq.s32.totalorder %s11, 1
    %p138 = por %p136, %p137
    %p139 = scmp.ne.s32.totalorder %s131, %s134
    %p140 = scmp.eq.s32.totalorder %s11, 0
    %p141 = por %p139, %p140
    %p142 = scmp.ne.s32.totalorder %s131, %s134
    %p143 = scmp.eq.s32.totalorder %s16, 1
    %p144 = por %p142, %p143
    %p145 = scmp.ne.s32.totalorder %s134, %s135
    %p146 = scmp.eq.s32.totalorder %s16, 0
    %p147 = por %p145, %p146
    %p148 = scmp.ne.s32.totalorder %s134, %s135
    %p149 = scmp.eq.s32.totalorder %s17, 1
    %p150 = por %p148, %p149
    %p152 = scmp.ne.s32.totalorder %s135, %s151
    %p153 = scmp.eq.s32.totalorder %s17, 0
    %p154 = por %p152, %p153
    %p155 = scmp.le.s32.totalorder 1, %s11
    %p156 = scmp.lt.s32.totalorder %s11, 3
    %p157 = pnand %p155, %p156
    %p158 = pneg %p157
    // Predicated region
    $region9: #{net_forward.5} parent=5 // pred_check
      _
    $region10: #{net_forward.5} parent=5 // pred_check_branch
      %160 = sbr.rel (%p157) target = $region12
    $region11: #{net_forward.5} parent=5 // pred_region
      %s161 = ssub.s32 %s11, 1
      // Predicated region
      $region13: #{net_forward.5} parent=11 // pred_check
        %p162 = pneg %p58
      $region14: #{net_forward.5} parent=11 // pred_check_branch
        %164 = sbr.rel (%p162) target = $region16
      $region15: #{net_forward.5} parent=11 // pred_region
        _
      $region16: #{net_forward.5} parent=11 // pred_fallthru
        _
      // Predicated region
      $region17: #{net_forward.5} parent=11 // pred_check
        %p165 = pneg %p79
      $region18: #{net_forward.5} parent=11 // pred_check_branch
        %167 = sbr.rel (%p165) target = $region20
      $region19: #{net_forward.5} parent=11 // pred_region
        _
      $region20: #{net_forward.5} parent=11 // pred_fallthru
        _
      // Predicated region
      $region21: #{net_forward.5} parent=11 // pred_check
        %p168 = pneg %p100
      $region22: #{net_forward.5} parent=11 // pred_check_branch
        %170 = sbr.rel (%p168) target = $region24
      $region23: #{net_forward.5} parent=11 // pred_region
        _
      $region24: #{net_forward.5} parent=11 // pred_fallthru
        _
      // Predicated region
      $region25: #{net_forward.5} parent=11 // pred_check
        %p171 = pneg %p121
      $region26: #{net_forward.5} parent=11 // pred_check_branch
        %173 = sbr.rel (%p171) target = $region28
      $region27: #{net_forward.5} parent=11 // pred_region
        _
      $region28: #{net_forward.5} parent=11 // pred_fallthru
        _
    $region12: #{net_forward.5} parent=5 // pred_fallthru
      _
    %p174 = scmp.lt.s32.totalorder %s11, 2
    // Predicated region
    $region29: #{net_forward.5} parent=5 // pred_check
      %p175 = pneg %p174
    $region30: #{net_forward.5} parent=5 // pred_check_branch
      %177 = sbr.rel (%p175) target = $region32
    $region31: #{net_forward.5} parent=5 // pred_region
      // Predicated region
      $region33: #{net_forward.5} parent=31 // pred_check
        %p178 = pneg %p31
      $region34: #{net_forward.5} parent=31 // pred_check_branch
        %180 = sbr.rel (%p178) target = $region36
      $region35: #{net_forward.5} parent=31 // pred_region
        %p181 = scmp.lt.s32.totalorder %s11, 1
        %s182 = scalar_select %p181, %s11, 1
        %s183 = smul.addr %s182, 13
        %s184 = smul.addr %s183, 4
        %s185 = scalar_lea.vmem %s0, %s184
      $region36: #{net_forward.5} parent=31 // pred_fallthru
        _
    $region32: #{net_forward.5} parent=5 // pred_fallthru
      _
    %p186 = scmp.le.s32.totalorder 1, %s11
    %p187 = scmp.lt.s32.totalorder %s11, 3
    %p188 = pnand %p186, %p187
    %p189 = pneg %p188
    // Predicated region
    $region37: #{net_forward.5} parent=5 // pred_check
      _
    $region38: #{net_forward.5} parent=5 // pred_check_branch
      %191 = sbr.rel (%p188) target = $region40
    $region39: #{net_forward.5} parent=5 // pred_region
      %s192 = ssub.s32 %s11, 1
      %p193 = scmp.lt.s32.totalorder %s16, 1
      %s194 = scalar_select %p193, %s16, 1
      %s195 = smul.addr %s194, 13
      %s196 = smul.addr %s195, 4
      %s197 = scalar_lea.vmem %s0, %s196
      %p198 = pneg %p37
      %p199 = pneg %p34
      %p200 = pneg %p58
      %p201 = pneg %p55
      %p202 = pneg %p79
      %p203 = pneg %p76
      %p204 = pneg %p100
      %p205 = pneg %p97
      %p206 = pneg %p121
      %p207 = pneg %p118
      %p208 = pneg %p147
      %p209 = pneg %p144
      %p210 = scmp.lt.s32.totalorder %s16, 1
      %s211 = scalar_select %p210, %s16, 1
      %s212 = smul.addr %s211, 8
      %s213 = scalar_lea.vmem %s5, %s212
      %p214 = scmp.lt.s32.totalorder %s16, 1
      %s215 = scalar_select %p214, %s16, 1
      %s216 = smul.addr %s215, 13
      %s217 = smul.addr %s216, 4
      %s218 = scalar_lea.vmem %s0, %s217
      %p219 = scmp.lt.s32.totalorder %s16, 1
      %s220 = scalar_select %p219, %s16, 1
      %s221 = smul.addr %s220, 8
      %s222 = scalar_lea.vmem %s5, %s221
      %v224 = vld [vmem:[%s218] sm:$0xff]
      %v225 = vld [vmem:[%s218 + $0x8] sm:$0xff]
      %v226 = vld [vmem:[%s218 + $0x10] sm:$0xff]
      %v227 = vld [vmem:[%s218 + $0x18] sm:$0xff]
      %v228 = vld [vmem:[%s218 + $0x20] sm:$0xff]
      %v229 = vld [vmem:[%s218 + $0x28] sm:$0xff]
      %v230 = vld [vmem:[%s218 + $0x30] sm:$0xf]
      %v231 = vld [vmem:[%s1] sm:$0xff]
      %v232 = vld [vmem:[%s1 + $0x8] sm:$0xff]
      %v233 = vld [vmem:[%s1 + $0x10] sm:$0xff]
      %v234 = vld [vmem:[%s1 + $0x18] sm:$0xff]
      %v235 = vld [vmem:[%s1 + $0x20] sm:$0xff]
      %v236 = vld [vmem:[%s1 + $0x28] sm:$0xff]
      %v237 = vld [vmem:[%s1 + $0x30] sm:$0xff]
      %v238 = vld [vmem:[%s1 + $0x38] sm:$0xff]
      %v239 = vld [vmem:[%s1 + $0x40] sm:$0xff]
      %v240 = vld [vmem:[%s1 + $0x48] sm:$0xff]
      %v241 = vld [vmem:[%s1 + $0x50] sm:$0xff]
      %v242 = vld [vmem:[%s1 + $0x58] sm:$0xff]
      %v243 = vld [vmem:[%s1 + $0x60] sm:$0xff]
      %v244 = vld [vmem:[%s1 + $0x68] sm:$0xff]
      %v245 = vld [vmem:[%s1 + $0x70] sm:$0xff]
      %v246 = vld [vmem:[%s1 + $0x78] sm:$0xff]
      %v247 = vld [vmem:[%s1 + $0x80] sm:$0xff]
      %v248 = vld [vmem:[%s1 + $0x88] sm:$0xff]
      %v249 = vld [vmem:[%s1 + $0x90] sm:$0xff]
      %v250 = vld [vmem:[%s1 + $0x98] sm:$0xff]
      %v251 = vld [vmem:[%s1 + $0xa0] sm:$0xff]
      %v252 = vld [vmem:[%s1 + $0xa8] sm:$0xff]
      %v253 = vld [vmem:[%s1 + $0xb0] sm:$0xff]
      %v254 = vld [vmem:[%s1 + $0xb8] sm:$0xff]
      %v255 = vld [vmem:[%s1 + $0xc0] sm:$0xff]
      %v256 = vld [vmem:[%s1 + $0xc8] sm:$0xff]
      %v257 = vld [vmem:[%s1 + $0xd0] sm:$0xff]
      %v258 = vld [vmem:[%s1 + $0xd8] sm:$0xff]
      %v259 = vld [vmem:[%s1 + $0xe0] sm:$0xff]
      %v260 = vld [vmem:[%s1 + $0xe8] sm:$0xff]
      %v261 = vld [vmem:[%s1 + $0xf0] sm:$0xff]
      %v262 = vld [vmem:[%s1 + $0xf8] sm:$0xff]
      %v263 = vld [vmem:[%s1 + $0x100] sm:$0xff]
      %v264 = vld [vmem:[%s1 + $0x108] sm:$0xff]
      %v265 = vld [vmem:[%s1 + $0x110] sm:$0xff]
      %v266 = vld [vmem:[%s1 + $0x118] sm:$0xff]
      %v267 = vld [vmem:[%s1 + $0x120] sm:$0xff]
      %v268 = vld [vmem:[%s1 + $0x128] sm:$0xff]
      %v269 = vld [vmem:[%s1 + $0x130] sm:$0xff]
      %v270 = vld [vmem:[%s1 + $0x138] sm:$0xff]
      %v271 = vld [vmem:[%s1 + $0x140] sm:$0xff]
      %v272 = vld [vmem:[%s1 + $0x148] sm:$0xff]
      %v273 = vld [vmem:[%s1 + $0x150] sm:$0xff]
      %v274 = vld [vmem:[%s1 + $0x158] sm:$0xff]
      %v275 = vld [vmem:[%s1 + $0x160] sm:$0xff]
      %v276 = vld [vmem:[%s1 + $0x168] sm:$0xff]
      %v277 = vld [vmem:[%s1 + $0x170] sm:$0xff]
      %v278 = vld [vmem:[%s1 + $0x178] sm:$0xff]
      %v279 = vld [vmem:[%s1 + $0x180] sm:$0xff]
      %v280 = vld [vmem:[%s1 + $0x188] sm:$0xff]
      %v281 = vld [vmem:[%s1 + $0x190] sm:$0xff]
      %v282 = vld [vmem:[%s1 + $0x198] sm:$0xff]
      %v283 = vld [vmem:[%s1 + $0x1a0] sm:$0xff]
      %v284 = vld [vmem:[%s1 + $0x1a8] sm:$0xff]
      %v285 = vld [vmem:[%s1 + $0x1b0] sm:$0xff]
      %v286 = vld [vmem:[%s1 + $0x1b8] sm:$0xff]
      %v287 = vld [vmem:[%s1 + $0x1c0] sm:$0xff]
      %v288 = vld [vmem:[%s1 + $0x1c8] sm:$0xff]
      %v289 = vld [vmem:[%s1 + $0x1d0] sm:$0xff]
      %v290 = vld [vmem:[%s1 + $0x1d8] sm:$0xff]
      %v291 = vld [vmem:[%s1 + $0x1e0] sm:$0xff]
      %v292 = vld [vmem:[%s1 + $0x1e8] sm:$0xff]
      %v293 = vld [vmem:[%s1 + $0x1f0] sm:$0xff]
      %v294 = vld [vmem:[%s1 + $0x1f8] sm:$0xff]
      %v295 = vld [vmem:[%s1 + $0x200] sm:$0xff]
      %v296 = vld [vmem:[%s1 + $0x208] sm:$0xff]
      %v297 = vld [vmem:[%s1 + $0x210] sm:$0xff]
      %v298 = vld [vmem:[%s1 + $0x218] sm:$0xff]
      %v299 = vld [vmem:[%s1 + $0x220] sm:$0xff]
      %v300 = vld [vmem:[%s1 + $0x228] sm:$0xff]
      %v301 = vld [vmem:[%s1 + $0x230] sm:$0xff]
      %v302 = vld [vmem:[%s1 + $0x238] sm:$0xff]
      %v303 = vld [vmem:[%s1 + $0x240] sm:$0xff]
      %v304 = vld [vmem:[%s1 + $0x248] sm:$0xff]
      %v305 = vld [vmem:[%s1 + $0x250] sm:$0xff]
      %v306 = vld [vmem:[%s1 + $0x258] sm:$0xff]
      %v307 = vld [vmem:[%s1 + $0x260] sm:$0xff]
      %v308 = vld [vmem:[%s1 + $0x268] sm:$0xff]
      %v309 = vld [vmem:[%s1 + $0x270] sm:$0xff]
      %v310 = vld [vmem:[%s1 + $0x278] sm:$0xff]
      %v311 = vld [vmem:[%s1 + $0x280] sm:$0xff]
      %v312 = vld [vmem:[%s1 + $0x288] sm:$0xff]
      %v313 = vld [vmem:[%s1 + $0x290] sm:$0xff]
      %v314 = vld [vmem:[%s1 + $0x298] sm:$0xff]
      %v315 = vld [vmem:[%s1 + $0x2a0] sm:$0xff]
      %v316 = vld [vmem:[%s1 + $0x2a8] sm:$0xff]
      %v317 = vld [vmem:[%s1 + $0x2b0] sm:$0xff]
      %v318 = vld [vmem:[%s1 + $0x2b8] sm:$0xff]
      %v319 = vld [vmem:[%s1 + $0x2c0] sm:$0xff]
      %v320 = vld [vmem:[%s1 + $0x2c8] sm:$0xff]
      %v321 = vld [vmem:[%s1 + $0x2d0] sm:$0xff]
      %v322 = vld [vmem:[%s1 + $0x2d8] sm:$0xff]
      %v323 = vld [vmem:[%s1 + $0x2e0] sm:$0xff]
      %v324 = vld [vmem:[%s1 + $0x2e8] sm:$0xff]
      %v325 = vld [vmem:[%s1 + $0x2f0] sm:$0xff]
      %v326 = vld [vmem:[%s1 + $0x2f8] sm:$0xff]
      %v327 = vld [vmem:[%s1 + $0x300] sm:$0xff]
      %v328 = vld [vmem:[%s1 + $0x308] sm:$0xff]
      %v329 = vld [vmem:[%s1 + $0x310] sm:$0xff]
      %v330 = vld [vmem:[%s1 + $0x318] sm:$0xff]
      %v331 = vld [vmem:[%s1 + $0x320] sm:$0xff]
      %v332 = vld [vmem:[%s1 + $0x328] sm:$0xff]
      %v333 = vld [vmem:[%s1 + $0x330] sm:$0xff]
      %v334 = vld [vmem:[%s1 + $0x338] sm:$0xff]
      %v335 = vld [vmem:[%s1 + $0x340] sm:$0xff]
      %v336 = vld [vmem:[%s1 + $0x348] sm:$0xff]
      %v337 = vld [vmem:[%s1 + $0x350] sm:$0xff]
      %v338 = vld [vmem:[%s1 + $0x358] sm:$0xff]
      %v339 = vld [vmem:[%s1 + $0x360] sm:$0xff]
      %v340 = vld [vmem:[%s1 + $0x368] sm:$0xff]
      %v341 = vld [vmem:[%s1 + $0x370] sm:$0xff]
      %v342 = vld [vmem:[%s1 + $0x378] sm:$0xff]
      %v343 = vld [vmem:[%s1 + $0x380] sm:$0xff]
      %v344 = vld [vmem:[%s1 + $0x388] sm:$0xff]
      %v345 = vld [vmem:[%s1 + $0x390] sm:$0xff]
      %v346 = vld [vmem:[%s1 + $0x398] sm:$0xff]
      %v347 = vld [vmem:[%s1 + $0x3a0] sm:$0xff]
      %v348 = vld [vmem:[%s1 + $0x3a8] sm:$0xff]
      %v349 = vld [vmem:[%s1 + $0x3b0] sm:$0xff]
      %v350 = vld [vmem:[%s1 + $0x3b8] sm:$0xff]
      %v351 = vld [vmem:[%s1 + $0x3c0] sm:$0xff]
      %v352 = vld [vmem:[%s1 + $0x3c8] sm:$0xff]
      %v353 = vld [vmem:[%s1 + $0x3d0] sm:$0xff]
      %v354 = vld [vmem:[%s1 + $0x3d8] sm:$0xff]
      %v355 = vld [vmem:[%s1 + $0x3e0] sm:$0xff]
      %v356 = vld [vmem:[%s1 + $0x3e8] sm:$0xff]
      %v357 = vld [vmem:[%s1 + $0x3f0] sm:$0xff]
      %v358 = vld [vmem:[%s1 + $0x3f8] sm:$0xff]
      %v359 = vld [vmem:[%s1 + $0x400] sm:$0xff]
      %v360 = vld [vmem:[%s1 + $0x408] sm:$0xff]
      %v361 = vld [vmem:[%s1 + $0x410] sm:$0xff]
      %v362 = vld [vmem:[%s1 + $0x418] sm:$0xff]
      %v363 = vld [vmem:[%s1 + $0x420] sm:$0xff]
      %v364 = vld [vmem:[%s1 + $0x428] sm:$0xff]
      %v365 = vld [vmem:[%s1 + $0x430] sm:$0xff]
      %v366 = vld [vmem:[%s1 + $0x438] sm:$0xff]
      %v367 = vld [vmem:[%s1 + $0x440] sm:$0xff]
      %v368 = vld [vmem:[%s1 + $0x448] sm:$0xff]
      %v369 = vld [vmem:[%s1 + $0x450] sm:$0xff]
      %v370 = vld [vmem:[%s1 + $0x458] sm:$0xff]
      %v371 = vld [vmem:[%s1 + $0x460] sm:$0xff]
      %v372 = vld [vmem:[%s1 + $0x468] sm:$0xff]
      %v373 = vld [vmem:[%s1 + $0x470] sm:$0xff]
      %v374 = vld [vmem:[%s1 + $0x478] sm:$0xff]
      %v375 = vld [vmem:[%s1 + $0x480] sm:$0xff]
      %v376 = vld [vmem:[%s1 + $0x488] sm:$0xff]
      %v377 = vld [vmem:[%s1 + $0x490] sm:$0xff]
      %v378 = vld [vmem:[%s1 + $0x498] sm:$0xff]
      %v379 = vld [vmem:[%s1 + $0x4a0] sm:$0xff]
      %v380 = vld [vmem:[%s1 + $0x4a8] sm:$0xff]
      %v381 = vld [vmem:[%s1 + $0x4b0] sm:$0xff]
      %v382 = vld [vmem:[%s1 + $0x4b8] sm:$0xff]
      %v383 = vld [vmem:[%s1 + $0x4c0] sm:$0xff]
      %v384 = vld [vmem:[%s1 + $0x4c8] sm:$0xff]
      %v385 = vld [vmem:[%s1 + $0x4d0] sm:$0xff]
      %v386 = vld [vmem:[%s1 + $0x4d8] sm:$0xff]
      %v387 = vld [vmem:[%s1 + $0x4e0] sm:$0xff]
      %v388 = vld [vmem:[%s1 + $0x4e8] sm:$0xff]
      %v389 = vld [vmem:[%s1 + $0x4f0] sm:$0xff]
      %v390 = vld [vmem:[%s1 + $0x4f8] sm:$0xff]
      %v391 = vld [vmem:[%s1 + $0x500] sm:$0xff]
      %v392 = vld [vmem:[%s1 + $0x508] sm:$0xff]
      %v393 = vld [vmem:[%s1 + $0x510] sm:$0xff]
      %v394 = vld [vmem:[%s1 + $0x518] sm:$0xff]
      %v395 = vld [vmem:[%s1 + $0x520] sm:$0xff]
      %v396 = vld [vmem:[%s1 + $0x528] sm:$0xff]
      %v397 = vld [vmem:[%s1 + $0x530] sm:$0xff]
      %v398 = vld [vmem:[%s1 + $0x538] sm:$0xff]
      %v399 = vld [vmem:[%s1 + $0x540] sm:$0xff]
      %v400 = vld [vmem:[%s1 + $0x548] sm:$0xff]
      %v401 = vld [vmem:[%s1 + $0x550] sm:$0xff]
      %v402 = vld [vmem:[%s1 + $0x558] sm:$0xff]
      %v403 = vld [vmem:[%s1 + $0x560] sm:$0xff]
      %v404 = vld [vmem:[%s1 + $0x568] sm:$0xff]
      %v405 = vld [vmem:[%s1 + $0x570] sm:$0xff]
      %v406 = vld [vmem:[%s1 + $0x578] sm:$0xff]
      %v407 = vld [vmem:[%s1 + $0x580] sm:$0xff]
      %v408 = vld [vmem:[%s1 + $0x588] sm:$0xff]
      %v409 = vld [vmem:[%s1 + $0x590] sm:$0xff]
      %v410 = vld [vmem:[%s1 + $0x598] sm:$0xff]
      %v411 = vld [vmem:[%s1 + $0x5a0] sm:$0xff]
      %v412 = vld [vmem:[%s1 + $0x5a8] sm:$0xff]
      %v413 = vld [vmem:[%s1 + $0x5b0] sm:$0xff]
      %v414 = vld [vmem:[%s1 + $0x5b8] sm:$0xff]
      %v415 = vld [vmem:[%s1 + $0x5c0] sm:$0xff]
      %v416 = vld [vmem:[%s1 + $0x5c8] sm:$0xff]
      %v417 = vld [vmem:[%s1 + $0x5d0] sm:$0xff]
      %v418 = vld [vmem:[%s1 + $0x5d8] sm:$0xff]
      %v419 = vld [vmem:[%s1 + $0x5e0] sm:$0xff]
      %v420 = vld [vmem:[%s1 + $0x5e8] sm:$0xff]
      %v421 = vld [vmem:[%s1 + $0x5f0] sm:$0xff]
      %v422 = vld [vmem:[%s1 + $0x5f8] sm:$0xff]
      %v423 = vld [vmem:[%s1 + $0x600] sm:$0xff]
      %v424 = vld [vmem:[%s1 + $0x608] sm:$0xff]
      %v425 = vld [vmem:[%s1 + $0x610] sm:$0xff]
      %v426 = vld [vmem:[%s1 + $0x618] sm:$0xff]
      %v427 = vld [vmem:[%s1 + $0x620] sm:$0xff]
      %v428 = vld [vmem:[%s1 + $0x628] sm:$0xff]
      %v429 = vld [vmem:[%s1 + $0x630] sm:$0xff]
      %v430 = vld [vmem:[%s1 + $0x638] sm:$0xff]
      %v431 = vld [vmem:[%s1 + $0x640] sm:$0xff]
      %v432 = vld [vmem:[%s1 + $0x648] sm:$0xff]
      %v433 = vld [vmem:[%s1 + $0x650] sm:$0xff]
      %v434 = vld [vmem:[%s1 + $0x658] sm:$0xff]
      %v435 = vld [vmem:[%s1 + $0x660] sm:$0xff]
      %v436 = vld [vmem:[%s1 + $0x668] sm:$0xff]
      %v437 = vld [vmem:[%s1 + $0x670] sm:$0xff]
      %v438 = vld [vmem:[%s1 + $0x678] sm:$0xff]
      %v439 = vld [vmem:[%s1 + $0x680] sm:$0xff]
      %v440 = vld [vmem:[%s1 + $0x688] sm:$0xff]
      %v441 = vld [vmem:[%s1 + $0x690] sm:$0xff]
      %v442 = vld [vmem:[%s1 + $0x698] sm:$0xff]
      %v443 = vld [vmem:[%s1 + $0x6a0] sm:$0xff]
      %v444 = vld [vmem:[%s1 + $0x6a8] sm:$0xff]
      %v445 = vld [vmem:[%s1 + $0x6b0] sm:$0xff]
      %v446 = vld [vmem:[%s1 + $0x6b8] sm:$0xff]
      %v447 = vld [vmem:[%s1 + $0x6c0] sm:$0xff]
      %v448 = vld [vmem:[%s1 + $0x6c8] sm:$0xff]
      %v449 = vld [vmem:[%s1 + $0x6d0] sm:$0xff]
      %v450 = vld [vmem:[%s1 + $0x6d8] sm:$0xff]
      %v451 = vld [vmem:[%s1 + $0x6e0] sm:$0xff]
      %v452 = vld [vmem:[%s1 + $0x6e8] sm:$0xff]
      %v453 = vld [vmem:[%s1 + $0x6f0] sm:$0xff]
      %v454 = vld [vmem:[%s1 + $0x6f8] sm:$0xff]
      %v455 = vld [vmem:[%s1 + $0x700] sm:$0xff]
      %v456 = vld [vmem:[%s1 + $0x708] sm:$0xff]
      %v457 = vld [vmem:[%s1 + $0x710] sm:$0xff]
      %v458 = vld [vmem:[%s1 + $0x718] sm:$0xff]
      %v459 = vld [vmem:[%s1 + $0x720] sm:$0xff]
      %v460 = vld [vmem:[%s1 + $0x728] sm:$0xff]
      %v461 = vld [vmem:[%s1 + $0x730] sm:$0xff]
      %v462 = vld [vmem:[%s1 + $0x738] sm:$0xff]
      %v463 = vld [vmem:[%s1 + $0x740] sm:$0xff]
      %v464 = vld [vmem:[%s1 + $0x748] sm:$0xff]
      %v465 = vld [vmem:[%s1 + $0x750] sm:$0xff]
      %v466 = vld [vmem:[%s1 + $0x758] sm:$0xff]
      %v467 = vld [vmem:[%s1 + $0x760] sm:$0xff]
      %v468 = vld [vmem:[%s1 + $0x768] sm:$0xff]
      %v469 = vld [vmem:[%s1 + $0x770] sm:$0xff]
      %v470 = vld [vmem:[%s1 + $0x778] sm:$0xff]
      %v471 = vld [vmem:[%s1 + $0x780] sm:$0xff]
      %v472 = vld [vmem:[%s1 + $0x788] sm:$0xff]
      %v473 = vld [vmem:[%s1 + $0x790] sm:$0xff]
      %v474 = vld [vmem:[%s1 + $0x798] sm:$0xff]
      %v475 = vld [vmem:[%s1 + $0x7a0] sm:$0xff]
      %v476 = vld [vmem:[%s1 + $0x7a8] sm:$0xff]
      %v477 = vld [vmem:[%s1 + $0x7b0] sm:$0xff]
      %v478 = vld [vmem:[%s1 + $0x7b8] sm:$0xff]
      %v479 = vld [vmem:[%s1 + $0x7c0] sm:$0xff]
      %v480 = vld [vmem:[%s1 + $0x7c8] sm:$0xff]
      %v481 = vld [vmem:[%s1 + $0x7d0] sm:$0xff]
      %v482 = vld [vmem:[%s1 + $0x7d8] sm:$0xff]
      %v483 = vld [vmem:[%s1 + $0x7e0] sm:$0xff]
      %v484 = vld [vmem:[%s1 + $0x7e8] sm:$0xff]
      %v485 = vld [vmem:[%s1 + $0x7f0] sm:$0xff]
      %v486 = vld [vmem:[%s1 + $0x7f8] sm:$0xff]
      %v487 = vld [vmem:[%s1 + $0x800] sm:$0xff]
      %v488 = vld [vmem:[%s1 + $0x808] sm:$0xff]
      %v489 = vld [vmem:[%s1 + $0x810] sm:$0xff]
      %v490 = vld [vmem:[%s1 + $0x818] sm:$0xff]
      %v491 = vld [vmem:[%s1 + $0x820] sm:$0xff]
      %v492 = vld [vmem:[%s1 + $0x828] sm:$0xff]
      %v493 = vld [vmem:[%s1 + $0x830] sm:$0xff]
      %v494 = vld [vmem:[%s1 + $0x838] sm:$0xff]
      %v495 = vld [vmem:[%s1 + $0x840] sm:$0xff]
      %v496 = vld [vmem:[%s1 + $0x848] sm:$0xff]
      %v497 = vld [vmem:[%s1 + $0x850] sm:$0xff]
      %v498 = vld [vmem:[%s1 + $0x858] sm:$0xff]
      %v499 = vld [vmem:[%s1 + $0x860] sm:$0xff]
      %v500 = vld [vmem:[%s1 + $0x868] sm:$0xff]
      %v501 = vld [vmem:[%s1 + $0x870] sm:$0xff]
      %v502 = vld [vmem:[%s1 + $0x878] sm:$0xff]
      %v503 = vld [vmem:[%s1 + $0x880] sm:$0xff]
      %v504 = vld [vmem:[%s1 + $0x888] sm:$0xff]
      %v505 = vld [vmem:[%s1 + $0x890] sm:$0xff]
      %v506 = vld [vmem:[%s1 + $0x898] sm:$0xff]
      %v507 = vld [vmem:[%s1 + $0x8a0] sm:$0xff]
      %v508 = vld [vmem:[%s1 + $0x8a8] sm:$0xff]
      %v509 = vld [vmem:[%s1 + $0x8b0] sm:$0xff]
      %v510 = vld [vmem:[%s1 + $0x8b8] sm:$0xff]
      %v511 = vld [vmem:[%s1 + $0x8c0] sm:$0xff]
      %v512 = vld [vmem:[%s1 + $0x8c8] sm:$0xff]
      %v513 = vld [vmem:[%s1 + $0x8d0] sm:$0xff]
      %v514 = vld [vmem:[%s1 + $0x8d8] sm:$0xff]
      %v515 = vld [vmem:[%s1 + $0x8e0] sm:$0xff]
      %v516 = vld [vmem:[%s1 + $0x8e8] sm:$0xff]
      %v517 = vld [vmem:[%s1 + $0x8f0] sm:$0xff]
      %v518 = vld [vmem:[%s1 + $0x8f8] sm:$0xff]
      %v519 = vld [vmem:[%s1 + $0x900] sm:$0xff]
      %v520 = vld [vmem:[%s1 + $0x908] sm:$0xff]
      %v521 = vld [vmem:[%s1 + $0x910] sm:$0xff]
      %v522 = vld [vmem:[%s1 + $0x918] sm:$0xff]
      %v523 = vld [vmem:[%s1 + $0x920] sm:$0xff]
      %v524 = vld [vmem:[%s1 + $0x928] sm:$0xff]
      %v525 = vld [vmem:[%s1 + $0x930] sm:$0xff]
      %v526 = vld [vmem:[%s1 + $0x938] sm:$0xff]
      %v527 = vld [vmem:[%s1 + $0x940] sm:$0xff]
      %v528 = vld [vmem:[%s1 + $0x948] sm:$0xff]
      %v529 = vld [vmem:[%s1 + $0x950] sm:$0xff]
      %v530 = vld [vmem:[%s1 + $0x958] sm:$0xff]
      %v531 = vld [vmem:[%s1 + $0x960] sm:$0xff]
      %v532 = vld [vmem:[%s1 + $0x968] sm:$0xff]
      %v533 = vld [vmem:[%s1 + $0x970] sm:$0xff]
      %v534 = vld [vmem:[%s1 + $0x978] sm:$0xff]
      %v535 = vld [vmem:[%s1 + $0x980] sm:$0xff]
      %v536 = vld [vmem:[%s1 + $0x988] sm:$0xff]
      %v537 = vld [vmem:[%s1 + $0x990] sm:$0xff]
      %v538 = vld [vmem:[%s1 + $0x998] sm:$0xff]
      %v539 = vld [vmem:[%s1 + $0x9a0] sm:$0xff]
      %v540 = vld [vmem:[%s1 + $0x9a8] sm:$0xff]
      %v541 = vld [vmem:[%s1 + $0x9b0] sm:$0xff]
      %v542 = vld [vmem:[%s1 + $0x9b8] sm:$0xff]
      %v543 = vld [vmem:[%s1 + $0x9c0] sm:$0xff]
      %v544 = vld [vmem:[%s1 + $0x9c8] sm:$0xff]
      %v545 = vld [vmem:[%s1 + $0x9d0] sm:$0xff]
      %v546 = vld [vmem:[%s1 + $0x9d8] sm:$0xff]
      %v547 = vld [vmem:[%s1 + $0x9e0] sm:$0xff]
      %v548 = vld [vmem:[%s1 + $0x9e8] sm:$0xff]
      %v549 = vld [vmem:[%s1 + $0x9f0] sm:$0xff]
      %v550 = vld [vmem:[%s1 + $0x9f8] sm:$0xff]
      %v551 = vld [vmem:[%s1 + $0xa00] sm:$0xff]
      %v552 = vld [vmem:[%s1 + $0xa08] sm:$0xff]
      %v553 = vld [vmem:[%s1 + $0xa10] sm:$0xff]
      %v554 = vld [vmem:[%s1 + $0xa18] sm:$0xff]
      %v555 = vld [vmem:[%s1 + $0xa20] sm:$0xff]
      %v556 = vld [vmem:[%s1 + $0xa28] sm:$0xff]
      %v557 = vld [vmem:[%s1 + $0xa30] sm:$0xff]
      %v558 = vld [vmem:[%s1 + $0xa38] sm:$0xff]
      %v559 = vld [vmem:[%s1 + $0xa40] sm:$0xff]
      %v560 = vld [vmem:[%s1 + $0xa48] sm:$0xff]
      %v561 = vld [vmem:[%s1 + $0xa50] sm:$0xff]
      %v562 = vld [vmem:[%s1 + $0xa58] sm:$0xff]
      %v563 = vld [vmem:[%s1 + $0xa60] sm:$0xff]
      %v564 = vld [vmem:[%s1 + $0xa68] sm:$0xff]
      %v565 = vld [vmem:[%s1 + $0xa70] sm:$0xff]
      %v566 = vld [vmem:[%s1 + $0xa78] sm:$0xff]
      %v567 = vld [vmem:[%s1 + $0xa80] sm:$0xff]
      %v568 = vld [vmem:[%s1 + $0xa88] sm:$0xff]
      %v569 = vld [vmem:[%s1 + $0xa90] sm:$0xff]
      %v570 = vld [vmem:[%s1 + $0xa98] sm:$0xff]
      %v571 = vld [vmem:[%s1 + $0xaa0] sm:$0xff]
      %v572 = vld [vmem:[%s1 + $0xaa8] sm:$0xff]
      %v573 = vld [vmem:[%s1 + $0xab0] sm:$0xff]
      %v574 = vld [vmem:[%s1 + $0xab8] sm:$0xff]
      %v575 = vld [vmem:[%s1 + $0xac0] sm:$0xff]
      %v576 = vld [vmem:[%s1 + $0xac8] sm:$0xff]
      %v577 = vld [vmem:[%s1 + $0xad0] sm:$0xff]
      %v578 = vld [vmem:[%s1 + $0xad8] sm:$0xff]
      %v579 = vld [vmem:[%s1 + $0xae0] sm:$0xff]
      %v580 = vld [vmem:[%s1 + $0xae8] sm:$0xff]
      %v581 = vld [vmem:[%s1 + $0xaf0] sm:$0xff]
      %v582 = vld [vmem:[%s1 + $0xaf8] sm:$0xff]
      %v583 = vld [vmem:[%s1 + $0xb00] sm:$0xff]
      %v584 = vld [vmem:[%s1 + $0xb08] sm:$0xff]
      %v585 = vld [vmem:[%s1 + $0xb10] sm:$0xff]
      %v586 = vld [vmem:[%s1 + $0xb18] sm:$0xff]
      %v587 = vld [vmem:[%s1 + $0xb20] sm:$0xff]
      %v588 = vld [vmem:[%s1 + $0xb28] sm:$0xff]
      %v589 = vld [vmem:[%s1 + $0xb30] sm:$0xff]
      %v590 = vld [vmem:[%s1 + $0xb38] sm:$0xff]
      %v591 = vld [vmem:[%s1 + $0xb40] sm:$0xff]
      %v592 = vld [vmem:[%s1 + $0xb48] sm:$0xff]
      %v593 = vld [vmem:[%s1 + $0xb50] sm:$0xff]
      %v594 = vld [vmem:[%s1 + $0xb58] sm:$0xff]
      %v595 = vld [vmem:[%s1 + $0xb60] sm:$0xff]
      %v596 = vld [vmem:[%s1 + $0xb68] sm:$0xff]
      %v597 = vld [vmem:[%s1 + $0xb70] sm:$0xff]
      %v598 = vld [vmem:[%s1 + $0xb78] sm:$0xff]
      %v599 = vld [vmem:[%s1 + $0xb80] sm:$0xff]
      %v600 = vld [vmem:[%s1 + $0xb88] sm:$0xff]
      %v601 = vld [vmem:[%s1 + $0xb90] sm:$0xff]
      %v602 = vld [vmem:[%s1 + $0xb98] sm:$0xff]
      %v603 = vld [vmem:[%s1 + $0xba0] sm:$0xff]
      %v604 = vld [vmem:[%s1 + $0xba8] sm:$0xff]
      %v605 = vld [vmem:[%s1 + $0xbb0] sm:$0xff]
      %v606 = vld [vmem:[%s1 + $0xbb8] sm:$0xff]
      %v607 = vld [vmem:[%s1 + $0xbc0] sm:$0xff]
      %v608 = vld [vmem:[%s1 + $0xbc8] sm:$0xff]
      %v609 = vld [vmem:[%s1 + $0xbd0] sm:$0xff]
      %v610 = vld [vmem:[%s1 + $0xbd8] sm:$0xff]
      %v611 = vld [vmem:[%s1 + $0xbe0] sm:$0xff]
      %v612 = vld [vmem:[%s1 + $0xbe8] sm:$0xff]
      %v613 = vld [vmem:[%s1 + $0xbf0] sm:$0xff]
      %v614 = vld [vmem:[%s1 + $0xbf8] sm:$0xff]
      %v615 = vld [vmem:[%s1 + $0xc00] sm:$0xff]
      %v616 = vld [vmem:[%s1 + $0xc08] sm:$0xff]
      %v617 = vld [vmem:[%s1 + $0xc10] sm:$0xff]
      %v618 = vld [vmem:[%s1 + $0xc18] sm:$0xff]
      %v619 = vld [vmem:[%s1 + $0xc20] sm:$0xff]
      %v620 = vld [vmem:[%s1 + $0xc28] sm:$0xff]
      %v621 = vld [vmem:[%s1 + $0xc30] sm:$0xff]
      %v622 = vld [vmem:[%s1 + $0xc38] sm:$0xff]
      %v623 = vld [vmem:[%s1 + $0xc40] sm:$0xff]
      %v624 = vld [vmem:[%s1 + $0xc48] sm:$0xff]
      %v625 = vld [vmem:[%s1 + $0xc50] sm:$0xff]
      %v626 = vld [vmem:[%s1 + $0xc58] sm:$0xff]
      %v627 = vld [vmem:[%s1 + $0xc60] sm:$0xff]
      %v628 = vld [vmem:[%s1 + $0xc68] sm:$0xff]
      %v629 = vld [vmem:[%s1 + $0xc70] sm:$0xff]
      %v630 = vld [vmem:[%s1 + $0xc78] sm:$0xff]
      %v631 = vld [vmem:[%s2] sm:$0xf]
      %v633 = vlaneseq
      %v634 = vshrl.u32 %v633, 7
      %v635 = vsub.s32 0, %v634
      %v636 = vrot.slane %v631, %v635
      %v637 = vlaneseq
      %v638 = vshrl.u32 %v637, 7
      %v639 = vsub.s32 1, %v638
      %v640 = vrot.slane %v631, %v639
      %v641 = vlaneseq
      %v642 = vshrl.u32 %v641, 7
      %v643 = vsub.s32 2, %v642
      %v644 = vrot.slane %v631, %v643
      %v645 = vlaneseq
      %v646 = vshrl.u32 %v645, 7
      %v647 = vsub.s32 3, %v646
      %v648 = vrot.slane %v631, %v647
      %v660 = vunpack.c.l.b16 %v224
      %v661 = vunpack.c.h.b16 %v224
      %v662 = vunpack.c.l.b16 %v225
      %v663 = vunpack.c.h.b16 %v225
      %v664 = vunpack.c.l.b16 %v226
      %v665 = vunpack.c.h.b16 %v226
      %v666 = vunpack.c.l.b16 %v227
      %v667 = vunpack.c.h.b16 %v227
      %v668 = vunpack.c.l.b16 %v228
      %v669 = vunpack.c.h.b16 %v228
      %v670 = vunpack.c.l.b16 %v229
      %v671 = vunpack.c.h.b16 %v229
      %v672 = vunpack.c.l.b16 %v230
      %v673 = vpack.c.b16 %v660, %v660
      %v674 = vpack.c.b16 %v661, %v661
      %v675 = vpack.c.b16 %v662, %v662
      %v676 = vpack.c.b16 %v663, %v663
      %v677 = vpack.c.b16 %v664, %v664
      %v678 = vpack.c.b16 %v665, %v665
      %v679 = vpack.c.b16 %v666, %v666
      %v680 = vpack.c.b16 %v667, %v667
      %v681 = vpack.c.b16 %v668, %v668
      %v682 = vpack.c.b16 %v669, %v669
      %v683 = vpack.c.b16 %v670, %v670
      %v684 = vpack.c.b16 %v671, %v671
      %v685 = vpack.c.b16 %v672, %v672
      %v1098 = vunpack.c.l.b16 %v231
      %v1099 = vunpack.c.h.b16 %v231
      %v1100 = vunpack.c.l.b16 %v232
      %v1101 = vunpack.c.h.b16 %v232
      %v1102 = vunpack.c.l.b16 %v233
      %v1103 = vunpack.c.h.b16 %v233
      %v1104 = vunpack.c.l.b16 %v234
      %v1105 = vunpack.c.h.b16 %v234
      %v1106 = vunpack.c.l.b16 %v235
      %v1107 = vunpack.c.h.b16 %v235
      %v1108 = vunpack.c.l.b16 %v236
      %v1109 = vunpack.c.h.b16 %v236
      %v1110 = vunpack.c.l.b16 %v237
      %v1111 = vunpack.c.h.b16 %v237
      %v1112 = vunpack.c.l.b16 %v238
      %v1113 = vunpack.c.h.b16 %v238
      %v1114 = vunpack.c.l.b16 %v239
      %v1115 = vunpack.c.h.b16 %v239
      %v1116 = vunpack.c.l.b16 %v240
      %v1117 = vunpack.c.h.b16 %v240
      %v1118 = vunpack.c.l.b16 %v241
      %v1119 = vunpack.c.h.b16 %v241
      %v1120 = vunpack.c.l.b16 %v242
      %v1121 = vunpack.c.h.b16 %v242
      %v1122 = vunpack.c.l.b16 %v243
      %v1123 = vunpack.c.h.b16 %v243
      %v1124 = vunpack.c.l.b16 %v244
      %v1125 = vunpack.c.h.b16 %v244
      %v1126 = vunpack.c.l.b16 %v245
      %v1127 = vunpack.c.h.b16 %v245
      %v1128 = vunpack.c.l.b16 %v246
      %v1129 = vunpack.c.h.b16 %v246
      %v1130 = vunpack.c.l.b16 %v247
      %v1131 = vunpack.c.h.b16 %v247
      %v1132 = vunpack.c.l.b16 %v248
      %v1133 = vunpack.c.h.b16 %v248
      %v1134 = vunpack.c.l.b16 %v249
      %v1135 = vunpack.c.h.b16 %v249
      %v1136 = vunpack.c.l.b16 %v250
      %v1137 = vunpack.c.h.b16 %v250
      %v1138 = vunpack.c.l.b16 %v251
      %v1139 = vunpack.c.h.b16 %v251
      %v1140 = vunpack.c.l.b16 %v252
      %v1141 = vunpack.c.h.b16 %v252
      %v1142 = vunpack.c.l.b16 %v253
      %v1143 = vunpack.c.h.b16 %v253
      %v1144 = vunpack.c.l.b16 %v254
      %v1145 = vunpack.c.h.b16 %v254
      %v1146 = vunpack.c.l.b16 %v255
      %v1147 = vunpack.c.h.b16 %v255
      %v1148 = vunpack.c.l.b16 %v256
      %v1149 = vunpack.c.h.b16 %v256
      %v1150 = vunpack.c.l.b16 %v257
      %v1151 = vunpack.c.h.b16 %v257
      %v1152 = vunpack.c.l.b16 %v258
      %v1153 = vunpack.c.h.b16 %v258
      %v1154 = vunpack.c.l.b16 %v259
      %v1155 = vunpack.c.h.b16 %v259
      %v1156 = vunpack.c.l.b16 %v260
      %v1157 = vunpack.c.h.b16 %v260
      %v1158 = vunpack.c.l.b16 %v261
      %v1159 = vunpack.c.h.b16 %v261
      %v1160 = vunpack.c.l.b16 %v262
      %v1161 = vunpack.c.h.b16 %v262
      %v1162 = vunpack.c.l.b16 %v263
      %v1163 = vunpack.c.h.b16 %v263
      %v1164 = vunpack.c.l.b16 %v264
      %v1165 = vunpack.c.h.b16 %v264
      %v1166 = vunpack.c.l.b16 %v265
      %v1167 = vunpack.c.h.b16 %v265
      %v1168 = vunpack.c.l.b16 %v266
      %v1169 = vunpack.c.h.b16 %v266
      %v1170 = vunpack.c.l.b16 %v267
      %v1171 = vunpack.c.h.b16 %v267
      %v1172 = vunpack.c.l.b16 %v268
      %v1173 = vunpack.c.h.b16 %v268
      %v1174 = vunpack.c.l.b16 %v269
      %v1175 = vunpack.c.h.b16 %v269
      %v1176 = vunpack.c.l.b16 %v270
      %v1177 = vunpack.c.h.b16 %v270
      %v1178 = vunpack.c.l.b16 %v271
      %v1179 = vunpack.c.h.b16 %v271
      %v1180 = vunpack.c.l.b16 %v272
      %v1181 = vunpack.c.h.b16 %v272
      %v1182 = vunpack.c.l.b16 %v273
      %v1183 = vunpack.c.h.b16 %v273
      %v1184 = vunpack.c.l.b16 %v274
      %v1185 = vunpack.c.h.b16 %v274
      %v1186 = vunpack.c.l.b16 %v275
      %v1187 = vunpack.c.h.b16 %v275
      %v1188 = vunpack.c.l.b16 %v276
      %v1189 = vunpack.c.h.b16 %v276
      %v1190 = vunpack.c.l.b16 %v277
      %v1191 = vunpack.c.h.b16 %v277
      %v1192 = vunpack.c.l.b16 %v278
      %v1193 = vunpack.c.h.b16 %v278
      %v1194 = vunpack.c.l.b16 %v279
      %v1195 = vunpack.c.h.b16 %v279
      %v1196 = vunpack.c.l.b16 %v280
      %v1197 = vunpack.c.h.b16 %v280
      %v1198 = vunpack.c.l.b16 %v281
      %v1199 = vunpack.c.h.b16 %v281
      %v1200 = vunpack.c.l.b16 %v282
      %v1201 = vunpack.c.h.b16 %v282
      %v1202 = vunpack.c.l.b16 %v283
      %v1203 = vunpack.c.h.b16 %v283
      %v1204 = vunpack.c.l.b16 %v284
      %v1205 = vunpack.c.h.b16 %v284
      %v1206 = vunpack.c.l.b16 %v285
      %v1207 = vunpack.c.h.b16 %v285
      %v1208 = vunpack.c.l.b16 %v286
      %v1209 = vunpack.c.h.b16 %v286
      %v1210 = vunpack.c.l.b16 %v287
      %v1211 = vunpack.c.h.b16 %v287
      %v1212 = vunpack.c.l.b16 %v288
      %v1213 = vunpack.c.h.b16 %v288
      %v1214 = vunpack.c.l.b16 %v289
      %v1215 = vunpack.c.h.b16 %v289
      %v1216 = vunpack.c.l.b16 %v290
      %v1217 = vunpack.c.h.b16 %v290
      %v1218 = vunpack.c.l.b16 %v291
      %v1219 = vunpack.c.h.b16 %v291
      %v1220 = vunpack.c.l.b16 %v292
      %v1221 = vunpack.c.h.b16 %v292
      %v1222 = vunpack.c.l.b16 %v293
      %v1223 = vunpack.c.h.b16 %v293
      %v1224 = vunpack.c.l.b16 %v294
      %v1225 = vunpack.c.h.b16 %v294
      %v1226 = vunpack.c.l.b16 %v295
      %v1227 = vunpack.c.h.b16 %v295
      %v1228 = vunpack.c.l.b16 %v296
      %v1229 = vunpack.c.h.b16 %v296
      %v1230 = vunpack.c.l.b16 %v297
      %v1231 = vunpack.c.h.b16 %v297
      %v1232 = vunpack.c.l.b16 %v298
      %v1233 = vunpack.c.h.b16 %v298
      %v1234 = vunpack.c.l.b16 %v299
      %v1235 = vunpack.c.h.b16 %v299
      %v1236 = vunpack.c.l.b16 %v300
      %v1237 = vunpack.c.h.b16 %v300
      %v1238 = vunpack.c.l.b16 %v301
      %v1239 = vunpack.c.h.b16 %v301
      %v1240 = vunpack.c.l.b16 %v302
      %v1241 = vunpack.c.h.b16 %v302
      %v1242 = vunpack.c.l.b16 %v303
      %v1243 = vunpack.c.h.b16 %v303
      %v1244 = vunpack.c.l.b16 %v304
      %v1245 = vunpack.c.h.b16 %v304
      %v1246 = vunpack.c.l.b16 %v305
      %v1247 = vunpack.c.h.b16 %v305
      %v1248 = vunpack.c.l.b16 %v306
      %v1249 = vunpack.c.h.b16 %v306
      %v1250 = vunpack.c.l.b16 %v307
      %v1251 = vunpack.c.h.b16 %v307
      %v1252 = vunpack.c.l.b16 %v308
      %v1253 = vunpack.c.h.b16 %v308
      %v1254 = vunpack.c.l.b16 %v309
      %v1255 = vunpack.c.h.b16 %v309
      %v1256 = vunpack.c.l.b16 %v310
      %v1257 = vunpack.c.h.b16 %v310
      %v1258 = vunpack.c.l.b16 %v311
      %v1259 = vunpack.c.h.b16 %v311
      %v1260 = vunpack.c.l.b16 %v312
      %v1261 = vunpack.c.h.b16 %v312
      %v1262 = vunpack.c.l.b16 %v313
      %v1263 = vunpack.c.h.b16 %v313
      %v1264 = vunpack.c.l.b16 %v314
      %v1265 = vunpack.c.h.b16 %v314
      %v1266 = vunpack.c.l.b16 %v315
      %v1267 = vunpack.c.h.b16 %v315
      %v1268 = vunpack.c.l.b16 %v316
      %v1269 = vunpack.c.h.b16 %v316
      %v1270 = vunpack.c.l.b16 %v317
      %v1271 = vunpack.c.h.b16 %v317
      %v1272 = vunpack.c.l.b16 %v318
      %v1273 = vunpack.c.h.b16 %v318
      %v1274 = vunpack.c.l.b16 %v319
      %v1275 = vunpack.c.h.b16 %v319
      %v1276 = vunpack.c.l.b16 %v320
      %v1277 = vunpack.c.h.b16 %v320
      %v1278 = vunpack.c.l.b16 %v321
      %v1279 = vunpack.c.h.b16 %v321
      %v1280 = vunpack.c.l.b16 %v322
      %v1281 = vunpack.c.h.b16 %v322
      %v1282 = vunpack.c.l.b16 %v323
      %v1283 = vunpack.c.h.b16 %v323
      %v1284 = vunpack.c.l.b16 %v324
      %v1285 = vunpack.c.h.b16 %v324
      %v1286 = vunpack.c.l.b16 %v325
      %v1287 = vunpack.c.h.b16 %v325
      %v1288 = vunpack.c.l.b16 %v326
      %v1289 = vunpack.c.h.b16 %v326
      %v1290 = vunpack.c.l.b16 %v327
      %v1291 = vunpack.c.h.b16 %v327
      %v1292 = vunpack.c.l.b16 %v328
      %v1293 = vunpack.c.h.b16 %v328
      %v1294 = vunpack.c.l.b16 %v329
      %v1295 = vunpack.c.h.b16 %v329
      %v1296 = vunpack.c.l.b16 %v330
      %v1297 = vunpack.c.h.b16 %v330
      %v1298 = vunpack.c.l.b16 %v331
      %v1299 = vunpack.c.h.b16 %v331
      %v1300 = vunpack.c.l.b16 %v332
      %v1301 = vunpack.c.h.b16 %v332
      %v1302 = vunpack.c.l.b16 %v333
      %v1303 = vunpack.c.h.b16 %v333
      %v1304 = vunpack.c.l.b16 %v334
      %v1305 = vunpack.c.h.b16 %v334
      %v1306 = vunpack.c.l.b16 %v335
      %v1307 = vunpack.c.h.b16 %v335
      %v1308 = vunpack.c.l.b16 %v336
      %v1309 = vunpack.c.h.b16 %v336
      %v1310 = vunpack.c.l.b16 %v337
      %v1311 = vunpack.c.h.b16 %v337
      %v1312 = vunpack.c.l.b16 %v338
      %v1313 = vunpack.c.h.b16 %v338
      %v1314 = vunpack.c.l.b16 %v339
      %v1315 = vunpack.c.h.b16 %v339
      %v1316 = vunpack.c.l.b16 %v340
      %v1317 = vunpack.c.h.b16 %v340
      %v1318 = vunpack.c.l.b16 %v341
      %v1319 = vunpack.c.h.b16 %v341
      %v1320 = vunpack.c.l.b16 %v342
      %v1321 = vunpack.c.h.b16 %v342
      %v1322 = vunpack.c.l.b16 %v343
      %v1323 = vunpack.c.h.b16 %v343
      %v1324 = vunpack.c.l.b16 %v344
      %v1325 = vunpack.c.h.b16 %v344
      %v1326 = vunpack.c.l.b16 %v345
      %v1327 = vunpack.c.h.b16 %v345
      %v1328 = vunpack.c.l.b16 %v346
      %v1329 = vunpack.c.h.b16 %v346
      %v1330 = vunpack.c.l.b16 %v347
      %v1331 = vunpack.c.h.b16 %v347
      %v1332 = vunpack.c.l.b16 %v348
      %v1333 = vunpack.c.h.b16 %v348
      %v1334 = vunpack.c.l.b16 %v349
      %v1335 = vunpack.c.h.b16 %v349
      %v1336 = vunpack.c.l.b16 %v350
      %v1337 = vunpack.c.h.b16 %v350
      %v1338 = vunpack.c.l.b16 %v351
      %v1339 = vunpack.c.h.b16 %v351
      %v1340 = vunpack.c.l.b16 %v352
      %v1341 = vunpack.c.h.b16 %v352
      %v1342 = vunpack.c.l.b16 %v353
      %v1343 = vunpack.c.h.b16 %v353
      %v1344 = vunpack.c.l.b16 %v354
      %v1345 = vunpack.c.h.b16 %v354
      %v1346 = vunpack.c.l.b16 %v355
      %v1347 = vunpack.c.h.b16 %v355
      %v1348 = vunpack.c.l.b16 %v356
      %v1349 = vunpack.c.h.b16 %v356
      %v1350 = vunpack.c.l.b16 %v357
      %v1351 = vunpack.c.h.b16 %v357
      %v1352 = vunpack.c.l.b16 %v358
      %v1353 = vunpack.c.h.b16 %v358
      %v1354 = vunpack.c.l.b16 %v359
      %v1355 = vunpack.c.h.b16 %v359
      %v1356 = vunpack.c.l.b16 %v360
      %v1357 = vunpack.c.h.b16 %v360
      %v1358 = vunpack.c.l.b16 %v361
      %v1359 = vunpack.c.h.b16 %v361
      %v1360 = vunpack.c.l.b16 %v362
      %v1361 = vunpack.c.h.b16 %v362
      %v1362 = vunpack.c.l.b16 %v363
      %v1363 = vunpack.c.h.b16 %v363
      %v1364 = vunpack.c.l.b16 %v364
      %v1365 = vunpack.c.h.b16 %v364
      %v1366 = vunpack.c.l.b16 %v365
      %v1367 = vunpack.c.h.b16 %v365
      %v1368 = vunpack.c.l.b16 %v366
      %v1369 = vunpack.c.h.b16 %v366
      %v1370 = vunpack.c.l.b16 %v367
      %v1371 = vunpack.c.h.b16 %v367
      %v1372 = vunpack.c.l.b16 %v368
      %v1373 = vunpack.c.h.b16 %v368
      %v1374 = vunpack.c.l.b16 %v369
      %v1375 = vunpack.c.h.b16 %v369
      %v1376 = vunpack.c.l.b16 %v370
      %v1377 = vunpack.c.h.b16 %v370
      %v1378 = vunpack.c.l.b16 %v371
      %v1379 = vunpack.c.h.b16 %v371
      %v1380 = vunpack.c.l.b16 %v372
      %v1381 = vunpack.c.h.b16 %v372
      %v1382 = vunpack.c.l.b16 %v373
      %v1383 = vunpack.c.h.b16 %v373
      %v1384 = vunpack.c.l.b16 %v374
      %v1385 = vunpack.c.h.b16 %v374
      %v1386 = vunpack.c.l.b16 %v375
      %v1387 = vunpack.c.h.b16 %v375
      %v1388 = vunpack.c.l.b16 %v376
      %v1389 = vunpack.c.h.b16 %v376
      %v1390 = vunpack.c.l.b16 %v377
      %v1391 = vunpack.c.h.b16 %v377
      %v1392 = vunpack.c.l.b16 %v378
      %v1393 = vunpack.c.h.b16 %v378
      %v1394 = vunpack.c.l.b16 %v379
      %v1395 = vunpack.c.h.b16 %v379
      %v1396 = vunpack.c.l.b16 %v380
      %v1397 = vunpack.c.h.b16 %v380
      %v1398 = vunpack.c.l.b16 %v381
      %v1399 = vunpack.c.h.b16 %v381
      %v1400 = vunpack.c.l.b16 %v382
      %v1401 = vunpack.c.h.b16 %v382
      %v1402 = vunpack.c.l.b16 %v383
      %v1403 = vunpack.c.h.b16 %v383
      %v1404 = vunpack.c.l.b16 %v384
      %v1405 = vunpack.c.h.b16 %v384
      %v1406 = vunpack.c.l.b16 %v385
      %v1407 = vunpack.c.h.b16 %v385
      %v1408 = vunpack.c.l.b16 %v386
      %v1409 = vunpack.c.h.b16 %v386
      %v1410 = vunpack.c.l.b16 %v387
      %v1411 = vunpack.c.h.b16 %v387
      %v1412 = vunpack.c.l.b16 %v388
      %v1413 = vunpack.c.h.b16 %v388
      %v1414 = vunpack.c.l.b16 %v389
      %v1415 = vunpack.c.h.b16 %v389
      %v1416 = vunpack.c.l.b16 %v390
      %v1417 = vunpack.c.h.b16 %v390
      %v1418 = vunpack.c.l.b16 %v391
      %v1419 = vunpack.c.h.b16 %v391
      %v1420 = vunpack.c.l.b16 %v392
      %v1421 = vunpack.c.h.b16 %v392
      %v1422 = vunpack.c.l.b16 %v393
      %v1423 = vunpack.c.h.b16 %v393
      %v1424 = vunpack.c.l.b16 %v394
      %v1425 = vunpack.c.h.b16 %v394
      %v1426 = vunpack.c.l.b16 %v395
      %v1427 = vunpack.c.h.b16 %v395
      %v1428 = vunpack.c.l.b16 %v396
      %v1429 = vunpack.c.h.b16 %v396
      %v1430 = vunpack.c.l.b16 %v397
      %v1431 = vunpack.c.h.b16 %v397
      %v1432 = vunpack.c.l.b16 %v398
      %v1433 = vunpack.c.h.b16 %v398
      %v1434 = vunpack.c.l.b16 %v399
      %v1435 = vunpack.c.h.b16 %v399
      %v1436 = vunpack.c.l.b16 %v400
      %v1437 = vunpack.c.h.b16 %v400
      %v1438 = vunpack.c.l.b16 %v401
      %v1439 = vunpack.c.h.b16 %v401
      %v1440 = vunpack.c.l.b16 %v402
      %v1441 = vunpack.c.h.b16 %v402
      %v1442 = vunpack.c.l.b16 %v403
      %v1443 = vunpack.c.h.b16 %v403
      %v1444 = vunpack.c.l.b16 %v404
      %v1445 = vunpack.c.h.b16 %v404
      %v1446 = vunpack.c.l.b16 %v405
      %v1447 = vunpack.c.h.b16 %v405
      %v1448 = vunpack.c.l.b16 %v406
      %v1449 = vunpack.c.h.b16 %v406
      %v1450 = vunpack.c.l.b16 %v407
      %v1451 = vunpack.c.h.b16 %v407
      %v1452 = vunpack.c.l.b16 %v408
      %v1453 = vunpack.c.h.b16 %v408
      %v1454 = vunpack.c.l.b16 %v409
      %v1455 = vunpack.c.h.b16 %v409
      %v1456 = vunpack.c.l.b16 %v410
      %v1457 = vunpack.c.h.b16 %v410
      %v1458 = vunpack.c.l.b16 %v411
      %v1459 = vunpack.c.h.b16 %v411
      %v1460 = vunpack.c.l.b16 %v412
      %v1461 = vunpack.c.h.b16 %v412
      %v1462 = vunpack.c.l.b16 %v413
      %v1463 = vunpack.c.h.b16 %v413
      %v1464 = vunpack.c.l.b16 %v414
      %v1465 = vunpack.c.h.b16 %v414
      %v1466 = vunpack.c.l.b16 %v415
      %v1467 = vunpack.c.h.b16 %v415
      %v1468 = vunpack.c.l.b16 %v416
      %v1469 = vunpack.c.h.b16 %v416
      %v1470 = vunpack.c.l.b16 %v417
      %v1471 = vunpack.c.h.b16 %v417
      %v1472 = vunpack.c.l.b16 %v418
      %v1473 = vunpack.c.h.b16 %v418
      %v1474 = vunpack.c.l.b16 %v419
      %v1475 = vunpack.c.h.b16 %v419
      %v1476 = vunpack.c.l.b16 %v420
      %v1477 = vunpack.c.h.b16 %v420
      %v1478 = vunpack.c.l.b16 %v421
      %v1479 = vunpack.c.h.b16 %v421
      %v1480 = vunpack.c.l.b16 %v422
      %v1481 = vunpack.c.h.b16 %v422
      %v1482 = vunpack.c.l.b16 %v423
      %v1483 = vunpack.c.h.b16 %v423
      %v1484 = vunpack.c.l.b16 %v424
      %v1485 = vunpack.c.h.b16 %v424
      %v1486 = vunpack.c.l.b16 %v425
      %v1487 = vunpack.c.h.b16 %v425
      %v1488 = vunpack.c.l.b16 %v426
      %v1489 = vunpack.c.h.b16 %v426
      %v1490 = vunpack.c.l.b16 %v427
      %v1491 = vunpack.c.h.b16 %v427
      %v1492 = vunpack.c.l.b16 %v428
      %v1493 = vunpack.c.h.b16 %v428
      %v1494 = vunpack.c.l.b16 %v429
      %v1495 = vunpack.c.h.b16 %v429
      %v1496 = vunpack.c.l.b16 %v430
      %v1497 = vunpack.c.h.b16 %v430
      %v1498 = vunpack.c.l.b16 %v431
      %v1499 = vunpack.c.h.b16 %v431
      %v1500 = vunpack.c.l.b16 %v432
      %v1501 = vunpack.c.h.b16 %v432
      %v1502 = vunpack.c.l.b16 %v433
      %v1503 = vunpack.c.h.b16 %v433
      %v1504 = vunpack.c.l.b16 %v434
      %v1505 = vunpack.c.h.b16 %v434
      %v1506 = vunpack.c.l.b16 %v435
      %v1507 = vunpack.c.h.b16 %v435
      %v1508 = vunpack.c.l.b16 %v436
      %v1509 = vunpack.c.h.b16 %v436
      %v1510 = vunpack.c.l.b16 %v437
      %v1511 = vunpack.c.h.b16 %v437
      %v1512 = vunpack.c.l.b16 %v438
      %v1513 = vunpack.c.h.b16 %v438
      %v1514 = vunpack.c.l.b16 %v439
      %v1515 = vunpack.c.h.b16 %v439
      %v1516 = vunpack.c.l.b16 %v440
      %v1517 = vunpack.c.h.b16 %v440
      %v1518 = vunpack.c.l.b16 %v441
      %v1519 = vunpack.c.h.b16 %v441
      %v1520 = vunpack.c.l.b16 %v442
      %v1521 = vunpack.c.h.b16 %v442
      %v1522 = vunpack.c.l.b16 %v443
      %v1523 = vunpack.c.h.b16 %v443
      %v1524 = vunpack.c.l.b16 %v444
      %v1525 = vunpack.c.h.b16 %v444
      %v1526 = vunpack.c.l.b16 %v445
      %v1527 = vunpack.c.h.b16 %v445
      %v1528 = vunpack.c.l.b16 %v446
      %v1529 = vunpack.c.h.b16 %v446
      %v1530 = vunpack.c.l.b16 %v447
      %v1531 = vunpack.c.h.b16 %v447
      %v1532 = vunpack.c.l.b16 %v448
      %v1533 = vunpack.c.h.b16 %v448
      %v1534 = vunpack.c.l.b16 %v449
      %v1535 = vunpack.c.h.b16 %v449
      %v1536 = vunpack.c.l.b16 %v450
      %v1537 = vunpack.c.h.b16 %v450
      %v1538 = vunpack.c.l.b16 %v451
      %v1539 = vunpack.c.h.b16 %v451
      %v1540 = vunpack.c.l.b16 %v452
      %v1541 = vunpack.c.h.b16 %v452
      %v1542 = vunpack.c.l.b16 %v453
      %v1543 = vunpack.c.h.b16 %v453
      %v1544 = vunpack.c.l.b16 %v454
      %v1545 = vunpack.c.h.b16 %v454
      %v1546 = vunpack.c.l.b16 %v455
      %v1547 = vunpack.c.h.b16 %v455
      %v1548 = vunpack.c.l.b16 %v456
      %v1549 = vunpack.c.h.b16 %v456
      %v1550 = vunpack.c.l.b16 %v457
      %v1551 = vunpack.c.h.b16 %v457
      %v1552 = vunpack.c.l.b16 %v458
      %v1553 = vunpack.c.h.b16 %v458
      %v1554 = vunpack.c.l.b16 %v459
      %v1555 = vunpack.c.h.b16 %v459
      %v1556 = vunpack.c.l.b16 %v460
      %v1557 = vunpack.c.h.b16 %v460
      %v1558 = vunpack.c.l.b16 %v461
      %v1559 = vunpack.c.h.b16 %v461
      %v1560 = vunpack.c.l.b16 %v462
      %v1561 = vunpack.c.h.b16 %v462
      %v1562 = vunpack.c.l.b16 %v463
      %v1563 = vunpack.c.h.b16 %v463
      %v1564 = vunpack.c.l.b16 %v464
      %v1565 = vunpack.c.h.b16 %v464
      %v1566 = vunpack.c.l.b16 %v465
      %v1567 = vunpack.c.h.b16 %v465
      %v1568 = vunpack.c.l.b16 %v466
      %v1569 = vunpack.c.h.b16 %v466
      %v1570 = vunpack.c.l.b16 %v467
      %v1571 = vunpack.c.h.b16 %v467
      %v1572 = vunpack.c.l.b16 %v468
      %v1573 = vunpack.c.h.b16 %v468
      %v1574 = vunpack.c.l.b16 %v469
      %v1575 = vunpack.c.h.b16 %v469
      %v1576 = vunpack.c.l.b16 %v470
      %v1577 = vunpack.c.h.b16 %v470
      %v1578 = vunpack.c.l.b16 %v471
      %v1579 = vunpack.c.h.b16 %v471
      %v1580 = vunpack.c.l.b16 %v472
      %v1581 = vunpack.c.h.b16 %v472
      %v1582 = vunpack.c.l.b16 %v473
      %v1583 = vunpack.c.h.b16 %v473
      %v1584 = vunpack.c.l.b16 %v474
      %v1585 = vunpack.c.h.b16 %v474
      %v1586 = vunpack.c.l.b16 %v475
      %v1587 = vunpack.c.h.b16 %v475
      %v1588 = vunpack.c.l.b16 %v476
      %v1589 = vunpack.c.h.b16 %v476
      %v1590 = vunpack.c.l.b16 %v477
      %v1591 = vunpack.c.h.b16 %v477
      %v1592 = vunpack.c.l.b16 %v478
      %v1593 = vunpack.c.h.b16 %v478
      %v1594 = vunpack.c.l.b16 %v479
      %v1595 = vunpack.c.h.b16 %v479
      %v1596 = vunpack.c.l.b16 %v480
      %v1597 = vunpack.c.h.b16 %v480
      %v1598 = vunpack.c.l.b16 %v481
      %v1599 = vunpack.c.h.b16 %v481
      %v1600 = vunpack.c.l.b16 %v482
      %v1601 = vunpack.c.h.b16 %v482
      %v1602 = vunpack.c.l.b16 %v483
      %v1603 = vunpack.c.h.b16 %v483
      %v1604 = vunpack.c.l.b16 %v484
      %v1605 = vunpack.c.h.b16 %v484
      %v1606 = vunpack.c.l.b16 %v485
      %v1607 = vunpack.c.h.b16 %v485
      %v1608 = vunpack.c.l.b16 %v486
      %v1609 = vunpack.c.h.b16 %v486
      %v1610 = vunpack.c.l.b16 %v487
      %v1611 = vunpack.c.h.b16 %v487
      %v1612 = vunpack.c.l.b16 %v488
      %v1613 = vunpack.c.h.b16 %v488
      %v1614 = vunpack.c.l.b16 %v489
      %v1615 = vunpack.c.h.b16 %v489
      %v1616 = vunpack.c.l.b16 %v490
      %v1617 = vunpack.c.h.b16 %v490
      %v1618 = vunpack.c.l.b16 %v491
      %v1619 = vunpack.c.h.b16 %v491
      %v1620 = vunpack.c.l.b16 %v492
      %v1621 = vunpack.c.h.b16 %v492
      %v1622 = vunpack.c.l.b16 %v493
      %v1623 = vunpack.c.h.b16 %v493
      %v1624 = vunpack.c.l.b16 %v494
      %v1625 = vunpack.c.h.b16 %v494
      %v1626 = vunpack.c.l.b16 %v495
      %v1627 = vunpack.c.h.b16 %v495
      %v1628 = vunpack.c.l.b16 %v496
      %v1629 = vunpack.c.h.b16 %v496
      %v1630 = vunpack.c.l.b16 %v497
      %v1631 = vunpack.c.h.b16 %v497
      %v1632 = vunpack.c.l.b16 %v498
      %v1633 = vunpack.c.h.b16 %v498
      %v1634 = vunpack.c.l.b16 %v499
      %v1635 = vunpack.c.h.b16 %v499
      %v1636 = vunpack.c.l.b16 %v500
      %v1637 = vunpack.c.h.b16 %v500
      %v1638 = vunpack.c.l.b16 %v501
      %v1639 = vunpack.c.h.b16 %v501
      %v1640 = vunpack.c.l.b16 %v502
      %v1641 = vunpack.c.h.b16 %v502
      %v1642 = vunpack.c.l.b16 %v503
      %v1643 = vunpack.c.h.b16 %v503
      %v1644 = vunpack.c.l.b16 %v504
      %v1645 = vunpack.c.h.b16 %v504
      %v1646 = vunpack.c.l.b16 %v505
      %v1647 = vunpack.c.h.b16 %v505
      %v1648 = vunpack.c.l.b16 %v506
      %v1649 = vunpack.c.h.b16 %v506
      %v1650 = vunpack.c.l.b16 %v507
      %v1651 = vunpack.c.h.b16 %v507
      %v1652 = vunpack.c.l.b16 %v508
      %v1653 = vunpack.c.h.b16 %v508
      %v1654 = vunpack.c.l.b16 %v509
      %v1655 = vunpack.c.h.b16 %v509
      %v1656 = vunpack.c.l.b16 %v510
      %v1657 = vunpack.c.h.b16 %v510
      %v1658 = vunpack.c.l.b16 %v511
      %v1659 = vunpack.c.h.b16 %v511
      %v1660 = vunpack.c.l.b16 %v512
      %v1661 = vunpack.c.h.b16 %v512
      %v1662 = vunpack.c.l.b16 %v513
      %v1663 = vunpack.c.h.b16 %v513
      %v1664 = vunpack.c.l.b16 %v514
      %v1665 = vunpack.c.h.b16 %v514
      %v1666 = vunpack.c.l.b16 %v515
      %v1667 = vunpack.c.h.b16 %v515
      %v1668 = vunpack.c.l.b16 %v516
      %v1669 = vunpack.c.h.b16 %v516
      %v1670 = vunpack.c.l.b16 %v517
      %v1671 = vunpack.c.h.b16 %v517
      %v1672 = vunpack.c.l.b16 %v518
      %v1673 = vunpack.c.h.b16 %v518
      %v1674 = vunpack.c.l.b16 %v519
      %v1675 = vunpack.c.h.b16 %v519
      %v1676 = vunpack.c.l.b16 %v520
      %v1677 = vunpack.c.h.b16 %v520
      %v1678 = vunpack.c.l.b16 %v521
      %v1679 = vunpack.c.h.b16 %v521
      %v1680 = vunpack.c.l.b16 %v522
      %v1681 = vunpack.c.h.b16 %v522
      %v1682 = vunpack.c.l.b16 %v523
      %v1683 = vunpack.c.h.b16 %v523
      %v1684 = vunpack.c.l.b16 %v524
      %v1685 = vunpack.c.h.b16 %v524
      %v1686 = vunpack.c.l.b16 %v525
      %v1687 = vunpack.c.h.b16 %v525
      %v1688 = vunpack.c.l.b16 %v526
      %v1689 = vunpack.c.h.b16 %v526
      %v1690 = vunpack.c.l.b16 %v527
      %v1691 = vunpack.c.h.b16 %v527
      %v1692 = vunpack.c.l.b16 %v528
      %v1693 = vunpack.c.h.b16 %v528
      %v1694 = vunpack.c.l.b16 %v529
      %v1695 = vunpack.c.h.b16 %v529
      %v1696 = vunpack.c.l.b16 %v530
      %v1697 = vunpack.c.h.b16 %v530
      %v1698 = vunpack.c.l.b16 %v531
      %v1699 = vunpack.c.h.b16 %v531
      %v1700 = vunpack.c.l.b16 %v532
      %v1701 = vunpack.c.h.b16 %v532
      %v1702 = vunpack.c.l.b16 %v533
      %v1703 = vunpack.c.h.b16 %v533
      %v1704 = vunpack.c.l.b16 %v534
      %v1705 = vunpack.c.h.b16 %v534
      %v1706 = vunpack.c.l.b16 %v535
      %v1707 = vunpack.c.h.b16 %v535
      %v1708 = vunpack.c.l.b16 %v536
      %v1709 = vunpack.c.h.b16 %v536
      %v1710 = vunpack.c.l.b16 %v537
      %v1711 = vunpack.c.h.b16 %v537
      %v1712 = vunpack.c.l.b16 %v538
      %v1713 = vunpack.c.h.b16 %v538
      %v1714 = vunpack.c.l.b16 %v539
      %v1715 = vunpack.c.h.b16 %v539
      %v1716 = vunpack.c.l.b16 %v540
      %v1717 = vunpack.c.h.b16 %v540
      %v1718 = vunpack.c.l.b16 %v541
      %v1719 = vunpack.c.h.b16 %v541
      %v1720 = vunpack.c.l.b16 %v542
      %v1721 = vunpack.c.h.b16 %v542
      %v1722 = vunpack.c.l.b16 %v543
      %v1723 = vunpack.c.h.b16 %v543
      %v1724 = vunpack.c.l.b16 %v544
      %v1725 = vunpack.c.h.b16 %v544
      %v1726 = vunpack.c.l.b16 %v545
      %v1727 = vunpack.c.h.b16 %v545
      %v1728 = vunpack.c.l.b16 %v546
      %v1729 = vunpack.c.h.b16 %v546
      %v1730 = vunpack.c.l.b16 %v547
      %v1731 = vunpack.c.h.b16 %v547
      %v1732 = vunpack.c.l.b16 %v548
      %v1733 = vunpack.c.h.b16 %v548
      %v1734 = vunpack.c.l.b16 %v549
      %v1735 = vunpack.c.h.b16 %v549
      %v1736 = vunpack.c.l.b16 %v550
      %v1737 = vunpack.c.h.b16 %v550
      %v1738 = vunpack.c.l.b16 %v551
      %v1739 = vunpack.c.h.b16 %v551
      %v1740 = vunpack.c.l.b16 %v552
      %v1741 = vunpack.c.h.b16 %v552
      %v1742 = vunpack.c.l.b16 %v553
      %v1743 = vunpack.c.h.b16 %v553
      %v1744 = vunpack.c.l.b16 %v554
      %v1745 = vunpack.c.h.b16 %v554
      %v1746 = vunpack.c.l.b16 %v555
      %v1747 = vunpack.c.h.b16 %v555
      %v1748 = vunpack.c.l.b16 %v556
      %v1749 = vunpack.c.h.b16 %v556
      %v1750 = vunpack.c.l.b16 %v557
      %v1751 = vunpack.c.h.b16 %v557
      %v1752 = vunpack.c.l.b16 %v558
      %v1753 = vunpack.c.h.b16 %v558
      %v1754 = vunpack.c.l.b16 %v559
      %v1755 = vunpack.c.h.b16 %v559
      %v1756 = vunpack.c.l.b16 %v560
      %v1757 = vunpack.c.h.b16 %v560
      %v1758 = vunpack.c.l.b16 %v561
      %v1759 = vunpack.c.h.b16 %v561
      %v1760 = vunpack.c.l.b16 %v562
      %v1761 = vunpack.c.h.b16 %v562
      %v1762 = vunpack.c.l.b16 %v563
      %v1763 = vunpack.c.h.b16 %v563
      %v1764 = vunpack.c.l.b16 %v564
      %v1765 = vunpack.c.h.b16 %v564
      %v1766 = vunpack.c.l.b16 %v565
      %v1767 = vunpack.c.h.b16 %v565
      %v1768 = vunpack.c.l.b16 %v566
      %v1769 = vunpack.c.h.b16 %v566
      %v1770 = vunpack.c.l.b16 %v567
      %v1771 = vunpack.c.h.b16 %v567
      %v1772 = vunpack.c.l.b16 %v568
      %v1773 = vunpack.c.h.b16 %v568
      %v1774 = vunpack.c.l.b16 %v569
      %v1775 = vunpack.c.h.b16 %v569
      %v1776 = vunpack.c.l.b16 %v570
      %v1777 = vunpack.c.h.b16 %v570
      %v1778 = vunpack.c.l.b16 %v571
      %v1779 = vunpack.c.h.b16 %v571
      %v1780 = vunpack.c.l.b16 %v572
      %v1781 = vunpack.c.h.b16 %v572
      %v1782 = vunpack.c.l.b16 %v573
      %v1783 = vunpack.c.h.b16 %v573
      %v1784 = vunpack.c.l.b16 %v574
      %v1785 = vunpack.c.h.b16 %v574
      %v1786 = vunpack.c.l.b16 %v575
      %v1787 = vunpack.c.h.b16 %v575
      %v1788 = vunpack.c.l.b16 %v576
      %v1789 = vunpack.c.h.b16 %v576
      %v1790 = vunpack.c.l.b16 %v577
      %v1791 = vunpack.c.h.b16 %v577
      %v1792 = vunpack.c.l.b16 %v578
      %v1793 = vunpack.c.h.b16 %v578
      %v1794 = vunpack.c.l.b16 %v579
      %v1795 = vunpack.c.h.b16 %v579
      %v1796 = vunpack.c.l.b16 %v580
      %v1797 = vunpack.c.h.b16 %v580
      %v1798 = vunpack.c.l.b16 %v581
      %v1799 = vunpack.c.h.b16 %v581
      %v1800 = vunpack.c.l.b16 %v582
      %v1801 = vunpack.c.h.b16 %v582
      %v1802 = vunpack.c.l.b16 %v583
      %v1803 = vunpack.c.h.b16 %v583
      %v1804 = vunpack.c.l.b16 %v584
      %v1805 = vunpack.c.h.b16 %v584
      %v1806 = vunpack.c.l.b16 %v585
      %v1807 = vunpack.c.h.b16 %v585
      %v1808 = vunpack.c.l.b16 %v586
      %v1809 = vunpack.c.h.b16 %v586
      %v1810 = vunpack.c.l.b16 %v587
      %v1811 = vunpack.c.h.b16 %v587
      %v1812 = vunpack.c.l.b16 %v588
      %v1813 = vunpack.c.h.b16 %v588
      %v1814 = vunpack.c.l.b16 %v589
      %v1815 = vunpack.c.h.b16 %v589
      %v1816 = vunpack.c.l.b16 %v590
      %v1817 = vunpack.c.h.b16 %v590
      %v1818 = vunpack.c.l.b16 %v591
      %v1819 = vunpack.c.h.b16 %v591
      %v1820 = vunpack.c.l.b16 %v592
      %v1821 = vunpack.c.h.b16 %v592
      %v1822 = vunpack.c.l.b16 %v593
      %v1823 = vunpack.c.h.b16 %v593
      %v1824 = vunpack.c.l.b16 %v594
      %v1825 = vunpack.c.h.b16 %v594
      %v1826 = vunpack.c.l.b16 %v595
      %v1827 = vunpack.c.h.b16 %v595
      %v1828 = vunpack.c.l.b16 %v596
      %v1829 = vunpack.c.h.b16 %v596
      %v1830 = vunpack.c.l.b16 %v597
      %v1831 = vunpack.c.h.b16 %v597
      %v1832 = vunpack.c.l.b16 %v598
      %v1833 = vunpack.c.h.b16 %v598
      %v1834 = vunpack.c.l.b16 %v599
      %v1835 = vunpack.c.h.b16 %v599
      %v1836 = vunpack.c.l.b16 %v600
      %v1837 = vunpack.c.h.b16 %v600
      %v1838 = vunpack.c.l.b16 %v601
      %v1839 = vunpack.c.h.b16 %v601
      %v1840 = vunpack.c.l.b16 %v602
      %v1841 = vunpack.c.h.b16 %v602
      %v1842 = vunpack.c.l.b16 %v603
      %v1843 = vunpack.c.h.b16 %v603
      %v1844 = vunpack.c.l.b16 %v604
      %v1845 = vunpack.c.h.b16 %v604
      %v1846 = vunpack.c.l.b16 %v605
      %v1847 = vunpack.c.h.b16 %v605
      %v1848 = vunpack.c.l.b16 %v606
      %v1849 = vunpack.c.h.b16 %v606
      %v1850 = vunpack.c.l.b16 %v607
      %v1851 = vunpack.c.h.b16 %v607
      %v1852 = vunpack.c.l.b16 %v608
      %v1853 = vunpack.c.h.b16 %v608
      %v1854 = vunpack.c.l.b16 %v609
      %v1855 = vunpack.c.h.b16 %v609
      %v1856 = vunpack.c.l.b16 %v610
      %v1857 = vunpack.c.h.b16 %v610
      %v1858 = vunpack.c.l.b16 %v611
      %v1859 = vunpack.c.h.b16 %v611
      %v1860 = vunpack.c.l.b16 %v612
      %v1861 = vunpack.c.h.b16 %v612
      %v1862 = vunpack.c.l.b16 %v613
      %v1863 = vunpack.c.h.b16 %v613
      %v1864 = vunpack.c.l.b16 %v614
      %v1865 = vunpack.c.h.b16 %v614
      %v1866 = vunpack.c.l.b16 %v615
      %v1867 = vunpack.c.h.b16 %v615
      %v1868 = vunpack.c.l.b16 %v616
      %v1869 = vunpack.c.h.b16 %v616
      %v1870 = vunpack.c.l.b16 %v617
      %v1871 = vunpack.c.h.b16 %v617
      %v1872 = vunpack.c.l.b16 %v618
      %v1873 = vunpack.c.h.b16 %v618
      %v1874 = vunpack.c.l.b16 %v619
      %v1875 = vunpack.c.h.b16 %v619
      %v1876 = vunpack.c.l.b16 %v620
      %v1877 = vunpack.c.h.b16 %v620
      %v1878 = vunpack.c.l.b16 %v621
      %v1879 = vunpack.c.h.b16 %v621
      %v1880 = vunpack.c.l.b16 %v622
      %v1881 = vunpack.c.h.b16 %v622
      %v1882 = vunpack.c.l.b16 %v623
      %v1883 = vunpack.c.h.b16 %v623
      %v1884 = vunpack.c.l.b16 %v624
      %v1885 = vunpack.c.h.b16 %v624
      %v1886 = vunpack.c.l.b16 %v625
      %v1887 = vunpack.c.h.b16 %v625
      %v1888 = vunpack.c.l.b16 %v626
      %v1889 = vunpack.c.h.b16 %v626
      %v1890 = vunpack.c.l.b16 %v627
      %v1891 = vunpack.c.h.b16 %v627
      %v1892 = vunpack.c.l.b16 %v628
      %v1893 = vunpack.c.h.b16 %v628
      %v1894 = vunpack.c.l.b16 %v629
      %v1895 = vunpack.c.h.b16 %v629
      %v1896 = vunpack.c.l.b16 %v630
      %v1897 = vunpack.c.h.b16 %v630
      %v1898 = vpack.c.b16 %v1102, %v1098
      %v1899 = vpack.c.b16 %v1103, %v1099
      %v1900 = vpack.c.b16 %v1104, %v1100
      %v1901 = vpack.c.b16 %v1105, %v1101
      %v1902 = vpack.c.b16 %v1110, %v1106
      %v1903 = vpack.c.b16 %v1111, %v1107
      %v1904 = vpack.c.b16 %v1112, %v1108
      %v1905 = vpack.c.b16 %v1113, %v1109
      %v1906 = vpack.c.b16 %v1118, %v1114
      %v1907 = vpack.c.b16 %v1119, %v1115
      %v1908 = vpack.c.b16 %v1120, %v1116
      %v1909 = vpack.c.b16 %v1121, %v1117
      %v1910 = vpack.c.b16 %v1126, %v1122
      %v1911 = vpack.c.b16 %v1127, %v1123
      %v1912 = vpack.c.b16 %v1128, %v1124
      %v1913 = vpack.c.b16 %v1129, %v1125
      %v1914 = vpack.c.b16 %v1134, %v1130
      %v1915 = vpack.c.b16 %v1135, %v1131
      %v1916 = vpack.c.b16 %v1136, %v1132
      %v1917 = vpack.c.b16 %v1137, %v1133
      %v1918 = vpack.c.b16 %v1142, %v1138
      %v1919 = vpack.c.b16 %v1143, %v1139
      %v1920 = vpack.c.b16 %v1144, %v1140
      %v1921 = vpack.c.b16 %v1145, %v1141
      %v1922 = vpack.c.b16 %v1150, %v1146
      %v1923 = vpack.c.b16 %v1151, %v1147
      %v1924 = vpack.c.b16 %v1152, %v1148
      %v1925 = vpack.c.b16 %v1153, %v1149
      %v1926 = vpack.c.b16 %v1158, %v1154
      %v1927 = vpack.c.b16 %v1159, %v1155
      %v1928 = vpack.c.b16 %v1160, %v1156
      %v1929 = vpack.c.b16 %v1161, %v1157
      %v1930 = vpack.c.b16 %v1166, %v1162
      %v1931 = vpack.c.b16 %v1167, %v1163
      %v1932 = vpack.c.b16 %v1168, %v1164
      %v1933 = vpack.c.b16 %v1169, %v1165
      %v1934 = vpack.c.b16 %v1174, %v1170
      %v1935 = vpack.c.b16 %v1175, %v1171
      %v1936 = vpack.c.b16 %v1176, %v1172
      %v1937 = vpack.c.b16 %v1177, %v1173
      %v1938 = vpack.c.b16 %v1182, %v1178
      %v1939 = vpack.c.b16 %v1183, %v1179
      %v1940 = vpack.c.b16 %v1184, %v1180
      %v1941 = vpack.c.b16 %v1185, %v1181
      %v1942 = vpack.c.b16 %v1190, %v1186
      %v1943 = vpack.c.b16 %v1191, %v1187
      %v1944 = vpack.c.b16 %v1192, %v1188
      %v1945 = vpack.c.b16 %v1193, %v1189
      %v1946 = vpack.c.b16 %v1198, %v1194
      %v1947 = vpack.c.b16 %v1199, %v1195
      %v1948 = vpack.c.b16 %v1200, %v1196
      %v1949 = vpack.c.b16 %v1201, %v1197
      %v1950 = vpack.c.b16 %v1206, %v1202
      %v1951 = vpack.c.b16 %v1207, %v1203
      %v1952 = vpack.c.b16 %v1208, %v1204
      %v1953 = vpack.c.b16 %v1209, %v1205
      %v1954 = vpack.c.b16 %v1214, %v1210
      %v1955 = vpack.c.b16 %v1215, %v1211
      %v1956 = vpack.c.b16 %v1216, %v1212
      %v1957 = vpack.c.b16 %v1217, %v1213
      %v1958 = vpack.c.b16 %v1222, %v1218
      %v1959 = vpack.c.b16 %v1223, %v1219
      %v1960 = vpack.c.b16 %v1224, %v1220
      %v1961 = vpack.c.b16 %v1225, %v1221
      %v1962 = vpack.c.b16 %v1230, %v1226
      %v1963 = vpack.c.b16 %v1231, %v1227
      %v1964 = vpack.c.b16 %v1232, %v1228
      %v1965 = vpack.c.b16 %v1233, %v1229
      %v1966 = vpack.c.b16 %v1238, %v1234
      %v1967 = vpack.c.b16 %v1239, %v1235
      %v1968 = vpack.c.b16 %v1240, %v1236
      %v1969 = vpack.c.b16 %v1241, %v1237
      %v1970 = vpack.c.b16 %v1246, %v1242
      %v1971 = vpack.c.b16 %v1247, %v1243
      %v1972 = vpack.c.b16 %v1248, %v1244
      %v1973 = vpack.c.b16 %v1249, %v1245
      %v1974 = vpack.c.b16 %v1254, %v1250
      %v1975 = vpack.c.b16 %v1255, %v1251
      %v1976 = vpack.c.b16 %v1256, %v1252
      %v1977 = vpack.c.b16 %v1257, %v1253
      %v1978 = vpack.c.b16 %v1262, %v1258
      %v1979 = vpack.c.b16 %v1263, %v1259
      %v1980 = vpack.c.b16 %v1264, %v1260
      %v1981 = vpack.c.b16 %v1265, %v1261
      %v1982 = vpack.c.b16 %v1270, %v1266
      %v1983 = vpack.c.b16 %v1271, %v1267
      %v1984 = vpack.c.b16 %v1272, %v1268
      %v1985 = vpack.c.b16 %v1273, %v1269
      %v1986 = vpack.c.b16 %v1278, %v1274
      %v1987 = vpack.c.b16 %v1279, %v1275
      %v1988 = vpack.c.b16 %v1280, %v1276
      %v1989 = vpack.c.b16 %v1281, %v1277
      %v1990 = vpack.c.b16 %v1286, %v1282
      %v1991 = vpack.c.b16 %v1287, %v1283
      %v1992 = vpack.c.b16 %v1288, %v1284
      %v1993 = vpack.c.b16 %v1289, %v1285
      %v1994 = vpack.c.b16 %v1294, %v1290
      %v1995 = vpack.c.b16 %v1295, %v1291
      %v1996 = vpack.c.b16 %v1296, %v1292
      %v1997 = vpack.c.b16 %v1297, %v1293
      %v1998 = vpack.c.b16 %v1302, %v1298
      %v1999 = vpack.c.b16 %v1303, %v1299
      %v2000 = vpack.c.b16 %v1304, %v1300
      %v2001 = vpack.c.b16 %v1305, %v1301
      %v2002 = vpack.c.b16 %v1310, %v1306
      %v2003 = vpack.c.b16 %v1311, %v1307
      %v2004 = vpack.c.b16 %v1312, %v1308
      %v2005 = vpack.c.b16 %v1313, %v1309
      %v2006 = vpack.c.b16 %v1318, %v1314
      %v2007 = vpack.c.b16 %v1319, %v1315
      %v2008 = vpack.c.b16 %v1320, %v1316
      %v2009 = vpack.c.b16 %v1321, %v1317
      %v2010 = vpack.c.b16 %v1326, %v1322
      %v2011 = vpack.c.b16 %v1327, %v1323
      %v2012 = vpack.c.b16 %v1328, %v1324
      %v2013 = vpack.c.b16 %v1329, %v1325
      %v2014 = vpack.c.b16 %v1334, %v1330
      %v2015 = vpack.c.b16 %v1335, %v1331
      %v2016 = vpack.c.b16 %v1336, %v1332
      %v2017 = vpack.c.b16 %v1337, %v1333
      %v2018 = vpack.c.b16 %v1342, %v1338
      %v2019 = vpack.c.b16 %v1343, %v1339
      %v2020 = vpack.c.b16 %v1344, %v1340
      %v2021 = vpack.c.b16 %v1345, %v1341
      %v2022 = vpack.c.b16 %v1350, %v1346
      %v2023 = vpack.c.b16 %v1351, %v1347
      %v2024 = vpack.c.b16 %v1352, %v1348
      %v2025 = vpack.c.b16 %v1353, %v1349
      %v2026 = vpack.c.b16 %v1358, %v1354
      %v2027 = vpack.c.b16 %v1359, %v1355
      %v2028 = vpack.c.b16 %v1360, %v1356
      %v2029 = vpack.c.b16 %v1361, %v1357
      %v2030 = vpack.c.b16 %v1366, %v1362
      %v2031 = vpack.c.b16 %v1367, %v1363
      %v2032 = vpack.c.b16 %v1368, %v1364
      %v2033 = vpack.c.b16 %v1369, %v1365
      %v2034 = vpack.c.b16 %v1374, %v1370
      %v2035 = vpack.c.b16 %v1375, %v1371
      %v2036 = vpack.c.b16 %v1376, %v1372
      %v2037 = vpack.c.b16 %v1377, %v1373
      %v2038 = vpack.c.b16 %v1382, %v1378
      %v2039 = vpack.c.b16 %v1383, %v1379
      %v2040 = vpack.c.b16 %v1384, %v1380
      %v2041 = vpack.c.b16 %v1385, %v1381
      %v2042 = vpack.c.b16 %v1390, %v1386
      %v2043 = vpack.c.b16 %v1391, %v1387
      %v2044 = vpack.c.b16 %v1392, %v1388
      %v2045 = vpack.c.b16 %v1393, %v1389
      %v2046 = vpack.c.b16 %v1398, %v1394
      %v2047 = vpack.c.b16 %v1399, %v1395
      %v2048 = vpack.c.b16 %v1400, %v1396
      %v2049 = vpack.c.b16 %v1401, %v1397
      %v2050 = vpack.c.b16 %v1406, %v1402
      %v2051 = vpack.c.b16 %v1407, %v1403
      %v2052 = vpack.c.b16 %v1408, %v1404
      %v2053 = vpack.c.b16 %v1409, %v1405
      %v2054 = vpack.c.b16 %v1414, %v1410
      %v2055 = vpack.c.b16 %v1415, %v1411
      %v2056 = vpack.c.b16 %v1416, %v1412
      %v2057 = vpack.c.b16 %v1417, %v1413
      %v2058 = vpack.c.b16 %v1422, %v1418
      %v2059 = vpack.c.b16 %v1423, %v1419
      %v2060 = vpack.c.b16 %v1424, %v1420
      %v2061 = vpack.c.b16 %v1425, %v1421
      %v2062 = vpack.c.b16 %v1430, %v1426
      %v2063 = vpack.c.b16 %v1431, %v1427
      %v2064 = vpack.c.b16 %v1432, %v1428
      %v2065 = vpack.c.b16 %v1433, %v1429
      %v2066 = vpack.c.b16 %v1438, %v1434
      %v2067 = vpack.c.b16 %v1439, %v1435
      %v2068 = vpack.c.b16 %v1440, %v1436
      %v2069 = vpack.c.b16 %v1441, %v1437
      %v2070 = vpack.c.b16 %v1446, %v1442
      %v2071 = vpack.c.b16 %v1447, %v1443
      %v2072 = vpack.c.b16 %v1448, %v1444
      %v2073 = vpack.c.b16 %v1449, %v1445
      %v2074 = vpack.c.b16 %v1454, %v1450
      %v2075 = vpack.c.b16 %v1455, %v1451
      %v2076 = vpack.c.b16 %v1456, %v1452
      %v2077 = vpack.c.b16 %v1457, %v1453
      %v2078 = vpack.c.b16 %v1462, %v1458
      %v2079 = vpack.c.b16 %v1463, %v1459
      %v2080 = vpack.c.b16 %v1464, %v1460
      %v2081 = vpack.c.b16 %v1465, %v1461
      %v2082 = vpack.c.b16 %v1470, %v1466
      %v2083 = vpack.c.b16 %v1471, %v1467
      %v2084 = vpack.c.b16 %v1472, %v1468
      %v2085 = vpack.c.b16 %v1473, %v1469
      %v2086 = vpack.c.b16 %v1478, %v1474
      %v2087 = vpack.c.b16 %v1479, %v1475
      %v2088 = vpack.c.b16 %v1480, %v1476
      %v2089 = vpack.c.b16 %v1481, %v1477
      %v2090 = vpack.c.b16 %v1486, %v1482
      %v2091 = vpack.c.b16 %v1487, %v1483
      %v2092 = vpack.c.b16 %v1488, %v1484
      %v2093 = vpack.c.b16 %v1489, %v1485
      %v2094 = vpack.c.b16 %v1494, %v1490
      %v2095 = vpack.c.b16 %v1495, %v1491
      %v2096 = vpack.c.b16 %v1496, %v1492
      %v2097 = vpack.c.b16 %v1497, %v1493
      %v2098 = vpack.c.b16 %v1502, %v1498
      %v2099 = vpack.c.b16 %v1503, %v1499
      %v2100 = vpack.c.b16 %v1504, %v1500
      %v2101 = vpack.c.b16 %v1505, %v1501
      %v2102 = vpack.c.b16 %v1510, %v1506
      %v2103 = vpack.c.b16 %v1511, %v1507
      %v2104 = vpack.c.b16 %v1512, %v1508
      %v2105 = vpack.c.b16 %v1513, %v1509
      %v2106 = vpack.c.b16 %v1518, %v1514
      %v2107 = vpack.c.b16 %v1519, %v1515
      %v2108 = vpack.c.b16 %v1520, %v1516
      %v2109 = vpack.c.b16 %v1521, %v1517
      %v2110 = vpack.c.b16 %v1526, %v1522
      %v2111 = vpack.c.b16 %v1527, %v1523
      %v2112 = vpack.c.b16 %v1528, %v1524
      %v2113 = vpack.c.b16 %v1529, %v1525
      %v2114 = vpack.c.b16 %v1534, %v1530
      %v2115 = vpack.c.b16 %v1535, %v1531
      %v2116 = vpack.c.b16 %v1536, %v1532
      %v2117 = vpack.c.b16 %v1537, %v1533
      %v2118 = vpack.c.b16 %v1542, %v1538
      %v2119 = vpack.c.b16 %v1543, %v1539
      %v2120 = vpack.c.b16 %v1544, %v1540
      %v2121 = vpack.c.b16 %v1545, %v1541
      %v2122 = vpack.c.b16 %v1550, %v1546
      %v2123 = vpack.c.b16 %v1551, %v1547
      %v2124 = vpack.c.b16 %v1552, %v1548
      %v2125 = vpack.c.b16 %v1553, %v1549
      %v2126 = vpack.c.b16 %v1558, %v1554
      %v2127 = vpack.c.b16 %v1559, %v1555
      %v2128 = vpack.c.b16 %v1560, %v1556
      %v2129 = vpack.c.b16 %v1561, %v1557
      %v2130 = vpack.c.b16 %v1566, %v1562
      %v2131 = vpack.c.b16 %v1567, %v1563
      %v2132 = vpack.c.b16 %v1568, %v1564
      %v2133 = vpack.c.b16 %v1569, %v1565
      %v2134 = vpack.c.b16 %v1574, %v1570
      %v2135 = vpack.c.b16 %v1575, %v1571
      %v2136 = vpack.c.b16 %v1576, %v1572
      %v2137 = vpack.c.b16 %v1577, %v1573
      %v2138 = vpack.c.b16 %v1582, %v1578
      %v2139 = vpack.c.b16 %v1583, %v1579
      %v2140 = vpack.c.b16 %v1584, %v1580
      %v2141 = vpack.c.b16 %v1585, %v1581
      %v2142 = vpack.c.b16 %v1590, %v1586
      %v2143 = vpack.c.b16 %v1591, %v1587
      %v2144 = vpack.c.b16 %v1592, %v1588
      %v2145 = vpack.c.b16 %v1593, %v1589
      %v2146 = vpack.c.b16 %v1598, %v1594
      %v2147 = vpack.c.b16 %v1599, %v1595
      %v2148 = vpack.c.b16 %v1600, %v1596
      %v2149 = vpack.c.b16 %v1601, %v1597
      %v2150 = vpack.c.b16 %v1606, %v1602
      %v2151 = vpack.c.b16 %v1607, %v1603
      %v2152 = vpack.c.b16 %v1608, %v1604
      %v2153 = vpack.c.b16 %v1609, %v1605
      %v2154 = vpack.c.b16 %v1614, %v1610
      %v2155 = vpack.c.b16 %v1615, %v1611
      %v2156 = vpack.c.b16 %v1616, %v1612
      %v2157 = vpack.c.b16 %v1617, %v1613
      %v2158 = vpack.c.b16 %v1622, %v1618
      %v2159 = vpack.c.b16 %v1623, %v1619
      %v2160 = vpack.c.b16 %v1624, %v1620
      %v2161 = vpack.c.b16 %v1625, %v1621
      %v2162 = vpack.c.b16 %v1630, %v1626
      %v2163 = vpack.c.b16 %v1631, %v1627
      %v2164 = vpack.c.b16 %v1632, %v1628
      %v2165 = vpack.c.b16 %v1633, %v1629
      %v2166 = vpack.c.b16 %v1638, %v1634
      %v2167 = vpack.c.b16 %v1639, %v1635
      %v2168 = vpack.c.b16 %v1640, %v1636
      %v2169 = vpack.c.b16 %v1641, %v1637
      %v2170 = vpack.c.b16 %v1646, %v1642
      %v2171 = vpack.c.b16 %v1647, %v1643
      %v2172 = vpack.c.b16 %v1648, %v1644
      %v2173 = vpack.c.b16 %v1649, %v1645
      %v2174 = vpack.c.b16 %v1654, %v1650
      %v2175 = vpack.c.b16 %v1655, %v1651
      %v2176 = vpack.c.b16 %v1656, %v1652
      %v2177 = vpack.c.b16 %v1657, %v1653
      %v2178 = vpack.c.b16 %v1662, %v1658
      %v2179 = vpack.c.b16 %v1663, %v1659
      %v2180 = vpack.c.b16 %v1664, %v1660
      %v2181 = vpack.c.b16 %v1665, %v1661
      %v2182 = vpack.c.b16 %v1670, %v1666
      %v2183 = vpack.c.b16 %v1671, %v1667
      %v2184 = vpack.c.b16 %v1672, %v1668
      %v2185 = vpack.c.b16 %v1673, %v1669
      %v2186 = vpack.c.b16 %v1678, %v1674
      %v2187 = vpack.c.b16 %v1679, %v1675
      %v2188 = vpack.c.b16 %v1680, %v1676
      %v2189 = vpack.c.b16 %v1681, %v1677
      %v2190 = vpack.c.b16 %v1686, %v1682
      %v2191 = vpack.c.b16 %v1687, %v1683
      %v2192 = vpack.c.b16 %v1688, %v1684
      %v2193 = vpack.c.b16 %v1689, %v1685
      %v2194 = vpack.c.b16 %v1694, %v1690
      %v2195 = vpack.c.b16 %v1695, %v1691
      %v2196 = vpack.c.b16 %v1696, %v1692
      %v2197 = vpack.c.b16 %v1697, %v1693
      %v2198 = vpack.c.b16 %v1702, %v1698
      %v2199 = vpack.c.b16 %v1703, %v1699
      %v2200 = vpack.c.b16 %v1704, %v1700
      %v2201 = vpack.c.b16 %v1705, %v1701
      %v2202 = vpack.c.b16 %v1710, %v1706
      %v2203 = vpack.c.b16 %v1711, %v1707
      %v2204 = vpack.c.b16 %v1712, %v1708
      %v2205 = vpack.c.b16 %v1713, %v1709
      %v2206 = vpack.c.b16 %v1718, %v1714
      %v2207 = vpack.c.b16 %v1719, %v1715
      %v2208 = vpack.c.b16 %v1720, %v1716
      %v2209 = vpack.c.b16 %v1721, %v1717
      %v2210 = vpack.c.b16 %v1726, %v1722
      %v2211 = vpack.c.b16 %v1727, %v1723
      %v2212 = vpack.c.b16 %v1728, %v1724
      %v2213 = vpack.c.b16 %v1729, %v1725
      %v2214 = vpack.c.b16 %v1734, %v1730
      %v2215 = vpack.c.b16 %v1735, %v1731
      %v2216 = vpack.c.b16 %v1736, %v1732
      %v2217 = vpack.c.b16 %v1737, %v1733
      %v2218 = vpack.c.b16 %v1742, %v1738
      %v2219 = vpack.c.b16 %v1743, %v1739
      %v2220 = vpack.c.b16 %v1744, %v1740
      %v2221 = vpack.c.b16 %v1745, %v1741
      %v2222 = vpack.c.b16 %v1750, %v1746
      %v2223 = vpack.c.b16 %v1751, %v1747
      %v2224 = vpack.c.b16 %v1752, %v1748
      %v2225 = vpack.c.b16 %v1753, %v1749
      %v2226 = vpack.c.b16 %v1758, %v1754
      %v2227 = vpack.c.b16 %v1759, %v1755
      %v2228 = vpack.c.b16 %v1760, %v1756
      %v2229 = vpack.c.b16 %v1761, %v1757
      %v2230 = vpack.c.b16 %v1766, %v1762
      %v2231 = vpack.c.b16 %v1767, %v1763
      %v2232 = vpack.c.b16 %v1768, %v1764
      %v2233 = vpack.c.b16 %v1769, %v1765
      %v2234 = vpack.c.b16 %v1774, %v1770
      %v2235 = vpack.c.b16 %v1775, %v1771
      %v2236 = vpack.c.b16 %v1776, %v1772
      %v2237 = vpack.c.b16 %v1777, %v1773
      %v2238 = vpack.c.b16 %v1782, %v1778
      %v2239 = vpack.c.b16 %v1783, %v1779
      %v2240 = vpack.c.b16 %v1784, %v1780
      %v2241 = vpack.c.b16 %v1785, %v1781
      %v2242 = vpack.c.b16 %v1790, %v1786
      %v2243 = vpack.c.b16 %v1791, %v1787
      %v2244 = vpack.c.b16 %v1792, %v1788
      %v2245 = vpack.c.b16 %v1793, %v1789
      %v2246 = vpack.c.b16 %v1798, %v1794
      %v2247 = vpack.c.b16 %v1799, %v1795
      %v2248 = vpack.c.b16 %v1800, %v1796
      %v2249 = vpack.c.b16 %v1801, %v1797
      %v2250 = vpack.c.b16 %v1806, %v1802
      %v2251 = vpack.c.b16 %v1807, %v1803
      %v2252 = vpack.c.b16 %v1808, %v1804
      %v2253 = vpack.c.b16 %v1809, %v1805
      %v2254 = vpack.c.b16 %v1814, %v1810
      %v2255 = vpack.c.b16 %v1815, %v1811
      %v2256 = vpack.c.b16 %v1816, %v1812
      %v2257 = vpack.c.b16 %v1817, %v1813
      %v2258 = vpack.c.b16 %v1822, %v1818
      %v2259 = vpack.c.b16 %v1823, %v1819
      %v2260 = vpack.c.b16 %v1824, %v1820
      %v2261 = vpack.c.b16 %v1825, %v1821
      %v2262 = vpack.c.b16 %v1830, %v1826
      %v2263 = vpack.c.b16 %v1831, %v1827
      %v2264 = vpack.c.b16 %v1832, %v1828
      %v2265 = vpack.c.b16 %v1833, %v1829
      %v2266 = vpack.c.b16 %v1838, %v1834
      %v2267 = vpack.c.b16 %v1839, %v1835
      %v2268 = vpack.c.b16 %v1840, %v1836
      %v2269 = vpack.c.b16 %v1841, %v1837
      %v2270 = vpack.c.b16 %v1846, %v1842
      %v2271 = vpack.c.b16 %v1847, %v1843
      %v2272 = vpack.c.b16 %v1848, %v1844
      %v2273 = vpack.c.b16 %v1849, %v1845
      %v2274 = vpack.c.b16 %v1854, %v1850
      %v2275 = vpack.c.b16 %v1855, %v1851
      %v2276 = vpack.c.b16 %v1856, %v1852
      %v2277 = vpack.c.b16 %v1857, %v1853
      %v2278 = vpack.c.b16 %v1862, %v1858
      %v2279 = vpack.c.b16 %v1863, %v1859
      %v2280 = vpack.c.b16 %v1864, %v1860
      %v2281 = vpack.c.b16 %v1865, %v1861
      %v2282 = vpack.c.b16 %v1870, %v1866
      %v2283 = vpack.c.b16 %v1871, %v1867
      %v2284 = vpack.c.b16 %v1872, %v1868
      %v2285 = vpack.c.b16 %v1873, %v1869
      %v2286 = vpack.c.b16 %v1878, %v1874
      %v2287 = vpack.c.b16 %v1879, %v1875
      %v2288 = vpack.c.b16 %v1880, %v1876
      %v2289 = vpack.c.b16 %v1881, %v1877
      %v2290 = vpack.c.b16 %v1886, %v1882
      %v2291 = vpack.c.b16 %v1887, %v1883
      %v2292 = vpack.c.b16 %v1888, %v1884
      %v2293 = vpack.c.b16 %v1889, %v1885
      %v2294 = vpack.c.b16 %v1894, %v1890
      %v2295 = vpack.c.b16 %v1895, %v1891
      %v2296 = vpack.c.b16 %v1896, %v1892
      %v2297 = vpack.c.b16 %v1897, %v1893
      %vm2698 = vcmask 523264
      %v2700 = vsel %vm2698, %v685, 0
      %2702 = vmatprep.subr.bf16.mxu0 %v1899
      %2703 = vmatpush1.bf16.msra.mxu0 %v1898
      %2704 = vmatprep.subr.bf16.mxu0 %v1903
      %2705 = vmatpush1.bf16.msra.mxu0 %v1902
      %2706 = vmatprep.subr.bf16.mxu0 %v1907
      %2707 = vmatpush1.bf16.msra.mxu0 %v1906
      %2708 = vmatprep.subr.bf16.mxu0 %v1911
      %2709 = vmatpush1.bf16.msra.mxu0 %v1910
      %2710 = vmatprep.subr.bf16.mxu0 %v1915
      %2711 = vmatpush1.bf16.msra.mxu0 %v1914
      %2712 = vmatprep.subr.bf16.mxu0 %v1919
      %2713 = vmatpush1.bf16.msra.mxu0 %v1918
      %2714 = vmatprep.subr.bf16.mxu0 %v1923
      %2715 = vmatpush1.bf16.msra.mxu0 %v1922
      %2716 = vmatprep.subr.bf16.mxu0 %v1927
      %2717 = vmatpush1.bf16.msra.mxu0 %v1926
      %2718 = vmatprep.subr.bf16.mxu0 %v1931
      %2719 = vmatpush1.bf16.msra.mxu0 %v1930
      %2720 = vmatprep.subr.bf16.mxu0 %v1935
      %2721 = vmatpush1.bf16.msra.mxu0 %v1934
      %2722 = vmatprep.subr.bf16.mxu0 %v1939
      %2723 = vmatpush1.bf16.msra.mxu0 %v1938
      %2724 = vmatprep.subr.bf16.mxu0 %v1943
      %2725 = vmatpush1.bf16.msra.mxu0 %v1942
      %2726 = vmatprep.subr.bf16.mxu0 %v1947
      %2727 = vmatpush1.bf16.msra.mxu0 %v1946
      %2728 = vmatprep.subr.bf16.mxu0 %v1951
      %2729 = vmatpush1.bf16.msra.mxu0 %v1950
      %2730 = vmatprep.subr.bf16.mxu0 %v1955
      %2731 = vmatpush1.bf16.msra.mxu0 %v1954
      %2732 = vmatprep.subr.bf16.mxu0 %v1959
      %2733 = vmatpush1.bf16.msra.mxu0 %v1958
      %2734 = vmatprep.mubr.bf16.mxu0 %v674
      %2735 = vmatmul.mubr.bf16.gmra.mrb[0].mxu0 %v673
      %v2736 = vpop.f32.mrb[0].mxu0
      %v2737 = vadd.f32 %v636, %v2736
      %v2738 = vpop.f32.mrb[0].mxu0
      %v2739 = vadd.f32 %v640, %v2738
      %v2740 = vpop.f32.mrb[0].mxu0
      %v2741 = vpop.f32.mrb[0].mxu0
      %2742 = vdwg.mxu0
      %2743 = vmatprep.subr.bf16.mxu0 %v1963
      %2744 = vmatpush1.bf16.msra.mxu0 %v1962
      %2745 = vmatprep.subr.bf16.mxu0 %v1967
      %2746 = vmatpush1.bf16.msra.mxu0 %v1966
      %2747 = vmatprep.subr.bf16.mxu0 %v1971
      %2748 = vmatpush1.bf16.msra.mxu0 %v1970
      %2749 = vmatprep.subr.bf16.mxu0 %v1975
      %2750 = vmatpush1.bf16.msra.mxu0 %v1974
      %2751 = vmatprep.subr.bf16.mxu0 %v1979
      %2752 = vmatpush1.bf16.msra.mxu0 %v1978
      %2753 = vmatprep.subr.bf16.mxu0 %v1983
      %2754 = vmatpush1.bf16.msra.mxu0 %v1982
      %2755 = vmatprep.subr.bf16.mxu0 %v1987
      %2756 = vmatpush1.bf16.msra.mxu0 %v1986
      %2757 = vmatprep.subr.bf16.mxu0 %v1991
      %2758 = vmatpush1.bf16.msra.mxu0 %v1990
      %2759 = vmatprep.subr.bf16.mxu0 %v1995
      %2760 = vmatpush1.bf16.msra.mxu0 %v1994
      %2761 = vmatprep.subr.bf16.mxu0 %v1999
      %2762 = vmatpush1.bf16.msra.mxu0 %v1998
      %2763 = vmatprep.subr.bf16.mxu0 %v2003
      %2764 = vmatpush1.bf16.msra.mxu0 %v2002
      %2765 = vmatprep.subr.bf16.mxu0 %v2007
      %2766 = vmatpush1.bf16.msra.mxu0 %v2006
      %2767 = vmatprep.subr.bf16.mxu0 %v2011
      %2768 = vmatpush1.bf16.msra.mxu0 %v2010
      %2769 = vmatprep.subr.bf16.mxu0 %v2015
      %2770 = vmatpush1.bf16.msra.mxu0 %v2014
      %2771 = vmatprep.subr.bf16.mxu0 %v2019
      %2772 = vmatpush1.bf16.msra.mxu0 %v2018
      %2773 = vmatprep.subr.bf16.mxu0 %v2023
      %2774 = vmatpush1.bf16.msra.mxu0 %v2022
      %2775 = vmatprep.mubr.bf16.mxu0 %v676
      %2776 = vmatmul.mubr.bf16.gmra.mrb[0].mxu0 %v675
      %v2777 = vpop.f32.mrb[0].mxu0
      %v2778 = vadd.f32 %v2737, %v2777
      %v2779 = vpop.f32.mrb[0].mxu0
      %v2780 = vadd.f32 %v2739, %v2779
      %v2781 = vpop.f32.mrb[0].mxu0
      %v2782 = vpop.f32.mrb[0].mxu0
      %2783 = vdwg.mxu0
      %2784 = vmatprep.subr.bf16.mxu0 %v2027
      %2785 = vmatpush1.bf16.msra.mxu0 %v2026
      %2786 = vmatprep.subr.bf16.mxu0 %v2031
      %2787 = vmatpush1.bf16.msra.mxu0 %v2030
      %2788 = vmatprep.subr.bf16.mxu0 %v2035
      %2789 = vmatpush1.bf16.msra.mxu0 %v2034
      %2790 = vmatprep.subr.bf16.mxu0 %v2039
      %2791 = vmatpush1.bf16.msra.mxu0 %v2038
      %2792 = vmatprep.subr.bf16.mxu0 %v2043
      %2793 = vmatpush1.bf16.msra.mxu0 %v2042
      %2794 = vmatprep.subr.bf16.mxu0 %v2047
      %2795 = vmatpush1.bf16.msra.mxu0 %v2046
      %2796 = vmatprep.subr.bf16.mxu0 %v2051
      %2797 = vmatpush1.bf16.msra.mxu0 %v2050
      %2798 = vmatprep.subr.bf16.mxu0 %v2055
      %2799 = vmatpush1.bf16.msra.mxu0 %v2054
      %2800 = vmatprep.subr.bf16.mxu0 %v2059
      %2801 = vmatpush1.bf16.msra.mxu0 %v2058
      %2802 = vmatprep.subr.bf16.mxu0 %v2063
      %2803 = vmatpush1.bf16.msra.mxu0 %v2062
      %2804 = vmatprep.subr.bf16.mxu0 %v2067
      %2805 = vmatpush1.bf16.msra.mxu0 %v2066
      %2806 = vmatprep.subr.bf16.mxu0 %v2071
      %2807 = vmatpush1.bf16.msra.mxu0 %v2070
      %2808 = vmatprep.subr.bf16.mxu0 %v2075
      %2809 = vmatpush1.bf16.msra.mxu0 %v2074
      %2810 = vmatprep.subr.bf16.mxu0 %v2079
      %2811 = vmatpush1.bf16.msra.mxu0 %v2078
      %2812 = vmatprep.subr.bf16.mxu0 %v2083
      %2813 = vmatpush1.bf16.msra.mxu0 %v2082
      %2814 = vmatprep.subr.bf16.mxu0 %v2087
      %2815 = vmatpush1.bf16.msra.mxu0 %v2086
      %2816 = vmatprep.mubr.bf16.mxu0 %v678
      %2817 = vmatmul.mubr.bf16.gmra.mrb[0].mxu0 %v677
      %v2818 = vpop.f32.mrb[0].mxu0
      %v2819 = vadd.f32 %v2778, %v2818
      %v2820 = vpop.f32.mrb[0].mxu0
      %v2821 = vadd.f32 %v2780, %v2820
      %v2822 = vpop.f32.mrb[0].mxu0
      %v2823 = vpop.f32.mrb[0].mxu0
      %2824 = vdwg.mxu0
      %2825 = vmatprep.subr.bf16.mxu0 %v2091
      %2826 = vmatpush1.bf16.msra.mxu0 %v2090
      %2827 = vmatprep.subr.bf16.mxu0 %v2095
      %2828 = vmatpush1.bf16.msra.mxu0 %v2094
      %2829 = vmatprep.subr.bf16.mxu0 %v2099
      %2830 = vmatpush1.bf16.msra.mxu0 %v2098
      %2831 = vmatprep.subr.bf16.mxu0 %v2103
      %2832 = vmatpush1.bf16.msra.mxu0 %v2102
      %2833 = vmatprep.subr.bf16.mxu0 %v2107
      %2834 = vmatpush1.bf16.msra.mxu0 %v2106
      %2835 = vmatprep.subr.bf16.mxu0 %v2111
      %2836 = vmatpush1.bf16.msra.mxu0 %v2110
      %2837 = vmatprep.subr.bf16.mxu0 %v2115
      %2838 = vmatpush1.bf16.msra.mxu0 %v2114
      %2839 = vmatprep.subr.bf16.mxu0 %v2119
      %2840 = vmatpush1.bf16.msra.mxu0 %v2118
      %2841 = vmatprep.subr.bf16.mxu0 %v2123
      %2842 = vmatpush1.bf16.msra.mxu0 %v2122
      %2843 = vmatprep.subr.bf16.mxu0 %v2127
      %2844 = vmatpush1.bf16.msra.mxu0 %v2126
      %2845 = vmatprep.subr.bf16.mxu0 %v2131
      %2846 = vmatpush1.bf16.msra.mxu0 %v2130
      %2847 = vmatprep.subr.bf16.mxu0 %v2135
      %2848 = vmatpush1.bf16.msra.mxu0 %v2134
      %2849 = vmatprep.subr.bf16.mxu0 %v2139
      %2850 = vmatpush1.bf16.msra.mxu0 %v2138
      %2851 = vmatprep.subr.bf16.mxu0 %v2143
      %2852 = vmatpush1.bf16.msra.mxu0 %v2142
      %2853 = vmatprep.subr.bf16.mxu0 %v2147
      %2854 = vmatpush1.bf16.msra.mxu0 %v2146
      %2855 = vmatprep.subr.bf16.mxu0 %v2151
      %2856 = vmatpush1.bf16.msra.mxu0 %v2150
      %2857 = vmatprep.mubr.bf16.mxu0 %v680
      %2858 = vmatmul.mubr.bf16.gmra.mrb[0].mxu0 %v679
      %v2859 = vpop.f32.mrb[0].mxu0
      %v2860 = vadd.f32 %v2819, %v2859
      %v2861 = vpop.f32.mrb[0].mxu0
      %v2862 = vadd.f32 %v2821, %v2861
      %v2863 = vpop.f32.mrb[0].mxu0
      %v2864 = vpop.f32.mrb[0].mxu0
      %2865 = vdwg.mxu0
      %2866 = vmatprep.subr.bf16.mxu0 %v2155
      %2867 = vmatpush1.bf16.msra.mxu0 %v2154
      %2868 = vmatprep.subr.bf16.mxu0 %v2159
      %2869 = vmatpush1.bf16.msra.mxu0 %v2158
      %2870 = vmatprep.subr.bf16.mxu0 %v2163
      %2871 = vmatpush1.bf16.msra.mxu0 %v2162
      %2872 = vmatprep.subr.bf16.mxu0 %v2167
      %2873 = vmatpush1.bf16.msra.mxu0 %v2166
      %2874 = vmatprep.subr.bf16.mxu0 %v2171
      %2875 = vmatpush1.bf16.msra.mxu0 %v2170
      %2876 = vmatprep.subr.bf16.mxu0 %v2175
      %2877 = vmatpush1.bf16.msra.mxu0 %v2174
      %2878 = vmatprep.subr.bf16.mxu0 %v2179
      %2879 = vmatpush1.bf16.msra.mxu0 %v2178
      %2880 = vmatprep.subr.bf16.mxu0 %v2183
      %2881 = vmatpush1.bf16.msra.mxu0 %v2182
      %2882 = vmatprep.subr.bf16.mxu0 %v2187
      %2883 = vmatpush1.bf16.msra.mxu0 %v2186
      %2884 = vmatprep.subr.bf16.mxu0 %v2191
      %2885 = vmatpush1.bf16.msra.mxu0 %v2190
      %2886 = vmatprep.subr.bf16.mxu0 %v2195
      %2887 = vmatpush1.bf16.msra.mxu0 %v2194
      %2888 = vmatprep.subr.bf16.mxu0 %v2199
      %2889 = vmatpush1.bf16.msra.mxu0 %v2198
      %2890 = vmatprep.subr.bf16.mxu0 %v2203
      %2891 = vmatpush1.bf16.msra.mxu0 %v2202
      %2892 = vmatprep.subr.bf16.mxu0 %v2207
      %2893 = vmatpush1.bf16.msra.mxu0 %v2206
      %2894 = vmatprep.subr.bf16.mxu0 %v2211
      %2895 = vmatpush1.bf16.msra.mxu0 %v2210
      %2896 = vmatprep.subr.bf16.mxu0 %v2215
      %2897 = vmatpush1.bf16.msra.mxu0 %v2214
      %2898 = vmatprep.mubr.bf16.mxu0 %v682
      %2899 = vmatmul.mubr.bf16.gmra.mrb[0].mxu0 %v681
      %v2900 = vpop.f32.mrb[0].mxu0
      %v2901 = vadd.f32 %v2860, %v2900
      %v2902 = vpop.f32.mrb[0].mxu0
      %v2903 = vadd.f32 %v2862, %v2902
      %v2904 = vpop.f32.mrb[0].mxu0
      %v2905 = vpop.f32.mrb[0].mxu0
      %2906 = vdwg.mxu0
      %2907 = vmatprep.subr.bf16.mxu0 %v2219
      %2908 = vmatpush1.bf16.msra.mxu0 %v2218
      %2909 = vmatprep.subr.bf16.mxu0 %v2223
      %2910 = vmatpush1.bf16.msra.mxu0 %v2222
      %2911 = vmatprep.subr.bf16.mxu0 %v2227
      %2912 = vmatpush1.bf16.msra.mxu0 %v2226
      %2913 = vmatprep.subr.bf16.mxu0 %v2231
      %2914 = vmatpush1.bf16.msra.mxu0 %v2230
      %2915 = vmatprep.subr.bf16.mxu0 %v2235
      %2916 = vmatpush1.bf16.msra.mxu0 %v2234
      %2917 = vmatprep.subr.bf16.mxu0 %v2239
      %2918 = vmatpush1.bf16.msra.mxu0 %v2238
      %2919 = vmatprep.subr.bf16.mxu0 %v2243
      %2920 = vmatpush1.bf16.msra.mxu0 %v2242
      %2921 = vmatprep.subr.bf16.mxu0 %v2247
      %2922 = vmatpush1.bf16.msra.mxu0 %v2246
      %2923 = vmatprep.subr.bf16.mxu0 %v2251
      %2924 = vmatpush1.bf16.msra.mxu0 %v2250
      %2925 = vmatprep.subr.bf16.mxu0 %v2255
      %2926 = vmatpush1.bf16.msra.mxu0 %v2254
      %2927 = vmatprep.subr.bf16.mxu0 %v2259
      %2928 = vmatpush1.bf16.msra.mxu0 %v2258
      %2929 = vmatprep.subr.bf16.mxu0 %v2263
      %2930 = vmatpush1.bf16.msra.mxu0 %v2262
      %2931 = vmatprep.subr.bf16.mxu0 %v2267
      %2932 = vmatpush1.bf16.msra.mxu0 %v2266
      %2933 = vmatprep.subr.bf16.mxu0 %v2271
      %2934 = vmatpush1.bf16.msra.mxu0 %v2270
      %2935 = vmatprep.subr.bf16.mxu0 %v2275
      %2936 = vmatpush1.bf16.msra.mxu0 %v2274
      %2937 = vmatprep.subr.bf16.mxu0 %v2279
      %2938 = vmatpush1.bf16.msra.mxu0 %v2278
      %2939 = vmatprep.mubr.bf16.mxu0 %v684
      %2940 = vmatmul.mubr.bf16.gmra.mrb[0].mxu0 %v683
      %v2941 = vpop.f32.mrb[0].mxu0
      %v2942 = vadd.f32 %v2901, %v2941
      %v2943 = vpop.f32.mrb[0].mxu0
      %v2944 = vadd.f32 %v2903, %v2943
      %v2945 = vpop.f32.mrb[0].mxu0
      %v2946 = vpop.f32.mrb[0].mxu0
      %2947 = vdwg.mxu0
      %2948 = vmatprep.subr.bf16.mxu0 %v2283
      %2949 = vmatpush1.bf16.msra.mxu0 %v2282
      %2950 = vmatprep.subr.bf16.mxu0 %v2287
      %2951 = vmatpush1.bf16.msra.mxu0 %v2286
      %2952 = vmatprep.subr.bf16.mxu0 %v2291
      %2953 = vmatpush1.bf16.msra.mxu0 %v2290
      %2954 = vmatprep.subr.bf16.mxu0 %v2295
      %2955 = vmatpush1.bf16.msra.mxu0 %v2294
      %2956 = vmatprep.subr.bf16.mxu0 0
      %2957 = vmatpush1.bf16.msra.mxu0 0
      %2958 = vmatprep.subr.bf16.mxu0 0
      %2959 = vmatpush1.bf16.msra.mxu0 0
      %2960 = vmatprep.subr.bf16.mxu0 0
      %2961 = vmatpush1.bf16.msra.mxu0 0
      %2962 = vmatprep.subr.bf16.mxu0 0
      %2963 = vmatpush1.bf16.msra.mxu0 0
      %2964 = vmatprep.subr.bf16.mxu0 0
      %2965 = vmatpush1.bf16.msra.mxu0 0
      %2966 = vmatprep.subr.bf16.mxu0 0
      %2967 = vmatpush1.bf16.msra.mxu0 0
      %2968 = vmatprep.subr.bf16.mxu0 0
      %2969 = vmatpush1.bf16.msra.mxu0 0
      %2970 = vmatprep.subr.bf16.mxu0 0
      %2971 = vmatpush1.bf16.msra.mxu0 0
      %2972 = vmatprep.subr.bf16.mxu0 0
      %2973 = vmatpush1.bf16.msra.mxu0 0
      %2974 = vmatprep.subr.bf16.mxu0 0
      %2975 = vmatpush1.bf16.msra.mxu0 0
      %2976 = vmatprep.subr.bf16.mxu0 0
      %2977 = vmatpush1.bf16.msra.mxu0 0
      %2978 = vmatprep.subr.bf16.mxu0 0
      %2979 = vmatpush1.bf16.msra.mxu0 0
      %2980 = vmatprep.mubr.bf16.mxu0 0
      %2981 = vmatmul.mubr.bf16.gmra.mrb[0].mxu0 %v2700
      %v2982 = vpop.f32.mrb[0].mxu0
      %v2983 = vadd.f32 %v2942, %v2982
      %v2984 = vpop.f32.mrb[0].mxu0
      %v2985 = vadd.f32 %v2944, %v2984
      %v2986 = vpop.f32.mrb[0].mxu0
      %v2987 = vpop.f32.mrb[0].mxu0
      %2988 = vdwg.mxu0
      %2989 = vmatprep.subr.bf16.mxu0 %v1901
      %2990 = vmatpush1.bf16.msra.mxu0 %v1900
      %2991 = vmatprep.subr.bf16.mxu0 %v1905
      %2992 = vmatpush1.bf16.msra.mxu0 %v1904
      %2993 = vmatprep.subr.bf16.mxu0 %v1909
      %2994 = vmatpush1.bf16.msra.mxu0 %v1908
      %2995 = vmatprep.subr.bf16.mxu0 %v1913
      %2996 = vmatpush1.bf16.msra.mxu0 %v1912
      %2997 = vmatprep.subr.bf16.mxu0 %v1917
      %2998 = vmatpush1.bf16.msra.mxu0 %v1916
      %2999 = vmatprep.subr.bf16.mxu0 %v1921
      %3000 = vmatpush1.bf16.msra.mxu0 %v1920
      %3001 = vmatprep.subr.bf16.mxu0 %v1925
      %3002 = vmatpush1.bf16.msra.mxu0 %v1924
      %3003 = vmatprep.subr.bf16.mxu0 %v1929
      %3004 = vmatpush1.bf16.msra.mxu0 %v1928
      %3005 = vmatprep.subr.bf16.mxu0 %v1933
      %3006 = vmatpush1.bf16.msra.mxu0 %v1932
      %3007 = vmatprep.subr.bf16.mxu0 %v1937
      %3008 = vmatpush1.bf16.msra.mxu0 %v1936
      %3009 = vmatprep.subr.bf16.mxu0 %v1941
      %3010 = vmatpush1.bf16.msra.mxu0 %v1940
      %3011 = vmatprep.subr.bf16.mxu0 %v1945
      %3012 = vmatpush1.bf16.msra.mxu0 %v1944
      %3013 = vmatprep.subr.bf16.mxu0 %v1949
      %3014 = vmatpush1.bf16.msra.mxu0 %v1948
      %3015 = vmatprep.subr.bf16.mxu0 %v1953
      %3016 = vmatpush1.bf16.msra.mxu0 %v1952
      %3017 = vmatprep.subr.bf16.mxu0 %v1957
      %3018 = vmatpush1.bf16.msra.mxu0 %v1956
      %3019 = vmatprep.subr.bf16.mxu0 %v1961
      %3020 = vmatpush1.bf16.msra.mxu0 %v1960
      %3021 = vmatprep.mubr.bf16.mxu0 %v674
      %3022 = vmatmul.mubr.bf16.gmra.mrb[0].mxu0 %v673
      %v3023 = vpop.f32.mrb[0].mxu0
      %v3024 = vadd.f32 %v644, %v3023
      %v3025 = vpop.f32.mrb[0].mxu0
      %v3026 = vadd.f32 %v648, %v3025
      %v3027 = vpop.f32.mrb[0].mxu0
      %v3028 = vpop.f32.mrb[0].mxu0
      %3029 = vdwg.mxu0
      %3030 = vmatprep.subr.bf16.mxu0 %v1965
      %3031 = vmatpush1.bf16.msra.mxu0 %v1964
      %3032 = vmatprep.subr.bf16.mxu0 %v1969
      %3033 = vmatpush1.bf16.msra.mxu0 %v1968
      %3034 = vmatprep.subr.bf16.mxu0 %v1973
      %3035 = vmatpush1.bf16.msra.mxu0 %v1972
      %3036 = vmatprep.subr.bf16.mxu0 %v1977
      %3037 = vmatpush1.bf16.msra.mxu0 %v1976
      %3038 = vmatprep.subr.bf16.mxu0 %v1981
      %3039 = vmatpush1.bf16.msra.mxu0 %v1980
      %3040 = vmatprep.subr.bf16.mxu0 %v1985
      %3041 = vmatpush1.bf16.msra.mxu0 %v1984
      %3042 = vmatprep.subr.bf16.mxu0 %v1989
      %3043 = vmatpush1.bf16.msra.mxu0 %v1988
      %3044 = vmatprep.subr.bf16.mxu0 %v1993
      %3045 = vmatpush1.bf16.msra.mxu0 %v1992
      %3046 = vmatprep.subr.bf16.mxu0 %v1997
      %3047 = vmatpush1.bf16.msra.mxu0 %v1996
      %3048 = vmatprep.subr.bf16.mxu0 %v2001
      %3049 = vmatpush1.bf16.msra.mxu0 %v2000
      %3050 = vmatprep.subr.bf16.mxu0 %v2005
      %3051 = vmatpush1.bf16.msra.mxu0 %v2004
      %3052 = vmatprep.subr.bf16.mxu0 %v2009
      %3053 = vmatpush1.bf16.msra.mxu0 %v2008
      %3054 = vmatprep.subr.bf16.mxu0 %v2013
      %3055 = vmatpush1.bf16.msra.mxu0 %v2012
      %3056 = vmatprep.subr.bf16.mxu0 %v2017
      %3057 = vmatpush1.bf16.msra.mxu0 %v2016
      %3058 = vmatprep.subr.bf16.mxu0 %v2021
      %3059 = vmatpush1.bf16.msra.mxu0 %v2020
      %3060 = vmatprep.subr.bf16.mxu0 %v2025
      %3061 = vmatpush1.bf16.msra.mxu0 %v2024
      %3062 = vmatprep.mubr.bf16.mxu0 %v676
      %3063 = vmatmul.mubr.bf16.gmra.mrb[0].mxu0 %v675
      %v3064 = vpop.f32.mrb[0].mxu0
      %v3065 = vadd.f32 %v3024, %v3064
      %v3066 = vpop.f32.mrb[0].mxu0
      %v3067 = vadd.f32 %v3026, %v3066
      %v3068 = vpop.f32.mrb[0].mxu0
      %v3069 = vpop.f32.mrb[0].mxu0
      %3070 = vdwg.mxu0
      %3071 = vmatprep.subr.bf16.mxu0 %v2029
      %3072 = vmatpush1.bf16.msra.mxu0 %v2028
      %3073 = vmatprep.subr.bf16.mxu0 %v2033
      %3074 = vmatpush1.bf16.msra.mxu0 %v2032
      %3075 = vmatprep.subr.bf16.mxu0 %v2037
      %3076 = vmatpush1.bf16.msra.mxu0 %v2036
      %3077 = vmatprep.subr.bf16.mxu0 %v2041
      %3078 = vmatpush1.bf16.msra.mxu0 %v2040
      %3079 = vmatprep.subr.bf16.mxu0 %v2045
      %3080 = vmatpush1.bf16.msra.mxu0 %v2044
      %3081 = vmatprep.subr.bf16.mxu0 %v2049
      %3082 = vmatpush1.bf16.msra.mxu0 %v2048
      %3083 = vmatprep.subr.bf16.mxu0 %v2053
      %3084 = vmatpush1.bf16.msra.mxu0 %v2052
      %3085 = vmatprep.subr.bf16.mxu0 %v2057
      %3086 = vmatpush1.bf16.msra.mxu0 %v2056
      %3087 = vmatprep.subr.bf16.mxu0 %v2061
      %3088 = vmatpush1.bf16.msra.mxu0 %v2060
      %3089 = vmatprep.subr.bf16.mxu0 %v2065
      %3090 = vmatpush1.bf16.msra.mxu0 %v2064
      %3091 = vmatprep.subr.bf16.mxu0 %v2069
      %3092 = vmatpush1.bf16.msra.mxu0 %v2068
      %3093 = vmatprep.subr.bf16.mxu0 %v2073
      %3094 = vmatpush1.bf16.msra.mxu0 %v2072
      %3095 = vmatprep.subr.bf16.mxu0 %v2077
      %3096 = vmatpush1.bf16.msra.mxu0 %v2076
      %3097 = vmatprep.subr.bf16.mxu0 %v2081
      %3098 = vmatpush1.bf16.msra.mxu0 %v2080
      %3099 = vmatprep.subr.bf16.mxu0 %v2085
      %3100 = vmatpush1.bf16.msra.mxu0 %v2084
      %3101 = vmatprep.subr.bf16.mxu0 %v2089
      %3102 = vmatpush1.bf16.msra.mxu0 %v2088
      %3103 = vmatprep.mubr.bf16.mxu0 %v678
      %3104 = vmatmul.mubr.bf16.gmra.mrb[0].mxu0 %v677
      %v3105 = vpop.f32.mrb[0].mxu0
      %v3106 = vadd.f32 %v3065, %v3105
      %v3107 = vpop.f32.mrb[0].mxu0
      %v3108 = vadd.f32 %v3067, %v3107
      %v3109 = vpop.f32.mrb[0].mxu0
      %v3110 = vpop.f32.mrb[0].mxu0
      %3111 = vdwg.mxu0
      %3112 = vmatprep.subr.bf16.mxu0 %v2093
      %3113 = vmatpush1.bf16.msra.mxu0 %v2092
      %3114 = vmatprep.subr.bf16.mxu0 %v2097
      %3115 = vmatpush1.bf16.msra.mxu0 %v2096
      %3116 = vmatprep.subr.bf16.mxu0 %v2101
      %3117 = vmatpush1.bf16.msra.mxu0 %v2100
      %3118 = vmatprep.subr.bf16.mxu0 %v2105
      %3119 = vmatpush1.bf16.msra.mxu0 %v2104
      %3120 = vmatprep.subr.bf16.mxu0 %v2109
      %3121 = vmatpush1.bf16.msra.mxu0 %v2108
      %3122 = vmatprep.subr.bf16.mxu0 %v2113
      %3123 = vmatpush1.bf16.msra.mxu0 %v2112
      %3124 = vmatprep.subr.bf16.mxu0 %v2117
      %3125 = vmatpush1.bf16.msra.mxu0 %v2116
      %3126 = vmatprep.subr.bf16.mxu0 %v2121
      %3127 = vmatpush1.bf16.msra.mxu0 %v2120
      %3128 = vmatprep.subr.bf16.mxu0 %v2125
      %3129 = vmatpush1.bf16.msra.mxu0 %v2124
      %3130 = vmatprep.subr.bf16.mxu0 %v2129
      %3131 = vmatpush1.bf16.msra.mxu0 %v2128
      %3132 = vmatprep.subr.bf16.mxu0 %v2133
      %3133 = vmatpush1.bf16.msra.mxu0 %v2132
      %3134 = vmatprep.subr.bf16.mxu0 %v2137
      %3135 = vmatpush1.bf16.msra.mxu0 %v2136
      %3136 = vmatprep.subr.bf16.mxu0 %v2141
      %3137 = vmatpush1.bf16.msra.mxu0 %v2140
      %3138 = vmatprep.subr.bf16.mxu0 %v2145
      %3139 = vmatpush1.bf16.msra.mxu0 %v2144
      %3140 = vmatprep.subr.bf16.mxu0 %v2149
      %3141 = vmatpush1.bf16.msra.mxu0 %v2148
      %3142 = vmatprep.subr.bf16.mxu0 %v2153
      %3143 = vmatpush1.bf16.msra.mxu0 %v2152
      %3144 = vmatprep.mubr.bf16.mxu0 %v680
      %3145 = vmatmul.mubr.bf16.gmra.mrb[0].mxu0 %v679
      %v3146 = vpop.f32.mrb[0].mxu0
      %v3147 = vadd.f32 %v3106, %v3146
      %v3148 = vpop.f32.mrb[0].mxu0
      %v3149 = vadd.f32 %v3108, %v3148
      %v3150 = vpop.f32.mrb[0].mxu0
      %v3151 = vpop.f32.mrb[0].mxu0
      %3152 = vdwg.mxu0
      %3153 = vmatprep.subr.bf16.mxu0 %v2157
      %3154 = vmatpush1.bf16.msra.mxu0 %v2156
      %3155 = vmatprep.subr.bf16.mxu0 %v2161
      %3156 = vmatpush1.bf16.msra.mxu0 %v2160
      %3157 = vmatprep.subr.bf16.mxu0 %v2165
      %3158 = vmatpush1.bf16.msra.mxu0 %v2164
      %3159 = vmatprep.subr.bf16.mxu0 %v2169
      %3160 = vmatpush1.bf16.msra.mxu0 %v2168
      %3161 = vmatprep.subr.bf16.mxu0 %v2173
      %3162 = vmatpush1.bf16.msra.mxu0 %v2172
      %3163 = vmatprep.subr.bf16.mxu0 %v2177
      %3164 = vmatpush1.bf16.msra.mxu0 %v2176
      %3165 = vmatprep.subr.bf16.mxu0 %v2181
      %3166 = vmatpush1.bf16.msra.mxu0 %v2180
      %3167 = vmatprep.subr.bf16.mxu0 %v2185
      %3168 = vmatpush1.bf16.msra.mxu0 %v2184
      %3169 = vmatprep.subr.bf16.mxu0 %v2189
      %3170 = vmatpush1.bf16.msra.mxu0 %v2188
      %3171 = vmatprep.subr.bf16.mxu0 %v2193
      %3172 = vmatpush1.bf16.msra.mxu0 %v2192
      %3173 = vmatprep.subr.bf16.mxu0 %v2197
      %3174 = vmatpush1.bf16.msra.mxu0 %v2196
      %3175 = vmatprep.subr.bf16.mxu0 %v2201
      %3176 = vmatpush1.bf16.msra.mxu0 %v2200
      %3177 = vmatprep.subr.bf16.mxu0 %v2205
      %3178 = vmatpush1.bf16.msra.mxu0 %v2204
      %3179 = vmatprep.subr.bf16.mxu0 %v2209
      %3180 = vmatpush1.bf16.msra.mxu0 %v2208
      %3181 = vmatprep.subr.bf16.mxu0 %v2213
      %3182 = vmatpush1.bf16.msra.mxu0 %v2212
      %3183 = vmatprep.subr.bf16.mxu0 %v2217
      %3184 = vmatpush1.bf16.msra.mxu0 %v2216
      %3185 = vmatprep.mubr.bf16.mxu0 %v682
      %3186 = vmatmul.mubr.bf16.gmra.mrb[0].mxu0 %v681
      %v3187 = vpop.f32.mrb[0].mxu0
      %v3188 = vadd.f32 %v3147, %v3187
      %v3189 = vpop.f32.mrb[0].mxu0
      %v3190 = vadd.f32 %v3149, %v3189
      %v3191 = vpop.f32.mrb[0].mxu0
      %v3192 = vpop.f32.mrb[0].mxu0
      %3193 = vdwg.mxu0
      %3194 = vmatprep.subr.bf16.mxu0 %v2221
      %3195 = vmatpush1.bf16.msra.mxu0 %v2220
      %3196 = vmatprep.subr.bf16.mxu0 %v2225
      %3197 = vmatpush1.bf16.msra.mxu0 %v2224
      %3198 = vmatprep.subr.bf16.mxu0 %v2229
      %3199 = vmatpush1.bf16.msra.mxu0 %v2228
      %3200 = vmatprep.subr.bf16.mxu0 %v2233
      %3201 = vmatpush1.bf16.msra.mxu0 %v2232
      %3202 = vmatprep.subr.bf16.mxu0 %v2237
      %3203 = vmatpush1.bf16.msra.mxu0 %v2236
      %3204 = vmatprep.subr.bf16.mxu0 %v2241
      %3205 = vmatpush1.bf16.msra.mxu0 %v2240
      %3206 = vmatprep.subr.bf16.mxu0 %v2245
      %3207 = vmatpush1.bf16.msra.mxu0 %v2244
      %3208 = vmatprep.subr.bf16.mxu0 %v2249
      %3209 = vmatpush1.bf16.msra.mxu0 %v2248
      %3210 = vmatprep.subr.bf16.mxu0 %v2253
      %3211 = vmatpush1.bf16.msra.mxu0 %v2252
      %3212 = vmatprep.subr.bf16.mxu0 %v2257
      %3213 = vmatpush1.bf16.msra.mxu0 %v2256
      %3214 = vmatprep.subr.bf16.mxu0 %v2261
      %3215 = vmatpush1.bf16.msra.mxu0 %v2260
      %3216 = vmatprep.subr.bf16.mxu0 %v2265
      %3217 = vmatpush1.bf16.msra.mxu0 %v2264
      %3218 = vmatprep.subr.bf16.mxu0 %v2269
      %3219 = vmatpush1.bf16.msra.mxu0 %v2268
      %3220 = vmatprep.subr.bf16.mxu0 %v2273
      %3221 = vmatpush1.bf16.msra.mxu0 %v2272
      %3222 = vmatprep.subr.bf16.mxu0 %v2277
      %3223 = vmatpush1.bf16.msra.mxu0 %v2276
      %3224 = vmatprep.subr.bf16.mxu0 %v2281
      %3225 = vmatpush1.bf16.msra.mxu0 %v2280
      %3226 = vmatprep.mubr.bf16.mxu0 %v684
      %3227 = vmatmul.mubr.bf16.gmra.mrb[0].mxu0 %v683
      %v3228 = vpop.f32.mrb[0].mxu0
      %v3229 = vadd.f32 %v3188, %v3228
      %v3230 = vpop.f32.mrb[0].mxu0
      %v3231 = vadd.f32 %v3190, %v3230
      %v3232 = vpop.f32.mrb[0].mxu0
      %v3233 = vpop.f32.mrb[0].mxu0
      %3234 = vdwg.mxu0
      %3235 = vmatprep.subr.bf16.mxu0 %v2285
      %3236 = vmatpush1.bf16.msra.mxu0 %v2284
      %3237 = vmatprep.subr.bf16.mxu0 %v2289
      %3238 = vmatpush1.bf16.msra.mxu0 %v2288
      %3239 = vmatprep.subr.bf16.mxu0 %v2293
      %3240 = vmatpush1.bf16.msra.mxu0 %v2292
      %3241 = vmatprep.subr.bf16.mxu0 %v2297
      %3242 = vmatpush1.bf16.msra.mxu0 %v2296
      %3243 = vmatprep.subr.bf16.mxu0 0
      %3244 = vmatpush1.bf16.msra.mxu0 0
      %3245 = vmatprep.subr.bf16.mxu0 0
      %3246 = vmatpush1.bf16.msra.mxu0 0
      %3247 = vmatprep.subr.bf16.mxu0 0
      %3248 = vmatpush1.bf16.msra.mxu0 0
      %3249 = vmatprep.subr.bf16.mxu0 0
      %3250 = vmatpush1.bf16.msra.mxu0 0
      %3251 = vmatprep.subr.bf16.mxu0 0
      %3252 = vmatpush1.bf16.msra.mxu0 0
      %3253 = vmatprep.subr.bf16.mxu0 0
      %3254 = vmatpush1.bf16.msra.mxu0 0
      %3255 = vmatprep.subr.bf16.mxu0 0
      %3256 = vmatpush1.bf16.msra.mxu0 0
      %3257 = vmatprep.subr.bf16.mxu0 0
      %3258 = vmatpush1.bf16.msra.mxu0 0
      %3259 = vmatprep.subr.bf16.mxu0 0
      %3260 = vmatpush1.bf16.msra.mxu0 0
      %3261 = vmatprep.subr.bf16.mxu0 0
      %3262 = vmatpush1.bf16.msra.mxu0 0
      %3263 = vmatprep.subr.bf16.mxu0 0
      %3264 = vmatpush1.bf16.msra.mxu0 0
      %3265 = vmatprep.subr.bf16.mxu0 0
      %3266 = vmatpush1.bf16.msra.mxu0 0
      %3267 = vmatprep.mubr.bf16.mxu0 0
      %3268 = vmatmul.mubr.bf16.gmra.mrb[0].mxu0 %v2700
      %v3269 = vpop.f32.mrb[0].mxu0
      %v3270 = vadd.f32 %v3229, %v3269
      %v3271 = vpop.f32.mrb[0].mxu0
      %v3272 = vadd.f32 %v3231, %v3271
      %v3273 = vpop.f32.mrb[0].mxu0
      %v3274 = vpop.f32.mrb[0].mxu0
      %3275 = vdwg.mxu0
      %v3276 = vmax.f32 %v2983, 0.0
      %v3277 = vmax.f32 %v2985, 0.0
      %v3278 = vmax.f32 %v3270, 0.0
      %v3279 = vmax.f32 %v3272, 0.0
      %v3280 = vpack.c.bf16 %v3276, %v3276
      %v3281 = vpack.c.bf16 %v3277, %v3277
      %v3282 = vpack.c.bf16 %v3278, %v3278
      %v3283 = vpack.c.bf16 %v3279, %v3279
      %v3284 = vld [vmem:[%s3] sm:$0xf]
      %v3285 = vld [vmem:[%s3 + $0x4] sm:$0xf]
      %v3286 = vld [vmem:[%s3 + $0x8] sm:$0xf]
      %v3287 = vld [vmem:[%s3 + $0xc] sm:$0xf]
      %v3288 = vld [vmem:[%s3 + $0x10] sm:$0xf]
      %v3289 = vld [vmem:[%s3 + $0x14] sm:$0xf]
      %v3290 = vld [vmem:[%s3 + $0x18] sm:$0xf]
      %v3291 = vld [vmem:[%s3 + $0x1c] sm:$0xf]
      %v3292 = vld [vmem:[%s3 + $0x20] sm:$0xf]
      %v3293 = vld [vmem:[%s3 + $0x24] sm:$0xf]
      %v3294 = vld [vmem:[%s3 + $0x28] sm:$0xf]
      %v3295 = vld [vmem:[%s3 + $0x2c] sm:$0xf]
      %v3296 = vld [vmem:[%s3 + $0x30] sm:$0xf]
      %v3297 = vld [vmem:[%s3 + $0x34] sm:$0xf]
      %v3298 = vld [vmem:[%s3 + $0x38] sm:$0xf]
      %v3299 = vld [vmem:[%s3 + $0x3c] sm:$0xf]
      %v3300 = vld [vmem:[%s3 + $0x40] sm:$0xf]
      %v3301 = vld [vmem:[%s3 + $0x44] sm:$0xf]
      %v3302 = vld [vmem:[%s3 + $0x48] sm:$0xf]
      %v3303 = vld [vmem:[%s3 + $0x4c] sm:$0xf]
      %v3304 = vld [vmem:[%s3 + $0x50] sm:$0xf]
      %v3305 = vld [vmem:[%s3 + $0x54] sm:$0xf]
      %v3306 = vld [vmem:[%s3 + $0x58] sm:$0xf]
      %v3307 = vld [vmem:[%s3 + $0x5c] sm:$0xf]
      %v3308 = vld [vmem:[%s3 + $0x60] sm:$0xf]
      %v3309 = vld [vmem:[%s3 + $0x64] sm:$0xf]
      %v3310 = vld [vmem:[%s3 + $0x68] sm:$0xf]
      %v3311 = vld [vmem:[%s3 + $0x6c] sm:$0xf]
      %v3312 = vld [vmem:[%s3 + $0x70] sm:$0xf]
      %v3313 = vld [vmem:[%s3 + $0x74] sm:$0xf]
      %v3314 = vld [vmem:[%s3 + $0x78] sm:$0xf]
      %v3315 = vld [vmem:[%s3 + $0x7c] sm:$0xf]
      %v3316 = vld [vmem:[%s3 + $0x80] sm:$0xf]
      %v3317 = vld [vmem:[%s3 + $0x84] sm:$0xf]
      %v3318 = vld [vmem:[%s3 + $0x88] sm:$0xf]
      %v3319 = vld [vmem:[%s3 + $0x8c] sm:$0xf]
      %v3320 = vld [vmem:[%s3 + $0x90] sm:$0xf]
      %v3321 = vld [vmem:[%s3 + $0x94] sm:$0xf]
      %v3322 = vld [vmem:[%s3 + $0x98] sm:$0xf]
      %v3323 = vld [vmem:[%s3 + $0x9c] sm:$0xf]
      %v3324 = vld [vmem:[%s3 + $0xa0] sm:$0xf]
      %v3325 = vld [vmem:[%s3 + $0xa4] sm:$0xf]
      %v3326 = vld [vmem:[%s3 + $0xa8] sm:$0xf]
      %v3327 = vld [vmem:[%s3 + $0xac] sm:$0xf]
      %v3328 = vld [vmem:[%s3 + $0xb0] sm:$0xf]
      %v3329 = vld [vmem:[%s3 + $0xb4] sm:$0xf]
      %v3330 = vld [vmem:[%s3 + $0xb8] sm:$0xf]
      %v3331 = vld [vmem:[%s3 + $0xbc] sm:$0xf]
      %v3332 = vld [vmem:[%s3 + $0xc0] sm:$0xf]
      %v3333 = vld [vmem:[%s3 + $0xc4] sm:$0xf]
      %v3334 = vld [vmem:[%s3 + $0xc8] sm:$0xf]
      %v3335 = vld [vmem:[%s3 + $0xcc] sm:$0xf]
      %v3336 = vld [vmem:[%s3 + $0xd0] sm:$0xf]
      %v3337 = vld [vmem:[%s3 + $0xd4] sm:$0xf]
      %v3338 = vld [vmem:[%s3 + $0xd8] sm:$0xf]
      %v3339 = vld [vmem:[%s3 + $0xdc] sm:$0xf]
      %v3340 = vld [vmem:[%s3 + $0xe0] sm:$0xf]
      %v3341 = vld [vmem:[%s3 + $0xe4] sm:$0xf]
      %v3342 = vld [vmem:[%s3 + $0xe8] sm:$0xf]
      %v3343 = vld [vmem:[%s3 + $0xec] sm:$0xf]
      %v3344 = vld [vmem:[%s3 + $0xf0] sm:$0xf]
      %v3345 = vld [vmem:[%s3 + $0xf4] sm:$0xf]
      %v3346 = vld [vmem:[%s3 + $0xf8] sm:$0xf]
      %v3347 = vld [vmem:[%s3 + $0xfc] sm:$0xf]
      %v3348 = vld [vmem:[%s4] sm:$0x1]
      %v3350 = vlaneseq
      %v3351 = vshrl.u32 %v3350, 7
      %v3352 = vsub.s32 0, %v3351
      %v3353 = vrot.slane %v3348, %v3352
      %v3419 = vunpack.c.l.b16 %v3284
      %v3420 = vunpack.c.l.b16 %v3285
      %v3421 = vunpack.c.l.b16 %v3286
      %v3422 = vunpack.c.l.b16 %v3287
      %v3423 = vunpack.c.l.b16 %v3288
      %v3424 = vunpack.c.l.b16 %v3289
      %v3425 = vunpack.c.l.b16 %v3290
      %v3426 = vunpack.c.l.b16 %v3291
      %v3427 = vunpack.c.l.b16 %v3292
      %v3428 = vunpack.c.l.b16 %v3293
      %v3429 = vunpack.c.l.b16 %v3294
      %v3430 = vunpack.c.l.b16 %v3295
      %v3431 = vunpack.c.l.b16 %v3296
      %v3432 = vunpack.c.l.b16 %v3297
      %v3433 = vunpack.c.l.b16 %v3298
      %v3434 = vunpack.c.l.b16 %v3299
      %v3435 = vunpack.c.l.b16 %v3300
      %v3436 = vunpack.c.l.b16 %v3301
      %v3437 = vunpack.c.l.b16 %v3302
      %v3438 = vunpack.c.l.b16 %v3303
      %v3439 = vunpack.c.l.b16 %v3304
      %v3440 = vunpack.c.l.b16 %v3305
      %v3441 = vunpack.c.l.b16 %v3306
      %v3442 = vunpack.c.l.b16 %v3307
      %v3443 = vunpack.c.l.b16 %v3308
      %v3444 = vunpack.c.l.b16 %v3309
      %v3445 = vunpack.c.l.b16 %v3310
      %v3446 = vunpack.c.l.b16 %v3311
      %v3447 = vunpack.c.l.b16 %v3312
      %v3448 = vunpack.c.l.b16 %v3313
      %v3449 = vunpack.c.l.b16 %v3314
      %v3450 = vunpack.c.l.b16 %v3315
      %v3451 = vunpack.c.l.b16 %v3316
      %v3452 = vunpack.c.l.b16 %v3317
      %v3453 = vunpack.c.l.b16 %v3318
      %v3454 = vunpack.c.l.b16 %v3319
      %v3455 = vunpack.c.l.b16 %v3320
      %v3456 = vunpack.c.l.b16 %v3321
      %v3457 = vunpack.c.l.b16 %v3322
      %v3458 = vunpack.c.l.b16 %v3323
      %v3459 = vunpack.c.l.b16 %v3324
      %v3460 = vunpack.c.l.b16 %v3325
      %v3461 = vunpack.c.l.b16 %v3326
      %v3462 = vunpack.c.l.b16 %v3327
      %v3463 = vunpack.c.l.b16 %v3328
      %v3464 = vunpack.c.l.b16 %v3329
      %v3465 = vunpack.c.l.b16 %v3330
      %v3466 = vunpack.c.l.b16 %v3331
      %v3467 = vunpack.c.l.b16 %v3332
      %v3468 = vunpack.c.l.b16 %v3333
      %v3469 = vunpack.c.l.b16 %v3334
      %v3470 = vunpack.c.l.b16 %v3335
      %v3471 = vunpack.c.l.b16 %v3336
      %v3472 = vunpack.c.l.b16 %v3337
      %v3473 = vunpack.c.l.b16 %v3338
      %v3474 = vunpack.c.l.b16 %v3339
      %v3475 = vunpack.c.l.b16 %v3340
      %v3476 = vunpack.c.l.b16 %v3341
      %v3477 = vunpack.c.l.b16 %v3342
      %v3478 = vunpack.c.l.b16 %v3343
      %v3479 = vunpack.c.l.b16 %v3344
      %v3480 = vunpack.c.l.b16 %v3345
      %v3481 = vunpack.c.l.b16 %v3346
      %v3482 = vunpack.c.l.b16 %v3347
      %v3483 = vpack.c.b16 %v3420, %v3419
      %v3484 = vpack.c.b16 %v3422, %v3421
      %v3485 = vpack.c.b16 %v3424, %v3423
      %v3486 = vpack.c.b16 %v3426, %v3425
      %v3487 = vpack.c.b16 %v3428, %v3427
      %v3488 = vpack.c.b16 %v3430, %v3429
      %v3489 = vpack.c.b16 %v3432, %v3431
      %v3490 = vpack.c.b16 %v3434, %v3433
      %v3491 = vpack.c.b16 %v3436, %v3435
      %v3492 = vpack.c.b16 %v3438, %v3437
      %v3493 = vpack.c.b16 %v3440, %v3439
      %v3494 = vpack.c.b16 %v3442, %v3441
      %v3495 = vpack.c.b16 %v3444, %v3443
      %v3496 = vpack.c.b16 %v3446, %v3445
      %v3497 = vpack.c.b16 %v3448, %v3447
      %v3498 = vpack.c.b16 %v3450, %v3449
      %v3499 = vpack.c.b16 %v3452, %v3451
      %v3500 = vpack.c.b16 %v3454, %v3453
      %v3501 = vpack.c.b16 %v3456, %v3455
      %v3502 = vpack.c.b16 %v3458, %v3457
      %v3503 = vpack.c.b16 %v3460, %v3459
      %v3504 = vpack.c.b16 %v3462, %v3461
      %v3505 = vpack.c.b16 %v3464, %v3463
      %v3506 = vpack.c.b16 %v3466, %v3465
      %v3507 = vpack.c.b16 %v3468, %v3467
      %v3508 = vpack.c.b16 %v3470, %v3469
      %v3509 = vpack.c.b16 %v3472, %v3471
      %v3510 = vpack.c.b16 %v3474, %v3473
      %v3511 = vpack.c.b16 %v3476, %v3475
      %v3512 = vpack.c.b16 %v3478, %v3477
      %v3513 = vpack.c.b16 %v3480, %v3479
      %v3514 = vpack.c.b16 %v3482, %v3481
      %3547 = vmatprep.subr.bf16.mxu0 0
      %3548 = vmatpush1.bf16.msra.mxu0 %v3483
      %3549 = vmatprep.subr.bf16.mxu0 0
      %3550 = vmatpush1.bf16.msra.mxu0 %v3484
      %3551 = vmatprep.subr.bf16.mxu0 0
      %3552 = vmatpush1.bf16.msra.mxu0 %v3485
      %3553 = vmatprep.subr.bf16.mxu0 0
      %3554 = vmatpush1.bf16.msra.mxu0 %v3486
      %3555 = vmatprep.subr.bf16.mxu0 0
      %3556 = vmatpush1.bf16.msra.mxu0 %v3487
      %3557 = vmatprep.subr.bf16.mxu0 0
      %3558 = vmatpush1.bf16.msra.mxu0 %v3488
      %3559 = vmatprep.subr.bf16.mxu0 0
      %3560 = vmatpush1.bf16.msra.mxu0 %v3489
      %3561 = vmatprep.subr.bf16.mxu0 0
      %3562 = vmatpush1.bf16.msra.mxu0 %v3490
      %3563 = vmatprep.subr.bf16.mxu0 0
      %3564 = vmatpush1.bf16.msra.mxu0 %v3491
      %3565 = vmatprep.subr.bf16.mxu0 0
      %3566 = vmatpush1.bf16.msra.mxu0 %v3492
      %3567 = vmatprep.subr.bf16.mxu0 0
      %3568 = vmatpush1.bf16.msra.mxu0 %v3493
      %3569 = vmatprep.subr.bf16.mxu0 0
      %3570 = vmatpush1.bf16.msra.mxu0 %v3494
      %3571 = vmatprep.subr.bf16.mxu0 0
      %3572 = vmatpush1.bf16.msra.mxu0 %v3495
      %3573 = vmatprep.subr.bf16.mxu0 0
      %3574 = vmatpush1.bf16.msra.mxu0 %v3496
      %3575 = vmatprep.subr.bf16.mxu0 0
      %3576 = vmatpush1.bf16.msra.mxu0 %v3497
      %3577 = vmatprep.subr.bf16.mxu0 0
      %3578 = vmatpush1.bf16.msra.mxu0 %v3498
      %3579 = vmatprep.mubr.bf16.mxu0 %v3281
      %3580 = vmatmul.mubr.bf16.gmra.mrb[0].mxu0 %v3280
      %v3581 = vpop.f32.mrb[0].mxu0
      %v3582 = vadd.f32 %v3353, %v3581
      %v3583 = vpop.f32.mrb[0].mxu0
      %v3584 = vpop.f32.mrb[0].mxu0
      %v3585 = vpop.f32.mrb[0].mxu0
      %3586 = vdwg.mxu0
      %3587 = vmatprep.subr.bf16.mxu0 0
      %3588 = vmatpush1.bf16.msra.mxu0 %v3499
      %3589 = vmatprep.subr.bf16.mxu0 0
      %3590 = vmatpush1.bf16.msra.mxu0 %v3500
      %3591 = vmatprep.subr.bf16.mxu0 0
      %3592 = vmatpush1.bf16.msra.mxu0 %v3501
      %3593 = vmatprep.subr.bf16.mxu0 0
      %3594 = vmatpush1.bf16.msra.mxu0 %v3502
      %3595 = vmatprep.subr.bf16.mxu0 0
      %3596 = vmatpush1.bf16.msra.mxu0 %v3503
      %3597 = vmatprep.subr.bf16.mxu0 0
      %3598 = vmatpush1.bf16.msra.mxu0 %v3504
      %3599 = vmatprep.subr.bf16.mxu0 0
      %3600 = vmatpush1.bf16.msra.mxu0 %v3505
      %3601 = vmatprep.subr.bf16.mxu0 0
      %3602 = vmatpush1.bf16.msra.mxu0 %v3506
      %3603 = vmatprep.subr.bf16.mxu0 0
      %3604 = vmatpush1.bf16.msra.mxu0 %v3507
      %3605 = vmatprep.subr.bf16.mxu0 0
      %3606 = vmatpush1.bf16.msra.mxu0 %v3508
      %3607 = vmatprep.subr.bf16.mxu0 0
      %3608 = vmatpush1.bf16.msra.mxu0 %v3509
      %3609 = vmatprep.subr.bf16.mxu0 0
      %3610 = vmatpush1.bf16.msra.mxu0 %v3510
      %3611 = vmatprep.subr.bf16.mxu0 0
      %3612 = vmatpush1.bf16.msra.mxu0 %v3511
      %3613 = vmatprep.subr.bf16.mxu0 0
      %3614 = vmatpush1.bf16.msra.mxu0 %v3512
      %3615 = vmatprep.subr.bf16.mxu0 0
      %3616 = vmatpush1.bf16.msra.mxu0 %v3513
      %3617 = vmatprep.subr.bf16.mxu0 0
      %3618 = vmatpush1.bf16.msra.mxu0 %v3514
      %3619 = vmatprep.mubr.bf16.mxu0 %v3283
      %3620 = vmatmul.mubr.bf16.gmra.mrb[0].mxu0 %v3282
      %v3621 = vpop.f32.mrb[0].mxu0
      %v3622 = vadd.f32 %v3582, %v3621
      %v3623 = vpop.f32.mrb[0].mxu0
      %v3624 = vpop.f32.mrb[0].mxu0
      %v3625 = vpop.f32.mrb[0].mxu0
      %3626 = vdwg.mxu0
      %v3627 = vmax.f32 %v3622, 0.0
      %3628 = vst [vmem:[%s222] sm:$0xff] %v3627
      %p3629 = scmp.lt.s32.totalorder %s16, 1
      %s3630 = scalar_select %p3629, %s16, 1
      %s3631 = smul.addr %s3630, 8
      %s3632 = scalar_lea.vmem %s5, %s3631
      // Predicated region
      $region41: #{net_forward.5} parent=39 // pred_check
        %p3633 = pneg %p144
      $region42: #{net_forward.5} parent=39 // pred_check_branch
        %3635 = sbr.rel (%p3633) target = $region44
      $region43: #{net_forward.5} parent=39 // pred_region
        _
      $region44: #{net_forward.5} parent=39 // pred_fallthru
        _
    $region40: #{net_forward.5} parent=5 // pred_fallthru
      _
    %p3636 = scmp.le.s32.totalorder 2, %s11
    // Predicated region
    $region45: #{net_forward.5} parent=5 // pred_check
      %p3637 = pneg %p3636
    $region46: #{net_forward.5} parent=5 // pred_check_branch
      %3639 = sbr.rel (%p3637) target = $region48
    $region47: #{net_forward.5} parent=5 // pred_region
      %s3640 = ssub.s32 %s11, 2
      // Predicated region
      $region49: #{net_forward.5} parent=47 // pred_check
        %p3641 = pneg %p150
      $region50: #{net_forward.5} parent=47 // pred_check_branch
        %3643 = sbr.rel (%p3641) target = $region52
      $region51: #{net_forward.5} parent=47 // pred_region
        %p3644 = scmp.lt.s32.totalorder %s17, 1
        %s3645 = scalar_select %p3644, %s17, 1
        %s3646 = smul.addr %s3645, 8
        %s3647 = scalar_lea.vmem %s5, %s3646
      $region52: #{net_forward.5} parent=47 // pred_fallthru
        _
    $region48: #{net_forward.5} parent=5 // pred_fallthru
      _
  $region6: #{net_forward.5} parent=0 // loop_footer
    %s15 = sadd.s32 1, %s11
  $region7: #{net_forward.5} parent=0 // loop_footer_branch
    %10 = sbr.rel target = $region3
  $region8: #{net_forward.5} parent=0 // loop_exit
    _

</llo_original>
